<compile_context>
chip_gen: v5e
topology: v5e:2x2
jax: 0.10.0
libtpu: 0.0.40
codegen_flags: <defaults>
</compile_context>

<pallas_src>
import jax
import jax.numpy as jnp
from jax import lax
from jax.experimental import pallas as pl
from jax.experimental.pallas import tpu as pltpu

N_ACTIONS = 3
N_OBS = 10
HIDDEN = 5        # LSTM hidden size
IN_SZ = 5         # LSTM input size
SEQ = 42
MLP_H = 128
LANES = 128
GS = 32           # per-gate lane stride: gate k at lanes [32k, 32k+5); order i,f,g,o
NG = 4
H_OFF = 3 * GS    # h lands in the o-gate block -> lanes [96, 101)
C_OFF = 1 * GS    # c is carried in the f-gate block -> lanes [32, 37)
PROJ_CHUNK = 7    # time steps per hoisted-projection chunk (42 = 6 * 7)
XCOLS = 8         # 5 features + 1 ones column (bias fold) + 2 zero pad


def make_dqn_kernel(bs, bp):
    def kernel(x_ref, wih0_ref, whh0_ref, b1_ref, w1cat_ref,
               w1h_ref, bl1_ref, w2_ref, bl2_ref, w3_ref, bl3_ref,
               o_ref, xp_ref):
        f32 = jnp.float32
        bf16 = jnp.bfloat16

        # ---- hoisted layer-0 input projection (b0 folded via the ones column),
        #      chunked so early LSTM steps can overlap the tail of the prologue.
        for t0 in range(0, SEQ, PROJ_CHUNK):
            r0, r1 = t0 * bp, (t0 + PROJ_CHUNK) * bp
            xp_ref[r0:r1, :] = jnp.dot(x_ref[r0:r1, :], wih0_ref[...],
                                       preferred_element_type=f32)

        # ---- small (post-repack, bf16) recurrent weights: hoist once (~24 vregs).
        # TODO(synk): pin these RHS tiles across the 42 steps with
        # pltpu.matmul_push_rhs / matmul_acc_lhs / matmul_pop to drop the
        # per-step weight push from the serial chain.
        whh0 = whh0_ref[...]          # (128, 128) bf16
        w1c = w1cat_ref[...]          # (256, 128) bf16 = [wih1; whh1]
        b1b = jnp.broadcast_to(b1_ref[...], (bp, LANES))   # hoisted broadcast

        # ---- gate activation constants: sigma(x)=.5*tanh(.5x)+.5 on i/f/o
        #      blocks, tanh(x) on the g block -> ONE tanh per activation.
        lane = lax.broadcasted_iota(jnp.int32, (bp, LANES), 1)
        is_g = jnp.logical_and(lane >= 2 * GS, lane < 3 * GS)
        m_s = jnp.where(is_g, 1.0, 0.5).astype(f32)
        m_o = jnp.where(is_g, 0.0, 0.5).astype(f32)

        def cell(z, c):
            # z blocks: [i | f | g | o]; c carried in the f block (lanes 32..36).
            a = m_s * jnp.tanh(m_s * z) + m_o              # [si | sf | tg | so]
            p = a * pltpu.roll(a, shift=2 * GS, axis=1)    # i*g at blocks 0 and 2
            c_new = pltpu.roll(p, shift=GS, axis=1) + a * c    # block 1: i*g + f*c
            tc = jnp.tanh(c_new)
            h_new = a * pltpu.roll(tc, shift=2 * GS, axis=1)   # block 3: o*tanh(c)
            return h_new, c_new

        z0s = jnp.zeros((bp, LANES), f32)
        h0, c0, h1, c1 = z0s, z0s, z0s, z0s

        # ---- fully unrolled 42-step recurrence: 2 MXU dots + 2 cells per step,
        #      each dot produces a single 128-lane output tile.
        for t in range(SEQ):
            xp_t = xp_ref[t * bp:(t + 1) * bp, :]          # static, 8-aligned slice
            z0 = xp_t + jnp.dot(h0.astype(bf16), whh0, preferred_element_type=f32)
            h0, c0 = cell(z0, c0)
            hcat = jnp.concatenate([h0, h1], axis=1).astype(bf16)     # (bp, 256)
            z1 = jnp.dot(hcat, w1c, preferred_element_type=f32) + b1b
            h1, c1 = cell(z1, c1)

        # ---- epilogue: feat = h.reshape(bs, 10) for h = (2, bs, 5), via two tiny
        #      batch-row selector matmuls built in-kernel from iotas (no extra DMAs).
        hs = jnp.concatenate([h0, h1], axis=0)             # (2*bp, 128)
        row = lax.broadcasted_iota(jnp.int32, (bp, 2 * bp), 0)
        col = lax.broadcasted_iota(jnp.int32, (bp, 2 * bp), 1)

        def selector(off):
            ti = 2 * row + off                     # flat row of the (2*bs, 5) view
            layer = (ti >= bs).astype(jnp.int32)   # exact for the real rows
            tgt = layer * bp + (ti - layer * bs)
            hit = jnp.logical_and(col == tgt, row < bs)    # padded rows -> 0
            return hit.astype(f32)

        left = jnp.dot(selector(0), hs, preferred_element_type=f32)   # feat[:, :5]
        right = jnp.dot(selector(1), hs, preferred_element_type=f32)  # feat[:, 5:]
        feat = jnp.concatenate([left, right], axis=1).astype(bf16)    # (bp, 256)

        # ---- MLP head: relu(L1) -> relu(L2) -> L3 (lane-dense 128-wide output).
        a1 = jnp.maximum(jnp.dot(feat, w1h_ref[...], preferred_element_type=f32)
                         + bl1_ref[...], 0.0)
        a2 = jnp.maximum(jnp.dot(a1.astype(bf16), w2_ref[...],
                                 preferred_element_type=f32) + bl2_ref[...], 0.0)
        o_ref[...] = (jnp.dot(a2.astype(bf16), w3_ref[...],
                              preferred_element_type=f32) + bl3_ref[...])

    return kernel


# ----------------------------- parameter packing -----------------------------

def _gate_pack(w_gates, n_rows, row_off, dtype=jnp.float32):
    """w_gates: (4, k_in, HIDDEN) in (in, out) orientation. Returns (n_rows, 128)
    with gate k at lanes [32k, 32k+5) and inputs at rows [row_off, row_off+k_in)."""
    k_in = w_gates.shape[1]
    out = jnp.zeros((n_rows, LANES), jnp.float32)
    for k in range(NG):
        out = out.at[row_off:row_off + k_in, k * GS:k * GS + HIDDEN].set(w_gates[k])
    return out.astype(dtype)


def _gate_bias(b_gates):
    out = jnp.zeros((1, LANES), jnp.float32)
    for k in range(NG):
        out = out.at[0, k * GS:k * GS + HIDDEN].set(b_gates[k])
    return out


def init_params(key):
    """PyTorch-style uniform(-1/sqrt(fan_in), 1/sqrt(fan_in)) init in logical
    shapes, packed into the fused 32-lane-stride layouts the kernel consumes."""
    ks = jax.random.split(key, 14)

    def unif(k, shape, fan_in):
        bound = 1.0 / float(fan_in) ** 0.5
        return jax.random.uniform(k, shape, jnp.float32, -bound, bound)

    wih0 = unif(ks[0], (NG, IN_SZ, HIDDEN), HIDDEN)
    whh0 = unif(ks[1], (NG, HIDDEN, HIDDEN), HIDDEN)
    b0 = unif(ks[2], (NG, HIDDEN), HIDDEN) + unif(ks[3], (NG, HIDDEN), HIDDEN)
    wih1 = unif(ks[4], (NG, HIDDEN, HIDDEN), HIDDEN)
    whh1 = unif(ks[5], (NG, HIDDEN, HIDDEN), HIDDEN)
    b1 = unif(ks[6], (NG, HIDDEN), HIDDEN) + unif(ks[7], (NG, HIDDEN), HIDDEN)
    w1 = unif(ks[8], (N_OBS, MLP_H), N_OBS)
    bl1 = unif(ks[9], (1, MLP_H), N_OBS)
    w2 = unif(ks[10], (MLP_H, MLP_H), MLP_H)
    bl2 = unif(ks[11], (1, MLP_H), MLP_H)
    w3 = unif(ks[12], (MLP_H, N_ACTIONS), MLP_H)
    bl3 = unif(ks[13], (1, N_ACTIONS), MLP_H)

    # layer-0 input weight with the gate-packed bias folded in as row IN_SZ
    # (matches the ones column appended to x in the wrapper).
    wih0f = _gate_pack(wih0, XCOLS, 0)
    wih0f = wih0f.at[IN_SZ:IN_SZ + 1, :].set(_gate_bias(b0))

    # layer-1 fused recurrent weight: [wih1; whh1], h inputs at rows 96..100 / 224..228
    w1cat = jnp.concatenate([_gate_pack(wih1, LANES, H_OFF),
                             _gate_pack(whh1, LANES, H_OFF)],
                            axis=0).astype(jnp.bfloat16)

    # head layer-1: feat columns 0..4 (left, rows 96..100) and 5..9 (right, rows 224..228)
    w1h = jnp.zeros((2 * LANES, MLP_H), jnp.float32)
    w1h = w1h.at[H_OFF:H_OFF + HIDDEN, :].set(w1[:HIDDEN])
    w1h = w1h.at[LANES + H_OFF:LANES + H_OFF + HIDDEN, :].set(w1[HIDDEN:])

    w3p = jnp.zeros((MLP_H, LANES), jnp.float32).at[:, :N_ACTIONS].set(w3)
    bl3p = jnp.zeros((1, LANES), jnp.float32).at[:, :N_ACTIONS].set(bl3)

    return {
        "wih0f": wih0f,                                          # (8, 128)   f32
        "whh0f": _gate_pack(whh0, LANES, H_OFF, jnp.bfloat16),   # (128, 128) bf16
        "b1f": _gate_bias(b1),                                   # (1, 128)   f32
        "w1cat": w1cat,                                          # (256, 128) bf16
        "w1h": w1h.astype(jnp.bfloat16),                         # (256, 128) bf16
        "bl1": bl1,                                              # (1, 128)   f32
        "w2": w2.astype(jnp.bfloat16),                           # (128, 128) bf16
        "bl2": bl2,                                              # (1, 128)   f32
        "w3p": w3p.astype(jnp.bfloat16),                         # (128, 128) bf16
        "bl3p": bl3p,                                            # (1, 128)   f32
    }


@jax.jit
def dqn_forward(x, params):
    # bs = prod(first three dims) // 210, exactly as in the PyTorch forward
    bs = (x.shape[0] * x.shape[1] * x.shape[2]) // 210
    bp = max(8, ((bs + 7) // 8) * 8)                 # pad batch to 8 sublanes

    xs = x.reshape(bs, SEQ, IN_SZ).astype(jnp.float32)
    xt = jnp.transpose(xs, (1, 0, 2))                # time-major (T, bs, 5)
    # append ones column (b0 fold) + zero pad to 8 columns; padded batch rows stay
    # all-zero (including the ones column) so they never see the layer-0 bias.
    xe = jnp.concatenate(
        [xt, jnp.ones((SEQ, bs, 1), jnp.float32),
         jnp.zeros((SEQ, bs, XCOLS - IN_SZ - 1), jnp.float32)], axis=2)
    xpad = jnp.zeros((SEQ, bp, XCOLS), jnp.float32).at[:, :bs, :].set(xe)
    x2 = xpad.reshape(SEQ * bp, XCOLS)               # row index = t*bp + b

    vmem = pl.BlockSpec(memory_space=pltpu.MemorySpace.VMEM)

    # TODO(synk): if bs ever grows large, add a batch grid with
    # dimension_semantics=("parallel",) (2 TCs on v7x) and size the per-block
    # batch for v7x's 64 MiB VMEM (set vmem_limit_bytes explicitly).
    out = pl.pallas_call(
        make_dqn_kernel(bs, bp),
        out_shape=jax.ShapeDtypeStruct((bp, LANES), jnp.float32),
        in_specs=[vmem] * 11,
        out_specs=vmem,
        scratch_shapes=[pltpu.VMEM((SEQ * bp, LANES), jnp.float32)],
    )(x2, params["wih0f"], params["whh0f"], params["b1f"], params["w1cat"],
      params["w1h"], params["bl1"], params["w2"], params["bl2"],
      params["w3p"], params["bl3p"])
    return out[:bs, :N_ACTIONS]


if __name__ == "__main__":
    key = jax.random.PRNGKey(0)
    kx, kp = jax.random.split(key)
    # (2, 42, 5): 2*42*5 = 420 -> bs = 420 // 210 = 2
    x = jax.random.normal(kx, (2, 42, 5), jnp.float32)
    params = init_params(kp)

    out = dqn_forward(x, params)
    jax.block_until_ready(out)
    assert out.shape == (2, N_ACTIONS) and out.dtype == jnp.float32
    assert bool(jnp.all(jnp.isfinite(out)))
    print("KERNEL_OK")
</pallas_src>

<mosaic_0001>
module attributes {stable_mosaic.version = 11 : i64} {
  func.func @kernel(%arg0: memref<336x8xf32, #tpu.memory_space<vmem>>, %arg1: memref<8x128xf32, #tpu.memory_space<vmem>>, %arg2: memref<128x128xbf16, #tpu.memory_space<vmem>>, %arg3: memref<1x128xf32, #tpu.memory_space<vmem>>, %arg4: memref<256x128xbf16, #tpu.memory_space<vmem>>, %arg5: memref<256x128xbf16, #tpu.memory_space<vmem>>, %arg6: memref<1x128xf32, #tpu.memory_space<vmem>>, %arg7: memref<128x128xbf16, #tpu.memory_space<vmem>>, %arg8: memref<1x128xf32, #tpu.memory_space<vmem>>, %arg9: memref<128x128xbf16, #tpu.memory_space<vmem>>, %arg10: memref<1x128xf32, #tpu.memory_space<vmem>>, %arg11: memref<8x128xf32, #tpu.memory_space<vmem>>, %arg12: memref<336x128xf32, #tpu.memory_space<vmem>>) attributes {dimension_semantics = [], scalar_prefetch = 0 : i64, scratch_operands = 1 : i64, tpu.core_type = #tpu.core_type<tc>} {
    %c0 = arith.constant 0 : index
    %c0_0 = arith.constant 0 : index
    %0 = vector.load %arg0[%c0, %c0_0] : memref<336x8xf32, #tpu.memory_space<vmem>>, vector<56x8xf32>
    %c0_1 = arith.constant 0 : index
    %c0_2 = arith.constant 0 : index
    %1 = vector.load %arg1[%c0_1, %c0_2] : memref<8x128xf32, #tpu.memory_space<vmem>>, vector<8x128xf32>
    %cst = arith.constant dense<0.000000e+00> : vector<56x128xf32>
    %2 = tpu.matmul %0, %1, %cst {dimension_numbers = #tpu.dot_dimension_numbers<[1], [0], [0], [1], [0, 0, 1, 1], [], []>} : vector<56x8xf32>, vector<8x128xf32>, vector<56x128xf32> -> vector<56x128xf32>
    %c0_3 = arith.constant 0 : index
    %c0_4 = arith.constant 0 : index
    %3 = vector.load %arg12[%c0_3, %c0_4] : memref<336x128xf32, #tpu.memory_space<vmem>>, vector<56x128xf32>
    tpu.vector_store %arg12[%c0_3, %c0_4], %2 {strides = array<i32>} : memref<336x128xf32, #tpu.memory_space<vmem>>, vector<56x128xf32>,
    %c56 = arith.constant 56 : index
    %c0_5 = arith.constant 0 : index
    %4 = vector.load %arg0[%c56, %c0_5] : memref<336x8xf32, #tpu.memory_space<vmem>>, vector<56x8xf32>
    %c0_6 = arith.constant 0 : index
    %c0_7 = arith.constant 0 : index
    %5 = vector.load %arg1[%c0_6, %c0_7] : memref<8x128xf32, #tpu.memory_space<vmem>>, vector<8x128xf32>
    %cst_8 = arith.constant dense<0.000000e+00> : vector<56x128xf32>
    %6 = tpu.matmul %4, %5, %cst_8 {dimension_numbers = #tpu.dot_dimension_numbers<[1], [0], [0], [1], [0, 0, 1, 1], [], []>} : vector<56x8xf32>, vector<8x128xf32>, vector<56x128xf32> -> vector<56x128xf32>
    %c56_9 = arith.constant 56 : index
    %c0_10 = arith.constant 0 : index
    %7 = vector.load %arg12[%c56_9, %c0_10] : memref<336x128xf32, #tpu.memory_space<vmem>>, vector<56x128xf32>
    tpu.vector_store %arg12[%c56_9, %c0_10], %6 {strides = array<i32>} : memref<336x128xf32, #tpu.memory_space<vmem>>, vector<56x128xf32>,
    %c112 = arith.constant 112 : index
    %c0_11 = arith.constant 0 : index
    %8 = vector.load %arg0[%c112, %c0_11] : memref<336x8xf32, #tpu.memory_space<vmem>>, vector<56x8xf32>
    %c0_12 = arith.constant 0 : index
    %c0_13 = arith.constant 0 : index
    %9 = vector.load %arg1[%c0_12, %c0_13] : memref<8x128xf32, #tpu.memory_space<vmem>>, vector<8x128xf32>
    %cst_14 = arith.constant dense<0.000000e+00> : vector<56x128xf32>
    %10 = tpu.matmul %8, %9, %cst_14 {dimension_numbers = #tpu.dot_dimension_numbers<[1], [0], [0], [1], [0, 0, 1, 1], [], []>} : vector<56x8xf32>, vector<8x128xf32>, vector<56x128xf32> -> vector<56x128xf32>
    %c112_15 = arith.constant 112 : index
    %c0_16 = arith.constant 0 : index
    %11 = vector.load %arg12[%c112_15, %c0_16] : memref<336x128xf32, #tpu.memory_space<vmem>>, vector<56x128xf32>
    tpu.vector_store %arg12[%c112_15, %c0_16], %10 {strides = array<i32>} : memref<336x128xf32, #tpu.memory_space<vmem>>, vector<56x128xf32>,
    %c168 = arith.constant 168 : index
    %c0_17 = arith.constant 0 : index
    %12 = vector.load %arg0[%c168, %c0_17] : memref<336x8xf32, #tpu.memory_space<vmem>>, vector<56x8xf32>
    %c0_18 = arith.constant 0 : index
    %c0_19 = arith.constant 0 : index
    %13 = vector.load %arg1[%c0_18, %c0_19] : memref<8x128xf32, #tpu.memory_space<vmem>>, vector<8x128xf32>
    %cst_20 = arith.constant dense<0.000000e+00> : vector<56x128xf32>
    %14 = tpu.matmul %12, %13, %cst_20 {dimension_numbers = #tpu.dot_dimension_numbers<[1], [0], [0], [1], [0, 0, 1, 1], [], []>} : vector<56x8xf32>, vector<8x128xf32>, vector<56x128xf32> -> vector<56x128xf32>
    %c168_21 = arith.constant 168 : index
    %c0_22 = arith.constant 0 : index
    %15 = vector.load %arg12[%c168_21, %c0_22] : memref<336x128xf32, #tpu.memory_space<vmem>>, vector<56x128xf32>
    tpu.vector_store %arg12[%c168_21, %c0_22], %14 {strides = array<i32>} : memref<336x128xf32, #tpu.memory_space<vmem>>, vector<56x128xf32>,
    %c224 = arith.constant 224 : index
    %c0_23 = arith.constant 0 : index
    %16 = vector.load %arg0[%c224, %c0_23] : memref<336x8xf32, #tpu.memory_space<vmem>>, vector<56x8xf32>
    %c0_24 = arith.constant 0 : index
    %c0_25 = arith.constant 0 : index
    %17 = vector.load %arg1[%c0_24, %c0_25] : memref<8x128xf32, #tpu.memory_space<vmem>>, vector<8x128xf32>
    %cst_26 = arith.constant dense<0.000000e+00> : vector<56x128xf32>
    %18 = tpu.matmul %16, %17, %cst_26 {dimension_numbers = #tpu.dot_dimension_numbers<[1], [0], [0], [1], [0, 0, 1, 1], [], []>} : vector<56x8xf32>, vector<8x128xf32>, vector<56x128xf32> -> vector<56x128xf32>
    %c224_27 = arith.constant 224 : index
    %c0_28 = arith.constant 0 : index
    %19 = vector.load %arg12[%c224_27, %c0_28] : memref<336x128xf32, #tpu.memory_space<vmem>>, vector<56x128xf32>
    tpu.vector_store %arg12[%c224_27, %c0_28], %18 {strides = array<i32>} : memref<336x128xf32, #tpu.memory_space<vmem>>, vector<56x128xf32>,
    %c280 = arith.constant 280 : index
    %c0_29 = arith.constant 0 : index
    %20 = vector.load %arg0[%c280, %c0_29] : memref<336x8xf32, #tpu.memory_space<vmem>>, vector<56x8xf32>
    %c0_30 = arith.constant 0 : index
    %c0_31 = arith.constant 0 : index
    %21 = vector.load %arg1[%c0_30, %c0_31] : memref<8x128xf32, #tpu.memory_space<vmem>>, vector<8x128xf32>
    %cst_32 = arith.constant dense<0.000000e+00> : vector<56x128xf32>
    %22 = tpu.matmul %20, %21, %cst_32 {dimension_numbers = #tpu.dot_dimension_numbers<[1], [0], [0], [1], [0, 0, 1, 1], [], []>} : vector<56x8xf32>, vector<8x128xf32>, vector<56x128xf32> -> vector<56x128xf32>
    %c280_33 = arith.constant 280 : index
    %c0_34 = arith.constant 0 : index
    %23 = vector.load %arg12[%c280_33, %c0_34] : memref<336x128xf32, #tpu.memory_space<vmem>>, vector<56x128xf32>
    tpu.vector_store %arg12[%c280_33, %c0_34], %22 {strides = array<i32>} : memref<336x128xf32, #tpu.memory_space<vmem>>, vector<56x128xf32>,
    %c0_35 = arith.constant 0 : index
    %c0_36 = arith.constant 0 : index
    %24 = vector.load %arg2[%c0_35, %c0_36] : memref<128x128xbf16, #tpu.memory_space<vmem>>, vector<128x128xbf16>
    %c0_37 = arith.constant 0 : index
    %c0_38 = arith.constant 0 : index
    %25 = vector.load %arg4[%c0_37, %c0_38] : memref<256x128xbf16, #tpu.memory_space<vmem>>, vector<256x128xbf16>
    %c0_39 = arith.constant 0 : index
    %c0_40 = arith.constant 0 : index
    %26 = vector.load %arg3[%c0_39, %c0_40] : memref<1x128xf32, #tpu.memory_space<vmem>>, vector<1x128xf32>
    %27 = vector.shape_cast %26 : vector<1x128xf32> to vector<1x128xf32>
    %28 = vector.broadcast %27 : vector<1x128xf32> to vector<8x128xf32>
    %29 = tpu.iota {dimensions = array<i32: 1>} : vector<8x128xi32>
    %c64_i32 = arith.constant 64 : i32
    %30 = vector.broadcast %c64_i32 : i32 to vector<8x128xi32>
    %31 = arith.cmpi sge, %29, %30 : vector<8x128xi32>
    %c96_i32 = arith.constant 96 : i32
    %32 = vector.broadcast %c96_i32 : i32 to vector<8x128xi32>
    %33 = arith.cmpi slt, %29, %32 : vector<8x128xi32>
    %34 = arith.andi %31, %33 : vector<8x128xi1>
    %cst_41 = arith.constant 1.000000e+00 : f32
    %cst_42 = arith.constant 5.000000e-01 : f32
    %35 = vector.broadcast %cst_41 : f32 to vector<8x128xf32>
    %36 = vector.broadcast %cst_42 : f32 to vector<8x128xf32>
    %37 = arith.select %34, %35, %36 : vector<8x128xi1>, vector<8x128xf32>
    %cst_43 = arith.constant 0.000000e+00 : f32
    %cst_44 = arith.constant 5.000000e-01 : f32
    %38 = vector.broadcast %cst_43 : f32 to vector<8x128xf32>
    %39 = vector.broadcast %cst_44 : f32 to vector<8x128xf32>
    %40 = arith.select %34, %38, %39 : vector<8x128xi1>, vector<8x128xf32>
    %cst_45 = arith.constant 0.000000e+00 : f32
    %41 = vector.broadcast %cst_45 : f32 to vector<8x128xf32>
    %c0_46 = arith.constant 0 : index
    %c0_47 = arith.constant 0 : index
    %42 = vector.load %arg12[%c0_46, %c0_47] : memref<336x128xf32, #tpu.memory_space<vmem>>, vector<8x128xf32>
    %43 = arith.truncf %41 : vector<8x128xf32> to vector<8x128xbf16>
    %cst_48 = arith.constant dense<0.000000e+00> : vector<8x128xf32>
    %44 = tpu.matmul %43, %24, %cst_48 {dimension_numbers = #tpu.dot_dimension_numbers<[1], [0], [0], [1], [0, 0, 1, 1], [], []>} : vector<8x128xbf16>, vector<128x128xbf16>, vector<8x128xf32> -> vector<8x128xf32>
    %45 = arith.addf %42, %44 : vector<8x128xf32>
    %46 = arith.mulf %37, %45 : vector<8x128xf32>
    %47 = math.tanh %46 : vector<8x128xf32>
    %48 = arith.mulf %37, %47 : vector<8x128xf32>
    %49 = arith.addf %48, %40 : vector<8x128xf32>
    %c64_i32_49 = arith.constant 64 : i32
    %50 = tpu.dynamic_rotate %49 by %c64_i32_49 dim 1 : vector<8x128xf32>, i32 -> vector<8x128xf32>
    %51 = arith.mulf %49, %50 : vector<8x128xf32>
    %c32_i32 = arith.constant 32 : i32
    %52 = tpu.dynamic_rotate %51 by %c32_i32 dim 1 : vector<8x128xf32>, i32 -> vector<8x128xf32>
    %53 = arith.mulf %49, %41 : vector<8x128xf32>
    %54 = arith.addf %52, %53 : vector<8x128xf32>
    %55 = math.tanh %54 : vector<8x128xf32>
    %c64_i32_50 = arith.constant 64 : i32
    %56 = tpu.dynamic_rotate %55 by %c64_i32_50 dim 1 : vector<8x128xf32>, i32 -> vector<8x128xf32>
    %57 = arith.mulf %49, %56 : vector<8x128xf32>
    %58 = tpu.concatenate %57, %41 in 1 : vector<8x128xf32>, vector<8x128xf32> -> vector<8x256xf32>
    %59 = arith.truncf %58 : vector<8x256xf32> to vector<8x256xbf16>
    %cst_51 = arith.constant dense<0.000000e+00> : vector<8x128xf32>
    %60 = tpu.matmul %59, %25, %cst_51 {dimension_numbers = #tpu.dot_dimension_numbers<[1], [0], [0], [1], [0, 0, 1, 1], [], []>} : vector<8x256xbf16>, vector<256x128xbf16>, vector<8x128xf32> -> vector<8x128xf32>
    %61 = arith.addf %60, %28 : vector<8x128xf32>
    %62 = arith.mulf %37, %61 : vector<8x128xf32>
    %63 = math.tanh %62 : vector<8x128xf32>
    %64 = arith.mulf %37, %63 : vector<8x128xf32>
    %65 = arith.addf %64, %40 : vector<8x128xf32>
    %c64_i32_52 = arith.constant 64 : i32
    %66 = tpu.dynamic_rotate %65 by %c64_i32_52 dim 1 : vector<8x128xf32>, i32 -> vector<8x128xf32>
    %67 = arith.mulf %65, %66 : vector<8x128xf32>
    %c32_i32_53 = arith.constant 32 : i32
    %68 = tpu.dynamic_rotate %67 by %c32_i32_53 dim 1 : vector<8x128xf32>, i32 -> vector<8x128xf32>
    %69 = arith.mulf %65, %41 : vector<8x128xf32>
    %70 = arith.addf %68, %69 : vector<8x128xf32>
    %71 = math.tanh %70 : vector<8x128xf32>
    %c64_i32_54 = arith.constant 64 : i32
    %72 = tpu.dynamic_rotate %71 by %c64_i32_54 dim 1 : vector<8x128xf32>, i32 -> vector<8x128xf32>
    %73 = arith.mulf %65, %72 : vector<8x128xf32>
    %c8 = arith.constant 8 : index
    %c0_55 = arith.constant 0 : index
    %74 = vector.load %arg12[%c8, %c0_55] : memref<336x128xf32, #tpu.memory_space<vmem>>, vector<8x128xf32>
    %75 = arith.truncf %57 : vector<8x128xf32> to vector<8x128xbf16>
    %cst_56 = arith.constant dense<0.000000e+00> : vector<8x128xf32>
    %76 = tpu.matmul %75, %24, %cst_56 {dimension_numbers = #tpu.dot_dimension_numbers<[1], [0], [0], [1], [0, 0, 1, 1], [], []>} : vector<8x128xbf16>, vector<128x128xbf16>, vector<8x128xf32> -> vector<8x128xf32>
    %77 = arith.addf %74, %76 : vector<8x128xf32>
    %78 = arith.mulf %37, %77 : vector<8x128xf32>
    %79 = math.tanh %78 : vector<8x128xf32>
    %80 = arith.mulf %37, %79 : vector<8x128xf32>
    %81 = arith.addf %80, %40 : vector<8x128xf32>
    %c64_i32_57 = arith.constant 64 : i32
    %82 = tpu.dynamic_rotate %81 by %c64_i32_57 dim 1 : vector<8x128xf32>, i32 -> vector<8x128xf32>
    %83 = arith.mulf %81, %82 : vector<8x128xf32>
    %c32_i32_58 = arith.constant 32 : i32
    %84 = tpu.dynamic_rotate %83 by %c32_i32_58 dim 1 : vector<8x128xf32>, i32 -> vector<8x128xf32>
    %85 = arith.mulf %81, %54 : vector<8x128xf32>
    %86 = arith.addf %84, %85 : vector<8x128xf32>
    %87 = math.tanh %86 : vector<8x128xf32>
    %c64_i32_59 = arith.constant 64 : i32
    %88 = tpu.dynamic_rotate %87 by %c64_i32_59 dim 1 : vector<8x128xf32>, i32 -> vector<8x128xf32>
    %89 = arith.mulf %81, %88 : vector<8x128xf32>
    %90 = tpu.concatenate %89, %73 in 1 : vector<8x128xf32>, vector<8x128xf32> -> vector<8x256xf32>
    %91 = arith.truncf %90 : vector<8x256xf32> to vector<8x256xbf16>
    %cst_60 = arith.constant dense<0.000000e+00> : vector<8x128xf32>
    %92 = tpu.matmul %91, %25, %cst_60 {dimension_numbers = #tpu.dot_dimension_numbers<[1], [0], [0], [1], [0, 0, 1, 1], [], []>} : vector<8x256xbf16>, vector<256x128xbf16>, vector<8x128xf32> -> vector<8x128xf32>
    %93 = arith.addf %92, %28 : vector<8x128xf32>
    %94 = arith.mulf %37, %93 : vector<8x128xf32>
    %95 = math.tanh %94 : vector<8x128xf32>
    %96 = arith.mulf %37, %95 : vector<8x128xf32>
    %97 = arith.addf %96, %40 : vector<8x128xf32>
    %c64_i32_61 = arith.constant 64 : i32
    %98 = tpu.dynamic_rotate %97 by %c64_i32_61 dim 1 : vector<8x128xf32>, i32 -> vector<8x128xf32>
    %99 = arith.mulf %97, %98 : vector<8x128xf32>
    %c32_i32_62 = arith.constant 32 : i32
    %100 = tpu.dynamic_rotate %99 by %c32_i32_62 dim 1 : vector<8x128xf32>, i32 -> vector<8x128xf32>
    %101 = arith.mulf %97, %70 : vector<8x128xf32>
    %102 = arith.addf %100, %101 : vector<8x128xf32>
    %103 = math.tanh %102 : vector<8x128xf32>
    %c64_i32_63 = arith.constant 64 : i32
    %104 = tpu.dynamic_rotate %103 by %c64_i32_63 dim 1 : vector<8x128xf32>, i32 -> vector<8x128xf32>
    %105 = arith.mulf %97, %104 : vector<8x128xf32>
    %c16 = arith.constant 16 : index
    %c0_64 = arith.constant 0 : index
    %106 = vector.load %arg12[%c16, %c0_64] : memref<336x128xf32, #tpu.memory_space<vmem>>, vector<8x128xf32>
    %107 = arith.truncf %89 : vector<8x128xf32> to vector<8x128xbf16>
    %cst_65 = arith.constant dense<0.000000e+00> : vector<8x128xf32>
    %108 = tpu.matmul %107, %24, %cst_65 {dimension_numbers = #tpu.dot_dimension_numbers<[1], [0], [0], [1], [0, 0, 1, 1], [], []>} : vector<8x128xbf16>, vector<128x128xbf16>, vector<8x128xf32> -> vector<8x128xf32>
    %109 = arith.addf %106, %108 : vector<8x128xf32>
    %110 = arith.mulf %37, %109 : vector<8x128xf32>
    %111 = math.tanh %110 : vector<8x128xf32>
    %112 = arith.mulf %37, %111 : vector<8x128xf32>
    %113 = arith.addf %112, %40 : vector<8x128xf32>
    %c64_i32_66 = arith.constant 64 : i32
    %114 = tpu.dynamic_rotate %113 by %c64_i32_66 dim 1 : vector<8x128xf32>, i32 -> vector<8x128xf32>
    %115 = arith.mulf %113, %114 : vector<8x128xf32>
    %c32_i32_67 = arith.constant 32 : i32
    %116 = tpu.dynamic_rotate %115 by %c32_i32_67 dim 1 : vector<8x128xf32>, i32 -> vector<8x128xf32>
    %117 = arith.mulf %113, %86 : vector<8x128xf32>
    %118 = arith.addf %116, %117 : vector<8x128xf32>
    %119 = math.tanh %118 : vector<8x128xf32>
    %c64_i32_68 = arith.constant 64 : i32
    %120 = tpu.dynamic_rotate %119 by %c64_i32_68 dim 1 : vector<8x128xf32>, i32 -> vector<8x128xf32>
    %121 = arith.mulf %113, %120 : vector<8x128xf32>
    %122 = tpu.concatenate %121, %105 in 1 : vector<8x128xf32>, vector<8x128xf32> -> vector<8x256xf32>
    %123 = arith.truncf %122 : vector<8x256xf32> to vector<8x256xbf16>
    %cst_69 = arith.constant dense<0.000000e+00> : vector<8x128xf32>
    %124 = tpu.matmul %123, %25, %cst_69 {dimension_numbers = #tpu.dot_dimension_numbers<[1], [0], [0], [1], [0, 0, 1, 1], [], []>} : vector<8x256xbf16>, vector<256x128xbf16>, vector<8x128xf32> -> vector<8x128xf32>
    %125 = arith.addf %124, %28 : vector<8x128xf32>
    %126 = arith.mulf %37, %125 : vector<8x128xf32>
    %127 = math.tanh %126 : vector<8x128xf32>
    %128 = arith.mulf %37, %127 : vector<8x128xf32>
    %129 = arith.addf %128, %40 : vector<8x128xf32>
    %c64_i32_70 = arith.constant 64 : i32
    %130 = tpu.dynamic_rotate %129 by %c64_i32_70 dim 1 : vector<8x128xf32>, i32 -> vector<8x128xf32>
    %131 = arith.mulf %129, %130 : vector<8x128xf32>
    %c32_i32_71 = arith.constant 32 : i32
    %132 = tpu.dynamic_rotate %131 by %c32_i32_71 dim 1 : vector<8x128xf32>, i32 -> vector<8x128xf32>
    %133 = arith.mulf %129, %102 : vector<8x128xf32>
    %134 = arith.addf %132, %133 : vector<8x128xf32>
    %135 = math.tanh %134 : vector<8x128xf32>
    %c64_i32_72 = arith.constant 64 : i32
    %136 = tpu.dynamic_rotate %135 by %c64_i32_72 dim 1 : vector<8x128xf32>, i32 -> vector<8x128xf32>
    %137 = arith.mulf %129, %136 : vector<8x128xf32>
    %c24 = arith.constant 24 : index
    %c0_73 = arith.constant 0 : index
    %138 = vector.load %arg12[%c24, %c0_73] : memref<336x128xf32, #tpu.memory_space<vmem>>, vector<8x128xf32>
    %139 = arith.truncf %121 : vector<8x128xf32> to vector<8x128xbf16>
    %cst_74 = arith.constant dense<0.000000e+00> : vector<8x128xf32>
    %140 = tpu.matmul %139, %24, %cst_74 {dimension_numbers = #tpu.dot_dimension_numbers<[1], [0], [0], [1], [0, 0, 1, 1], [], []>} : vector<8x128xbf16>, vector<128x128xbf16>, vector<8x128xf32> -> vector<8x128xf32>
    %141 = arith.addf %138, %140 : vector<8x128xf32>
    %142 = arith.mulf %37, %141 : vector<8x128xf32>
    %143 = math.tanh %142 : vector<8x128xf32>
    %144 = arith.mulf %37, %143 : vector<8x128xf32>
    %145 = arith.addf %144, %40 : vector<8x128xf32>
    %c64_i32_75 = arith.constant 64 : i32
    %146 = tpu.dynamic_rotate %145 by %c64_i32_75 dim 1 : vector<8x128xf32>, i32 -> vector<8x128xf32>
    %147 = arith.mulf %145, %146 : vector<8x128xf32>
    %c32_i32_76 = arith.constant 32 : i32
    %148 = tpu.dynamic_rotate %147 by %c32_i32_76 dim 1 : vector<8x128xf32>, i32 -> vector<8x128xf32>
    %149 = arith.mulf %145, %118 : vector<8x128xf32>
    %150 = arith.addf %148, %149 : vector<8x128xf32>
    %151 = math.tanh %150 : vector<8x128xf32>
    %c64_i32_77 = arith.constant 64 : i32
    %152 = tpu.dynamic_rotate %151 by %c64_i32_77 dim 1 : vector<8x128xf32>, i32 -> vector<8x128xf32>
    %153 = arith.mulf %145, %152 : vector<8x128xf32>
    %154 = tpu.concatenate %153, %137 in 1 : vector<8x128xf32>, vector<8x128xf32> -> vector<8x256xf32>
    %155 = arith.truncf %154 : vector<8x256xf32> to vector<8x256xbf16>
    %cst_78 = arith.constant dense<0.000000e+00> : vector<8x128xf32>
    %156 = tpu.matmul %155, %25, %cst_78 {dimension_numbers = #tpu.dot_dimension_numbers<[1], [0], [0], [1], [0, 0, 1, 1], [], []>} : vector<8x256xbf16>, vector<256x128xbf16>, vector<8x128xf32> -> vector<8x128xf32>
    %157 = arith.addf %156, %28 : vector<8x128xf32>
    %158 = arith.mulf %37, %157 : vector<8x128xf32>
    %159 = math.tanh %158 : vector<8x128xf32>
    %160 = arith.mulf %37, %159 : vector<8x128xf32>
    %161 = arith.addf %160, %40 : vector<8x128xf32>
    %c64_i32_79 = arith.constant 64 : i32
    %162 = tpu.dynamic_rotate %161 by %c64_i32_79 dim 1 : vector<8x128xf32>, i32 -> vector<8x128xf32>
    %163 = arith.mulf %161, %162 : vector<8x128xf32>
    %c32_i32_80 = arith.constant 32 : i32
    %164 = tpu.dynamic_rotate %163 by %c32_i32_80 dim 1 : vector<8x128xf32>, i32 -> vector<8x128xf32>
    %165 = arith.mulf %161, %134 : vector<8x128xf32>
    %166 = arith.addf %164, %165 : vector<8x128xf32>
    %167 = math.tanh %166 : vector<8x128xf32>
    %c64_i32_81 = arith.constant 64 : i32
    %168 = tpu.dynamic_rotate %167 by %c64_i32_81 dim 1 : vector<8x128xf32>, i32 -> vector<8x128xf32>
    %169 = arith.mulf %161, %168 : vector<8x128xf32>
    %c32 = arith.constant 32 : index
    %c0_82 = arith.constant 0 : index
    %170 = vector.load %arg12[%c32, %c0_82] : memref<336x128xf32, #tpu.memory_space<vmem>>, vector<8x128xf32>
    %171 = arith.truncf %153 : vector<8x128xf32> to vector<8x128xbf16>
    %cst_83 = arith.constant dense<0.000000e+00> : vector<8x128xf32>
    %172 = tpu.matmul %171, %24, %cst_83 {dimension_numbers = #tpu.dot_dimension_numbers<[1], [0], [0], [1], [0, 0, 1, 1], [], []>} : vector<8x128xbf16>, vector<128x128xbf16>, vector<8x128xf32> -> vector<8x128xf32>
    %173 = arith.addf %170, %172 : vector<8x128xf32>
    %174 = arith.mulf %37, %173 : vector<8x128xf32>
    %175 = math.tanh %174 : vector<8x128xf32>
    %176 = arith.mulf %37, %175 : vector<8x128xf32>
    %177 = arith.addf %176, %40 : vector<8x128xf32>
    %c64_i32_84 = arith.constant 64 : i32
    %178 = tpu.dynamic_rotate %177 by %c64_i32_84 dim 1 : vector<8x128xf32>, i32 -> vector<8x128xf32>
    %179 = arith.mulf %177, %178 : vector<8x128xf32>
    %c32_i32_85 = arith.constant 32 : i32
    %180 = tpu.dynamic_rotate %179 by %c32_i32_85 dim 1 : vector<8x128xf32>, i32 -> vector<8x128xf32>
    %181 = arith.mulf %177, %150 : vector<8x128xf32>
    %182 = arith.addf %180, %181 : vector<8x128xf32>
    %183 = math.tanh %182 : vector<8x128xf32>
    %c64_i32_86 = arith.constant 64 : i32
    %184 = tpu.dynamic_rotate %183 by %c64_i32_86 dim 1 : vector<8x128xf32>, i32 -> vector<8x128xf32>
    %185 = arith.mulf %177, %184 : vector<8x128xf32>
    %186 = tpu.concatenate %185, %169 in 1 : vector<8x128xf32>, vector<8x128xf32> -> vector<8x256xf32>
    %187 = arith.truncf %186 : vector<8x256xf32> to vector<8x256xbf16>
    %cst_87 = arith.constant dense<0.000000e+00> : vector<8x128xf32>
    %188 = tpu.matmul %187, %25, %cst_87 {dimension_numbers = #tpu.dot_dimension_numbers<[1], [0], [0], [1], [0, 0, 1, 1], [], []>} : vector<8x256xbf16>, vector<256x128xbf16>, vector<8x128xf32> -> vector<8x128xf32>
    %189 = arith.addf %188, %28 : vector<8x128xf32>
    %190 = arith.mulf %37, %189 : vector<8x128xf32>
    %191 = math.tanh %190 : vector<8x128xf32>
    %192 = arith.mulf %37, %191 : vector<8x128xf32>
    %193 = arith.addf %192, %40 : vector<8x128xf32>
    %c64_i32_88 = arith.constant 64 : i32
    %194 = tpu.dynamic_rotate %193 by %c64_i32_88 dim 1 : vector<8x128xf32>, i32 -> vector<8x128xf32>
    %195 = arith.mulf %193, %194 : vector<8x128xf32>
    %c32_i32_89 = arith.constant 32 : i32
    %196 = tpu.dynamic_rotate %195 by %c32_i32_89 dim 1 : vector<8x128xf32>, i32 -> vector<8x128xf32>
    %197 = arith.mulf %193, %166 : vector<8x128xf32>
    %198 = arith.addf %196, %197 : vector<8x128xf32>
    %199 = math.tanh %198 : vector<8x128xf32>
    %c64_i32_90 = arith.constant 64 : i32
    %200 = tpu.dynamic_rotate %199 by %c64_i32_90 dim 1 : vector<8x128xf32>, i32 -> vector<8x128xf32>
    %201 = arith.mulf %193, %200 : vector<8x128xf32>
    %c40 = arith.constant 40 : index
    %c0_91 = arith.constant 0 : index
    %202 = vector.load %arg12[%c40, %c0_91] : memref<336x128xf32, #tpu.memory_space<vmem>>, vector<8x128xf32>
    %203 = arith.truncf %185 : vector<8x128xf32> to vector<8x128xbf16>
    %cst_92 = arith.constant dense<0.000000e+00> : vector<8x128xf32>
    %204 = tpu.matmul %203, %24, %cst_92 {dimension_numbers = #tpu.dot_dimension_numbers<[1], [0], [0], [1], [0, 0, 1, 1], [], []>} : vector<8x128xbf16>, vector<128x128xbf16>, vector<8x128xf32> -> vector<8x128xf32>
    %205 = arith.addf %202, %204 : vector<8x128xf32>
    %206 = arith.mulf %37, %205 : vector<8x128xf32>
    %207 = math.tanh %206 : vector<8x128xf32>
    %208 = arith.mulf %37, %207 : vector<8x128xf32>
    %209 = arith.addf %208, %40 : vector<8x128xf32>
    %c64_i32_93 = arith.constant 64 : i32
    %210 = tpu.dynamic_rotate %209 by %c64_i32_93 dim 1 : vector<8x128xf32>, i32 -> vector<8x128xf32>
    %211 = arith.mulf %209, %210 : vector<8x128xf32>
    %c32_i32_94 = arith.constant 32 : i32
    %212 = tpu.dynamic_rotate %211 by %c32_i32_94 dim 1 : vector<8x128xf32>, i32 -> vector<8x128xf32>
    %213 = arith.mulf %209, %182 : vector<8x128xf32>
    %214 = arith.addf %212, %213 : vector<8x128xf32>
    %215 = math.tanh %214 : vector<8x128xf32>
    %c64_i32_95 = arith.constant 64 : i32
    %216 = tpu.dynamic_rotate %215 by %c64_i32_95 dim 1 : vector<8x128xf32>, i32 -> vector<8x128xf32>
    %217 = arith.mulf %209, %216 : vector<8x128xf32>
    %218 = tpu.concatenate %217, %201 in 1 : vector<8x128xf32>, vector<8x128xf32> -> vector<8x256xf32>
    %219 = arith.truncf %218 : vector<8x256xf32> to vector<8x256xbf16>
    %cst_96 = arith.constant dense<0.000000e+00> : vector<8x128xf32>
    %220 = tpu.matmul %219, %25, %cst_96 {dimension_numbers = #tpu.dot_dimension_numbers<[1], [0], [0], [1], [0, 0, 1, 1], [], []>} : vector<8x256xbf16>, vector<256x128xbf16>, vector<8x128xf32> -> vector<8x128xf32>
    %221 = arith.addf %220, %28 : vector<8x128xf32>
    %222 = arith.mulf %37, %221 : vector<8x128xf32>
    %223 = math.tanh %222 : vector<8x128xf32>
    %224 = arith.mulf %37, %223 : vector<8x128xf32>
    %225 = arith.addf %224, %40 : vector<8x128xf32>
    %c64_i32_97 = arith.constant 64 : i32
    %226 = tpu.dynamic_rotate %225 by %c64_i32_97 dim 1 : vector<8x128xf32>, i32 -> vector<8x128xf32>
    %227 = arith.mulf %225, %226 : vector<8x128xf32>
    %c32_i32_98 = arith.constant 32 : i32
    %228 = tpu.dynamic_rotate %227 by %c32_i32_98 dim 1 : vector<8x128xf32>, i32 -> vector<8x128xf32>
    %229 = arith.mulf %225, %198 : vector<8x128xf32>
    %230 = arith.addf %228, %229 : vector<8x128xf32>
    %231 = math.tanh %230 : vector<8x128xf32>
    %c64_i32_99 = arith.constant 64 : i32
    %232 = tpu.dynamic_rotate %231 by %c64_i32_99 dim 1 : vector<8x128xf32>, i32 -> vector<8x128xf32>
    %233 = arith.mulf %225, %232 : vector<8x128xf32>
    %c48 = arith.constant 48 : index
    %c0_100 = arith.constant 0 : index
    %234 = vector.load %arg12[%c48, %c0_100] : memref<336x128xf32, #tpu.memory_space<vmem>>, vector<8x128xf32>
    %235 = arith.truncf %217 : vector<8x128xf32> to vector<8x128xbf16>
    %cst_101 = arith.constant dense<0.000000e+00> : vector<8x128xf32>
    %236 = tpu.matmul %235, %24, %cst_101 {dimension_numbers = #tpu.dot_dimension_numbers<[1], [0], [0], [1], [0, 0, 1, 1], [], []>} : vector<8x128xbf16>, vector<128x128xbf16>, vector<8x128xf32> -> vector<8x128xf32>
    %237 = arith.addf %234, %236 : vector<8x128xf32>
    %238 = arith.mulf %37, %237 : vector<8x128xf32>
    %239 = math.tanh %238 : vector<8x128xf32>
    %240 = arith.mulf %37, %239 : vector<8x128xf32>
    %241 = arith.addf %240, %40 : vector<8x128xf32>
    %c64_i32_102 = arith.constant 64 : i32
    %242 = tpu.dynamic_rotate %241 by %c64_i32_102 dim 1 : vector<8x128xf32>, i32 -> vector<8x128xf32>
    %243 = arith.mulf %241, %242 : vector<8x128xf32>
    %c32_i32_103 = arith.constant 32 : i32
    %244 = tpu.dynamic_rotate %243 by %c32_i32_103 dim 1 : vector<8x128xf32>, i32 -> vector<8x128xf32>
    %245 = arith.mulf %241, %214 : vector<8x128xf32>
    %246 = arith.addf %244, %245 : vector<8x128xf32>
    %247 = math.tanh %246 : vector<8x128xf32>
    %c64_i32_104 = arith.constant 64 : i32
    %248 = tpu.dynamic_rotate %247 by %c64_i32_104 dim 1 : vector<8x128xf32>, i32 -> vector<8x128xf32>
    %249 = arith.mulf %241, %248 : vector<8x128xf32>
    %250 = tpu.concatenate %249, %233 in 1 : vector<8x128xf32>, vector<8x128xf32> -> vector<8x256xf32>
    %251 = arith.truncf %250 : vector<8x256xf32> to vector<8x256xbf16>
    %cst_105 = arith.constant dense<0.000000e+00> : vector<8x128xf32>
    %252 = tpu.matmul %251, %25, %cst_105 {dimension_numbers = #tpu.dot_dimension_numbers<[1], [0], [0], [1], [0, 0, 1, 1], [], []>} : vector<8x256xbf16>, vector<256x128xbf16>, vector<8x128xf32> -> vector<8x128xf32>
    %253 = arith.addf %252, %28 : vector<8x128xf32>
    %254 = arith.mulf %37, %253 : vector<8x128xf32>
    %255 = math.tanh %254 : vector<8x128xf32>
    %256 = arith.mulf %37, %255 : vector<8x128xf32>
    %257 = arith.addf %256, %40 : vector<8x128xf32>
    %c64_i32_106 = arith.constant 64 : i32
    %258 = tpu.dynamic_rotate %257 by %c64_i32_106 dim 1 : vector<8x128xf32>, i32 -> vector<8x128xf32>
    %259 = arith.mulf %257, %258 : vector<8x128xf32>
    %c32_i32_107 = arith.constant 32 : i32
    %260 = tpu.dynamic_rotate %259 by %c32_i32_107 dim 1 : vector<8x128xf32>, i32 -> vector<8x128xf32>
    %261 = arith.mulf %257, %230 : vector<8x128xf32>
    %262 = arith.addf %260, %261 : vector<8x128xf32>
    %263 = math.tanh %262 : vector<8x128xf32>
    %c64_i32_108 = arith.constant 64 : i32
    %264 = tpu.dynamic_rotate %263 by %c64_i32_108 dim 1 : vector<8x128xf32>, i32 -> vector<8x128xf32>
    %265 = arith.mulf %257, %264 : vector<8x128xf32>
    %c56_109 = arith.constant 56 : index
    %c0_110 = arith.constant 0 : index
    %266 = vector.load %arg12[%c56_109, %c0_110] : memref<336x128xf32, #tpu.memory_space<vmem>>, vector<8x128xf32>
    %267 = arith.truncf %249 : vector<8x128xf32> to vector<8x128xbf16>
    %cst_111 = arith.constant dense<0.000000e+00> : vector<8x128xf32>
    %268 = tpu.matmul %267, %24, %cst_111 {dimension_numbers = #tpu.dot_dimension_numbers<[1], [0], [0], [1], [0, 0, 1, 1], [], []>} : vector<8x128xbf16>, vector<128x128xbf16>, vector<8x128xf32> -> vector<8x128xf32>
    %269 = arith.addf %266, %268 : vector<8x128xf32>
    %270 = arith.mulf %37, %269 : vector<8x128xf32>
    %271 = math.tanh %270 : vector<8x128xf32>
    %272 = arith.mulf %37, %271 : vector<8x128xf32>
    %273 = arith.addf %272, %40 : vector<8x128xf32>
    %c64_i32_112 = arith.constant 64 : i32
    %274 = tpu.dynamic_rotate %273 by %c64_i32_112 dim 1 : vector<8x128xf32>, i32 -> vector<8x128xf32>
    %275 = arith.mulf %273, %274 : vector<8x128xf32>
    %c32_i32_113 = arith.constant 32 : i32
    %276 = tpu.dynamic_rotate %275 by %c32_i32_113 dim 1 : vector<8x128xf32>, i32 -> vector<8x128xf32>
    %277 = arith.mulf %273, %246 : vector<8x128xf32>
    %278 = arith.addf %276, %277 : vector<8x128xf32>
    %279 = math.tanh %278 : vector<8x128xf32>
    %c64_i32_114 = arith.constant 64 : i32
    %280 = tpu.dynamic_rotate %279 by %c64_i32_114 dim 1 : vector<8x128xf32>, i32 -> vector<8x128xf32>
    %281 = arith.mulf %273, %280 : vector<8x128xf32>
    %282 = tpu.concatenate %281, %265 in 1 : vector<8x128xf32>, vector<8x128xf32> -> vector<8x256xf32>
    %283 = arith.truncf %282 : vector<8x256xf32> to vector<8x256xbf16>
    %cst_115 = arith.constant dense<0.000000e+00> : vector<8x128xf32>
    %284 = tpu.matmul %283, %25, %cst_115 {dimension_numbers = #tpu.dot_dimension_numbers<[1], [0], [0], [1], [0, 0, 1, 1], [], []>} : vector<8x256xbf16>, vector<256x128xbf16>, vector<8x128xf32> -> vector<8x128xf32>
    %285 = arith.addf %284, %28 : vector<8x128xf32>
    %286 = arith.mulf %37, %285 : vector<8x128xf32>
    %287 = math.tanh %286 : vector<8x128xf32>
    %288 = arith.mulf %37, %287 : vector<8x128xf32>
    %289 = arith.addf %288, %40 : vector<8x128xf32>
    %c64_i32_116 = arith.constant 64 : i32
    %290 = tpu.dynamic_rotate %289 by %c64_i32_116 dim 1 : vector<8x128xf32>, i32 -> vector<8x128xf32>
    %291 = arith.mulf %289, %290 : vector<8x128xf32>
    %c32_i32_117 = arith.constant 32 : i32
    %292 = tpu.dynamic_rotate %291 by %c32_i32_117 dim 1 : vector<8x128xf32>, i32 -> vector<8x128xf32>
    %293 = arith.mulf %289, %262 : vector<8x128xf32>
    %294 = arith.addf %292, %293 : vector<8x128xf32>
    %295 = math.tanh %294 : vector<8x128xf32>
    %c64_i32_118 = arith.constant 64 : i32
    %296 = tpu.dynamic_rotate %295 by %c64_i32_118 dim 1 : vector<8x128xf32>, i32 -> vector<8x128xf32>
    %297 = arith.mulf %289, %296 : vector<8x128xf32>
    %c64 = arith.constant 64 : index
    %c0_119 = arith.constant 0 : index
    %298 = vector.load %arg12[%c64, %c0_119] : memref<336x128xf32, #tpu.memory_space<vmem>>, vector<8x128xf32>
    %299 = arith.truncf %281 : vector<8x128xf32> to vector<8x128xbf16>
    %cst_120 = arith.constant dense<0.000000e+00> : vector<8x128xf32>
    %300 = tpu.matmul %299, %24, %cst_120 {dimension_numbers = #tpu.dot_dimension_numbers<[1], [0], [0], [1], [0, 0, 1, 1], [], []>} : vector<8x128xbf16>, vector<128x128xbf16>, vector<8x128xf32> -> vector<8x128xf32>
    %301 = arith.addf %298, %300 : vector<8x128xf32>
    %302 = arith.mulf %37, %301 : vector<8x128xf32>
    %303 = math.tanh %302 : vector<8x128xf32>
    %304 = arith.mulf %37, %303 : vector<8x128xf32>
    %305 = arith.addf %304, %40 : vector<8x128xf32>
    %c64_i32_121 = arith.constant 64 : i32
    %306 = tpu.dynamic_rotate %305 by %c64_i32_121 dim 1 : vector<8x128xf32>, i32 -> vector<8x128xf32>
    %307 = arith.mulf %305, %306 : vector<8x128xf32>
    %c32_i32_122 = arith.constant 32 : i32
    %308 = tpu.dynamic_rotate %307 by %c32_i32_122 dim 1 : vector<8x128xf32>, i32 -> vector<8x128xf32>
    %309 = arith.mulf %305, %278 : vector<8x128xf32>
    %310 = arith.addf %308, %309 : vector<8x128xf32>
    %311 = math.tanh %310 : vector<8x128xf32>
    %c64_i32_123 = arith.constant 64 : i32
    %312 = tpu.dynamic_rotate %311 by %c64_i32_123 dim 1 : vector<8x128xf32>, i32 -> vector<8x128xf32>
    %313 = arith.mulf %305, %312 : vector<8x128xf32>
    %314 = tpu.concatenate %313, %297 in 1 : vector<8x128xf32>, vector<8x128xf32> -> vector<8x256xf32>
    %315 = arith.truncf %314 : vector<8x256xf32> to vector<8x256xbf16>
    %cst_124 = arith.constant dense<0.000000e+00> : vector<8x128xf32>
    %316 = tpu.matmul %315, %25, %cst_124 {dimension_numbers = #tpu.dot_dimension_numbers<[1], [0], [0], [1], [0, 0, 1, 1], [], []>} : vector<8x256xbf16>, vector<256x128xbf16>, vector<8x128xf32> -> vector<8x128xf32>
    %317 = arith.addf %316, %28 : vector<8x128xf32>
    %318 = arith.mulf %37, %317 : vector<8x128xf32>
    %319 = math.tanh %318 : vector<8x128xf32>
    %320 = arith.mulf %37, %319 : vector<8x128xf32>
    %321 = arith.addf %320, %40 : vector<8x128xf32>
    %c64_i32_125 = arith.constant 64 : i32
    %322 = tpu.dynamic_rotate %321 by %c64_i32_125 dim 1 : vector<8x128xf32>, i32 -> vector<8x128xf32>
    %323 = arith.mulf %321, %322 : vector<8x128xf32>
    %c32_i32_126 = arith.constant 32 : i32
    %324 = tpu.dynamic_rotate %323 by %c32_i32_126 dim 1 : vector<8x128xf32>, i32 -> vector<8x128xf32>
    %325 = arith.mulf %321, %294 : vector<8x128xf32>
    %326 = arith.addf %324, %325 : vector<8x128xf32>
    %327 = math.tanh %326 : vector<8x128xf32>
    %c64_i32_127 = arith.constant 64 : i32
    %328 = tpu.dynamic_rotate %327 by %c64_i32_127 dim 1 : vector<8x128xf32>, i32 -> vector<8x128xf32>
    %329 = arith.mulf %321, %328 : vector<8x128xf32>
    %c72 = arith.constant 72 : index
    %c0_128 = arith.constant 0 : index
    %330 = vector.load %arg12[%c72, %c0_128] : memref<336x128xf32, #tpu.memory_space<vmem>>, vector<8x128xf32>
    %331 = arith.truncf %313 : vector<8x128xf32> to vector<8x128xbf16>
    %cst_129 = arith.constant dense<0.000000e+00> : vector<8x128xf32>
    %332 = tpu.matmul %331, %24, %cst_129 {dimension_numbers = #tpu.dot_dimension_numbers<[1], [0], [0], [1], [0, 0, 1, 1], [], []>} : vector<8x128xbf16>, vector<128x128xbf16>, vector<8x128xf32> -> vector<8x128xf32>
    %333 = arith.addf %330, %332 : vector<8x128xf32>
    %334 = arith.mulf %37, %333 : vector<8x128xf32>
    %335 = math.tanh %334 : vector<8x128xf32>
    %336 = arith.mulf %37, %335 : vector<8x128xf32>
    %337 = arith.addf %336, %40 : vector<8x128xf32>
    %c64_i32_130 = arith.constant 64 : i32
    %338 = tpu.dynamic_rotate %337 by %c64_i32_130 dim 1 : vector<8x128xf32>, i32 -> vector<8x128xf32>
    %339 = arith.mulf %337, %338 : vector<8x128xf32>
    %c32_i32_131 = arith.constant 32 : i32
    %340 = tpu.dynamic_rotate %339 by %c32_i32_131 dim 1 : vector<8x128xf32>, i32 -> vector<8x128xf32>
    %341 = arith.mulf %337, %310 : vector<8x128xf32>
    %342 = arith.addf %340, %341 : vector<8x128xf32>
    %343 = math.tanh %342 : vector<8x128xf32>
    %c64_i32_132 = arith.constant 64 : i32
    %344 = tpu.dynamic_rotate %343 by %c64_i32_132 dim 1 : vector<8x128xf32>, i32 -> vector<8x128xf32>
    %345 = arith.mulf %337, %344 : vector<8x128xf32>
    %346 = tpu.concatenate %345, %329 in 1 : vector<8x128xf32>, vector<8x128xf32> -> vector<8x256xf32>
    %347 = arith.truncf %346 : vector<8x256xf32> to vector<8x256xbf16>
    %cst_133 = arith.constant dense<0.000000e+00> : vector<8x128xf32>
    %348 = tpu.matmul %347, %25, %cst_133 {dimension_numbers = #tpu.dot_dimension_numbers<[1], [0], [0], [1], [0, 0, 1, 1], [], []>} : vector<8x256xbf16>, vector<256x128xbf16>, vector<8x128xf32> -> vector<8x128xf32>
    %349 = arith.addf %348, %28 : vector<8x128xf32>
    %350 = arith.mulf %37, %349 : vector<8x128xf32>
    %351 = math.tanh %350 : vector<8x128xf32>
    %352 = arith.mulf %37, %351 : vector<8x128xf32>
    %353 = arith.addf %352, %40 : vector<8x128xf32>
    %c64_i32_134 = arith.constant 64 : i32
    %354 = tpu.dynamic_rotate %353 by %c64_i32_134 dim 1 : vector<8x128xf32>, i32 -> vector<8x128xf32>
    %355 = arith.mulf %353, %354 : vector<8x128xf32>
    %c32_i32_135 = arith.constant 32 : i32
    %356 = tpu.dynamic_rotate %355 by %c32_i32_135 dim 1 : vector<8x128xf32>, i32 -> vector<8x128xf32>
    %357 = arith.mulf %353, %326 : vector<8x128xf32>
    %358 = arith.addf %356, %357 : vector<8x128xf32>
    %359 = math.tanh %358 : vector<8x128xf32>
    %c64_i32_136 = arith.constant 64 : i32
    %360 = tpu.dynamic_rotate %359 by %c64_i32_136 dim 1 : vector<8x128xf32>, i32 -> vector<8x128xf32>
    %361 = arith.mulf %353, %360 : vector<8x128xf32>
    %c80 = arith.constant 80 : index
    %c0_137 = arith.constant 0 : index
    %362 = vector.load %arg12[%c80, %c0_137] : memref<336x128xf32, #tpu.memory_space<vmem>>, vector<8x128xf32>
    %363 = arith.truncf %345 : vector<8x128xf32> to vector<8x128xbf16>
    %cst_138 = arith.constant dense<0.000000e+00> : vector<8x128xf32>
    %364 = tpu.matmul %363, %24, %cst_138 {dimension_numbers = #tpu.dot_dimension_numbers<[1], [0], [0], [1], [0, 0, 1, 1], [], []>} : vector<8x128xbf16>, vector<128x128xbf16>, vector<8x128xf32> -> vector<8x128xf32>
    %365 = arith.addf %362, %364 : vector<8x128xf32>
    %366 = arith.mulf %37, %365 : vector<8x128xf32>
    %367 = math.tanh %366 : vector<8x128xf32>
    %368 = arith.mulf %37, %367 : vector<8x128xf32>
    %369 = arith.addf %368, %40 : vector<8x128xf32>
    %c64_i32_139 = arith.constant 64 : i32
    %370 = tpu.dynamic_rotate %369 by %c64_i32_139 dim 1 : vector<8x128xf32>, i32 -> vector<8x128xf32>
    %371 = arith.mulf %369, %370 : vector<8x128xf32>
    %c32_i32_140 = arith.constant 32 : i32
    %372 = tpu.dynamic_rotate %371 by %c32_i32_140 dim 1 : vector<8x128xf32>, i32 -> vector<8x128xf32>
    %373 = arith.mulf %369, %342 : vector<8x128xf32>
    %374 = arith.addf %372, %373 : vector<8x128xf32>
    %375 = math.tanh %374 : vector<8x128xf32>
    %c64_i32_141 = arith.constant 64 : i32
    %376 = tpu.dynamic_rotate %375 by %c64_i32_141 dim 1 : vector<8x128xf32>, i32 -> vector<8x128xf32>
    %377 = arith.mulf %369, %376 : vector<8x128xf32>
    %378 = tpu.concatenate %377, %361 in 1 : vector<8x128xf32>, vector<8x128xf32> -> vector<8x256xf32>
    %379 = arith.truncf %378 : vector<8x256xf32> to vector<8x256xbf16>
    %cst_142 = arith.constant dense<0.000000e+00> : vector<8x128xf32>
    %380 = tpu.matmul %379, %25, %cst_142 {dimension_numbers = #tpu.dot_dimension_numbers<[1], [0], [0], [1], [0, 0, 1, 1], [], []>} : vector<8x256xbf16>, vector<256x128xbf16>, vector<8x128xf32> -> vector<8x128xf32>
    %381 = arith.addf %380, %28 : vector<8x128xf32>
    %382 = arith.mulf %37, %381 : vector<8x128xf32>
    %383 = math.tanh %382 : vector<8x128xf32>
    %384 = arith.mulf %37, %383 : vector<8x128xf32>
    %385 = arith.addf %384, %40 : vector<8x128xf32>
    %c64_i32_143 = arith.constant 64 : i32
    %386 = tpu.dynamic_rotate %385 by %c64_i32_143 dim 1 : vector<8x128xf32>, i32 -> vector<8x128xf32>
    %387 = arith.mulf %385, %386 : vector<8x128xf32>
    %c32_i32_144 = arith.constant 32 : i32
    %388 = tpu.dynamic_rotate %387 by %c32_i32_144 dim 1 : vector<8x128xf32>, i32 -> vector<8x128xf32>
    %389 = arith.mulf %385, %358 : vector<8x128xf32>
    %390 = arith.addf %388, %389 : vector<8x128xf32>
    %391 = math.tanh %390 : vector<8x128xf32>
    %c64_i32_145 = arith.constant 64 : i32
    %392 = tpu.dynamic_rotate %391 by %c64_i32_145 dim 1 : vector<8x128xf32>, i32 -> vector<8x128xf32>
    %393 = arith.mulf %385, %392 : vector<8x128xf32>
    %c88 = arith.constant 88 : index
    %c0_146 = arith.constant 0 : index
    %394 = vector.load %arg12[%c88, %c0_146] : memref<336x128xf32, #tpu.memory_space<vmem>>, vector<8x128xf32>
    %395 = arith.truncf %377 : vector<8x128xf32> to vector<8x128xbf16>
    %cst_147 = arith.constant dense<0.000000e+00> : vector<8x128xf32>
    %396 = tpu.matmul %395, %24, %cst_147 {dimension_numbers = #tpu.dot_dimension_numbers<[1], [0], [0], [1], [0, 0, 1, 1], [], []>} : vector<8x128xbf16>, vector<128x128xbf16>, vector<8x128xf32> -> vector<8x128xf32>
    %397 = arith.addf %394, %396 : vector<8x128xf32>
    %398 = arith.mulf %37, %397 : vector<8x128xf32>
    %399 = math.tanh %398 : vector<8x128xf32>
    %400 = arith.mulf %37, %399 : vector<8x128xf32>
    %401 = arith.addf %400, %40 : vector<8x128xf32>
    %c64_i32_148 = arith.constant 64 : i32
    %402 = tpu.dynamic_rotate %401 by %c64_i32_148 dim 1 : vector<8x128xf32>, i32 -> vector<8x128xf32>
    %403 = arith.mulf %401, %402 : vector<8x128xf32>
    %c32_i32_149 = arith.constant 32 : i32
    %404 = tpu.dynamic_rotate %403 by %c32_i32_149 dim 1 : vector<8x128xf32>, i32 -> vector<8x128xf32>
    %405 = arith.mulf %401, %374 : vector<8x128xf32>
    %406 = arith.addf %404, %405 : vector<8x128xf32>
    %407 = math.tanh %406 : vector<8x128xf32>
    %c64_i32_150 = arith.constant 64 : i32
    %408 = tpu.dynamic_rotate %407 by %c64_i32_150 dim 1 : vector<8x128xf32>, i32 -> vector<8x128xf32>
    %409 = arith.mulf %401, %408 : vector<8x128xf32>
    %410 = tpu.concatenate %409, %393 in 1 : vector<8x128xf32>, vector<8x128xf32> -> vector<8x256xf32>
    %411 = arith.truncf %410 : vector<8x256xf32> to vector<8x256xbf16>
    %cst_151 = arith.constant dense<0.000000e+00> : vector<8x128xf32>
    %412 = tpu.matmul %411, %25, %cst_151 {dimension_numbers = #tpu.dot_dimension_numbers<[1], [0], [0], [1], [0, 0, 1, 1], [], []>} : vector<8x256xbf16>, vector<256x128xbf16>, vector<8x128xf32> -> vector<8x128xf32>
    %413 = arith.addf %412, %28 : vector<8x128xf32>
    %414 = arith.mulf %37, %413 : vector<8x128xf32>
    %415 = math.tanh %414 : vector<8x128xf32>
    %416 = arith.mulf %37, %415 : vector<8x128xf32>
    %417 = arith.addf %416, %40 : vector<8x128xf32>
    %c64_i32_152 = arith.constant 64 : i32
    %418 = tpu.dynamic_rotate %417 by %c64_i32_152 dim 1 : vector<8x128xf32>, i32 -> vector<8x128xf32>
    %419 = arith.mulf %417, %418 : vector<8x128xf32>
    %c32_i32_153 = arith.constant 32 : i32
    %420 = tpu.dynamic_rotate %419 by %c32_i32_153 dim 1 : vector<8x128xf32>, i32 -> vector<8x128xf32>
    %421 = arith.mulf %417, %390 : vector<8x128xf32>
    %422 = arith.addf %420, %421 : vector<8x128xf32>
    %423 = math.tanh %422 : vector<8x128xf32>
    %c64_i32_154 = arith.constant 64 : i32
    %424 = tpu.dynamic_rotate %423 by %c64_i32_154 dim 1 : vector<8x128xf32>, i32 -> vector<8x128xf32>
    %425 = arith.mulf %417, %424 : vector<8x128xf32>
    %c96 = arith.constant 96 : index
    %c0_155 = arith.constant 0 : index
    %426 = vector.load %arg12[%c96, %c0_155] : memref<336x128xf32, #tpu.memory_space<vmem>>, vector<8x128xf32>
    %427 = arith.truncf %409 : vector<8x128xf32> to vector<8x128xbf16>
    %cst_156 = arith.constant dense<0.000000e+00> : vector<8x128xf32>
    %428 = tpu.matmul %427, %24, %cst_156 {dimension_numbers = #tpu.dot_dimension_numbers<[1], [0], [0], [1], [0, 0, 1, 1], [], []>} : vector<8x128xbf16>, vector<128x128xbf16>, vector<8x128xf32> -> vector<8x128xf32>
    %429 = arith.addf %426, %428 : vector<8x128xf32>
    %430 = arith.mulf %37, %429 : vector<8x128xf32>
    %431 = math.tanh %430 : vector<8x128xf32>
    %432 = arith.mulf %37, %431 : vector<8x128xf32>
    %433 = arith.addf %432, %40 : vector<8x128xf32>
    %c64_i32_157 = arith.constant 64 : i32
    %434 = tpu.dynamic_rotate %433 by %c64_i32_157 dim 1 : vector<8x128xf32>, i32 -> vector<8x128xf32>
    %435 = arith.mulf %433, %434 : vector<8x128xf32>
    %c32_i32_158 = arith.constant 32 : i32
    %436 = tpu.dynamic_rotate %435 by %c32_i32_158 dim 1 : vector<8x128xf32>, i32 -> vector<8x128xf32>
    %437 = arith.mulf %433, %406 : vector<8x128xf32>
    %438 = arith.addf %436, %437 : vector<8x128xf32>
    %439 = math.tanh %438 : vector<8x128xf32>
    %c64_i32_159 = arith.constant 64 : i32
    %440 = tpu.dynamic_rotate %439 by %c64_i32_159 dim 1 : vector<8x128xf32>, i32 -> vector<8x128xf32>
    %441 = arith.mulf %433, %440 : vector<8x128xf32>
    %442 = tpu.concatenate %441, %425 in 1 : vector<8x128xf32>, vector<8x128xf32> -> vector<8x256xf32>
    %443 = arith.truncf %442 : vector<8x256xf32> to vector<8x256xbf16>
    %cst_160 = arith.constant dense<0.000000e+00> : vector<8x128xf32>
    %444 = tpu.matmul %443, %25, %cst_160 {dimension_numbers = #tpu.dot_dimension_numbers<[1], [0], [0], [1], [0, 0, 1, 1], [], []>} : vector<8x256xbf16>, vector<256x128xbf16>, vector<8x128xf32> -> vector<8x128xf32>
    %445 = arith.addf %444, %28 : vector<8x128xf32>
    %446 = arith.mulf %37, %445 : vector<8x128xf32>
    %447 = math.tanh %446 : vector<8x128xf32>
    %448 = arith.mulf %37, %447 : vector<8x128xf32>
    %449 = arith.addf %448, %40 : vector<8x128xf32>
    %c64_i32_161 = arith.constant 64 : i32
    %450 = tpu.dynamic_rotate %449 by %c64_i32_161 dim 1 : vector<8x128xf32>, i32 -> vector<8x128xf32>
    %451 = arith.mulf %449, %450 : vector<8x128xf32>
    %c32_i32_162 = arith.constant 32 : i32
    %452 = tpu.dynamic_rotate %451 by %c32_i32_162 dim 1 : vector<8x128xf32>, i32 -> vector<8x128xf32>
    %453 = arith.mulf %449, %422 : vector<8x128xf32>
    %454 = arith.addf %452, %453 : vector<8x128xf32>
    %455 = math.tanh %454 : vector<8x128xf32>
    %c64_i32_163 = arith.constant 64 : i32
    %456 = tpu.dynamic_rotate %455 by %c64_i32_163 dim 1 : vector<8x128xf32>, i32 -> vector<8x128xf32>
    %457 = arith.mulf %449, %456 : vector<8x128xf32>
    %c104 = arith.constant 104 : index
    %c0_164 = arith.constant 0 : index
    %458 = vector.load %arg12[%c104, %c0_164] : memref<336x128xf32, #tpu.memory_space<vmem>>, vector<8x128xf32>
    %459 = arith.truncf %441 : vector<8x128xf32> to vector<8x128xbf16>
    %cst_165 = arith.constant dense<0.000000e+00> : vector<8x128xf32>
    %460 = tpu.matmul %459, %24, %cst_165 {dimension_numbers = #tpu.dot_dimension_numbers<[1], [0], [0], [1], [0, 0, 1, 1], [], []>} : vector<8x128xbf16>, vector<128x128xbf16>, vector<8x128xf32> -> vector<8x128xf32>
    %461 = arith.addf %458, %460 : vector<8x128xf32>
    %462 = arith.mulf %37, %461 : vector<8x128xf32>
    %463 = math.tanh %462 : vector<8x128xf32>
    %464 = arith.mulf %37, %463 : vector<8x128xf32>
    %465 = arith.addf %464, %40 : vector<8x128xf32>
    %c64_i32_166 = arith.constant 64 : i32
    %466 = tpu.dynamic_rotate %465 by %c64_i32_166 dim 1 : vector<8x128xf32>, i32 -> vector<8x128xf32>
    %467 = arith.mulf %465, %466 : vector<8x128xf32>
    %c32_i32_167 = arith.constant 32 : i32
    %468 = tpu.dynamic_rotate %467 by %c32_i32_167 dim 1 : vector<8x128xf32>, i32 -> vector<8x128xf32>
    %469 = arith.mulf %465, %438 : vector<8x128xf32>
    %470 = arith.addf %468, %469 : vector<8x128xf32>
    %471 = math.tanh %470 : vector<8x128xf32>
    %c64_i32_168 = arith.constant 64 : i32
    %472 = tpu.dynamic_rotate %471 by %c64_i32_168 dim 1 : vector<8x128xf32>, i32 -> vector<8x128xf32>
    %473 = arith.mulf %465, %472 : vector<8x128xf32>
    %474 = tpu.concatenate %473, %457 in 1 : vector<8x128xf32>, vector<8x128xf32> -> vector<8x256xf32>
    %475 = arith.truncf %474 : vector<8x256xf32> to vector<8x256xbf16>
    %cst_169 = arith.constant dense<0.000000e+00> : vector<8x128xf32>
    %476 = tpu.matmul %475, %25, %cst_169 {dimension_numbers = #tpu.dot_dimension_numbers<[1], [0], [0], [1], [0, 0, 1, 1], [], []>} : vector<8x256xbf16>, vector<256x128xbf16>, vector<8x128xf32> -> vector<8x128xf32>
    %477 = arith.addf %476, %28 : vector<8x128xf32>
    %478 = arith.mulf %37, %477 : vector<8x128xf32>
    %479 = math.tanh %478 : vector<8x128xf32>
    %480 = arith.mulf %37, %479 : vector<8x128xf32>
    %481 = arith.addf %480, %40 : vector<8x128xf32>
    %c64_i32_170 = arith.constant 64 : i32
    %482 = tpu.dynamic_rotate %481 by %c64_i32_170 dim 1 : vector<8x128xf32>, i32 -> vector<8x128xf32>
    %483 = arith.mulf %481, %482 : vector<8x128xf32>
    %c32_i32_171 = arith.constant 32 : i32
    %484 = tpu.dynamic_rotate %483 by %c32_i32_171 dim 1 : vector<8x128xf32>, i32 -> vector<8x128xf32>
    %485 = arith.mulf %481, %454 : vector<8x128xf32>
    %486 = arith.addf %484, %485 : vector<8x128xf32>
    %487 = math.tanh %486 : vector<8x128xf32>
    %c64_i32_172 = arith.constant 64 : i32
    %488 = tpu.dynamic_rotate %487 by %c64_i32_172 dim 1 : vector<8x128xf32>, i32 -> vector<8x128xf32>
    %489 = arith.mulf %481, %488 : vector<8x128xf32>
    %c112_173 = arith.constant 112 : index
    %c0_174 = arith.constant 0 : index
    %490 = vector.load %arg12[%c112_173, %c0_174] : memref<336x128xf32, #tpu.memory_space<vmem>>, vector<8x128xf32>
    %491 = arith.truncf %473 : vector<8x128xf32> to vector<8x128xbf16>
    %cst_175 = arith.constant dense<0.000000e+00> : vector<8x128xf32>
    %492 = tpu.matmul %491, %24, %cst_175 {dimension_numbers = #tpu.dot_dimension_numbers<[1], [0], [0], [1], [0, 0, 1, 1], [], []>} : vector<8x128xbf16>, vector<128x128xbf16>, vector<8x128xf32> -> vector<8x128xf32>
    %493 = arith.addf %490, %492 : vector<8x128xf32>
    %494 = arith.mulf %37, %493 : vector<8x128xf32>
    %495 = math.tanh %494 : vector<8x128xf32>
    %496 = arith.mulf %37, %495 : vector<8x128xf32>
    %497 = arith.addf %496, %40 : vector<8x128xf32>
    %c64_i32_176 = arith.constant 64 : i32
    %498 = tpu.dynamic_rotate %497 by %c64_i32_176 dim 1 : vector<8x128xf32>, i32 -> vector<8x128xf32>
    %499 = arith.mulf %497, %498 : vector<8x128xf32>
    %c32_i32_177 = arith.constant 32 : i32
    %500 = tpu.dynamic_rotate %499 by %c32_i32_177 dim 1 : vector<8x128xf32>, i32 -> vector<8x128xf32>
    %501 = arith.mulf %497, %470 : vector<8x128xf32>
    %502 = arith.addf %500, %501 : vector<8x128xf32>
    %503 = math.tanh %502 : vector<8x128xf32>
    %c64_i32_178 = arith.constant 64 : i32
    %504 = tpu.dynamic_rotate %503 by %c64_i32_178 dim 1 : vector<8x128xf32>, i32 -> vector<8x128xf32>
    %505 = arith.mulf %497, %504 : vector<8x128xf32>
    %506 = tpu.concatenate %505, %489 in 1 : vector<8x128xf32>, vector<8x128xf32> -> vector<8x256xf32>
    %507 = arith.truncf %506 : vector<8x256xf32> to vector<8x256xbf16>
    %cst_179 = arith.constant dense<0.000000e+00> : vector<8x128xf32>
    %508 = tpu.matmul %507, %25, %cst_179 {dimension_numbers = #tpu.dot_dimension_numbers<[1], [0], [0], [1], [0, 0, 1, 1], [], []>} : vector<8x256xbf16>, vector<256x128xbf16>, vector<8x128xf32> -> vector<8x128xf32>
    %509 = arith.addf %508, %28 : vector<8x128xf32>
    %510 = arith.mulf %37, %509 : vector<8x128xf32>
    %511 = math.tanh %510 : vector<8x128xf32>
    %512 = arith.mulf %37, %511 : vector<8x128xf32>
    %513 = arith.addf %512, %40 : vector<8x128xf32>
    %c64_i32_180 = arith.constant 64 : i32
    %514 = tpu.dynamic_rotate %513 by %c64_i32_180 dim 1 : vector<8x128xf32>, i32 -> vector<8x128xf32>
    %515 = arith.mulf %513, %514 : vector<8x128xf32>
    %c32_i32_181 = arith.constant 32 : i32
    %516 = tpu.dynamic_rotate %515 by %c32_i32_181 dim 1 : vector<8x128xf32>, i32 -> vector<8x128xf32>
    %517 = arith.mulf %513, %486 : vector<8x128xf32>
    %518 = arith.addf %516, %517 : vector<8x128xf32>
    %519 = math.tanh %518 : vector<8x128xf32>
    %c64_i32_182 = arith.constant 64 : i32
    %520 = tpu.dynamic_rotate %519 by %c64_i32_182 dim 1 : vector<8x128xf32>, i32 -> vector<8x128xf32>
    %521 = arith.mulf %513, %520 : vector<8x128xf32>
    %c120 = arith.constant 120 : index
    %c0_183 = arith.constant 0 : index
    %522 = vector.load %arg12[%c120, %c0_183] : memref<336x128xf32, #tpu.memory_space<vmem>>, vector<8x128xf32>
    %523 = arith.truncf %505 : vector<8x128xf32> to vector<8x128xbf16>
    %cst_184 = arith.constant dense<0.000000e+00> : vector<8x128xf32>
    %524 = tpu.matmul %523, %24, %cst_184 {dimension_numbers = #tpu.dot_dimension_numbers<[1], [0], [0], [1], [0, 0, 1, 1], [], []>} : vector<8x128xbf16>, vector<128x128xbf16>, vector<8x128xf32> -> vector<8x128xf32>
    %525 = arith.addf %522, %524 : vector<8x128xf32>
    %526 = arith.mulf %37, %525 : vector<8x128xf32>
    %527 = math.tanh %526 : vector<8x128xf32>
    %528 = arith.mulf %37, %527 : vector<8x128xf32>
    %529 = arith.addf %528, %40 : vector<8x128xf32>
    %c64_i32_185 = arith.constant 64 : i32
    %530 = tpu.dynamic_rotate %529 by %c64_i32_185 dim 1 : vector<8x128xf32>, i32 -> vector<8x128xf32>
    %531 = arith.mulf %529, %530 : vector<8x128xf32>
    %c32_i32_186 = arith.constant 32 : i32
    %532 = tpu.dynamic_rotate %531 by %c32_i32_186 dim 1 : vector<8x128xf32>, i32 -> vector<8x128xf32>
    %533 = arith.mulf %529, %502 : vector<8x128xf32>
    %534 = arith.addf %532, %533 : vector<8x128xf32>
    %535 = math.tanh %534 : vector<8x128xf32>
    %c64_i32_187 = arith.constant 64 : i32
    %536 = tpu.dynamic_rotate %535 by %c64_i32_187 dim 1 : vector<8x128xf32>, i32 -> vector<8x128xf32>
    %537 = arith.mulf %529, %536 : vector<8x128xf32>
    %538 = tpu.concatenate %537, %521 in 1 : vector<8x128xf32>, vector<8x128xf32> -> vector<8x256xf32>
    %539 = arith.truncf %538 : vector<8x256xf32> to vector<8x256xbf16>
    %cst_188 = arith.constant dense<0.000000e+00> : vector<8x128xf32>
    %540 = tpu.matmul %539, %25, %cst_188 {dimension_numbers = #tpu.dot_dimension_numbers<[1], [0], [0], [1], [0, 0, 1, 1], [], []>} : vector<8x256xbf16>, vector<256x128xbf16>, vector<8x128xf32> -> vector<8x128xf32>
    %541 = arith.addf %540, %28 : vector<8x128xf32>
    %542 = arith.mulf %37, %541 : vector<8x128xf32>
    %543 = math.tanh %542 : vector<8x128xf32>
    %544 = arith.mulf %37, %543 : vector<8x128xf32>
    %545 = arith.addf %544, %40 : vector<8x128xf32>
    %c64_i32_189 = arith.constant 64 : i32
    %546 = tpu.dynamic_rotate %545 by %c64_i32_189 dim 1 : vector<8x128xf32>, i32 -> vector<8x128xf32>
    %547 = arith.mulf %545, %546 : vector<8x128xf32>
    %c32_i32_190 = arith.constant 32 : i32
    %548 = tpu.dynamic_rotate %547 by %c32_i32_190 dim 1 : vector<8x128xf32>, i32 -> vector<8x128xf32>
    %549 = arith.mulf %545, %518 : vector<8x128xf32>
    %550 = arith.addf %548, %549 : vector<8x128xf32>
    %551 = math.tanh %550 : vector<8x128xf32>
    %c64_i32_191 = arith.constant 64 : i32
    %552 = tpu.dynamic_rotate %551 by %c64_i32_191 dim 1 : vector<8x128xf32>, i32 -> vector<8x128xf32>
    %553 = arith.mulf %545, %552 : vector<8x128xf32>
    %c128 = arith.constant 128 : index
    %c0_192 = arith.constant 0 : index
    %554 = vector.load %arg12[%c128, %c0_192] : memref<336x128xf32, #tpu.memory_space<vmem>>, vector<8x128xf32>
    %555 = arith.truncf %537 : vector<8x128xf32> to vector<8x128xbf16>
    %cst_193 = arith.constant dense<0.000000e+00> : vector<8x128xf32>
    %556 = tpu.matmul %555, %24, %cst_193 {dimension_numbers = #tpu.dot_dimension_numbers<[1], [0], [0], [1], [0, 0, 1, 1], [], []>} : vector<8x128xbf16>, vector<128x128xbf16>, vector<8x128xf32> -> vector<8x128xf32>
    %557 = arith.addf %554, %556 : vector<8x128xf32>
    %558 = arith.mulf %37, %557 : vector<8x128xf32>
    %559 = math.tanh %558 : vector<8x128xf32>
    %560 = arith.mulf %37, %559 : vector<8x128xf32>
    %561 = arith.addf %560, %40 : vector<8x128xf32>
    %c64_i32_194 = arith.constant 64 : i32
    %562 = tpu.dynamic_rotate %561 by %c64_i32_194 dim 1 : vector<8x128xf32>, i32 -> vector<8x128xf32>
    %563 = arith.mulf %561, %562 : vector<8x128xf32>
    %c32_i32_195 = arith.constant 32 : i32
    %564 = tpu.dynamic_rotate %563 by %c32_i32_195 dim 1 : vector<8x128xf32>, i32 -> vector<8x128xf32>
    %565 = arith.mulf %561, %534 : vector<8x128xf32>
    %566 = arith.addf %564, %565 : vector<8x128xf32>
    %567 = math.tanh %566 : vector<8x128xf32>
    %c64_i32_196 = arith.constant 64 : i32
    %568 = tpu.dynamic_rotate %567 by %c64_i32_196 dim 1 : vector<8x128xf32>, i32 -> vector<8x128xf32>
    %569 = arith.mulf %561, %568 : vector<8x128xf32>
    %570 = tpu.concatenate %569, %553 in 1 : vector<8x128xf32>, vector<8x128xf32> -> vector<8x256xf32>
    %571 = arith.truncf %570 : vector<8x256xf32> to vector<8x256xbf16>
    %cst_197 = arith.constant dense<0.000000e+00> : vector<8x128xf32>
    %572 = tpu.matmul %571, %25, %cst_197 {dimension_numbers = #tpu.dot_dimension_numbers<[1], [0], [0], [1], [0, 0, 1, 1], [], []>} : vector<8x256xbf16>, vector<256x128xbf16>, vector<8x128xf32> -> vector<8x128xf32>
    %573 = arith.addf %572, %28 : vector<8x128xf32>
    %574 = arith.mulf %37, %573 : vector<8x128xf32>
    %575 = math.tanh %574 : vector<8x128xf32>
    %576 = arith.mulf %37, %575 : vector<8x128xf32>
    %577 = arith.addf %576, %40 : vector<8x128xf32>
    %c64_i32_198 = arith.constant 64 : i32
    %578 = tpu.dynamic_rotate %577 by %c64_i32_198 dim 1 : vector<8x128xf32>, i32 -> vector<8x128xf32>
    %579 = arith.mulf %577, %578 : vector<8x128xf32>
    %c32_i32_199 = arith.constant 32 : i32
    %580 = tpu.dynamic_rotate %579 by %c32_i32_199 dim 1 : vector<8x128xf32>, i32 -> vector<8x128xf32>
    %581 = arith.mulf %577, %550 : vector<8x128xf32>
    %582 = arith.addf %580, %581 : vector<8x128xf32>
    %583 = math.tanh %582 : vector<8x128xf32>
    %c64_i32_200 = arith.constant 64 : i32
    %584 = tpu.dynamic_rotate %583 by %c64_i32_200 dim 1 : vector<8x128xf32>, i32 -> vector<8x128xf32>
    %585 = arith.mulf %577, %584 : vector<8x128xf32>
    %c136 = arith.constant 136 : index
    %c0_201 = arith.constant 0 : index
    %586 = vector.load %arg12[%c136, %c0_201] : memref<336x128xf32, #tpu.memory_space<vmem>>, vector<8x128xf32>
    %587 = arith.truncf %569 : vector<8x128xf32> to vector<8x128xbf16>
    %cst_202 = arith.constant dense<0.000000e+00> : vector<8x128xf32>
    %588 = tpu.matmul %587, %24, %cst_202 {dimension_numbers = #tpu.dot_dimension_numbers<[1], [0], [0], [1], [0, 0, 1, 1], [], []>} : vector<8x128xbf16>, vector<128x128xbf16>, vector<8x128xf32> -> vector<8x128xf32>
    %589 = arith.addf %586, %588 : vector<8x128xf32>
    %590 = arith.mulf %37, %589 : vector<8x128xf32>
    %591 = math.tanh %590 : vector<8x128xf32>
    %592 = arith.mulf %37, %591 : vector<8x128xf32>
    %593 = arith.addf %592, %40 : vector<8x128xf32>
    %c64_i32_203 = arith.constant 64 : i32
    %594 = tpu.dynamic_rotate %593 by %c64_i32_203 dim 1 : vector<8x128xf32>, i32 -> vector<8x128xf32>
    %595 = arith.mulf %593, %594 : vector<8x128xf32>
    %c32_i32_204 = arith.constant 32 : i32
    %596 = tpu.dynamic_rotate %595 by %c32_i32_204 dim 1 : vector<8x128xf32>, i32 -> vector<8x128xf32>
    %597 = arith.mulf %593, %566 : vector<8x128xf32>
    %598 = arith.addf %596, %597 : vector<8x128xf32>
    %599 = math.tanh %598 : vector<8x128xf32>
    %c64_i32_205 = arith.constant 64 : i32
    %600 = tpu.dynamic_rotate %599 by %c64_i32_205 dim 1 : vector<8x128xf32>, i32 -> vector<8x128xf32>
    %601 = arith.mulf %593, %600 : vector<8x128xf32>
    %602 = tpu.concatenate %601, %585 in 1 : vector<8x128xf32>, vector<8x128xf32> -> vector<8x256xf32>
    %603 = arith.truncf %602 : vector<8x256xf32> to vector<8x256xbf16>
    %cst_206 = arith.constant dense<0.000000e+00> : vector<8x128xf32>
    %604 = tpu.matmul %603, %25, %cst_206 {dimension_numbers = #tpu.dot_dimension_numbers<[1], [0], [0], [1], [0, 0, 1, 1], [], []>} : vector<8x256xbf16>, vector<256x128xbf16>, vector<8x128xf32> -> vector<8x128xf32>
    %605 = arith.addf %604, %28 : vector<8x128xf32>
    %606 = arith.mulf %37, %605 : vector<8x128xf32>
    %607 = math.tanh %606 : vector<8x128xf32>
    %608 = arith.mulf %37, %607 : vector<8x128xf32>
    %609 = arith.addf %608, %40 : vector<8x128xf32>
    %c64_i32_207 = arith.constant 64 : i32
    %610 = tpu.dynamic_rotate %609 by %c64_i32_207 dim 1 : vector<8x128xf32>, i32 -> vector<8x128xf32>
    %611 = arith.mulf %609, %610 : vector<8x128xf32>
    %c32_i32_208 = arith.constant 32 : i32
    %612 = tpu.dynamic_rotate %611 by %c32_i32_208 dim 1 : vector<8x128xf32>, i32 -> vector<8x128xf32>
    %613 = arith.mulf %609, %582 : vector<8x128xf32>
    %614 = arith.addf %612, %613 : vector<8x128xf32>
    %615 = math.tanh %614 : vector<8x128xf32>
    %c64_i32_209 = arith.constant 64 : i32
    %616 = tpu.dynamic_rotate %615 by %c64_i32_209 dim 1 : vector<8x128xf32>, i32 -> vector<8x128xf32>
    %617 = arith.mulf %609, %616 : vector<8x128xf32>
    %c144 = arith.constant 144 : index
    %c0_210 = arith.constant 0 : index
    %618 = vector.load %arg12[%c144, %c0_210] : memref<336x128xf32, #tpu.memory_space<vmem>>, vector<8x128xf32>
    %619 = arith.truncf %601 : vector<8x128xf32> to vector<8x128xbf16>
    %cst_211 = arith.constant dense<0.000000e+00> : vector<8x128xf32>
    %620 = tpu.matmul %619, %24, %cst_211 {dimension_numbers = #tpu.dot_dimension_numbers<[1], [0], [0], [1], [0, 0, 1, 1], [], []>} : vector<8x128xbf16>, vector<128x128xbf16>, vector<8x128xf32> -> vector<8x128xf32>
    %621 = arith.addf %618, %620 : vector<8x128xf32>
    %622 = arith.mulf %37, %621 : vector<8x128xf32>
    %623 = math.tanh %622 : vector<8x128xf32>
    %624 = arith.mulf %37, %623 : vector<8x128xf32>
    %625 = arith.addf %624, %40 : vector<8x128xf32>
    %c64_i32_212 = arith.constant 64 : i32
    %626 = tpu.dynamic_rotate %625 by %c64_i32_212 dim 1 : vector<8x128xf32>, i32 -> vector<8x128xf32>
    %627 = arith.mulf %625, %626 : vector<8x128xf32>
    %c32_i32_213 = arith.constant 32 : i32
    %628 = tpu.dynamic_rotate %627 by %c32_i32_213 dim 1 : vector<8x128xf32>, i32 -> vector<8x128xf32>
    %629 = arith.mulf %625, %598 : vector<8x128xf32>
    %630 = arith.addf %628, %629 : vector<8x128xf32>
    %631 = math.tanh %630 : vector<8x128xf32>
    %c64_i32_214 = arith.constant 64 : i32
    %632 = tpu.dynamic_rotate %631 by %c64_i32_214 dim 1 : vector<8x128xf32>, i32 -> vector<8x128xf32>
    %633 = arith.mulf %625, %632 : vector<8x128xf32>
    %634 = tpu.concatenate %633, %617 in 1 : vector<8x128xf32>, vector<8x128xf32> -> vector<8x256xf32>
    %635 = arith.truncf %634 : vector<8x256xf32> to vector<8x256xbf16>
    %cst_215 = arith.constant dense<0.000000e+00> : vector<8x128xf32>
    %636 = tpu.matmul %635, %25, %cst_215 {dimension_numbers = #tpu.dot_dimension_numbers<[1], [0], [0], [1], [0, 0, 1, 1], [], []>} : vector<8x256xbf16>, vector<256x128xbf16>, vector<8x128xf32> -> vector<8x128xf32>
    %637 = arith.addf %636, %28 : vector<8x128xf32>
    %638 = arith.mulf %37, %637 : vector<8x128xf32>
    %639 = math.tanh %638 : vector<8x128xf32>
    %640 = arith.mulf %37, %639 : vector<8x128xf32>
    %641 = arith.addf %640, %40 : vector<8x128xf32>
    %c64_i32_216 = arith.constant 64 : i32
    %642 = tpu.dynamic_rotate %641 by %c64_i32_216 dim 1 : vector<8x128xf32>, i32 -> vector<8x128xf32>
    %643 = arith.mulf %641, %642 : vector<8x128xf32>
    %c32_i32_217 = arith.constant 32 : i32
    %644 = tpu.dynamic_rotate %643 by %c32_i32_217 dim 1 : vector<8x128xf32>, i32 -> vector<8x128xf32>
    %645 = arith.mulf %641, %614 : vector<8x128xf32>
    %646 = arith.addf %644, %645 : vector<8x128xf32>
    %647 = math.tanh %646 : vector<8x128xf32>
    %c64_i32_218 = arith.constant 64 : i32
    %648 = tpu.dynamic_rotate %647 by %c64_i32_218 dim 1 : vector<8x128xf32>, i32 -> vector<8x128xf32>
    %649 = arith.mulf %641, %648 : vector<8x128xf32>
    %c152 = arith.constant 152 : index
    %c0_219 = arith.constant 0 : index
    %650 = vector.load %arg12[%c152, %c0_219] : memref<336x128xf32, #tpu.memory_space<vmem>>, vector<8x128xf32>
    %651 = arith.truncf %633 : vector<8x128xf32> to vector<8x128xbf16>
    %cst_220 = arith.constant dense<0.000000e+00> : vector<8x128xf32>
    %652 = tpu.matmul %651, %24, %cst_220 {dimension_numbers = #tpu.dot_dimension_numbers<[1], [0], [0], [1], [0, 0, 1, 1], [], []>} : vector<8x128xbf16>, vector<128x128xbf16>, vector<8x128xf32> -> vector<8x128xf32>
    %653 = arith.addf %650, %652 : vector<8x128xf32>
    %654 = arith.mulf %37, %653 : vector<8x128xf32>
    %655 = math.tanh %654 : vector<8x128xf32>
    %656 = arith.mulf %37, %655 : vector<8x128xf32>
    %657 = arith.addf %656, %40 : vector<8x128xf32>
    %c64_i32_221 = arith.constant 64 : i32
    %658 = tpu.dynamic_rotate %657 by %c64_i32_221 dim 1 : vector<8x128xf32>, i32 -> vector<8x128xf32>
    %659 = arith.mulf %657, %658 : vector<8x128xf32>
    %c32_i32_222 = arith.constant 32 : i32
    %660 = tpu.dynamic_rotate %659 by %c32_i32_222 dim 1 : vector<8x128xf32>, i32 -> vector<8x128xf32>
    %661 = arith.mulf %657, %630 : vector<8x128xf32>
    %662 = arith.addf %660, %661 : vector<8x128xf32>
    %663 = math.tanh %662 : vector<8x128xf32>
    %c64_i32_223 = arith.constant 64 : i32
    %664 = tpu.dynamic_rotate %663 by %c64_i32_223 dim 1 : vector<8x128xf32>, i32 -> vector<8x128xf32>
    %665 = arith.mulf %657, %664 : vector<8x128xf32>
    %666 = tpu.concatenate %665, %649 in 1 : vector<8x128xf32>, vector<8x128xf32> -> vector<8x256xf32>
    %667 = arith.truncf %666 : vector<8x256xf32> to vector<8x256xbf16>
    %cst_224 = arith.constant dense<0.000000e+00> : vector<8x128xf32>
    %668 = tpu.matmul %667, %25, %cst_224 {dimension_numbers = #tpu.dot_dimension_numbers<[1], [0], [0], [1], [0, 0, 1, 1], [], []>} : vector<8x256xbf16>, vector<256x128xbf16>, vector<8x128xf32> -> vector<8x128xf32>
    %669 = arith.addf %668, %28 : vector<8x128xf32>
    %670 = arith.mulf %37, %669 : vector<8x128xf32>
    %671 = math.tanh %670 : vector<8x128xf32>
    %672 = arith.mulf %37, %671 : vector<8x128xf32>
    %673 = arith.addf %672, %40 : vector<8x128xf32>
    %c64_i32_225 = arith.constant 64 : i32
    %674 = tpu.dynamic_rotate %673 by %c64_i32_225 dim 1 : vector<8x128xf32>, i32 -> vector<8x128xf32>
    %675 = arith.mulf %673, %674 : vector<8x128xf32>
    %c32_i32_226 = arith.constant 32 : i32
    %676 = tpu.dynamic_rotate %675 by %c32_i32_226 dim 1 : vector<8x128xf32>, i32 -> vector<8x128xf32>
    %677 = arith.mulf %673, %646 : vector<8x128xf32>
    %678 = arith.addf %676, %677 : vector<8x128xf32>
    %679 = math.tanh %678 : vector<8x128xf32>
    %c64_i32_227 = arith.constant 64 : i32
    %680 = tpu.dynamic_rotate %679 by %c64_i32_227 dim 1 : vector<8x128xf32>, i32 -> vector<8x128xf32>
    %681 = arith.mulf %673, %680 : vector<8x128xf32>
    %c160 = arith.constant 160 : index
    %c0_228 = arith.constant 0 : index
    %682 = vector.load %arg12[%c160, %c0_228] : memref<336x128xf32, #tpu.memory_space<vmem>>, vector<8x128xf32>
    %683 = arith.truncf %665 : vector<8x128xf32> to vector<8x128xbf16>
    %cst_229 = arith.constant dense<0.000000e+00> : vector<8x128xf32>
    %684 = tpu.matmul %683, %24, %cst_229 {dimension_numbers = #tpu.dot_dimension_numbers<[1], [0], [0], [1], [0, 0, 1, 1], [], []>} : vector<8x128xbf16>, vector<128x128xbf16>, vector<8x128xf32> -> vector<8x128xf32>
    %685 = arith.addf %682, %684 : vector<8x128xf32>
    %686 = arith.mulf %37, %685 : vector<8x128xf32>
    %687 = math.tanh %686 : vector<8x128xf32>
    %688 = arith.mulf %37, %687 : vector<8x128xf32>
    %689 = arith.addf %688, %40 : vector<8x128xf32>
    %c64_i32_230 = arith.constant 64 : i32
    %690 = tpu.dynamic_rotate %689 by %c64_i32_230 dim 1 : vector<8x128xf32>, i32 -> vector<8x128xf32>
    %691 = arith.mulf %689, %690 : vector<8x128xf32>
    %c32_i32_231 = arith.constant 32 : i32
    %692 = tpu.dynamic_rotate %691 by %c32_i32_231 dim 1 : vector<8x128xf32>, i32 -> vector<8x128xf32>
    %693 = arith.mulf %689, %662 : vector<8x128xf32>
    %694 = arith.addf %692, %693 : vector<8x128xf32>
    %695 = math.tanh %694 : vector<8x128xf32>
    %c64_i32_232 = arith.constant 64 : i32
    %696 = tpu.dynamic_rotate %695 by %c64_i32_232 dim 1 : vector<8x128xf32>, i32 -> vector<8x128xf32>
    %697 = arith.mulf %689, %696 : vector<8x128xf32>
    %698 = tpu.concatenate %697, %681 in 1 : vector<8x128xf32>, vector<8x128xf32> -> vector<8x256xf32>
    %699 = arith.truncf %698 : vector<8x256xf32> to vector<8x256xbf16>
    %cst_233 = arith.constant dense<0.000000e+00> : vector<8x128xf32>
    %700 = tpu.matmul %699, %25, %cst_233 {dimension_numbers = #tpu.dot_dimension_numbers<[1], [0], [0], [1], [0, 0, 1, 1], [], []>} : vector<8x256xbf16>, vector<256x128xbf16>, vector<8x128xf32> -> vector<8x128xf32>
    %701 = arith.addf %700, %28 : vector<8x128xf32>
    %702 = arith.mulf %37, %701 : vector<8x128xf32>
    %703 = math.tanh %702 : vector<8x128xf32>
    %704 = arith.mulf %37, %703 : vector<8x128xf32>
    %705 = arith.addf %704, %40 : vector<8x128xf32>
    %c64_i32_234 = arith.constant 64 : i32
    %706 = tpu.dynamic_rotate %705 by %c64_i32_234 dim 1 : vector<8x128xf32>, i32 -> vector<8x128xf32>
    %707 = arith.mulf %705, %706 : vector<8x128xf32>
    %c32_i32_235 = arith.constant 32 : i32
    %708 = tpu.dynamic_rotate %707 by %c32_i32_235 dim 1 : vector<8x128xf32>, i32 -> vector<8x128xf32>
    %709 = arith.mulf %705, %678 : vector<8x128xf32>
    %710 = arith.addf %708, %709 : vector<8x128xf32>
    %711 = math.tanh %710 : vector<8x128xf32>
    %c64_i32_236 = arith.constant 64 : i32
    %712 = tpu.dynamic_rotate %711 by %c64_i32_236 dim 1 : vector<8x128xf32>, i32 -> vector<8x128xf32>
    %713 = arith.mulf %705, %712 : vector<8x128xf32>
    %c168_237 = arith.constant 168 : index
    %c0_238 = arith.constant 0 : index
    %714 = vector.load %arg12[%c168_237, %c0_238] : memref<336x128xf32, #tpu.memory_space<vmem>>, vector<8x128xf32>
    %715 = arith.truncf %697 : vector<8x128xf32> to vector<8x128xbf16>
    %cst_239 = arith.constant dense<0.000000e+00> : vector<8x128xf32>
    %716 = tpu.matmul %715, %24, %cst_239 {dimension_numbers = #tpu.dot_dimension_numbers<[1], [0], [0], [1], [0, 0, 1, 1], [], []>} : vector<8x128xbf16>, vector<128x128xbf16>, vector<8x128xf32> -> vector<8x128xf32>
    %717 = arith.addf %714, %716 : vector<8x128xf32>
    %718 = arith.mulf %37, %717 : vector<8x128xf32>
    %719 = math.tanh %718 : vector<8x128xf32>
    %720 = arith.mulf %37, %719 : vector<8x128xf32>
    %721 = arith.addf %720, %40 : vector<8x128xf32>
    %c64_i32_240 = arith.constant 64 : i32
    %722 = tpu.dynamic_rotate %721 by %c64_i32_240 dim 1 : vector<8x128xf32>, i32 -> vector<8x128xf32>
    %723 = arith.mulf %721, %722 : vector<8x128xf32>
    %c32_i32_241 = arith.constant 32 : i32
    %724 = tpu.dynamic_rotate %723 by %c32_i32_241 dim 1 : vector<8x128xf32>, i32 -> vector<8x128xf32>
    %725 = arith.mulf %721, %694 : vector<8x128xf32>
    %726 = arith.addf %724, %725 : vector<8x128xf32>
    %727 = math.tanh %726 : vector<8x128xf32>
    %c64_i32_242 = arith.constant 64 : i32
    %728 = tpu.dynamic_rotate %727 by %c64_i32_242 dim 1 : vector<8x128xf32>, i32 -> vector<8x128xf32>
    %729 = arith.mulf %721, %728 : vector<8x128xf32>
    %730 = tpu.concatenate %729, %713 in 1 : vector<8x128xf32>, vector<8x128xf32> -> vector<8x256xf32>
    %731 = arith.truncf %730 : vector<8x256xf32> to vector<8x256xbf16>
    %cst_243 = arith.constant dense<0.000000e+00> : vector<8x128xf32>
    %732 = tpu.matmul %731, %25, %cst_243 {dimension_numbers = #tpu.dot_dimension_numbers<[1], [0], [0], [1], [0, 0, 1, 1], [], []>} : vector<8x256xbf16>, vector<256x128xbf16>, vector<8x128xf32> -> vector<8x128xf32>
    %733 = arith.addf %732, %28 : vector<8x128xf32>
    %734 = arith.mulf %37, %733 : vector<8x128xf32>
    %735 = math.tanh %734 : vector<8x128xf32>
    %736 = arith.mulf %37, %735 : vector<8x128xf32>
    %737 = arith.addf %736, %40 : vector<8x128xf32>
    %c64_i32_244 = arith.constant 64 : i32
    %738 = tpu.dynamic_rotate %737 by %c64_i32_244 dim 1 : vector<8x128xf32>, i32 -> vector<8x128xf32>
    %739 = arith.mulf %737, %738 : vector<8x128xf32>
    %c32_i32_245 = arith.constant 32 : i32
    %740 = tpu.dynamic_rotate %739 by %c32_i32_245 dim 1 : vector<8x128xf32>, i32 -> vector<8x128xf32>
    %741 = arith.mulf %737, %710 : vector<8x128xf32>
    %742 = arith.addf %740, %741 : vector<8x128xf32>
    %743 = math.tanh %742 : vector<8x128xf32>
    %c64_i32_246 = arith.constant 64 : i32
    %744 = tpu.dynamic_rotate %743 by %c64_i32_246 dim 1 : vector<8x128xf32>, i32 -> vector<8x128xf32>
    %745 = arith.mulf %737, %744 : vector<8x128xf32>
    %c176 = arith.constant 176 : index
    %c0_247 = arith.constant 0 : index
    %746 = vector.load %arg12[%c176, %c0_247] : memref<336x128xf32, #tpu.memory_space<vmem>>, vector<8x128xf32>
    %747 = arith.truncf %729 : vector<8x128xf32> to vector<8x128xbf16>
    %cst_248 = arith.constant dense<0.000000e+00> : vector<8x128xf32>
    %748 = tpu.matmul %747, %24, %cst_248 {dimension_numbers = #tpu.dot_dimension_numbers<[1], [0], [0], [1], [0, 0, 1, 1], [], []>} : vector<8x128xbf16>, vector<128x128xbf16>, vector<8x128xf32> -> vector<8x128xf32>
    %749 = arith.addf %746, %748 : vector<8x128xf32>
    %750 = arith.mulf %37, %749 : vector<8x128xf32>
    %751 = math.tanh %750 : vector<8x128xf32>
    %752 = arith.mulf %37, %751 : vector<8x128xf32>
    %753 = arith.addf %752, %40 : vector<8x128xf32>
    %c64_i32_249 = arith.constant 64 : i32
    %754 = tpu.dynamic_rotate %753 by %c64_i32_249 dim 1 : vector<8x128xf32>, i32 -> vector<8x128xf32>
    %755 = arith.mulf %753, %754 : vector<8x128xf32>
    %c32_i32_250 = arith.constant 32 : i32
    %756 = tpu.dynamic_rotate %755 by %c32_i32_250 dim 1 : vector<8x128xf32>, i32 -> vector<8x128xf32>
    %757 = arith.mulf %753, %726 : vector<8x128xf32>
    %758 = arith.addf %756, %757 : vector<8x128xf32>
    %759 = math.tanh %758 : vector<8x128xf32>
    %c64_i32_251 = arith.constant 64 : i32
    %760 = tpu.dynamic_rotate %759 by %c64_i32_251 dim 1 : vector<8x128xf32>, i32 -> vector<8x128xf32>
    %761 = arith.mulf %753, %760 : vector<8x128xf32>
    %762 = tpu.concatenate %761, %745 in 1 : vector<8x128xf32>, vector<8x128xf32> -> vector<8x256xf32>
    %763 = arith.truncf %762 : vector<8x256xf32> to vector<8x256xbf16>
    %cst_252 = arith.constant dense<0.000000e+00> : vector<8x128xf32>
    %764 = tpu.matmul %763, %25, %cst_252 {dimension_numbers = #tpu.dot_dimension_numbers<[1], [0], [0], [1], [0, 0, 1, 1], [], []>} : vector<8x256xbf16>, vector<256x128xbf16>, vector<8x128xf32> -> vector<8x128xf32>
    %765 = arith.addf %764, %28 : vector<8x128xf32>
    %766 = arith.mulf %37, %765 : vector<8x128xf32>
    %767 = math.tanh %766 : vector<8x128xf32>
    %768 = arith.mulf %37, %767 : vector<8x128xf32>
    %769 = arith.addf %768, %40 : vector<8x128xf32>
    %c64_i32_253 = arith.constant 64 : i32
    %770 = tpu.dynamic_rotate %769 by %c64_i32_253 dim 1 : vector<8x128xf32>, i32 -> vector<8x128xf32>
    %771 = arith.mulf %769, %770 : vector<8x128xf32>
    %c32_i32_254 = arith.constant 32 : i32
    %772 = tpu.dynamic_rotate %771 by %c32_i32_254 dim 1 : vector<8x128xf32>, i32 -> vector<8x128xf32>
    %773 = arith.mulf %769, %742 : vector<8x128xf32>
    %774 = arith.addf %772, %773 : vector<8x128xf32>
    %775 = math.tanh %774 : vector<8x128xf32>
    %c64_i32_255 = arith.constant 64 : i32
    %776 = tpu.dynamic_rotate %775 by %c64_i32_255 dim 1 : vector<8x128xf32>, i32 -> vector<8x128xf32>
    %777 = arith.mulf %769, %776 : vector<8x128xf32>
    %c184 = arith.constant 184 : index
    %c0_256 = arith.constant 0 : index
    %778 = vector.load %arg12[%c184, %c0_256] : memref<336x128xf32, #tpu.memory_space<vmem>>, vector<8x128xf32>
    %779 = arith.truncf %761 : vector<8x128xf32> to vector<8x128xbf16>
    %cst_257 = arith.constant dense<0.000000e+00> : vector<8x128xf32>
    %780 = tpu.matmul %779, %24, %cst_257 {dimension_numbers = #tpu.dot_dimension_numbers<[1], [0], [0], [1], [0, 0, 1, 1], [], []>} : vector<8x128xbf16>, vector<128x128xbf16>, vector<8x128xf32> -> vector<8x128xf32>
    %781 = arith.addf %778, %780 : vector<8x128xf32>
    %782 = arith.mulf %37, %781 : vector<8x128xf32>
    %783 = math.tanh %782 : vector<8x128xf32>
    %784 = arith.mulf %37, %783 : vector<8x128xf32>
    %785 = arith.addf %784, %40 : vector<8x128xf32>
    %c64_i32_258 = arith.constant 64 : i32
    %786 = tpu.dynamic_rotate %785 by %c64_i32_258 dim 1 : vector<8x128xf32>, i32 -> vector<8x128xf32>
    %787 = arith.mulf %785, %786 : vector<8x128xf32>
    %c32_i32_259 = arith.constant 32 : i32
    %788 = tpu.dynamic_rotate %787 by %c32_i32_259 dim 1 : vector<8x128xf32>, i32 -> vector<8x128xf32>
    %789 = arith.mulf %785, %758 : vector<8x128xf32>
    %790 = arith.addf %788, %789 : vector<8x128xf32>
    %791 = math.tanh %790 : vector<8x128xf32>
    %c64_i32_260 = arith.constant 64 : i32
    %792 = tpu.dynamic_rotate %791 by %c64_i32_260 dim 1 : vector<8x128xf32>, i32 -> vector<8x128xf32>
    %793 = arith.mulf %785, %792 : vector<8x128xf32>
    %794 = tpu.concatenate %793, %777 in 1 : vector<8x128xf32>, vector<8x128xf32> -> vector<8x256xf32>
    %795 = arith.truncf %794 : vector<8x256xf32> to vector<8x256xbf16>
    %cst_261 = arith.constant dense<0.000000e+00> : vector<8x128xf32>
    %796 = tpu.matmul %795, %25, %cst_261 {dimension_numbers = #tpu.dot_dimension_numbers<[1], [0], [0], [1], [0, 0, 1, 1], [], []>} : vector<8x256xbf16>, vector<256x128xbf16>, vector<8x128xf32> -> vector<8x128xf32>
    %797 = arith.addf %796, %28 : vector<8x128xf32>
    %798 = arith.mulf %37, %797 : vector<8x128xf32>
    %799 = math.tanh %798 : vector<8x128xf32>
    %800 = arith.mulf %37, %799 : vector<8x128xf32>
    %801 = arith.addf %800, %40 : vector<8x128xf32>
    %c64_i32_262 = arith.constant 64 : i32
    %802 = tpu.dynamic_rotate %801 by %c64_i32_262 dim 1 : vector<8x128xf32>, i32 -> vector<8x128xf32>
    %803 = arith.mulf %801, %802 : vector<8x128xf32>
    %c32_i32_263 = arith.constant 32 : i32
    %804 = tpu.dynamic_rotate %803 by %c32_i32_263 dim 1 : vector<8x128xf32>, i32 -> vector<8x128xf32>
    %805 = arith.mulf %801, %774 : vector<8x128xf32>
    %806 = arith.addf %804, %805 : vector<8x128xf32>
    %807 = math.tanh %806 : vector<8x128xf32>
    %c64_i32_264 = arith.constant 64 : i32
    %808 = tpu.dynamic_rotate %807 by %c64_i32_264 dim 1 : vector<8x128xf32>, i32 -> vector<8x128xf32>
    %809 = arith.mulf %801, %808 : vector<8x128xf32>
    %c192 = arith.constant 192 : index
    %c0_265 = arith.constant 0 : index
    %810 = vector.load %arg12[%c192, %c0_265] : memref<336x128xf32, #tpu.memory_space<vmem>>, vector<8x128xf32>
    %811 = arith.truncf %793 : vector<8x128xf32> to vector<8x128xbf16>
    %cst_266 = arith.constant dense<0.000000e+00> : vector<8x128xf32>
    %812 = tpu.matmul %811, %24, %cst_266 {dimension_numbers = #tpu.dot_dimension_numbers<[1], [0], [0], [1], [0, 0, 1, 1], [], []>} : vector<8x128xbf16>, vector<128x128xbf16>, vector<8x128xf32> -> vector<8x128xf32>
    %813 = arith.addf %810, %812 : vector<8x128xf32>
    %814 = arith.mulf %37, %813 : vector<8x128xf32>
    %815 = math.tanh %814 : vector<8x128xf32>
    %816 = arith.mulf %37, %815 : vector<8x128xf32>
    %817 = arith.addf %816, %40 : vector<8x128xf32>
    %c64_i32_267 = arith.constant 64 : i32
    %818 = tpu.dynamic_rotate %817 by %c64_i32_267 dim 1 : vector<8x128xf32>, i32 -> vector<8x128xf32>
    %819 = arith.mulf %817, %818 : vector<8x128xf32>
    %c32_i32_268 = arith.constant 32 : i32
    %820 = tpu.dynamic_rotate %819 by %c32_i32_268 dim 1 : vector<8x128xf32>, i32 -> vector<8x128xf32>
    %821 = arith.mulf %817, %790 : vector<8x128xf32>
    %822 = arith.addf %820, %821 : vector<8x128xf32>
    %823 = math.tanh %822 : vector<8x128xf32>
    %c64_i32_269 = arith.constant 64 : i32
    %824 = tpu.dynamic_rotate %823 by %c64_i32_269 dim 1 : vector<8x128xf32>, i32 -> vector<8x128xf32>
    %825 = arith.mulf %817, %824 : vector<8x128xf32>
    %826 = tpu.concatenate %825, %809 in 1 : vector<8x128xf32>, vector<8x128xf32> -> vector<8x256xf32>
    %827 = arith.truncf %826 : vector<8x256xf32> to vector<8x256xbf16>
    %cst_270 = arith.constant dense<0.000000e+00> : vector<8x128xf32>
    %828 = tpu.matmul %827, %25, %cst_270 {dimension_numbers = #tpu.dot_dimension_numbers<[1], [0], [0], [1], [0, 0, 1, 1], [], []>} : vector<8x256xbf16>, vector<256x128xbf16>, vector<8x128xf32> -> vector<8x128xf32>
    %829 = arith.addf %828, %28 : vector<8x128xf32>
    %830 = arith.mulf %37, %829 : vector<8x128xf32>
    %831 = math.tanh %830 : vector<8x128xf32>
    %832 = arith.mulf %37, %831 : vector<8x128xf32>
    %833 = arith.addf %832, %40 : vector<8x128xf32>
    %c64_i32_271 = arith.constant 64 : i32
    %834 = tpu.dynamic_rotate %833 by %c64_i32_271 dim 1 : vector<8x128xf32>, i32 -> vector<8x128xf32>
    %835 = arith.mulf %833, %834 : vector<8x128xf32>
    %c32_i32_272 = arith.constant 32 : i32
    %836 = tpu.dynamic_rotate %835 by %c32_i32_272 dim 1 : vector<8x128xf32>, i32 -> vector<8x128xf32>
    %837 = arith.mulf %833, %806 : vector<8x128xf32>
    %838 = arith.addf %836, %837 : vector<8x128xf32>
    %839 = math.tanh %838 : vector<8x128xf32>
    %c64_i32_273 = arith.constant 64 : i32
    %840 = tpu.dynamic_rotate %839 by %c64_i32_273 dim 1 : vector<8x128xf32>, i32 -> vector<8x128xf32>
    %841 = arith.mulf %833, %840 : vector<8x128xf32>
    %c200 = arith.constant 200 : index
    %c0_274 = arith.constant 0 : index
    %842 = vector.load %arg12[%c200, %c0_274] : memref<336x128xf32, #tpu.memory_space<vmem>>, vector<8x128xf32>
    %843 = arith.truncf %825 : vector<8x128xf32> to vector<8x128xbf16>
    %cst_275 = arith.constant dense<0.000000e+00> : vector<8x128xf32>
    %844 = tpu.matmul %843, %24, %cst_275 {dimension_numbers = #tpu.dot_dimension_numbers<[1], [0], [0], [1], [0, 0, 1, 1], [], []>} : vector<8x128xbf16>, vector<128x128xbf16>, vector<8x128xf32> -> vector<8x128xf32>
    %845 = arith.addf %842, %844 : vector<8x128xf32>
    %846 = arith.mulf %37, %845 : vector<8x128xf32>
    %847 = math.tanh %846 : vector<8x128xf32>
    %848 = arith.mulf %37, %847 : vector<8x128xf32>
    %849 = arith.addf %848, %40 : vector<8x128xf32>
    %c64_i32_276 = arith.constant 64 : i32
    %850 = tpu.dynamic_rotate %849 by %c64_i32_276 dim 1 : vector<8x128xf32>, i32 -> vector<8x128xf32>
    %851 = arith.mulf %849, %850 : vector<8x128xf32>
    %c32_i32_277 = arith.constant 32 : i32
    %852 = tpu.dynamic_rotate %851 by %c32_i32_277 dim 1 : vector<8x128xf32>, i32 -> vector<8x128xf32>
    %853 = arith.mulf %849, %822 : vector<8x128xf32>
    %854 = arith.addf %852, %853 : vector<8x128xf32>
    %855 = math.tanh %854 : vector<8x128xf32>
    %c64_i32_278 = arith.constant 64 : i32
    %856 = tpu.dynamic_rotate %855 by %c64_i32_278 dim 1 : vector<8x128xf32>, i32 -> vector<8x128xf32>
    %857 = arith.mulf %849, %856 : vector<8x128xf32>
    %858 = tpu.concatenate %857, %841 in 1 : vector<8x128xf32>, vector<8x128xf32> -> vector<8x256xf32>
    %859 = arith.truncf %858 : vector<8x256xf32> to vector<8x256xbf16>
    %cst_279 = arith.constant dense<0.000000e+00> : vector<8x128xf32>
    %860 = tpu.matmul %859, %25, %cst_279 {dimension_numbers = #tpu.dot_dimension_numbers<[1], [0], [0], [1], [0, 0, 1, 1], [], []>} : vector<8x256xbf16>, vector<256x128xbf16>, vector<8x128xf32> -> vector<8x128xf32>
    %861 = arith.addf %860, %28 : vector<8x128xf32>
    %862 = arith.mulf %37, %861 : vector<8x128xf32>
    %863 = math.tanh %862 : vector<8x128xf32>
    %864 = arith.mulf %37, %863 : vector<8x128xf32>
    %865 = arith.addf %864, %40 : vector<8x128xf32>
    %c64_i32_280 = arith.constant 64 : i32
    %866 = tpu.dynamic_rotate %865 by %c64_i32_280 dim 1 : vector<8x128xf32>, i32 -> vector<8x128xf32>
    %867 = arith.mulf %865, %866 : vector<8x128xf32>
    %c32_i32_281 = arith.constant 32 : i32
    %868 = tpu.dynamic_rotate %867 by %c32_i32_281 dim 1 : vector<8x128xf32>, i32 -> vector<8x128xf32>
    %869 = arith.mulf %865, %838 : vector<8x128xf32>
    %870 = arith.addf %868, %869 : vector<8x128xf32>
    %871 = math.tanh %870 : vector<8x128xf32>
    %c64_i32_282 = arith.constant 64 : i32
    %872 = tpu.dynamic_rotate %871 by %c64_i32_282 dim 1 : vector<8x128xf32>, i32 -> vector<8x128xf32>
    %873 = arith.mulf %865, %872 : vector<8x128xf32>
    %c208 = arith.constant 208 : index
    %c0_283 = arith.constant 0 : index
    %874 = vector.load %arg12[%c208, %c0_283] : memref<336x128xf32, #tpu.memory_space<vmem>>, vector<8x128xf32>
    %875 = arith.truncf %857 : vector<8x128xf32> to vector<8x128xbf16>
    %cst_284 = arith.constant dense<0.000000e+00> : vector<8x128xf32>
    %876 = tpu.matmul %875, %24, %cst_284 {dimension_numbers = #tpu.dot_dimension_numbers<[1], [0], [0], [1], [0, 0, 1, 1], [], []>} : vector<8x128xbf16>, vector<128x128xbf16>, vector<8x128xf32> -> vector<8x128xf32>
    %877 = arith.addf %874, %876 : vector<8x128xf32>
    %878 = arith.mulf %37, %877 : vector<8x128xf32>
    %879 = math.tanh %878 : vector<8x128xf32>
    %880 = arith.mulf %37, %879 : vector<8x128xf32>
    %881 = arith.addf %880, %40 : vector<8x128xf32>
    %c64_i32_285 = arith.constant 64 : i32
    %882 = tpu.dynamic_rotate %881 by %c64_i32_285 dim 1 : vector<8x128xf32>, i32 -> vector<8x128xf32>
    %883 = arith.mulf %881, %882 : vector<8x128xf32>
    %c32_i32_286 = arith.constant 32 : i32
    %884 = tpu.dynamic_rotate %883 by %c32_i32_286 dim 1 : vector<8x128xf32>, i32 -> vector<8x128xf32>
    %885 = arith.mulf %881, %854 : vector<8x128xf32>
    %886 = arith.addf %884, %885 : vector<8x128xf32>
    %887 = math.tanh %886 : vector<8x128xf32>
    %c64_i32_287 = arith.constant 64 : i32
    %888 = tpu.dynamic_rotate %887 by %c64_i32_287 dim 1 : vector<8x128xf32>, i32 -> vector<8x128xf32>
    %889 = arith.mulf %881, %888 : vector<8x128xf32>
    %890 = tpu.concatenate %889, %873 in 1 : vector<8x128xf32>, vector<8x128xf32> -> vector<8x256xf32>
    %891 = arith.truncf %890 : vector<8x256xf32> to vector<8x256xbf16>
    %cst_288 = arith.constant dense<0.000000e+00> : vector<8x128xf32>
    %892 = tpu.matmul %891, %25, %cst_288 {dimension_numbers = #tpu.dot_dimension_numbers<[1], [0], [0], [1], [0, 0, 1, 1], [], []>} : vector<8x256xbf16>, vector<256x128xbf16>, vector<8x128xf32> -> vector<8x128xf32>
    %893 = arith.addf %892, %28 : vector<8x128xf32>
    %894 = arith.mulf %37, %893 : vector<8x128xf32>
    %895 = math.tanh %894 : vector<8x128xf32>
    %896 = arith.mulf %37, %895 : vector<8x128xf32>
    %897 = arith.addf %896, %40 : vector<8x128xf32>
    %c64_i32_289 = arith.constant 64 : i32
    %898 = tpu.dynamic_rotate %897 by %c64_i32_289 dim 1 : vector<8x128xf32>, i32 -> vector<8x128xf32>
    %899 = arith.mulf %897, %898 : vector<8x128xf32>
    %c32_i32_290 = arith.constant 32 : i32
    %900 = tpu.dynamic_rotate %899 by %c32_i32_290 dim 1 : vector<8x128xf32>, i32 -> vector<8x128xf32>
    %901 = arith.mulf %897, %870 : vector<8x128xf32>
    %902 = arith.addf %900, %901 : vector<8x128xf32>
    %903 = math.tanh %902 : vector<8x128xf32>
    %c64_i32_291 = arith.constant 64 : i32
    %904 = tpu.dynamic_rotate %903 by %c64_i32_291 dim 1 : vector<8x128xf32>, i32 -> vector<8x128xf32>
    %905 = arith.mulf %897, %904 : vector<8x128xf32>
    %c216 = arith.constant 216 : index
    %c0_292 = arith.constant 0 : index
    %906 = vector.load %arg12[%c216, %c0_292] : memref<336x128xf32, #tpu.memory_space<vmem>>, vector<8x128xf32>
    %907 = arith.truncf %889 : vector<8x128xf32> to vector<8x128xbf16>
    %cst_293 = arith.constant dense<0.000000e+00> : vector<8x128xf32>
    %908 = tpu.matmul %907, %24, %cst_293 {dimension_numbers = #tpu.dot_dimension_numbers<[1], [0], [0], [1], [0, 0, 1, 1], [], []>} : vector<8x128xbf16>, vector<128x128xbf16>, vector<8x128xf32> -> vector<8x128xf32>
    %909 = arith.addf %906, %908 : vector<8x128xf32>
    %910 = arith.mulf %37, %909 : vector<8x128xf32>
    %911 = math.tanh %910 : vector<8x128xf32>
    %912 = arith.mulf %37, %911 : vector<8x128xf32>
    %913 = arith.addf %912, %40 : vector<8x128xf32>
    %c64_i32_294 = arith.constant 64 : i32
    %914 = tpu.dynamic_rotate %913 by %c64_i32_294 dim 1 : vector<8x128xf32>, i32 -> vector<8x128xf32>
    %915 = arith.mulf %913, %914 : vector<8x128xf32>
    %c32_i32_295 = arith.constant 32 : i32
    %916 = tpu.dynamic_rotate %915 by %c32_i32_295 dim 1 : vector<8x128xf32>, i32 -> vector<8x128xf32>
    %917 = arith.mulf %913, %886 : vector<8x128xf32>
    %918 = arith.addf %916, %917 : vector<8x128xf32>
    %919 = math.tanh %918 : vector<8x128xf32>
    %c64_i32_296 = arith.constant 64 : i32
    %920 = tpu.dynamic_rotate %919 by %c64_i32_296 dim 1 : vector<8x128xf32>, i32 -> vector<8x128xf32>
    %921 = arith.mulf %913, %920 : vector<8x128xf32>
    %922 = tpu.concatenate %921, %905 in 1 : vector<8x128xf32>, vector<8x128xf32> -> vector<8x256xf32>
    %923 = arith.truncf %922 : vector<8x256xf32> to vector<8x256xbf16>
    %cst_297 = arith.constant dense<0.000000e+00> : vector<8x128xf32>
    %924 = tpu.matmul %923, %25, %cst_297 {dimension_numbers = #tpu.dot_dimension_numbers<[1], [0], [0], [1], [0, 0, 1, 1], [], []>} : vector<8x256xbf16>, vector<256x128xbf16>, vector<8x128xf32> -> vector<8x128xf32>
    %925 = arith.addf %924, %28 : vector<8x128xf32>
    %926 = arith.mulf %37, %925 : vector<8x128xf32>
    %927 = math.tanh %926 : vector<8x128xf32>
    %928 = arith.mulf %37, %927 : vector<8x128xf32>
    %929 = arith.addf %928, %40 : vector<8x128xf32>
    %c64_i32_298 = arith.constant 64 : i32
    %930 = tpu.dynamic_rotate %929 by %c64_i32_298 dim 1 : vector<8x128xf32>, i32 -> vector<8x128xf32>
    %931 = arith.mulf %929, %930 : vector<8x128xf32>
    %c32_i32_299 = arith.constant 32 : i32
    %932 = tpu.dynamic_rotate %931 by %c32_i32_299 dim 1 : vector<8x128xf32>, i32 -> vector<8x128xf32>
    %933 = arith.mulf %929, %902 : vector<8x128xf32>
    %934 = arith.addf %932, %933 : vector<8x128xf32>
    %935 = math.tanh %934 : vector<8x128xf32>
    %c64_i32_300 = arith.constant 64 : i32
    %936 = tpu.dynamic_rotate %935 by %c64_i32_300 dim 1 : vector<8x128xf32>, i32 -> vector<8x128xf32>
    %937 = arith.mulf %929, %936 : vector<8x128xf32>
    %c224_301 = arith.constant 224 : index
    %c0_302 = arith.constant 0 : index
    %938 = vector.load %arg12[%c224_301, %c0_302] : memref<336x128xf32, #tpu.memory_space<vmem>>, vector<8x128xf32>
    %939 = arith.truncf %921 : vector<8x128xf32> to vector<8x128xbf16>
    %cst_303 = arith.constant dense<0.000000e+00> : vector<8x128xf32>
    %940 = tpu.matmul %939, %24, %cst_303 {dimension_numbers = #tpu.dot_dimension_numbers<[1], [0], [0], [1], [0, 0, 1, 1], [], []>} : vector<8x128xbf16>, vector<128x128xbf16>, vector<8x128xf32> -> vector<8x128xf32>
    %941 = arith.addf %938, %940 : vector<8x128xf32>
    %942 = arith.mulf %37, %941 : vector<8x128xf32>
    %943 = math.tanh %942 : vector<8x128xf32>
    %944 = arith.mulf %37, %943 : vector<8x128xf32>
    %945 = arith.addf %944, %40 : vector<8x128xf32>
    %c64_i32_304 = arith.constant 64 : i32
    %946 = tpu.dynamic_rotate %945 by %c64_i32_304 dim 1 : vector<8x128xf32>, i32 -> vector<8x128xf32>
    %947 = arith.mulf %945, %946 : vector<8x128xf32>
    %c32_i32_305 = arith.constant 32 : i32
    %948 = tpu.dynamic_rotate %947 by %c32_i32_305 dim 1 : vector<8x128xf32>, i32 -> vector<8x128xf32>
    %949 = arith.mulf %945, %918 : vector<8x128xf32>
    %950 = arith.addf %948, %949 : vector<8x128xf32>
    %951 = math.tanh %950 : vector<8x128xf32>
    %c64_i32_306 = arith.constant 64 : i32
    %952 = tpu.dynamic_rotate %951 by %c64_i32_306 dim 1 : vector<8x128xf32>, i32 -> vector<8x128xf32>
    %953 = arith.mulf %945, %952 : vector<8x128xf32>
    %954 = tpu.concatenate %953, %937 in 1 : vector<8x128xf32>, vector<8x128xf32> -> vector<8x256xf32>
    %955 = arith.truncf %954 : vector<8x256xf32> to vector<8x256xbf16>
    %cst_307 = arith.constant dense<0.000000e+00> : vector<8x128xf32>
    %956 = tpu.matmul %955, %25, %cst_307 {dimension_numbers = #tpu.dot_dimension_numbers<[1], [0], [0], [1], [0, 0, 1, 1], [], []>} : vector<8x256xbf16>, vector<256x128xbf16>, vector<8x128xf32> -> vector<8x128xf32>
    %957 = arith.addf %956, %28 : vector<8x128xf32>
    %958 = arith.mulf %37, %957 : vector<8x128xf32>
    %959 = math.tanh %958 : vector<8x128xf32>
    %960 = arith.mulf %37, %959 : vector<8x128xf32>
    %961 = arith.addf %960, %40 : vector<8x128xf32>
    %c64_i32_308 = arith.constant 64 : i32
    %962 = tpu.dynamic_rotate %961 by %c64_i32_308 dim 1 : vector<8x128xf32>, i32 -> vector<8x128xf32>
    %963 = arith.mulf %961, %962 : vector<8x128xf32>
    %c32_i32_309 = arith.constant 32 : i32
    %964 = tpu.dynamic_rotate %963 by %c32_i32_309 dim 1 : vector<8x128xf32>, i32 -> vector<8x128xf32>
    %965 = arith.mulf %961, %934 : vector<8x128xf32>
    %966 = arith.addf %964, %965 : vector<8x128xf32>
    %967 = math.tanh %966 : vector<8x128xf32>
    %c64_i32_310 = arith.constant 64 : i32
    %968 = tpu.dynamic_rotate %967 by %c64_i32_310 dim 1 : vector<8x128xf32>, i32 -> vector<8x128xf32>
    %969 = arith.mulf %961, %968 : vector<8x128xf32>
    %c232 = arith.constant 232 : index
    %c0_311 = arith.constant 0 : index
    %970 = vector.load %arg12[%c232, %c0_311] : memref<336x128xf32, #tpu.memory_space<vmem>>, vector<8x128xf32>
    %971 = arith.truncf %953 : vector<8x128xf32> to vector<8x128xbf16>
    %cst_312 = arith.constant dense<0.000000e+00> : vector<8x128xf32>
    %972 = tpu.matmul %971, %24, %cst_312 {dimension_numbers = #tpu.dot_dimension_numbers<[1], [0], [0], [1], [0, 0, 1, 1], [], []>} : vector<8x128xbf16>, vector<128x128xbf16>, vector<8x128xf32> -> vector<8x128xf32>
    %973 = arith.addf %970, %972 : vector<8x128xf32>
    %974 = arith.mulf %37, %973 : vector<8x128xf32>
    %975 = math.tanh %974 : vector<8x128xf32>
    %976 = arith.mulf %37, %975 : vector<8x128xf32>
    %977 = arith.addf %976, %40 : vector<8x128xf32>
    %c64_i32_313 = arith.constant 64 : i32
    %978 = tpu.dynamic_rotate %977 by %c64_i32_313 dim 1 : vector<8x128xf32>, i32 -> vector<8x128xf32>
    %979 = arith.mulf %977, %978 : vector<8x128xf32>
    %c32_i32_314 = arith.constant 32 : i32
    %980 = tpu.dynamic_rotate %979 by %c32_i32_314 dim 1 : vector<8x128xf32>, i32 -> vector<8x128xf32>
    %981 = arith.mulf %977, %950 : vector<8x128xf32>
    %982 = arith.addf %980, %981 : vector<8x128xf32>
    %983 = math.tanh %982 : vector<8x128xf32>
    %c64_i32_315 = arith.constant 64 : i32
    %984 = tpu.dynamic_rotate %983 by %c64_i32_315 dim 1 : vector<8x128xf32>, i32 -> vector<8x128xf32>
    %985 = arith.mulf %977, %984 : vector<8x128xf32>
    %986 = tpu.concatenate %985, %969 in 1 : vector<8x128xf32>, vector<8x128xf32> -> vector<8x256xf32>
    %987 = arith.truncf %986 : vector<8x256xf32> to vector<8x256xbf16>
    %cst_316 = arith.constant dense<0.000000e+00> : vector<8x128xf32>
    %988 = tpu.matmul %987, %25, %cst_316 {dimension_numbers = #tpu.dot_dimension_numbers<[1], [0], [0], [1], [0, 0, 1, 1], [], []>} : vector<8x256xbf16>, vector<256x128xbf16>, vector<8x128xf32> -> vector<8x128xf32>
    %989 = arith.addf %988, %28 : vector<8x128xf32>
    %990 = arith.mulf %37, %989 : vector<8x128xf32>
    %991 = math.tanh %990 : vector<8x128xf32>
    %992 = arith.mulf %37, %991 : vector<8x128xf32>
    %993 = arith.addf %992, %40 : vector<8x128xf32>
    %c64_i32_317 = arith.constant 64 : i32
    %994 = tpu.dynamic_rotate %993 by %c64_i32_317 dim 1 : vector<8x128xf32>, i32 -> vector<8x128xf32>
    %995 = arith.mulf %993, %994 : vector<8x128xf32>
    %c32_i32_318 = arith.constant 32 : i32
    %996 = tpu.dynamic_rotate %995 by %c32_i32_318 dim 1 : vector<8x128xf32>, i32 -> vector<8x128xf32>
    %997 = arith.mulf %993, %966 : vector<8x128xf32>
    %998 = arith.addf %996, %997 : vector<8x128xf32>
    %999 = math.tanh %998 : vector<8x128xf32>
    %c64_i32_319 = arith.constant 64 : i32
    %1000 = tpu.dynamic_rotate %999 by %c64_i32_319 dim 1 : vector<8x128xf32>, i32 -> vector<8x128xf32>
    %1001 = arith.mulf %993, %1000 : vector<8x128xf32>
    %c240 = arith.constant 240 : index
    %c0_320 = arith.constant 0 : index
    %1002 = vector.load %arg12[%c240, %c0_320] : memref<336x128xf32, #tpu.memory_space<vmem>>, vector<8x128xf32>
    %1003 = arith.truncf %985 : vector<8x128xf32> to vector<8x128xbf16>
    %cst_321 = arith.constant dense<0.000000e+00> : vector<8x128xf32>
    %1004 = tpu.matmul %1003, %24, %cst_321 {dimension_numbers = #tpu.dot_dimension_numbers<[1], [0], [0], [1], [0, 0, 1, 1], [], []>} : vector<8x128xbf16>, vector<128x128xbf16>, vector<8x128xf32> -> vector<8x128xf32>
    %1005 = arith.addf %1002, %1004 : vector<8x128xf32>
    %1006 = arith.mulf %37, %1005 : vector<8x128xf32>
    %1007 = math.tanh %1006 : vector<8x128xf32>
    %1008 = arith.mulf %37, %1007 : vector<8x128xf32>
    %1009 = arith.addf %1008, %40 : vector<8x128xf32>
    %c64_i32_322 = arith.constant 64 : i32
    %1010 = tpu.dynamic_rotate %1009 by %c64_i32_322 dim 1 : vector<8x128xf32>, i32 -> vector<8x128xf32>
    %1011 = arith.mulf %1009, %1010 : vector<8x128xf32>
    %c32_i32_323 = arith.constant 32 : i32
    %1012 = tpu.dynamic_rotate %1011 by %c32_i32_323 dim 1 : vector<8x128xf32>, i32 -> vector<8x128xf32>
    %1013 = arith.mulf %1009, %982 : vector<8x128xf32>
    %1014 = arith.addf %1012, %1013 : vector<8x128xf32>
    %1015 = math.tanh %1014 : vector<8x128xf32>
    %c64_i32_324 = arith.constant 64 : i32
    %1016 = tpu.dynamic_rotate %1015 by %c64_i32_324 dim 1 : vector<8x128xf32>, i32 -> vector<8x128xf32>
    %1017 = arith.mulf %1009, %1016 : vector<8x128xf32>
    %1018 = tpu.concatenate %1017, %1001 in 1 : vector<8x128xf32>, vector<8x128xf32> -> vector<8x256xf32>
    %1019 = arith.truncf %1018 : vector<8x256xf32> to vector<8x256xbf16>
    %cst_325 = arith.constant dense<0.000000e+00> : vector<8x128xf32>
    %1020 = tpu.matmul %1019, %25, %cst_325 {dimension_numbers = #tpu.dot_dimension_numbers<[1], [0], [0], [1], [0, 0, 1, 1], [], []>} : vector<8x256xbf16>, vector<256x128xbf16>, vector<8x128xf32> -> vector<8x128xf32>
    %1021 = arith.addf %1020, %28 : vector<8x128xf32>
    %1022 = arith.mulf %37, %1021 : vector<8x128xf32>
    %1023 = math.tanh %1022 : vector<8x128xf32>
    %1024 = arith.mulf %37, %1023 : vector<8x128xf32>
    %1025 = arith.addf %1024, %40 : vector<8x128xf32>
    %c64_i32_326 = arith.constant 64 : i32
    %1026 = tpu.dynamic_rotate %1025 by %c64_i32_326 dim 1 : vector<8x128xf32>, i32 -> vector<8x128xf32>
    %1027 = arith.mulf %1025, %1026 : vector<8x128xf32>
    %c32_i32_327 = arith.constant 32 : i32
    %1028 = tpu.dynamic_rotate %1027 by %c32_i32_327 dim 1 : vector<8x128xf32>, i32 -> vector<8x128xf32>
    %1029 = arith.mulf %1025, %998 : vector<8x128xf32>
    %1030 = arith.addf %1028, %1029 : vector<8x128xf32>
    %1031 = math.tanh %1030 : vector<8x128xf32>
    %c64_i32_328 = arith.constant 64 : i32
    %1032 = tpu.dynamic_rotate %1031 by %c64_i32_328 dim 1 : vector<8x128xf32>, i32 -> vector<8x128xf32>
    %1033 = arith.mulf %1025, %1032 : vector<8x128xf32>
    %c248 = arith.constant 248 : index
    %c0_329 = arith.constant 0 : index
    %1034 = vector.load %arg12[%c248, %c0_329] : memref<336x128xf32, #tpu.memory_space<vmem>>, vector<8x128xf32>
    %1035 = arith.truncf %1017 : vector<8x128xf32> to vector<8x128xbf16>
    %cst_330 = arith.constant dense<0.000000e+00> : vector<8x128xf32>
    %1036 = tpu.matmul %1035, %24, %cst_330 {dimension_numbers = #tpu.dot_dimension_numbers<[1], [0], [0], [1], [0, 0, 1, 1], [], []>} : vector<8x128xbf16>, vector<128x128xbf16>, vector<8x128xf32> -> vector<8x128xf32>
    %1037 = arith.addf %1034, %1036 : vector<8x128xf32>
    %1038 = arith.mulf %37, %1037 : vector<8x128xf32>
    %1039 = math.tanh %1038 : vector<8x128xf32>
    %1040 = arith.mulf %37, %1039 : vector<8x128xf32>
    %1041 = arith.addf %1040, %40 : vector<8x128xf32>
    %c64_i32_331 = arith.constant 64 : i32
    %1042 = tpu.dynamic_rotate %1041 by %c64_i32_331 dim 1 : vector<8x128xf32>, i32 -> vector<8x128xf32>
    %1043 = arith.mulf %1041, %1042 : vector<8x128xf32>
    %c32_i32_332 = arith.constant 32 : i32
    %1044 = tpu.dynamic_rotate %1043 by %c32_i32_332 dim 1 : vector<8x128xf32>, i32 -> vector<8x128xf32>
    %1045 = arith.mulf %1041, %1014 : vector<8x128xf32>
    %1046 = arith.addf %1044, %1045 : vector<8x128xf32>
    %1047 = math.tanh %1046 : vector<8x128xf32>
    %c64_i32_333 = arith.constant 64 : i32
    %1048 = tpu.dynamic_rotate %1047 by %c64_i32_333 dim 1 : vector<8x128xf32>, i32 -> vector<8x128xf32>
    %1049 = arith.mulf %1041, %1048 : vector<8x128xf32>
    %1050 = tpu.concatenate %1049, %1033 in 1 : vector<8x128xf32>, vector<8x128xf32> -> vector<8x256xf32>
    %1051 = arith.truncf %1050 : vector<8x256xf32> to vector<8x256xbf16>
    %cst_334 = arith.constant dense<0.000000e+00> : vector<8x128xf32>
    %1052 = tpu.matmul %1051, %25, %cst_334 {dimension_numbers = #tpu.dot_dimension_numbers<[1], [0], [0], [1], [0, 0, 1, 1], [], []>} : vector<8x256xbf16>, vector<256x128xbf16>, vector<8x128xf32> -> vector<8x128xf32>
    %1053 = arith.addf %1052, %28 : vector<8x128xf32>
    %1054 = arith.mulf %37, %1053 : vector<8x128xf32>
    %1055 = math.tanh %1054 : vector<8x128xf32>
    %1056 = arith.mulf %37, %1055 : vector<8x128xf32>
    %1057 = arith.addf %1056, %40 : vector<8x128xf32>
    %c64_i32_335 = arith.constant 64 : i32
    %1058 = tpu.dynamic_rotate %1057 by %c64_i32_335 dim 1 : vector<8x128xf32>, i32 -> vector<8x128xf32>
    %1059 = arith.mulf %1057, %1058 : vector<8x128xf32>
    %c32_i32_336 = arith.constant 32 : i32
    %1060 = tpu.dynamic_rotate %1059 by %c32_i32_336 dim 1 : vector<8x128xf32>, i32 -> vector<8x128xf32>
    %1061 = arith.mulf %1057, %1030 : vector<8x128xf32>
    %1062 = arith.addf %1060, %1061 : vector<8x128xf32>
    %1063 = math.tanh %1062 : vector<8x128xf32>
    %c64_i32_337 = arith.constant 64 : i32
    %1064 = tpu.dynamic_rotate %1063 by %c64_i32_337 dim 1 : vector<8x128xf32>, i32 -> vector<8x128xf32>
    %1065 = arith.mulf %1057, %1064 : vector<8x128xf32>
    %c256 = arith.constant 256 : index
    %c0_338 = arith.constant 0 : index
    %1066 = vector.load %arg12[%c256, %c0_338] : memref<336x128xf32, #tpu.memory_space<vmem>>, vector<8x128xf32>
    %1067 = arith.truncf %1049 : vector<8x128xf32> to vector<8x128xbf16>
    %cst_339 = arith.constant dense<0.000000e+00> : vector<8x128xf32>
    %1068 = tpu.matmul %1067, %24, %cst_339 {dimension_numbers = #tpu.dot_dimension_numbers<[1], [0], [0], [1], [0, 0, 1, 1], [], []>} : vector<8x128xbf16>, vector<128x128xbf16>, vector<8x128xf32> -> vector<8x128xf32>
    %1069 = arith.addf %1066, %1068 : vector<8x128xf32>
    %1070 = arith.mulf %37, %1069 : vector<8x128xf32>
    %1071 = math.tanh %1070 : vector<8x128xf32>
    %1072 = arith.mulf %37, %1071 : vector<8x128xf32>
    %1073 = arith.addf %1072, %40 : vector<8x128xf32>
    %c64_i32_340 = arith.constant 64 : i32
    %1074 = tpu.dynamic_rotate %1073 by %c64_i32_340 dim 1 : vector<8x128xf32>, i32 -> vector<8x128xf32>
    %1075 = arith.mulf %1073, %1074 : vector<8x128xf32>
    %c32_i32_341 = arith.constant 32 : i32
    %1076 = tpu.dynamic_rotate %1075 by %c32_i32_341 dim 1 : vector<8x128xf32>, i32 -> vector<8x128xf32>
    %1077 = arith.mulf %1073, %1046 : vector<8x128xf32>
    %1078 = arith.addf %1076, %1077 : vector<8x128xf32>
    %1079 = math.tanh %1078 : vector<8x128xf32>
    %c64_i32_342 = arith.constant 64 : i32
    %1080 = tpu.dynamic_rotate %1079 by %c64_i32_342 dim 1 : vector<8x128xf32>, i32 -> vector<8x128xf32>
    %1081 = arith.mulf %1073, %1080 : vector<8x128xf32>
    %1082 = tpu.concatenate %1081, %1065 in 1 : vector<8x128xf32>, vector<8x128xf32> -> vector<8x256xf32>
    %1083 = arith.truncf %1082 : vector<8x256xf32> to vector<8x256xbf16>
    %cst_343 = arith.constant dense<0.000000e+00> : vector<8x128xf32>
    %1084 = tpu.matmul %1083, %25, %cst_343 {dimension_numbers = #tpu.dot_dimension_numbers<[1], [0], [0], [1], [0, 0, 1, 1], [], []>} : vector<8x256xbf16>, vector<256x128xbf16>, vector<8x128xf32> -> vector<8x128xf32>
    %1085 = arith.addf %1084, %28 : vector<8x128xf32>
    %1086 = arith.mulf %37, %1085 : vector<8x128xf32>
    %1087 = math.tanh %1086 : vector<8x128xf32>
    %1088 = arith.mulf %37, %1087 : vector<8x128xf32>
    %1089 = arith.addf %1088, %40 : vector<8x128xf32>
    %c64_i32_344 = arith.constant 64 : i32
    %1090 = tpu.dynamic_rotate %1089 by %c64_i32_344 dim 1 : vector<8x128xf32>, i32 -> vector<8x128xf32>
    %1091 = arith.mulf %1089, %1090 : vector<8x128xf32>
    %c32_i32_345 = arith.constant 32 : i32
    %1092 = tpu.dynamic_rotate %1091 by %c32_i32_345 dim 1 : vector<8x128xf32>, i32 -> vector<8x128xf32>
    %1093 = arith.mulf %1089, %1062 : vector<8x128xf32>
    %1094 = arith.addf %1092, %1093 : vector<8x128xf32>
    %1095 = math.tanh %1094 : vector<8x128xf32>
    %c64_i32_346 = arith.constant 64 : i32
    %1096 = tpu.dynamic_rotate %1095 by %c64_i32_346 dim 1 : vector<8x128xf32>, i32 -> vector<8x128xf32>
    %1097 = arith.mulf %1089, %1096 : vector<8x128xf32>
    %c264 = arith.constant 264 : index
    %c0_347 = arith.constant 0 : index
    %1098 = vector.load %arg12[%c264, %c0_347] : memref<336x128xf32, #tpu.memory_space<vmem>>, vector<8x128xf32>
    %1099 = arith.truncf %1081 : vector<8x128xf32> to vector<8x128xbf16>
    %cst_348 = arith.constant dense<0.000000e+00> : vector<8x128xf32>
    %1100 = tpu.matmul %1099, %24, %cst_348 {dimension_numbers = #tpu.dot_dimension_numbers<[1], [0], [0], [1], [0, 0, 1, 1], [], []>} : vector<8x128xbf16>, vector<128x128xbf16>, vector<8x128xf32> -> vector<8x128xf32>
    %1101 = arith.addf %1098, %1100 : vector<8x128xf32>
    %1102 = arith.mulf %37, %1101 : vector<8x128xf32>
    %1103 = math.tanh %1102 : vector<8x128xf32>
    %1104 = arith.mulf %37, %1103 : vector<8x128xf32>
    %1105 = arith.addf %1104, %40 : vector<8x128xf32>
    %c64_i32_349 = arith.constant 64 : i32
    %1106 = tpu.dynamic_rotate %1105 by %c64_i32_349 dim 1 : vector<8x128xf32>, i32 -> vector<8x128xf32>
    %1107 = arith.mulf %1105, %1106 : vector<8x128xf32>
    %c32_i32_350 = arith.constant 32 : i32
    %1108 = tpu.dynamic_rotate %1107 by %c32_i32_350 dim 1 : vector<8x128xf32>, i32 -> vector<8x128xf32>
    %1109 = arith.mulf %1105, %1078 : vector<8x128xf32>
    %1110 = arith.addf %1108, %1109 : vector<8x128xf32>
    %1111 = math.tanh %1110 : vector<8x128xf32>
    %c64_i32_351 = arith.constant 64 : i32
    %1112 = tpu.dynamic_rotate %1111 by %c64_i32_351 dim 1 : vector<8x128xf32>, i32 -> vector<8x128xf32>
    %1113 = arith.mulf %1105, %1112 : vector<8x128xf32>
    %1114 = tpu.concatenate %1113, %1097 in 1 : vector<8x128xf32>, vector<8x128xf32> -> vector<8x256xf32>
    %1115 = arith.truncf %1114 : vector<8x256xf32> to vector<8x256xbf16>
    %cst_352 = arith.constant dense<0.000000e+00> : vector<8x128xf32>
    %1116 = tpu.matmul %1115, %25, %cst_352 {dimension_numbers = #tpu.dot_dimension_numbers<[1], [0], [0], [1], [0, 0, 1, 1], [], []>} : vector<8x256xbf16>, vector<256x128xbf16>, vector<8x128xf32> -> vector<8x128xf32>
    %1117 = arith.addf %1116, %28 : vector<8x128xf32>
    %1118 = arith.mulf %37, %1117 : vector<8x128xf32>
    %1119 = math.tanh %1118 : vector<8x128xf32>
    %1120 = arith.mulf %37, %1119 : vector<8x128xf32>
    %1121 = arith.addf %1120, %40 : vector<8x128xf32>
    %c64_i32_353 = arith.constant 64 : i32
    %1122 = tpu.dynamic_rotate %1121 by %c64_i32_353 dim 1 : vector<8x128xf32>, i32 -> vector<8x128xf32>
    %1123 = arith.mulf %1121, %1122 : vector<8x128xf32>
    %c32_i32_354 = arith.constant 32 : i32
    %1124 = tpu.dynamic_rotate %1123 by %c32_i32_354 dim 1 : vector<8x128xf32>, i32 -> vector<8x128xf32>
    %1125 = arith.mulf %1121, %1094 : vector<8x128xf32>
    %1126 = arith.addf %1124, %1125 : vector<8x128xf32>
    %1127 = math.tanh %1126 : vector<8x128xf32>
    %c64_i32_355 = arith.constant 64 : i32
    %1128 = tpu.dynamic_rotate %1127 by %c64_i32_355 dim 1 : vector<8x128xf32>, i32 -> vector<8x128xf32>
    %1129 = arith.mulf %1121, %1128 : vector<8x128xf32>
    %c272 = arith.constant 272 : index
    %c0_356 = arith.constant 0 : index
    %1130 = vector.load %arg12[%c272, %c0_356] : memref<336x128xf32, #tpu.memory_space<vmem>>, vector<8x128xf32>
    %1131 = arith.truncf %1113 : vector<8x128xf32> to vector<8x128xbf16>
    %cst_357 = arith.constant dense<0.000000e+00> : vector<8x128xf32>
    %1132 = tpu.matmul %1131, %24, %cst_357 {dimension_numbers = #tpu.dot_dimension_numbers<[1], [0], [0], [1], [0, 0, 1, 1], [], []>} : vector<8x128xbf16>, vector<128x128xbf16>, vector<8x128xf32> -> vector<8x128xf32>
    %1133 = arith.addf %1130, %1132 : vector<8x128xf32>
    %1134 = arith.mulf %37, %1133 : vector<8x128xf32>
    %1135 = math.tanh %1134 : vector<8x128xf32>
    %1136 = arith.mulf %37, %1135 : vector<8x128xf32>
    %1137 = arith.addf %1136, %40 : vector<8x128xf32>
    %c64_i32_358 = arith.constant 64 : i32
    %1138 = tpu.dynamic_rotate %1137 by %c64_i32_358 dim 1 : vector<8x128xf32>, i32 -> vector<8x128xf32>
    %1139 = arith.mulf %1137, %1138 : vector<8x128xf32>
    %c32_i32_359 = arith.constant 32 : i32
    %1140 = tpu.dynamic_rotate %1139 by %c32_i32_359 dim 1 : vector<8x128xf32>, i32 -> vector<8x128xf32>
    %1141 = arith.mulf %1137, %1110 : vector<8x128xf32>
    %1142 = arith.addf %1140, %1141 : vector<8x128xf32>
    %1143 = math.tanh %1142 : vector<8x128xf32>
    %c64_i32_360 = arith.constant 64 : i32
    %1144 = tpu.dynamic_rotate %1143 by %c64_i32_360 dim 1 : vector<8x128xf32>, i32 -> vector<8x128xf32>
    %1145 = arith.mulf %1137, %1144 : vector<8x128xf32>
    %1146 = tpu.concatenate %1145, %1129 in 1 : vector<8x128xf32>, vector<8x128xf32> -> vector<8x256xf32>
    %1147 = arith.truncf %1146 : vector<8x256xf32> to vector<8x256xbf16>
    %cst_361 = arith.constant dense<0.000000e+00> : vector<8x128xf32>
    %1148 = tpu.matmul %1147, %25, %cst_361 {dimension_numbers = #tpu.dot_dimension_numbers<[1], [0], [0], [1], [0, 0, 1, 1], [], []>} : vector<8x256xbf16>, vector<256x128xbf16>, vector<8x128xf32> -> vector<8x128xf32>
    %1149 = arith.addf %1148, %28 : vector<8x128xf32>
    %1150 = arith.mulf %37, %1149 : vector<8x128xf32>
    %1151 = math.tanh %1150 : vector<8x128xf32>
    %1152 = arith.mulf %37, %1151 : vector<8x128xf32>
    %1153 = arith.addf %1152, %40 : vector<8x128xf32>
    %c64_i32_362 = arith.constant 64 : i32
    %1154 = tpu.dynamic_rotate %1153 by %c64_i32_362 dim 1 : vector<8x128xf32>, i32 -> vector<8x128xf32>
    %1155 = arith.mulf %1153, %1154 : vector<8x128xf32>
    %c32_i32_363 = arith.constant 32 : i32
    %1156 = tpu.dynamic_rotate %1155 by %c32_i32_363 dim 1 : vector<8x128xf32>, i32 -> vector<8x128xf32>
    %1157 = arith.mulf %1153, %1126 : vector<8x128xf32>
    %1158 = arith.addf %1156, %1157 : vector<8x128xf32>
    %1159 = math.tanh %1158 : vector<8x128xf32>
    %c64_i32_364 = arith.constant 64 : i32
    %1160 = tpu.dynamic_rotate %1159 by %c64_i32_364 dim 1 : vector<8x128xf32>, i32 -> vector<8x128xf32>
    %1161 = arith.mulf %1153, %1160 : vector<8x128xf32>
    %c280_365 = arith.constant 280 : index
    %c0_366 = arith.constant 0 : index
    %1162 = vector.load %arg12[%c280_365, %c0_366] : memref<336x128xf32, #tpu.memory_space<vmem>>, vector<8x128xf32>
    %1163 = arith.truncf %1145 : vector<8x128xf32> to vector<8x128xbf16>
    %cst_367 = arith.constant dense<0.000000e+00> : vector<8x128xf32>
    %1164 = tpu.matmul %1163, %24, %cst_367 {dimension_numbers = #tpu.dot_dimension_numbers<[1], [0], [0], [1], [0, 0, 1, 1], [], []>} : vector<8x128xbf16>, vector<128x128xbf16>, vector<8x128xf32> -> vector<8x128xf32>
    %1165 = arith.addf %1162, %1164 : vector<8x128xf32>
    %1166 = arith.mulf %37, %1165 : vector<8x128xf32>
    %1167 = math.tanh %1166 : vector<8x128xf32>
    %1168 = arith.mulf %37, %1167 : vector<8x128xf32>
    %1169 = arith.addf %1168, %40 : vector<8x128xf32>
    %c64_i32_368 = arith.constant 64 : i32
    %1170 = tpu.dynamic_rotate %1169 by %c64_i32_368 dim 1 : vector<8x128xf32>, i32 -> vector<8x128xf32>
    %1171 = arith.mulf %1169, %1170 : vector<8x128xf32>
    %c32_i32_369 = arith.constant 32 : i32
    %1172 = tpu.dynamic_rotate %1171 by %c32_i32_369 dim 1 : vector<8x128xf32>, i32 -> vector<8x128xf32>
    %1173 = arith.mulf %1169, %1142 : vector<8x128xf32>
    %1174 = arith.addf %1172, %1173 : vector<8x128xf32>
    %1175 = math.tanh %1174 : vector<8x128xf32>
    %c64_i32_370 = arith.constant 64 : i32
    %1176 = tpu.dynamic_rotate %1175 by %c64_i32_370 dim 1 : vector<8x128xf32>, i32 -> vector<8x128xf32>
    %1177 = arith.mulf %1169, %1176 : vector<8x128xf32>
    %1178 = tpu.concatenate %1177, %1161 in 1 : vector<8x128xf32>, vector<8x128xf32> -> vector<8x256xf32>
    %1179 = arith.truncf %1178 : vector<8x256xf32> to vector<8x256xbf16>
    %cst_371 = arith.constant dense<0.000000e+00> : vector<8x128xf32>
    %1180 = tpu.matmul %1179, %25, %cst_371 {dimension_numbers = #tpu.dot_dimension_numbers<[1], [0], [0], [1], [0, 0, 1, 1], [], []>} : vector<8x256xbf16>, vector<256x128xbf16>, vector<8x128xf32> -> vector<8x128xf32>
    %1181 = arith.addf %1180, %28 : vector<8x128xf32>
    %1182 = arith.mulf %37, %1181 : vector<8x128xf32>
    %1183 = math.tanh %1182 : vector<8x128xf32>
    %1184 = arith.mulf %37, %1183 : vector<8x128xf32>
    %1185 = arith.addf %1184, %40 : vector<8x128xf32>
    %c64_i32_372 = arith.constant 64 : i32
    %1186 = tpu.dynamic_rotate %1185 by %c64_i32_372 dim 1 : vector<8x128xf32>, i32 -> vector<8x128xf32>
    %1187 = arith.mulf %1185, %1186 : vector<8x128xf32>
    %c32_i32_373 = arith.constant 32 : i32
    %1188 = tpu.dynamic_rotate %1187 by %c32_i32_373 dim 1 : vector<8x128xf32>, i32 -> vector<8x128xf32>
    %1189 = arith.mulf %1185, %1158 : vector<8x128xf32>
    %1190 = arith.addf %1188, %1189 : vector<8x128xf32>
    %1191 = math.tanh %1190 : vector<8x128xf32>
    %c64_i32_374 = arith.constant 64 : i32
    %1192 = tpu.dynamic_rotate %1191 by %c64_i32_374 dim 1 : vector<8x128xf32>, i32 -> vector<8x128xf32>
    %1193 = arith.mulf %1185, %1192 : vector<8x128xf32>
    %c288 = arith.constant 288 : index
    %c0_375 = arith.constant 0 : index
    %1194 = vector.load %arg12[%c288, %c0_375] : memref<336x128xf32, #tpu.memory_space<vmem>>, vector<8x128xf32>
    %1195 = arith.truncf %1177 : vector<8x128xf32> to vector<8x128xbf16>
    %cst_376 = arith.constant dense<0.000000e+00> : vector<8x128xf32>
    %1196 = tpu.matmul %1195, %24, %cst_376 {dimension_numbers = #tpu.dot_dimension_numbers<[1], [0], [0], [1], [0, 0, 1, 1], [], []>} : vector<8x128xbf16>, vector<128x128xbf16>, vector<8x128xf32> -> vector<8x128xf32>
    %1197 = arith.addf %1194, %1196 : vector<8x128xf32>
    %1198 = arith.mulf %37, %1197 : vector<8x128xf32>
    %1199 = math.tanh %1198 : vector<8x128xf32>
    %1200 = arith.mulf %37, %1199 : vector<8x128xf32>
    %1201 = arith.addf %1200, %40 : vector<8x128xf32>
    %c64_i32_377 = arith.constant 64 : i32
    %1202 = tpu.dynamic_rotate %1201 by %c64_i32_377 dim 1 : vector<8x128xf32>, i32 -> vector<8x128xf32>
    %1203 = arith.mulf %1201, %1202 : vector<8x128xf32>
    %c32_i32_378 = arith.constant 32 : i32
    %1204 = tpu.dynamic_rotate %1203 by %c32_i32_378 dim 1 : vector<8x128xf32>, i32 -> vector<8x128xf32>
    %1205 = arith.mulf %1201, %1174 : vector<8x128xf32>
    %1206 = arith.addf %1204, %1205 : vector<8x128xf32>
    %1207 = math.tanh %1206 : vector<8x128xf32>
    %c64_i32_379 = arith.constant 64 : i32
    %1208 = tpu.dynamic_rotate %1207 by %c64_i32_379 dim 1 : vector<8x128xf32>, i32 -> vector<8x128xf32>
    %1209 = arith.mulf %1201, %1208 : vector<8x128xf32>
    %1210 = tpu.concatenate %1209, %1193 in 1 : vector<8x128xf32>, vector<8x128xf32> -> vector<8x256xf32>
    %1211 = arith.truncf %1210 : vector<8x256xf32> to vector<8x256xbf16>
    %cst_380 = arith.constant dense<0.000000e+00> : vector<8x128xf32>
    %1212 = tpu.matmul %1211, %25, %cst_380 {dimension_numbers = #tpu.dot_dimension_numbers<[1], [0], [0], [1], [0, 0, 1, 1], [], []>} : vector<8x256xbf16>, vector<256x128xbf16>, vector<8x128xf32> -> vector<8x128xf32>
    %1213 = arith.addf %1212, %28 : vector<8x128xf32>
    %1214 = arith.mulf %37, %1213 : vector<8x128xf32>
    %1215 = math.tanh %1214 : vector<8x128xf32>
    %1216 = arith.mulf %37, %1215 : vector<8x128xf32>
    %1217 = arith.addf %1216, %40 : vector<8x128xf32>
    %c64_i32_381 = arith.constant 64 : i32
    %1218 = tpu.dynamic_rotate %1217 by %c64_i32_381 dim 1 : vector<8x128xf32>, i32 -> vector<8x128xf32>
    %1219 = arith.mulf %1217, %1218 : vector<8x128xf32>
    %c32_i32_382 = arith.constant 32 : i32
    %1220 = tpu.dynamic_rotate %1219 by %c32_i32_382 dim 1 : vector<8x128xf32>, i32 -> vector<8x128xf32>
    %1221 = arith.mulf %1217, %1190 : vector<8x128xf32>
    %1222 = arith.addf %1220, %1221 : vector<8x128xf32>
    %1223 = math.tanh %1222 : vector<8x128xf32>
    %c64_i32_383 = arith.constant 64 : i32
    %1224 = tpu.dynamic_rotate %1223 by %c64_i32_383 dim 1 : vector<8x128xf32>, i32 -> vector<8x128xf32>
    %1225 = arith.mulf %1217, %1224 : vector<8x128xf32>
    %c296 = arith.constant 296 : index
    %c0_384 = arith.constant 0 : index
    %1226 = vector.load %arg12[%c296, %c0_384] : memref<336x128xf32, #tpu.memory_space<vmem>>, vector<8x128xf32>
    %1227 = arith.truncf %1209 : vector<8x128xf32> to vector<8x128xbf16>
    %cst_385 = arith.constant dense<0.000000e+00> : vector<8x128xf32>
    %1228 = tpu.matmul %1227, %24, %cst_385 {dimension_numbers = #tpu.dot_dimension_numbers<[1], [0], [0], [1], [0, 0, 1, 1], [], []>} : vector<8x128xbf16>, vector<128x128xbf16>, vector<8x128xf32> -> vector<8x128xf32>
    %1229 = arith.addf %1226, %1228 : vector<8x128xf32>
    %1230 = arith.mulf %37, %1229 : vector<8x128xf32>
    %1231 = math.tanh %1230 : vector<8x128xf32>
    %1232 = arith.mulf %37, %1231 : vector<8x128xf32>
    %1233 = arith.addf %1232, %40 : vector<8x128xf32>
    %c64_i32_386 = arith.constant 64 : i32
    %1234 = tpu.dynamic_rotate %1233 by %c64_i32_386 dim 1 : vector<8x128xf32>, i32 -> vector<8x128xf32>
    %1235 = arith.mulf %1233, %1234 : vector<8x128xf32>
    %c32_i32_387 = arith.constant 32 : i32
    %1236 = tpu.dynamic_rotate %1235 by %c32_i32_387 dim 1 : vector<8x128xf32>, i32 -> vector<8x128xf32>
    %1237 = arith.mulf %1233, %1206 : vector<8x128xf32>
    %1238 = arith.addf %1236, %1237 : vector<8x128xf32>
    %1239 = math.tanh %1238 : vector<8x128xf32>
    %c64_i32_388 = arith.constant 64 : i32
    %1240 = tpu.dynamic_rotate %1239 by %c64_i32_388 dim 1 : vector<8x128xf32>, i32 -> vector<8x128xf32>
    %1241 = arith.mulf %1233, %1240 : vector<8x128xf32>
    %1242 = tpu.concatenate %1241, %1225 in 1 : vector<8x128xf32>, vector<8x128xf32> -> vector<8x256xf32>
    %1243 = arith.truncf %1242 : vector<8x256xf32> to vector<8x256xbf16>
    %cst_389 = arith.constant dense<0.000000e+00> : vector<8x128xf32>
    %1244 = tpu.matmul %1243, %25, %cst_389 {dimension_numbers = #tpu.dot_dimension_numbers<[1], [0], [0], [1], [0, 0, 1, 1], [], []>} : vector<8x256xbf16>, vector<256x128xbf16>, vector<8x128xf32> -> vector<8x128xf32>
    %1245 = arith.addf %1244, %28 : vector<8x128xf32>
    %1246 = arith.mulf %37, %1245 : vector<8x128xf32>
    %1247 = math.tanh %1246 : vector<8x128xf32>
    %1248 = arith.mulf %37, %1247 : vector<8x128xf32>
    %1249 = arith.addf %1248, %40 : vector<8x128xf32>
    %c64_i32_390 = arith.constant 64 : i32
    %1250 = tpu.dynamic_rotate %1249 by %c64_i32_390 dim 1 : vector<8x128xf32>, i32 -> vector<8x128xf32>
    %1251 = arith.mulf %1249, %1250 : vector<8x128xf32>
    %c32_i32_391 = arith.constant 32 : i32
    %1252 = tpu.dynamic_rotate %1251 by %c32_i32_391 dim 1 : vector<8x128xf32>, i32 -> vector<8x128xf32>
    %1253 = arith.mulf %1249, %1222 : vector<8x128xf32>
    %1254 = arith.addf %1252, %1253 : vector<8x128xf32>
    %1255 = math.tanh %1254 : vector<8x128xf32>
    %c64_i32_392 = arith.constant 64 : i32
    %1256 = tpu.dynamic_rotate %1255 by %c64_i32_392 dim 1 : vector<8x128xf32>, i32 -> vector<8x128xf32>
    %1257 = arith.mulf %1249, %1256 : vector<8x128xf32>
    %c304 = arith.constant 304 : index
    %c0_393 = arith.constant 0 : index
    %1258 = vector.load %arg12[%c304, %c0_393] : memref<336x128xf32, #tpu.memory_space<vmem>>, vector<8x128xf32>
    %1259 = arith.truncf %1241 : vector<8x128xf32> to vector<8x128xbf16>
    %cst_394 = arith.constant dense<0.000000e+00> : vector<8x128xf32>
    %1260 = tpu.matmul %1259, %24, %cst_394 {dimension_numbers = #tpu.dot_dimension_numbers<[1], [0], [0], [1], [0, 0, 1, 1], [], []>} : vector<8x128xbf16>, vector<128x128xbf16>, vector<8x128xf32> -> vector<8x128xf32>
    %1261 = arith.addf %1258, %1260 : vector<8x128xf32>
    %1262 = arith.mulf %37, %1261 : vector<8x128xf32>
    %1263 = math.tanh %1262 : vector<8x128xf32>
    %1264 = arith.mulf %37, %1263 : vector<8x128xf32>
    %1265 = arith.addf %1264, %40 : vector<8x128xf32>
    %c64_i32_395 = arith.constant 64 : i32
    %1266 = tpu.dynamic_rotate %1265 by %c64_i32_395 dim 1 : vector<8x128xf32>, i32 -> vector<8x128xf32>
    %1267 = arith.mulf %1265, %1266 : vector<8x128xf32>
    %c32_i32_396 = arith.constant 32 : i32
    %1268 = tpu.dynamic_rotate %1267 by %c32_i32_396 dim 1 : vector<8x128xf32>, i32 -> vector<8x128xf32>
    %1269 = arith.mulf %1265, %1238 : vector<8x128xf32>
    %1270 = arith.addf %1268, %1269 : vector<8x128xf32>
    %1271 = math.tanh %1270 : vector<8x128xf32>
    %c64_i32_397 = arith.constant 64 : i32
    %1272 = tpu.dynamic_rotate %1271 by %c64_i32_397 dim 1 : vector<8x128xf32>, i32 -> vector<8x128xf32>
    %1273 = arith.mulf %1265, %1272 : vector<8x128xf32>
    %1274 = tpu.concatenate %1273, %1257 in 1 : vector<8x128xf32>, vector<8x128xf32> -> vector<8x256xf32>
    %1275 = arith.truncf %1274 : vector<8x256xf32> to vector<8x256xbf16>
    %cst_398 = arith.constant dense<0.000000e+00> : vector<8x128xf32>
    %1276 = tpu.matmul %1275, %25, %cst_398 {dimension_numbers = #tpu.dot_dimension_numbers<[1], [0], [0], [1], [0, 0, 1, 1], [], []>} : vector<8x256xbf16>, vector<256x128xbf16>, vector<8x128xf32> -> vector<8x128xf32>
    %1277 = arith.addf %1276, %28 : vector<8x128xf32>
    %1278 = arith.mulf %37, %1277 : vector<8x128xf32>
    %1279 = math.tanh %1278 : vector<8x128xf32>
    %1280 = arith.mulf %37, %1279 : vector<8x128xf32>
    %1281 = arith.addf %1280, %40 : vector<8x128xf32>
    %c64_i32_399 = arith.constant 64 : i32
    %1282 = tpu.dynamic_rotate %1281 by %c64_i32_399 dim 1 : vector<8x128xf32>, i32 -> vector<8x128xf32>
    %1283 = arith.mulf %1281, %1282 : vector<8x128xf32>
    %c32_i32_400 = arith.constant 32 : i32
    %1284 = tpu.dynamic_rotate %1283 by %c32_i32_400 dim 1 : vector<8x128xf32>, i32 -> vector<8x128xf32>
    %1285 = arith.mulf %1281, %1254 : vector<8x128xf32>
    %1286 = arith.addf %1284, %1285 : vector<8x128xf32>
    %1287 = math.tanh %1286 : vector<8x128xf32>
    %c64_i32_401 = arith.constant 64 : i32
    %1288 = tpu.dynamic_rotate %1287 by %c64_i32_401 dim 1 : vector<8x128xf32>, i32 -> vector<8x128xf32>
    %1289 = arith.mulf %1281, %1288 : vector<8x128xf32>
    %c312 = arith.constant 312 : index
    %c0_402 = arith.constant 0 : index
    %1290 = vector.load %arg12[%c312, %c0_402] : memref<336x128xf32, #tpu.memory_space<vmem>>, vector<8x128xf32>
    %1291 = arith.truncf %1273 : vector<8x128xf32> to vector<8x128xbf16>
    %cst_403 = arith.constant dense<0.000000e+00> : vector<8x128xf32>
    %1292 = tpu.matmul %1291, %24, %cst_403 {dimension_numbers = #tpu.dot_dimension_numbers<[1], [0], [0], [1], [0, 0, 1, 1], [], []>} : vector<8x128xbf16>, vector<128x128xbf16>, vector<8x128xf32> -> vector<8x128xf32>
    %1293 = arith.addf %1290, %1292 : vector<8x128xf32>
    %1294 = arith.mulf %37, %1293 : vector<8x128xf32>
    %1295 = math.tanh %1294 : vector<8x128xf32>
    %1296 = arith.mulf %37, %1295 : vector<8x128xf32>
    %1297 = arith.addf %1296, %40 : vector<8x128xf32>
    %c64_i32_404 = arith.constant 64 : i32
    %1298 = tpu.dynamic_rotate %1297 by %c64_i32_404 dim 1 : vector<8x128xf32>, i32 -> vector<8x128xf32>
    %1299 = arith.mulf %1297, %1298 : vector<8x128xf32>
    %c32_i32_405 = arith.constant 32 : i32
    %1300 = tpu.dynamic_rotate %1299 by %c32_i32_405 dim 1 : vector<8x128xf32>, i32 -> vector<8x128xf32>
    %1301 = arith.mulf %1297, %1270 : vector<8x128xf32>
    %1302 = arith.addf %1300, %1301 : vector<8x128xf32>
    %1303 = math.tanh %1302 : vector<8x128xf32>
    %c64_i32_406 = arith.constant 64 : i32
    %1304 = tpu.dynamic_rotate %1303 by %c64_i32_406 dim 1 : vector<8x128xf32>, i32 -> vector<8x128xf32>
    %1305 = arith.mulf %1297, %1304 : vector<8x128xf32>
    %1306 = tpu.concatenate %1305, %1289 in 1 : vector<8x128xf32>, vector<8x128xf32> -> vector<8x256xf32>
    %1307 = arith.truncf %1306 : vector<8x256xf32> to vector<8x256xbf16>
    %cst_407 = arith.constant dense<0.000000e+00> : vector<8x128xf32>
    %1308 = tpu.matmul %1307, %25, %cst_407 {dimension_numbers = #tpu.dot_dimension_numbers<[1], [0], [0], [1], [0, 0, 1, 1], [], []>} : vector<8x256xbf16>, vector<256x128xbf16>, vector<8x128xf32> -> vector<8x128xf32>
    %1309 = arith.addf %1308, %28 : vector<8x128xf32>
    %1310 = arith.mulf %37, %1309 : vector<8x128xf32>
    %1311 = math.tanh %1310 : vector<8x128xf32>
    %1312 = arith.mulf %37, %1311 : vector<8x128xf32>
    %1313 = arith.addf %1312, %40 : vector<8x128xf32>
    %c64_i32_408 = arith.constant 64 : i32
    %1314 = tpu.dynamic_rotate %1313 by %c64_i32_408 dim 1 : vector<8x128xf32>, i32 -> vector<8x128xf32>
    %1315 = arith.mulf %1313, %1314 : vector<8x128xf32>
    %c32_i32_409 = arith.constant 32 : i32
    %1316 = tpu.dynamic_rotate %1315 by %c32_i32_409 dim 1 : vector<8x128xf32>, i32 -> vector<8x128xf32>
    %1317 = arith.mulf %1313, %1286 : vector<8x128xf32>
    %1318 = arith.addf %1316, %1317 : vector<8x128xf32>
    %1319 = math.tanh %1318 : vector<8x128xf32>
    %c64_i32_410 = arith.constant 64 : i32
    %1320 = tpu.dynamic_rotate %1319 by %c64_i32_410 dim 1 : vector<8x128xf32>, i32 -> vector<8x128xf32>
    %1321 = arith.mulf %1313, %1320 : vector<8x128xf32>
    %c320 = arith.constant 320 : index
    %c0_411 = arith.constant 0 : index
    %1322 = vector.load %arg12[%c320, %c0_411] : memref<336x128xf32, #tpu.memory_space<vmem>>, vector<8x128xf32>
    %1323 = arith.truncf %1305 : vector<8x128xf32> to vector<8x128xbf16>
    %cst_412 = arith.constant dense<0.000000e+00> : vector<8x128xf32>
    %1324 = tpu.matmul %1323, %24, %cst_412 {dimension_numbers = #tpu.dot_dimension_numbers<[1], [0], [0], [1], [0, 0, 1, 1], [], []>} : vector<8x128xbf16>, vector<128x128xbf16>, vector<8x128xf32> -> vector<8x128xf32>
    %1325 = arith.addf %1322, %1324 : vector<8x128xf32>
    %1326 = arith.mulf %37, %1325 : vector<8x128xf32>
    %1327 = math.tanh %1326 : vector<8x128xf32>
    %1328 = arith.mulf %37, %1327 : vector<8x128xf32>
    %1329 = arith.addf %1328, %40 : vector<8x128xf32>
    %c64_i32_413 = arith.constant 64 : i32
    %1330 = tpu.dynamic_rotate %1329 by %c64_i32_413 dim 1 : vector<8x128xf32>, i32 -> vector<8x128xf32>
    %1331 = arith.mulf %1329, %1330 : vector<8x128xf32>
    %c32_i32_414 = arith.constant 32 : i32
    %1332 = tpu.dynamic_rotate %1331 by %c32_i32_414 dim 1 : vector<8x128xf32>, i32 -> vector<8x128xf32>
    %1333 = arith.mulf %1329, %1302 : vector<8x128xf32>
    %1334 = arith.addf %1332, %1333 : vector<8x128xf32>
    %1335 = math.tanh %1334 : vector<8x128xf32>
    %c64_i32_415 = arith.constant 64 : i32
    %1336 = tpu.dynamic_rotate %1335 by %c64_i32_415 dim 1 : vector<8x128xf32>, i32 -> vector<8x128xf32>
    %1337 = arith.mulf %1329, %1336 : vector<8x128xf32>
    %1338 = tpu.concatenate %1337, %1321 in 1 : vector<8x128xf32>, vector<8x128xf32> -> vector<8x256xf32>
    %1339 = arith.truncf %1338 : vector<8x256xf32> to vector<8x256xbf16>
    %cst_416 = arith.constant dense<0.000000e+00> : vector<8x128xf32>
    %1340 = tpu.matmul %1339, %25, %cst_416 {dimension_numbers = #tpu.dot_dimension_numbers<[1], [0], [0], [1], [0, 0, 1, 1], [], []>} : vector<8x256xbf16>, vector<256x128xbf16>, vector<8x128xf32> -> vector<8x128xf32>
    %1341 = arith.addf %1340, %28 : vector<8x128xf32>
    %1342 = arith.mulf %37, %1341 : vector<8x128xf32>
    %1343 = math.tanh %1342 : vector<8x128xf32>
    %1344 = arith.mulf %37, %1343 : vector<8x128xf32>
    %1345 = arith.addf %1344, %40 : vector<8x128xf32>
    %c64_i32_417 = arith.constant 64 : i32
    %1346 = tpu.dynamic_rotate %1345 by %c64_i32_417 dim 1 : vector<8x128xf32>, i32 -> vector<8x128xf32>
    %1347 = arith.mulf %1345, %1346 : vector<8x128xf32>
    %c32_i32_418 = arith.constant 32 : i32
    %1348 = tpu.dynamic_rotate %1347 by %c32_i32_418 dim 1 : vector<8x128xf32>, i32 -> vector<8x128xf32>
    %1349 = arith.mulf %1345, %1318 : vector<8x128xf32>
    %1350 = arith.addf %1348, %1349 : vector<8x128xf32>
    %1351 = math.tanh %1350 : vector<8x128xf32>
    %c64_i32_419 = arith.constant 64 : i32
    %1352 = tpu.dynamic_rotate %1351 by %c64_i32_419 dim 1 : vector<8x128xf32>, i32 -> vector<8x128xf32>
    %1353 = arith.mulf %1345, %1352 : vector<8x128xf32>
    %c328 = arith.constant 328 : index
    %c0_420 = arith.constant 0 : index
    %1354 = vector.load %arg12[%c328, %c0_420] : memref<336x128xf32, #tpu.memory_space<vmem>>, vector<8x128xf32>
    %1355 = arith.truncf %1337 : vector<8x128xf32> to vector<8x128xbf16>
    %cst_421 = arith.constant dense<0.000000e+00> : vector<8x128xf32>
    %1356 = tpu.matmul %1355, %24, %cst_421 {dimension_numbers = #tpu.dot_dimension_numbers<[1], [0], [0], [1], [0, 0, 1, 1], [], []>} : vector<8x128xbf16>, vector<128x128xbf16>, vector<8x128xf32> -> vector<8x128xf32>
    %1357 = arith.addf %1354, %1356 : vector<8x128xf32>
    %1358 = arith.mulf %37, %1357 : vector<8x128xf32>
    %1359 = math.tanh %1358 : vector<8x128xf32>
    %1360 = arith.mulf %37, %1359 : vector<8x128xf32>
    %1361 = arith.addf %1360, %40 : vector<8x128xf32>
    %c64_i32_422 = arith.constant 64 : i32
    %1362 = tpu.dynamic_rotate %1361 by %c64_i32_422 dim 1 : vector<8x128xf32>, i32 -> vector<8x128xf32>
    %1363 = arith.mulf %1361, %1362 : vector<8x128xf32>
    %c32_i32_423 = arith.constant 32 : i32
    %1364 = tpu.dynamic_rotate %1363 by %c32_i32_423 dim 1 : vector<8x128xf32>, i32 -> vector<8x128xf32>
    %1365 = arith.mulf %1361, %1334 : vector<8x128xf32>
    %1366 = arith.addf %1364, %1365 : vector<8x128xf32>
    %1367 = math.tanh %1366 : vector<8x128xf32>
    %c64_i32_424 = arith.constant 64 : i32
    %1368 = tpu.dynamic_rotate %1367 by %c64_i32_424 dim 1 : vector<8x128xf32>, i32 -> vector<8x128xf32>
    %1369 = arith.mulf %1361, %1368 : vector<8x128xf32>
    %1370 = tpu.concatenate %1369, %1353 in 1 : vector<8x128xf32>, vector<8x128xf32> -> vector<8x256xf32>
    %1371 = arith.truncf %1370 : vector<8x256xf32> to vector<8x256xbf16>
    %cst_425 = arith.constant dense<0.000000e+00> : vector<8x128xf32>
    %1372 = tpu.matmul %1371, %25, %cst_425 {dimension_numbers = #tpu.dot_dimension_numbers<[1], [0], [0], [1], [0, 0, 1, 1], [], []>} : vector<8x256xbf16>, vector<256x128xbf16>, vector<8x128xf32> -> vector<8x128xf32>
    %1373 = arith.addf %1372, %28 : vector<8x128xf32>
    %1374 = arith.mulf %37, %1373 : vector<8x128xf32>
    %1375 = math.tanh %1374 : vector<8x128xf32>
    %1376 = arith.mulf %37, %1375 : vector<8x128xf32>
    %1377 = arith.addf %1376, %40 : vector<8x128xf32>
    %c64_i32_426 = arith.constant 64 : i32
    %1378 = tpu.dynamic_rotate %1377 by %c64_i32_426 dim 1 : vector<8x128xf32>, i32 -> vector<8x128xf32>
    %1379 = arith.mulf %1377, %1378 : vector<8x128xf32>
    %c32_i32_427 = arith.constant 32 : i32
    %1380 = tpu.dynamic_rotate %1379 by %c32_i32_427 dim 1 : vector<8x128xf32>, i32 -> vector<8x128xf32>
    %1381 = arith.mulf %1377, %1350 : vector<8x128xf32>
    %1382 = arith.addf %1380, %1381 : vector<8x128xf32>
    %1383 = math.tanh %1382 : vector<8x128xf32>
    %c64_i32_428 = arith.constant 64 : i32
    %1384 = tpu.dynamic_rotate %1383 by %c64_i32_428 dim 1 : vector<8x128xf32>, i32 -> vector<8x128xf32>
    %1385 = arith.mulf %1377, %1384 : vector<8x128xf32>
    %1386 = tpu.concatenate %1369, %1385 in 0 : vector<8x128xf32>, vector<8x128xf32> -> vector<16x128xf32>
    %1387 = tpu.iota {dimensions = array<i32: 0>} : vector<8x16xi32>
    %1388 = tpu.iota {dimensions = array<i32: 1>} : vector<8x16xi32>
    %c2_i32 = arith.constant 2 : i32
    %1389 = vector.broadcast %c2_i32 : i32 to vector<8x16xi32>
    %1390 = arith.muli %1389, %1387 : vector<8x16xi32>
    %c0_i32 = arith.constant 0 : i32
    %1391 = vector.broadcast %c0_i32 : i32 to vector<8x16xi32>
    %1392 = arith.addi %1390, %1391 : vector<8x16xi32>
    %c2_i32_429 = arith.constant 2 : i32
    %1393 = vector.broadcast %c2_i32_429 : i32 to vector<8x16xi32>
    %1394 = arith.cmpi sge, %1392, %1393 : vector<8x16xi32>
    %1395 = arith.extui %1394 : vector<8x16xi1> to vector<8x16xi32>
    %c8_i32 = arith.constant 8 : i32
    %1396 = vector.broadcast %c8_i32 : i32 to vector<8x16xi32>
    %1397 = arith.muli %1395, %1396 : vector<8x16xi32>
    %c2_i32_430 = arith.constant 2 : i32
    %1398 = vector.broadcast %c2_i32_430 : i32 to vector<8x16xi32>
    %1399 = arith.muli %1395, %1398 : vector<8x16xi32>
    %1400 = arith.subi %1392, %1399 : vector<8x16xi32>
    %1401 = arith.addi %1397, %1400 : vector<8x16xi32>
    %1402 = arith.cmpi eq, %1388, %1401 : vector<8x16xi32>
    %c2_i32_431 = arith.constant 2 : i32
    %1403 = vector.broadcast %c2_i32_431 : i32 to vector<8x16xi32>
    %1404 = arith.cmpi slt, %1387, %1403 : vector<8x16xi32>
    %1405 = arith.andi %1402, %1404 : vector<8x16xi1>
    %1406 = arith.extui %1405 : vector<8x16xi1> to vector<8x16xi32>
    %1407 = arith.sitofp %1406 : vector<8x16xi32> to vector<8x16xf32>
    %cst_432 = arith.constant dense<0.000000e+00> : vector<8x128xf32>
    %1408 = tpu.matmul %1407, %1386, %cst_432 {dimension_numbers = #tpu.dot_dimension_numbers<[1], [0], [0], [1], [0, 0, 1, 1], [], []>} : vector<8x16xf32>, vector<16x128xf32>, vector<8x128xf32> -> vector<8x128xf32>
    %c2_i32_433 = arith.constant 2 : i32
    %1409 = vector.broadcast %c2_i32_433 : i32 to vector<8x16xi32>
    %1410 = arith.muli %1409, %1387 : vector<8x16xi32>
    %c1_i32 = arith.constant 1 : i32
    %1411 = vector.broadcast %c1_i32 : i32 to vector<8x16xi32>
    %1412 = arith.addi %1410, %1411 : vector<8x16xi32>
    %c2_i32_434 = arith.constant 2 : i32
    %1413 = vector.broadcast %c2_i32_434 : i32 to vector<8x16xi32>
    %1414 = arith.cmpi sge, %1412, %1413 : vector<8x16xi32>
    %1415 = arith.extui %1414 : vector<8x16xi1> to vector<8x16xi32>
    %c8_i32_435 = arith.constant 8 : i32
    %1416 = vector.broadcast %c8_i32_435 : i32 to vector<8x16xi32>
    %1417 = arith.muli %1415, %1416 : vector<8x16xi32>
    %c2_i32_436 = arith.constant 2 : i32
    %1418 = vector.broadcast %c2_i32_436 : i32 to vector<8x16xi32>
    %1419 = arith.muli %1415, %1418 : vector<8x16xi32>
    %1420 = arith.subi %1412, %1419 : vector<8x16xi32>
    %1421 = arith.addi %1417, %1420 : vector<8x16xi32>
    %1422 = arith.cmpi eq, %1388, %1421 : vector<8x16xi32>
    %c2_i32_437 = arith.constant 2 : i32
    %1423 = vector.broadcast %c2_i32_437 : i32 to vector<8x16xi32>
    %1424 = arith.cmpi slt, %1387, %1423 : vector<8x16xi32>
    %1425 = arith.andi %1422, %1424 : vector<8x16xi1>
    %1426 = arith.extui %1425 : vector<8x16xi1> to vector<8x16xi32>
    %1427 = arith.sitofp %1426 : vector<8x16xi32> to vector<8x16xf32>
    %cst_438 = arith.constant dense<0.000000e+00> : vector<8x128xf32>
    %1428 = tpu.matmul %1427, %1386, %cst_438 {dimension_numbers = #tpu.dot_dimension_numbers<[1], [0], [0], [1], [0, 0, 1, 1], [], []>} : vector<8x16xf32>, vector<16x128xf32>, vector<8x128xf32> -> vector<8x128xf32>
    %1429 = tpu.concatenate %1408, %1428 in 1 : vector<8x128xf32>, vector<8x128xf32> -> vector<8x256xf32>
    %1430 = arith.truncf %1429 : vector<8x256xf32> to vector<8x256xbf16>
    %c0_439 = arith.constant 0 : index
    %c0_440 = arith.constant 0 : index
    %1431 = vector.load %arg5[%c0_439, %c0_440] : memref<256x128xbf16, #tpu.memory_space<vmem>>, vector<256x128xbf16>
    %cst_441 = arith.constant dense<0.000000e+00> : vector<8x128xf32>
    %1432 = tpu.matmul %1430, %1431, %cst_441 {dimension_numbers = #tpu.dot_dimension_numbers<[1], [0], [0], [1], [0, 0, 1, 1], [], []>} : vector<8x256xbf16>, vector<256x128xbf16>, vector<8x128xf32> -> vector<8x128xf32>
    %c0_442 = arith.constant 0 : index
    %c0_443 = arith.constant 0 : index
    %1433 = vector.load %arg6[%c0_442, %c0_443] : memref<1x128xf32, #tpu.memory_space<vmem>>, vector<1x128xf32>
    %1434 = vector.broadcast %1433 : vector<1x128xf32> to vector<8x128xf32>
    %1435 = arith.addf %1432, %1434 : vector<8x128xf32>
    %cst_444 = arith.constant 0.000000e+00 : f32
    %1436 = vector.broadcast %cst_444 : f32 to vector<8x128xf32>
    %1437 = arith.maximumf %1435, %1436 : vector<8x128xf32>
    %1438 = arith.truncf %1437 : vector<8x128xf32> to vector<8x128xbf16>
    %c0_445 = arith.constant 0 : index
    %c0_446 = arith.constant 0 : index
    %1439 = vector.load %arg7[%c0_445, %c0_446] : memref<128x128xbf16, #tpu.memory_space<vmem>>, vector<128x128xbf16>
    %cst_447 = arith.constant dense<0.000000e+00> : vector<8x128xf32>
    %1440 = tpu.matmul %1438, %1439, %cst_447 {dimension_numbers = #tpu.dot_dimension_numbers<[1], [0], [0], [1], [0, 0, 1, 1], [], []>} : vector<8x128xbf16>, vector<128x128xbf16>, vector<8x128xf32> -> vector<8x128xf32>
    %c0_448 = arith.constant 0 : index
    %c0_449 = arith.constant 0 : index
    %1441 = vector.load %arg8[%c0_448, %c0_449] : memref<1x128xf32, #tpu.memory_space<vmem>>, vector<1x128xf32>
    %1442 = vector.broadcast %1441 : vector<1x128xf32> to vector<8x128xf32>
    %1443 = arith.addf %1440, %1442 : vector<8x128xf32>
    %cst_450 = arith.constant 0.000000e+00 : f32
    %1444 = vector.broadcast %cst_450 : f32 to vector<8x128xf32>
    %1445 = arith.maximumf %1443, %1444 : vector<8x128xf32>
    %1446 = arith.truncf %1445 : vector<8x128xf32> to vector<8x128xbf16>
    %c0_451 = arith.constant 0 : index
    %c0_452 = arith.constant 0 : index
    %1447 = vector.load %arg9[%c0_451, %c0_452] : memref<128x128xbf16, #tpu.memory_space<vmem>>, vector<128x128xbf16>
    %cst_453 = arith.constant dense<0.000000e+00> : vector<8x128xf32>
    %1448 = tpu.matmul %1446, %1447, %cst_453 {dimension_numbers = #tpu.dot_dimension_numbers<[1], [0], [0], [1], [0, 0, 1, 1], [], []>} : vector<8x128xbf16>, vector<128x128xbf16>, vector<8x128xf32> -> vector<8x128xf32>
    %c0_454 = arith.constant 0 : index
    %c0_455 = arith.constant 0 : index
    %1449 = vector.load %arg10[%c0_454, %c0_455] : memref<1x128xf32, #tpu.memory_space<vmem>>, vector<1x128xf32>
    %1450 = vector.broadcast %1449 : vector<1x128xf32> to vector<8x128xf32>
    %1451 = arith.addf %1448, %1450 : vector<8x128xf32>
    %c0_456 = arith.constant 0 : index
    %c0_457 = arith.constant 0 : index
    %1452 = vector.load %arg11[%c0_456, %c0_457] : memref<8x128xf32, #tpu.memory_space<vmem>>, vector<8x128xf32>
    tpu.vector_store %arg11[%c0_456, %c0_457], %1451 {strides = array<i32>} : memref<8x128xf32, #tpu.memory_space<vmem>>, vector<8x128xf32>,
    return
  }
}

</mosaic_0001>

<llo_original>
// kernel: dqn_forward.1
$region0: #{dqn_forward.1}
  #allocation0 [shape = 'u32[]', space=smem, size = 0x4, offset = 0x4, fixed_abs, tag = 'smem constant byte address 0x4 - core index']
  #allocation1 [shape = 'u32[72,128]{1,0:T(1,128)}', space=vmem, size = 0x9000, scoped, tag = 'internal scratch']
  #allocation2 [shape = 'f32[336,128]{1,0:T(8,128)}', space=vmem, size = 0x2a000, scoped, tag = 'scratch operand']
  %s0 = inlined_call_operand.vmem [shape: f32[336,8], index: 0, kind: input, shape index: {}]
  %s1 = inlined_call_operand.vmem [shape: f32[8,128], index: 1, kind: input, shape index: {}]
  %s2 = inlined_call_operand.vmem [shape: bf16[128,128], index: 2, kind: input, shape index: {}]
  %s3 = inlined_call_operand.vmem [shape: f32[1,128], index: 3, kind: input, shape index: {}]
  %s4 = inlined_call_operand.vmem [shape: bf16[256,128], index: 4, kind: input, shape index: {}]
  %s5 = inlined_call_operand.vmem [shape: bf16[256,128], index: 5, kind: input, shape index: {}]
  %s6 = inlined_call_operand.vmem [shape: f32[1,128], index: 6, kind: input, shape index: {}]
  %s7 = inlined_call_operand.vmem [shape: bf16[128,128], index: 7, kind: input, shape index: {}]
  %s8 = inlined_call_operand.vmem [shape: f32[1,128], index: 8, kind: input, shape index: {}]
  %s9 = inlined_call_operand.vmem [shape: bf16[128,128], index: 9, kind: input, shape index: {}]
  %s10 = inlined_call_operand.vmem [shape: f32[1,128], index: 10, kind: input, shape index: {}]
  %s11 = inlined_call_operand.vmem [shape: f32[8,128], index: 11, kind: output, shape index: {}]
  %s12 = sld [smem:[#allocation0]]
  $region54: #{dqn_forward.1} parent=0
    _
  %s14 = ssub.s32 1, %s12
  %s15 = scalar_select 0, %s14, %s12
  // Predicated region
  $region2: #{dqn_forward.1} parent=0 // pred_check
    _
  $region3: #{dqn_forward.1} parent=0 // pred_check_branch
    %17 = sbr.rel (0) target = $region5
  $region4: #{dqn_forward.1} parent=0 // pred_region
    _
  $region5: #{dqn_forward.1} parent=0 // pred_fallthru
    _
  // Predicated region
  $region6: #{dqn_forward.1} parent=0 // pred_check
    _
  $region7: #{dqn_forward.1} parent=0 // pred_check_branch
    %19 = sbr.rel (0) target = $region9
  $region8: #{dqn_forward.1} parent=0 // pred_region
    _
  $region9: #{dqn_forward.1} parent=0 // pred_fallthru
    _
  // Predicated region
  $region10: #{dqn_forward.1} parent=0 // pred_check
    _
  $region11: #{dqn_forward.1} parent=0 // pred_check_branch
    %21 = sbr.rel (0) target = $region13
  $region12: #{dqn_forward.1} parent=0 // pred_region
    _
  $region13: #{dqn_forward.1} parent=0 // pred_fallthru
    _
  // Predicated region
  $region14: #{dqn_forward.1} parent=0 // pred_check
    _
  $region15: #{dqn_forward.1} parent=0 // pred_check_branch
    %23 = sbr.rel (0) target = $region17
  $region16: #{dqn_forward.1} parent=0 // pred_region
    _
  $region17: #{dqn_forward.1} parent=0 // pred_fallthru
    _
  // Predicated region
  $region18: #{dqn_forward.1} parent=0 // pred_check
    _
  $region19: #{dqn_forward.1} parent=0 // pred_check_branch
    %25 = sbr.rel (0) target = $region21
  $region20: #{dqn_forward.1} parent=0 // pred_region
    _
  $region21: #{dqn_forward.1} parent=0 // pred_fallthru
    _
  // Predicated region
  $region22: #{dqn_forward.1} parent=0 // pred_check
    _
  $region23: #{dqn_forward.1} parent=0 // pred_check_branch
    %27 = sbr.rel (0) target = $region25
  $region24: #{dqn_forward.1} parent=0 // pred_region
    _
  $region25: #{dqn_forward.1} parent=0 // pred_fallthru
    _
  // Predicated region
  $region26: #{dqn_forward.1} parent=0 // pred_check
    _
  $region27: #{dqn_forward.1} parent=0 // pred_check_branch
    %29 = sbr.rel (0) target = $region29
  $region28: #{dqn_forward.1} parent=0 // pred_region
    _
  $region29: #{dqn_forward.1} parent=0 // pred_fallthru
    _
  // Predicated region
  $region30: #{dqn_forward.1} parent=0 // pred_check
    _
  $region31: #{dqn_forward.1} parent=0 // pred_check_branch
    %31 = sbr.rel (0) target = $region33
  $region32: #{dqn_forward.1} parent=0 // pred_region
    _
  $region33: #{dqn_forward.1} parent=0 // pred_fallthru
    _
  // Predicated region
  $region34: #{dqn_forward.1} parent=0 // pred_check
    _
  $region35: #{dqn_forward.1} parent=0 // pred_check_branch
    %33 = sbr.rel (0) target = $region37
  $region36: #{dqn_forward.1} parent=0 // pred_region
    _
  $region37: #{dqn_forward.1} parent=0 // pred_fallthru
    _
  // Predicated region
  $region38: #{dqn_forward.1} parent=0 // pred_check
    _
  $region39: #{dqn_forward.1} parent=0 // pred_check_branch
    %35 = sbr.rel (0) target = $region41
  $region40: #{dqn_forward.1} parent=0 // pred_region
    _
  $region41: #{dqn_forward.1} parent=0 // pred_fallthru
    _
  // Predicated region
  $region42: #{dqn_forward.1} parent=0 // pred_check
    _
  $region43: #{dqn_forward.1} parent=0 // pred_check_branch
    %37 = sbr.rel (0) target = $region45
  $region44: #{dqn_forward.1} parent=0 // pred_region
    _
  $region45: #{dqn_forward.1} parent=0 // pred_fallthru
    _
  %v39 = vld [vmem:[%s0] sm:$0xff]
  %v40 = vld [vmem:[%s0 + $0x8] sm:$0xff]
  %v41 = vld [vmem:[%s0 + $0x10] sm:$0xff]
  %v42 = vld [vmem:[%s0 + $0x18] sm:$0xff]
  %v43 = vld [vmem:[%s0 + $0x20] sm:$0xff]
  %v44 = vld [vmem:[%s0 + $0x28] sm:$0xff]
  %v45 = vld [vmem:[%s0 + $0x30] sm:$0xff]
  %v46 = vld [vmem:[%s1] sm:$0xff]
  %vm47 = vcmask 64512
  %v49 = vsel %vm47, %v39, 0
  %v52 = vsel %vm47, %v40, 0
  %v55 = vsel %vm47, %v41, 0
  %v58 = vsel %vm47, %v42, 0
  %v61 = vsel %vm47, %v43, 0
  %v64 = vsel %vm47, %v44, 0
  %v67 = vsel %vm47, %v45, 0
  %69 = vmatpush.msra.mxu0 0.0
  %70 = vmatpush.msra.mxu0 0.0
  %71 = vmatpush.msra.mxu0 0.0
  %72 = vmatpush.msra.mxu0 0.0
  %73 = vmatpush.msra.mxu0 0.0
  %74 = vmatpush.msra.mxu0 0.0
  %75 = vmatpush.msra.mxu0 0.0
  %76 = vmatpush.msra.mxu0 0.0
  %77 = vmatpush.msra.mxu0 0.0
  %78 = vmatpush.msra.mxu0 0.0
  %79 = vmatpush.msra.mxu0 0.0
  %80 = vmatpush.msra.mxu0 0.0
  %81 = vmatpush.msra.mxu0 0.0
  %82 = vmatpush.msra.mxu0 0.0
  %83 = vmatpush.msra.mxu0 0.0
  %84 = vmatpush.msra.mxu0 %v46
  %85 = vmatmul.f32.gmra.mxu0 %v49
  %v86 = vpop.f32.mrf.mxu0
  %v87 = vadd.f32 0.0, %v86
  %88 = vmatmul.f32.gmra.mxu0 %v52
  %v89 = vpop.f32.mrf.mxu0
  %v90 = vadd.f32 0.0, %v89
  %91 = vmatmul.f32.gmra.mxu0 %v55
  %v92 = vpop.f32.mrf.mxu0
  %v93 = vadd.f32 0.0, %v92
  %94 = vmatmul.f32.gmra.mxu0 %v58
  %v95 = vpop.f32.mrf.mxu0
  %v96 = vadd.f32 0.0, %v95
  %97 = vmatmul.f32.gmra.mxu0 %v61
  %v98 = vpop.f32.mrf.mxu0
  %v99 = vadd.f32 0.0, %v98
  %100 = vmatmul.f32.gmra.mxu0 %v64
  %v101 = vpop.f32.mrf.mxu0
  %v102 = vadd.f32 0.0, %v101
  %103 = vmatmul.f32.gmra.mxu0 %v67
  %v104 = vpop.f32.mrf.mxu0
  %v105 = vadd.f32 0.0, %v104
  %106 = vdwg.mxu0
  %107 = vst [vmem:[#allocation2] sm:$0xff] %v87
  %108 = vst [vmem:[#allocation2 + $0x8] sm:$0xff] %v90
  %109 = vst [vmem:[#allocation2 + $0x10] sm:$0xff] %v93
  %110 = vst [vmem:[#allocation2 + $0x18] sm:$0xff] %v96
  %111 = vst [vmem:[#allocation2 + $0x20] sm:$0xff] %v99
  %112 = vst [vmem:[#allocation2 + $0x28] sm:$0xff] %v102
  %113 = vst [vmem:[#allocation2 + $0x30] sm:$0xff] %v105
  %v114 = vld [vmem:[%s0 + $0x38] sm:$0xff]
  %v115 = vld [vmem:[%s0 + $0x40] sm:$0xff]
  %v116 = vld [vmem:[%s0 + $0x48] sm:$0xff]
  %v117 = vld [vmem:[%s0 + $0x50] sm:$0xff]
  %v118 = vld [vmem:[%s0 + $0x58] sm:$0xff]
  %v119 = vld [vmem:[%s0 + $0x60] sm:$0xff]
  %v120 = vld [vmem:[%s0 + $0x68] sm:$0xff]
  %v121 = vld [vmem:[%s1] sm:$0xff]
  %v123 = vsel %vm47, %v114, 0
  %v126 = vsel %vm47, %v115, 0
  %v129 = vsel %vm47, %v116, 0
  %v132 = vsel %vm47, %v117, 0
  %v135 = vsel %vm47, %v118, 0
  %v138 = vsel %vm47, %v119, 0
  %v141 = vsel %vm47, %v120, 0
  %143 = vmatpush.msra.mxu0 0.0
  %144 = vmatpush.msra.mxu0 0.0
  %145 = vmatpush.msra.mxu0 0.0
  %146 = vmatpush.msra.mxu0 0.0
  %147 = vmatpush.msra.mxu0 0.0
  %148 = vmatpush.msra.mxu0 0.0
  %149 = vmatpush.msra.mxu0 0.0
  %150 = vmatpush.msra.mxu0 0.0
  %151 = vmatpush.msra.mxu0 0.0
  %152 = vmatpush.msra.mxu0 0.0
  %153 = vmatpush.msra.mxu0 0.0
  %154 = vmatpush.msra.mxu0 0.0
  %155 = vmatpush.msra.mxu0 0.0
  %156 = vmatpush.msra.mxu0 0.0
  %157 = vmatpush.msra.mxu0 0.0
  %158 = vmatpush.msra.mxu0 %v121
  %159 = vmatmul.f32.gmra.mxu0 %v123
  %v160 = vpop.f32.mrf.mxu0
  %v161 = vadd.f32 0.0, %v160
  %162 = vmatmul.f32.gmra.mxu0 %v126
  %v163 = vpop.f32.mrf.mxu0
  %v164 = vadd.f32 0.0, %v163
  %165 = vmatmul.f32.gmra.mxu0 %v129
  %v166 = vpop.f32.mrf.mxu0
  %v167 = vadd.f32 0.0, %v166
  %168 = vmatmul.f32.gmra.mxu0 %v132
  %v169 = vpop.f32.mrf.mxu0
  %v170 = vadd.f32 0.0, %v169
  %171 = vmatmul.f32.gmra.mxu0 %v135
  %v172 = vpop.f32.mrf.mxu0
  %v173 = vadd.f32 0.0, %v172
  %174 = vmatmul.f32.gmra.mxu0 %v138
  %v175 = vpop.f32.mrf.mxu0
  %v176 = vadd.f32 0.0, %v175
  %177 = vmatmul.f32.gmra.mxu0 %v141
  %v178 = vpop.f32.mrf.mxu0
  %v179 = vadd.f32 0.0, %v178
  %180 = vdwg.mxu0
  %181 = vst [vmem:[#allocation2 + $0x38] sm:$0xff] %v161
  %182 = vst [vmem:[#allocation2 + $0x40] sm:$0xff] %v164
  %183 = vst [vmem:[#allocation2 + $0x48] sm:$0xff] %v167
  %184 = vst [vmem:[#allocation2 + $0x50] sm:$0xff] %v170
  %185 = vst [vmem:[#allocation2 + $0x58] sm:$0xff] %v173
  %186 = vst [vmem:[#allocation2 + $0x60] sm:$0xff] %v176
  %187 = vst [vmem:[#allocation2 + $0x68] sm:$0xff] %v179
  %v188 = vld [vmem:[%s0 + $0x70] sm:$0xff]
  %v189 = vld [vmem:[%s0 + $0x78] sm:$0xff]
  %v190 = vld [vmem:[%s0 + $0x80] sm:$0xff]
  %v191 = vld [vmem:[%s0 + $0x88] sm:$0xff]
  %v192 = vld [vmem:[%s0 + $0x90] sm:$0xff]
  %v193 = vld [vmem:[%s0 + $0x98] sm:$0xff]
  %v194 = vld [vmem:[%s0 + $0xa0] sm:$0xff]
  %v195 = vld [vmem:[%s1] sm:$0xff]
  %v197 = vsel %vm47, %v188, 0
  %v200 = vsel %vm47, %v189, 0
  %v203 = vsel %vm47, %v190, 0
  %v206 = vsel %vm47, %v191, 0
  %v209 = vsel %vm47, %v192, 0
  %v212 = vsel %vm47, %v193, 0
  %v215 = vsel %vm47, %v194, 0
  %217 = vmatpush.msra.mxu0 0.0
  %218 = vmatpush.msra.mxu0 0.0
  %219 = vmatpush.msra.mxu0 0.0
  %220 = vmatpush.msra.mxu0 0.0
  %221 = vmatpush.msra.mxu0 0.0
  %222 = vmatpush.msra.mxu0 0.0
  %223 = vmatpush.msra.mxu0 0.0
  %224 = vmatpush.msra.mxu0 0.0
  %225 = vmatpush.msra.mxu0 0.0
  %226 = vmatpush.msra.mxu0 0.0
  %227 = vmatpush.msra.mxu0 0.0
  %228 = vmatpush.msra.mxu0 0.0
  %229 = vmatpush.msra.mxu0 0.0
  %230 = vmatpush.msra.mxu0 0.0
  %231 = vmatpush.msra.mxu0 0.0
  %232 = vmatpush.msra.mxu0 %v195
  %233 = vmatmul.f32.gmra.mxu0 %v197
  %v234 = vpop.f32.mrf.mxu0
  %v235 = vadd.f32 0.0, %v234
  %236 = vmatmul.f32.gmra.mxu0 %v200
  %v237 = vpop.f32.mrf.mxu0
  %v238 = vadd.f32 0.0, %v237
  %239 = vmatmul.f32.gmra.mxu0 %v203
  %v240 = vpop.f32.mrf.mxu0
  %v241 = vadd.f32 0.0, %v240
  %242 = vmatmul.f32.gmra.mxu0 %v206
  %v243 = vpop.f32.mrf.mxu0
  %v244 = vadd.f32 0.0, %v243
  %245 = vmatmul.f32.gmra.mxu0 %v209
  %v246 = vpop.f32.mrf.mxu0
  %v247 = vadd.f32 0.0, %v246
  %248 = vmatmul.f32.gmra.mxu0 %v212
  %v249 = vpop.f32.mrf.mxu0
  %v250 = vadd.f32 0.0, %v249
  %251 = vmatmul.f32.gmra.mxu0 %v215
  %v252 = vpop.f32.mrf.mxu0
  %v253 = vadd.f32 0.0, %v252
  %254 = vdwg.mxu0
  %255 = vst [vmem:[#allocation2 + $0x70] sm:$0xff] %v235
  %256 = vst [vmem:[#allocation2 + $0x78] sm:$0xff] %v238
  %257 = vst [vmem:[#allocation2 + $0x80] sm:$0xff] %v241
  %258 = vst [vmem:[#allocation2 + $0x88] sm:$0xff] %v244
  %259 = vst [vmem:[#allocation2 + $0x90] sm:$0xff] %v247
  %260 = vst [vmem:[#allocation2 + $0x98] sm:$0xff] %v250
  %261 = vst [vmem:[#allocation2 + $0xa0] sm:$0xff] %v253
  %v262 = vld [vmem:[%s0 + $0xa8] sm:$0xff]
  %v263 = vld [vmem:[%s0 + $0xb0] sm:$0xff]
  %v264 = vld [vmem:[%s0 + $0xb8] sm:$0xff]
  %v265 = vld [vmem:[%s0 + $0xc0] sm:$0xff]
  %v266 = vld [vmem:[%s0 + $0xc8] sm:$0xff]
  %v267 = vld [vmem:[%s0 + $0xd0] sm:$0xff]
  %v268 = vld [vmem:[%s0 + $0xd8] sm:$0xff]
  %v269 = vld [vmem:[%s1] sm:$0xff]
  %v271 = vsel %vm47, %v262, 0
  %v274 = vsel %vm47, %v263, 0
  %v277 = vsel %vm47, %v264, 0
  %v280 = vsel %vm47, %v265, 0
  %v283 = vsel %vm47, %v266, 0
  %v286 = vsel %vm47, %v267, 0
  %v289 = vsel %vm47, %v268, 0
  %291 = vmatpush.msra.mxu0 0.0
  %292 = vmatpush.msra.mxu0 0.0
  %293 = vmatpush.msra.mxu0 0.0
  %294 = vmatpush.msra.mxu0 0.0
  %295 = vmatpush.msra.mxu0 0.0
  %296 = vmatpush.msra.mxu0 0.0
  %297 = vmatpush.msra.mxu0 0.0
  %298 = vmatpush.msra.mxu0 0.0
  %299 = vmatpush.msra.mxu0 0.0
  %300 = vmatpush.msra.mxu0 0.0
  %301 = vmatpush.msra.mxu0 0.0
  %302 = vmatpush.msra.mxu0 0.0
  %303 = vmatpush.msra.mxu0 0.0
  %304 = vmatpush.msra.mxu0 0.0
  %305 = vmatpush.msra.mxu0 0.0
  %306 = vmatpush.msra.mxu0 %v269
  %307 = vmatmul.f32.gmra.mxu0 %v271
  %v308 = vpop.f32.mrf.mxu0
  %v309 = vadd.f32 0.0, %v308
  %310 = vmatmul.f32.gmra.mxu0 %v274
  %v311 = vpop.f32.mrf.mxu0
  %v312 = vadd.f32 0.0, %v311
  %313 = vmatmul.f32.gmra.mxu0 %v277
  %v314 = vpop.f32.mrf.mxu0
  %v315 = vadd.f32 0.0, %v314
  %316 = vmatmul.f32.gmra.mxu0 %v280
  %v317 = vpop.f32.mrf.mxu0
  %v318 = vadd.f32 0.0, %v317
  %319 = vmatmul.f32.gmra.mxu0 %v283
  %v320 = vpop.f32.mrf.mxu0
  %v321 = vadd.f32 0.0, %v320
  %322 = vmatmul.f32.gmra.mxu0 %v286
  %v323 = vpop.f32.mrf.mxu0
  %v324 = vadd.f32 0.0, %v323
  %325 = vmatmul.f32.gmra.mxu0 %v289
  %v326 = vpop.f32.mrf.mxu0
  %v327 = vadd.f32 0.0, %v326
  %328 = vdwg.mxu0
  %329 = vst [vmem:[#allocation2 + $0xa8] sm:$0xff] %v309
  %330 = vst [vmem:[#allocation2 + $0xb0] sm:$0xff] %v312
  %331 = vst [vmem:[#allocation2 + $0xb8] sm:$0xff] %v315
  %332 = vst [vmem:[#allocation2 + $0xc0] sm:$0xff] %v318
  %333 = vst [vmem:[#allocation2 + $0xc8] sm:$0xff] %v321
  %334 = vst [vmem:[#allocation2 + $0xd0] sm:$0xff] %v324
  %335 = vst [vmem:[#allocation2 + $0xd8] sm:$0xff] %v327
  %v336 = vld [vmem:[%s0 + $0xe0] sm:$0xff]
  %v337 = vld [vmem:[%s0 + $0xe8] sm:$0xff]
  %v338 = vld [vmem:[%s0 + $0xf0] sm:$0xff]
  %v339 = vld [vmem:[%s0 + $0xf8] sm:$0xff]
  %v340 = vld [vmem:[%s0 + $0x100] sm:$0xff]
  %v341 = vld [vmem:[%s0 + $0x108] sm:$0xff]
  %v342 = vld [vmem:[%s0 + $0x110] sm:$0xff]
  %v343 = vld [vmem:[%s1] sm:$0xff]
  %v345 = vsel %vm47, %v336, 0
  %v348 = vsel %vm47, %v337, 0
  %v351 = vsel %vm47, %v338, 0
  %v354 = vsel %vm47, %v339, 0
  %v357 = vsel %vm47, %v340, 0
  %v360 = vsel %vm47, %v341, 0
  %v363 = vsel %vm47, %v342, 0
  %365 = vmatpush.msra.mxu0 0.0
  %366 = vmatpush.msra.mxu0 0.0
  %367 = vmatpush.msra.mxu0 0.0
  %368 = vmatpush.msra.mxu0 0.0
  %369 = vmatpush.msra.mxu0 0.0
  %370 = vmatpush.msra.mxu0 0.0
  %371 = vmatpush.msra.mxu0 0.0
  %372 = vmatpush.msra.mxu0 0.0
  %373 = vmatpush.msra.mxu0 0.0
  %374 = vmatpush.msra.mxu0 0.0
  %375 = vmatpush.msra.mxu0 0.0
  %376 = vmatpush.msra.mxu0 0.0
  %377 = vmatpush.msra.mxu0 0.0
  %378 = vmatpush.msra.mxu0 0.0
  %379 = vmatpush.msra.mxu0 0.0
  %380 = vmatpush.msra.mxu0 %v343
  %381 = vmatmul.f32.gmra.mxu0 %v345
  %v382 = vpop.f32.mrf.mxu0
  %v383 = vadd.f32 0.0, %v382
  %384 = vmatmul.f32.gmra.mxu0 %v348
  %v385 = vpop.f32.mrf.mxu0
  %v386 = vadd.f32 0.0, %v385
  %387 = vmatmul.f32.gmra.mxu0 %v351
  %v388 = vpop.f32.mrf.mxu0
  %v389 = vadd.f32 0.0, %v388
  %390 = vmatmul.f32.gmra.mxu0 %v354
  %v391 = vpop.f32.mrf.mxu0
  %v392 = vadd.f32 0.0, %v391
  %393 = vmatmul.f32.gmra.mxu0 %v357
  %v394 = vpop.f32.mrf.mxu0
  %v395 = vadd.f32 0.0, %v394
  %396 = vmatmul.f32.gmra.mxu0 %v360
  %v397 = vpop.f32.mrf.mxu0
  %v398 = vadd.f32 0.0, %v397
  %399 = vmatmul.f32.gmra.mxu0 %v363
  %v400 = vpop.f32.mrf.mxu0
  %v401 = vadd.f32 0.0, %v400
  %402 = vdwg.mxu0
  %403 = vst [vmem:[#allocation2 + $0xe0] sm:$0xff] %v383
  %404 = vst [vmem:[#allocation2 + $0xe8] sm:$0xff] %v386
  %405 = vst [vmem:[#allocation2 + $0xf0] sm:$0xff] %v389
  %406 = vst [vmem:[#allocation2 + $0xf8] sm:$0xff] %v392
  %407 = vst [vmem:[#allocation2 + $0x100] sm:$0xff] %v395
  %408 = vst [vmem:[#allocation2 + $0x108] sm:$0xff] %v398
  %409 = vst [vmem:[#allocation2 + $0x110] sm:$0xff] %v401
  %v410 = vld [vmem:[%s0 + $0x118] sm:$0xff]
  %v411 = vld [vmem:[%s0 + $0x120] sm:$0xff]
  %v412 = vld [vmem:[%s0 + $0x128] sm:$0xff]
  %v413 = vld [vmem:[%s0 + $0x130] sm:$0xff]
  %v414 = vld [vmem:[%s0 + $0x138] sm:$0xff]
  %v415 = vld [vmem:[%s0 + $0x140] sm:$0xff]
  %v416 = vld [vmem:[%s0 + $0x148] sm:$0xff]
  %v417 = vld [vmem:[%s1] sm:$0xff]
  %v419 = vsel %vm47, %v410, 0
  %v422 = vsel %vm47, %v411, 0
  %v425 = vsel %vm47, %v412, 0
  %v428 = vsel %vm47, %v413, 0
  %v431 = vsel %vm47, %v414, 0
  %v434 = vsel %vm47, %v415, 0
  %v437 = vsel %vm47, %v416, 0
  %439 = vmatpush.msra.mxu0 0.0
  %440 = vmatpush.msra.mxu0 0.0
  %441 = vmatpush.msra.mxu0 0.0
  %442 = vmatpush.msra.mxu0 0.0
  %443 = vmatpush.msra.mxu0 0.0
  %444 = vmatpush.msra.mxu0 0.0
  %445 = vmatpush.msra.mxu0 0.0
  %446 = vmatpush.msra.mxu0 0.0
  %447 = vmatpush.msra.mxu0 0.0
  %448 = vmatpush.msra.mxu0 0.0
  %449 = vmatpush.msra.mxu0 0.0
  %450 = vmatpush.msra.mxu0 0.0
  %451 = vmatpush.msra.mxu0 0.0
  %452 = vmatpush.msra.mxu0 0.0
  %453 = vmatpush.msra.mxu0 0.0
  %454 = vmatpush.msra.mxu0 %v417
  %455 = vmatmul.f32.gmra.mxu0 %v419
  %v456 = vpop.f32.mrf.mxu0
  %v457 = vadd.f32 0.0, %v456
  %458 = vmatmul.f32.gmra.mxu0 %v422
  %v459 = vpop.f32.mrf.mxu0
  %v460 = vadd.f32 0.0, %v459
  %461 = vmatmul.f32.gmra.mxu0 %v425
  %v462 = vpop.f32.mrf.mxu0
  %v463 = vadd.f32 0.0, %v462
  %464 = vmatmul.f32.gmra.mxu0 %v428
  %v465 = vpop.f32.mrf.mxu0
  %v466 = vadd.f32 0.0, %v465
  %467 = vmatmul.f32.gmra.mxu0 %v431
  %v468 = vpop.f32.mrf.mxu0
  %v469 = vadd.f32 0.0, %v468
  %470 = vmatmul.f32.gmra.mxu0 %v434
  %v471 = vpop.f32.mrf.mxu0
  %v472 = vadd.f32 0.0, %v471
  %473 = vmatmul.f32.gmra.mxu0 %v437
  %v474 = vpop.f32.mrf.mxu0
  %v475 = vadd.f32 0.0, %v474
  %476 = vdwg.mxu0
  %477 = vst [vmem:[#allocation2 + $0x118] sm:$0xff] %v457
  %478 = vst [vmem:[#allocation2 + $0x120] sm:$0xff] %v460
  %479 = vst [vmem:[#allocation2 + $0x128] sm:$0xff] %v463
  %480 = vst [vmem:[#allocation2 + $0x130] sm:$0xff] %v466
  %481 = vst [vmem:[#allocation2 + $0x138] sm:$0xff] %v469
  %482 = vst [vmem:[#allocation2 + $0x140] sm:$0xff] %v472
  %483 = vst [vmem:[#allocation2 + $0x148] sm:$0xff] %v475
  %v484 = vld [vmem:[%s2] sm:$0xf]
  %v485 = vld [vmem:[%s2 + $0x4] sm:$0xf]
  %v486 = vld [vmem:[%s2 + $0x8] sm:$0xf]
  %v487 = vld [vmem:[%s2 + $0xc] sm:$0xf]
  %v488 = vld [vmem:[%s2 + $0x10] sm:$0xf]
  %v489 = vld [vmem:[%s2 + $0x14] sm:$0xf]
  %v490 = vld [vmem:[%s2 + $0x18] sm:$0xf]
  %v491 = vld [vmem:[%s2 + $0x1c] sm:$0xf]
  %v492 = vld [vmem:[%s2 + $0x20] sm:$0xf]
  %v493 = vld [vmem:[%s2 + $0x24] sm:$0xf]
  %v494 = vld [vmem:[%s2 + $0x28] sm:$0xf]
  %v495 = vld [vmem:[%s2 + $0x2c] sm:$0xf]
  %v496 = vld [vmem:[%s2 + $0x30] sm:$0xf]
  %v497 = vld [vmem:[%s2 + $0x34] sm:$0xf]
  %v498 = vld [vmem:[%s2 + $0x38] sm:$0xf]
  %v499 = vld [vmem:[%s2 + $0x3c] sm:$0xf]
  %v500 = vld [vmem:[%s4] sm:$0xf]
  %v501 = vld [vmem:[%s4 + $0x4] sm:$0xf]
  %v502 = vld [vmem:[%s4 + $0x8] sm:$0xf]
  %v503 = vld [vmem:[%s4 + $0xc] sm:$0xf]
  %v504 = vld [vmem:[%s4 + $0x10] sm:$0xf]
  %v505 = vld [vmem:[%s4 + $0x14] sm:$0xf]
  %v506 = vld [vmem:[%s4 + $0x18] sm:$0xf]
  %v507 = vld [vmem:[%s4 + $0x1c] sm:$0xf]
  %v508 = vld [vmem:[%s4 + $0x20] sm:$0xf]
  %v509 = vld [vmem:[%s4 + $0x24] sm:$0xf]
  %v510 = vld [vmem:[%s4 + $0x28] sm:$0xf]
  %v511 = vld [vmem:[%s4 + $0x2c] sm:$0xf]
  %v512 = vld [vmem:[%s4 + $0x30] sm:$0xf]
  %v513 = vld [vmem:[%s4 + $0x34] sm:$0xf]
  %v514 = vld [vmem:[%s4 + $0x38] sm:$0xf]
  %v515 = vld [vmem:[%s4 + $0x3c] sm:$0xf]
  %v516 = vld [vmem:[%s4 + $0x40] sm:$0xf]
  %v517 = vld [vmem:[%s4 + $0x44] sm:$0xf]
  %v518 = vld [vmem:[%s4 + $0x48] sm:$0xf]
  %v519 = vld [vmem:[%s4 + $0x4c] sm:$0xf]
  %v520 = vld [vmem:[%s4 + $0x50] sm:$0xf]
  %v521 = vld [vmem:[%s4 + $0x54] sm:$0xf]
  %v522 = vld [vmem:[%s4 + $0x58] sm:$0xf]
  %v523 = vld [vmem:[%s4 + $0x5c] sm:$0xf]
  %v524 = vld [vmem:[%s4 + $0x60] sm:$0xf]
  %v525 = vld [vmem:[%s4 + $0x64] sm:$0xf]
  %v526 = vld [vmem:[%s4 + $0x68] sm:$0xf]
  %v527 = vld [vmem:[%s4 + $0x6c] sm:$0xf]
  %v528 = vld [vmem:[%s4 + $0x70] sm:$0xf]
  %v529 = vld [vmem:[%s4 + $0x74] sm:$0xf]
  %v530 = vld [vmem:[%s4 + $0x78] sm:$0xf]
  %v531 = vld [vmem:[%s4 + $0x7c] sm:$0xf]
  %v532 = vld [vmem:[%s3] sm:$0x1]
  %v534 = vperm.slane %v532, 0
  %v536 = vlaneseq
  %v537 = vand.u32 %v536, 127
  %vm538 = vcmp.ge.s32.totalorder %v537, 64
  %vm539 = vcmp.lt.s32.totalorder %v537, 96
  %vm540 = vmand %vm538, %vm539
  %v541 = vsel %vm540, 1.0, 0.5
  %v542 = vsel %vm540, 0.0, 0.5
  %v543 = vld [vmem:[#allocation2] sm:$0xff]
  %v560 = vunpack.c.l.b16 %v484
  %v561 = vunpack.c.l.b16 %v485
  %v562 = vunpack.c.l.b16 %v486
  %v563 = vunpack.c.l.b16 %v487
  %v564 = vunpack.c.l.b16 %v488
  %v565 = vunpack.c.l.b16 %v489
  %v566 = vunpack.c.l.b16 %v490
  %v567 = vunpack.c.l.b16 %v491
  %v568 = vunpack.c.l.b16 %v492
  %v569 = vunpack.c.l.b16 %v493
  %v570 = vunpack.c.l.b16 %v494
  %v571 = vunpack.c.l.b16 %v495
  %v572 = vunpack.c.l.b16 %v496
  %v573 = vunpack.c.l.b16 %v497
  %v574 = vunpack.c.l.b16 %v498
  %v575 = vunpack.c.l.b16 %v499
  %v576 = vpack.c.b16 %v561, %v560
  %v577 = vpack.c.b16 %v563, %v562
  %v578 = vpack.c.b16 %v565, %v564
  %v579 = vpack.c.b16 %v567, %v566
  %v580 = vpack.c.b16 %v569, %v568
  %v581 = vpack.c.b16 %v571, %v570
  %v582 = vpack.c.b16 %v573, %v572
  %v583 = vpack.c.b16 %v575, %v574
  %592 = vmatpush.bf16.msra.mxu0 %v583
  %593 = vmatpush.bf16.msra.mxu0 %v582
  %594 = vmatpush.bf16.msra.mxu0 %v581
  %595 = vmatpush.bf16.msra.mxu0 %v580
  %596 = vmatpush.bf16.msra.mxu0 %v579
  %597 = vmatpush.bf16.msra.mxu0 %v578
  %598 = vmatpush.bf16.msra.mxu0 %v577
  %599 = vmatpush.bf16.msra.mxu0 %v576
  %600 = vmatmul.bf16.gmra.mxu0 0
  %v601 = vpop.f32.mrf.mxu0
  %v602 = vadd.f32 0.0, %v601
  %v603 = vpop.f32.mrf.mxu0
  %604 = vdwg.mxu0
  %v605 = vadd.f32 %v543, %v602
  %v606 = vmul.f32 %v541, %v605
  %v607 = vtanh.pop %v606
  %v608 = vmul.f32 %v541, %v607
  %v609 = vadd.f32 %v608, %v542
  %610 = vrot.lane.b32.xlu0 %v609, 64
  %v611 = vpop.permute.xlu0 %610
  %v612 = vmul.f32 %v609, %v611
  %613 = vrot.lane.b32.xlu0 %v612, 32
  %v614 = vpop.permute.xlu0 %613
  %v615 = vmul.f32 %v609, 0.0
  %v616 = vadd.f32 %v614, %v615
  %v617 = vtanh.pop %v616
  %618 = vrot.lane.b32.xlu0 %v617, 64
  %v619 = vpop.permute.xlu0 %618
  %v620 = vmul.f32 %v609, %v619
  %v621 = vpack.c.bf16 %v620, %v620
  %v622 = vpack.c.bf16 0.0, 0.0
  %v655 = vunpack.c.l.b16 %v500
  %v656 = vunpack.c.l.b16 %v501
  %v657 = vunpack.c.l.b16 %v502
  %v658 = vunpack.c.l.b16 %v503
  %v659 = vunpack.c.l.b16 %v504
  %v660 = vunpack.c.l.b16 %v505
  %v661 = vunpack.c.l.b16 %v506
  %v662 = vunpack.c.l.b16 %v507
  %v663 = vunpack.c.l.b16 %v508
  %v664 = vunpack.c.l.b16 %v509
  %v665 = vunpack.c.l.b16 %v510
  %v666 = vunpack.c.l.b16 %v511
  %v667 = vunpack.c.l.b16 %v512
  %v668 = vunpack.c.l.b16 %v513
  %v669 = vunpack.c.l.b16 %v514
  %v670 = vunpack.c.l.b16 %v515
  %v671 = vunpack.c.l.b16 %v516
  %v672 = vunpack.c.l.b16 %v517
  %v673 = vunpack.c.l.b16 %v518
  %v674 = vunpack.c.l.b16 %v519
  %v675 = vunpack.c.l.b16 %v520
  %v676 = vunpack.c.l.b16 %v521
  %v677 = vunpack.c.l.b16 %v522
  %v678 = vunpack.c.l.b16 %v523
  %v679 = vunpack.c.l.b16 %v524
  %v680 = vunpack.c.l.b16 %v525
  %v681 = vunpack.c.l.b16 %v526
  %v682 = vunpack.c.l.b16 %v527
  %v683 = vunpack.c.l.b16 %v528
  %v684 = vunpack.c.l.b16 %v529
  %v685 = vunpack.c.l.b16 %v530
  %v686 = vunpack.c.l.b16 %v531
  %v687 = vpack.c.b16 %v656, %v655
  %v688 = vpack.c.b16 %v658, %v657
  %v689 = vpack.c.b16 %v660, %v659
  %v690 = vpack.c.b16 %v662, %v661
  %v691 = vpack.c.b16 %v664, %v663
  %v692 = vpack.c.b16 %v666, %v665
  %v693 = vpack.c.b16 %v668, %v667
  %v694 = vpack.c.b16 %v670, %v669
  %v695 = vpack.c.b16 %v672, %v671
  %v696 = vpack.c.b16 %v674, %v673
  %v697 = vpack.c.b16 %v676, %v675
  %v698 = vpack.c.b16 %v678, %v677
  %v699 = vpack.c.b16 %v680, %v679
  %v700 = vpack.c.b16 %v682, %v681
  %v701 = vpack.c.b16 %v684, %v683
  %v702 = vpack.c.b16 %v686, %v685
  %719 = vmatpush.bf16.msra.mxu0 %v694
  %720 = vmatpush.bf16.msra.mxu0 %v693
  %721 = vmatpush.bf16.msra.mxu0 %v692
  %722 = vmatpush.bf16.msra.mxu0 %v691
  %723 = vmatpush.bf16.msra.mxu0 %v690
  %724 = vmatpush.bf16.msra.mxu0 %v689
  %725 = vmatpush.bf16.msra.mxu0 %v688
  %726 = vmatpush.bf16.msra.mxu0 %v687
  %727 = vmatmul.bf16.gmra.mxu0 %v621
  %v728 = vpop.f32.mrf.mxu0
  %v729 = vadd.f32 %v534, %v728
  %v730 = vpop.f32.mrf.mxu0
  %731 = vdwg.mxu0
  %732 = vmatpush.bf16.msra.mxu0 %v702
  %733 = vmatpush.bf16.msra.mxu0 %v701
  %734 = vmatpush.bf16.msra.mxu0 %v700
  %735 = vmatpush.bf16.msra.mxu0 %v699
  %736 = vmatpush.bf16.msra.mxu0 %v698
  %737 = vmatpush.bf16.msra.mxu0 %v697
  %738 = vmatpush.bf16.msra.mxu0 %v696
  %739 = vmatpush.bf16.msra.mxu0 %v695
  %740 = vmatmul.bf16.gmra.mxu0 %v622
  %v741 = vpop.f32.mrf.mxu0
  %v742 = vadd.f32 %v729, %v741
  %v743 = vpop.f32.mrf.mxu0
  %744 = vdwg.mxu0
  %v745 = vmul.f32 %v541, %v742
  %v746 = vtanh.pop %v745
  %v747 = vmul.f32 %v541, %v746
  %v748 = vadd.f32 %v747, %v542
  %749 = vrot.lane.b32.xlu0 %v748, 64
  %v750 = vpop.permute.xlu0 %749
  %v751 = vmul.f32 %v748, %v750
  %752 = vrot.lane.b32.xlu0 %v751, 32
  %v753 = vpop.permute.xlu0 %752
  %v754 = vmul.f32 %v748, 0.0
  %v755 = vadd.f32 %v753, %v754
  %v756 = vtanh.pop %v755
  %757 = vrot.lane.b32.xlu0 %v756, 64
  %v758 = vpop.permute.xlu0 %757
  %v759 = vmul.f32 %v748, %v758
  %v760 = vld [vmem:[#allocation2 + $0x8] sm:$0xff]
  %761 = vmatpush.bf16.msra.mxu0 %v583
  %762 = vmatpush.bf16.msra.mxu0 %v582
  %763 = vmatpush.bf16.msra.mxu0 %v581
  %764 = vmatpush.bf16.msra.mxu0 %v580
  %765 = vmatpush.bf16.msra.mxu0 %v579
  %766 = vmatpush.bf16.msra.mxu0 %v578
  %767 = vmatpush.bf16.msra.mxu0 %v577
  %768 = vmatpush.bf16.msra.mxu0 %v576
  %769 = vmatmul.bf16.gmra.mxu0 %v621
  %v770 = vpop.f32.mrf.mxu0
  %v771 = vadd.f32 0.0, %v770
  %v772 = vpop.f32.mrf.mxu0
  %773 = vdwg.mxu0
  %v774 = vadd.f32 %v760, %v771
  %v775 = vmul.f32 %v541, %v774
  %v776 = vtanh.pop %v775
  %v777 = vmul.f32 %v541, %v776
  %v778 = vadd.f32 %v777, %v542
  %779 = vrot.lane.b32.xlu0 %v778, 64
  %v780 = vpop.permute.xlu0 %779
  %v781 = vmul.f32 %v778, %v780
  %782 = vrot.lane.b32.xlu0 %v781, 32
  %v783 = vpop.permute.xlu0 %782
  %v784 = vmul.f32 %v778, %v616
  %v785 = vadd.f32 %v783, %v784
  %v786 = vtanh.pop %v785
  %787 = vrot.lane.b32.xlu0 %v786, 64
  %v788 = vpop.permute.xlu0 %787
  %v789 = vmul.f32 %v778, %v788
  %v790 = vpack.c.bf16 %v789, %v789
  %v791 = vpack.c.bf16 %v759, %v759
  %792 = vmatpush.bf16.msra.mxu0 %v694
  %793 = vmatpush.bf16.msra.mxu0 %v693
  %794 = vmatpush.bf16.msra.mxu0 %v692
  %795 = vmatpush.bf16.msra.mxu0 %v691
  %796 = vmatpush.bf16.msra.mxu0 %v690
  %797 = vmatpush.bf16.msra.mxu0 %v689
  %798 = vmatpush.bf16.msra.mxu0 %v688
  %799 = vmatpush.bf16.msra.mxu0 %v687
  %800 = vmatmul.bf16.gmra.mxu0 %v790
  %v801 = vpop.f32.mrf.mxu0
  %v802 = vadd.f32 %v534, %v801
  %v803 = vpop.f32.mrf.mxu0
  %804 = vdwg.mxu0
  %805 = vmatpush.bf16.msra.mxu0 %v702
  %806 = vmatpush.bf16.msra.mxu0 %v701
  %807 = vmatpush.bf16.msra.mxu0 %v700
  %808 = vmatpush.bf16.msra.mxu0 %v699
  %809 = vmatpush.bf16.msra.mxu0 %v698
  %810 = vmatpush.bf16.msra.mxu0 %v697
  %811 = vmatpush.bf16.msra.mxu0 %v696
  %812 = vmatpush.bf16.msra.mxu0 %v695
  %813 = vmatmul.bf16.gmra.mxu0 %v791
  %v814 = vpop.f32.mrf.mxu0
  %v815 = vadd.f32 %v802, %v814
  %v816 = vpop.f32.mrf.mxu0
  %817 = vdwg.mxu0
  %v818 = vmul.f32 %v541, %v815
  %v819 = vtanh.pop %v818
  %v820 = vmul.f32 %v541, %v819
  %v821 = vadd.f32 %v820, %v542
  %822 = vrot.lane.b32.xlu0 %v821, 64
  %v823 = vpop.permute.xlu0 %822
  %v824 = vmul.f32 %v821, %v823
  %825 = vrot.lane.b32.xlu0 %v824, 32
  %v826 = vpop.permute.xlu0 %825
  %v827 = vmul.f32 %v821, %v755
  %v828 = vadd.f32 %v826, %v827
  %v829 = vtanh.pop %v828
  %830 = vrot.lane.b32.xlu0 %v829, 64
  %v831 = vpop.permute.xlu0 %830
  %v832 = vmul.f32 %v821, %v831
  %v833 = vld [vmem:[#allocation2 + $0x10] sm:$0xff]
  %834 = vmatpush.bf16.msra.mxu0 %v583
  %835 = vmatpush.bf16.msra.mxu0 %v582
  %836 = vmatpush.bf16.msra.mxu0 %v581
  %837 = vmatpush.bf16.msra.mxu0 %v580
  %838 = vmatpush.bf16.msra.mxu0 %v579
  %839 = vmatpush.bf16.msra.mxu0 %v578
  %840 = vmatpush.bf16.msra.mxu0 %v577
  %841 = vmatpush.bf16.msra.mxu0 %v576
  %842 = vmatmul.bf16.gmra.mxu0 %v790
  %v843 = vpop.f32.mrf.mxu0
  %v844 = vadd.f32 0.0, %v843
  %v845 = vpop.f32.mrf.mxu0
  %846 = vdwg.mxu0
  %v847 = vadd.f32 %v833, %v844
  %v848 = vmul.f32 %v541, %v847
  %v849 = vtanh.pop %v848
  %v850 = vmul.f32 %v541, %v849
  %v851 = vadd.f32 %v850, %v542
  %852 = vrot.lane.b32.xlu0 %v851, 64
  %v853 = vpop.permute.xlu0 %852
  %v854 = vmul.f32 %v851, %v853
  %855 = vrot.lane.b32.xlu0 %v854, 32
  %v856 = vpop.permute.xlu0 %855
  %v857 = vmul.f32 %v851, %v785
  %v858 = vadd.f32 %v856, %v857
  %v859 = vtanh.pop %v858
  %860 = vrot.lane.b32.xlu0 %v859, 64
  %v861 = vpop.permute.xlu0 %860
  %v862 = vmul.f32 %v851, %v861
  %v863 = vpack.c.bf16 %v862, %v862
  %v864 = vpack.c.bf16 %v832, %v832
  %865 = vmatpush.bf16.msra.mxu0 %v694
  %866 = vmatpush.bf16.msra.mxu0 %v693
  %867 = vmatpush.bf16.msra.mxu0 %v692
  %868 = vmatpush.bf16.msra.mxu0 %v691
  %869 = vmatpush.bf16.msra.mxu0 %v690
  %870 = vmatpush.bf16.msra.mxu0 %v689
  %871 = vmatpush.bf16.msra.mxu0 %v688
  %872 = vmatpush.bf16.msra.mxu0 %v687
  %873 = vmatmul.bf16.gmra.mxu0 %v863
  %v874 = vpop.f32.mrf.mxu0
  %v875 = vadd.f32 %v534, %v874
  %v876 = vpop.f32.mrf.mxu0
  %877 = vdwg.mxu0
  %878 = vmatpush.bf16.msra.mxu0 %v702
  %879 = vmatpush.bf16.msra.mxu0 %v701
  %880 = vmatpush.bf16.msra.mxu0 %v700
  %881 = vmatpush.bf16.msra.mxu0 %v699
  %882 = vmatpush.bf16.msra.mxu0 %v698
  %883 = vmatpush.bf16.msra.mxu0 %v697
  %884 = vmatpush.bf16.msra.mxu0 %v696
  %885 = vmatpush.bf16.msra.mxu0 %v695
  %886 = vmatmul.bf16.gmra.mxu0 %v864
  %v887 = vpop.f32.mrf.mxu0
  %v888 = vadd.f32 %v875, %v887
  %v889 = vpop.f32.mrf.mxu0
  %890 = vdwg.mxu0
  %v891 = vmul.f32 %v541, %v888
  %v892 = vtanh.pop %v891
  %v893 = vmul.f32 %v541, %v892
  %v894 = vadd.f32 %v893, %v542
  %895 = vrot.lane.b32.xlu0 %v894, 64
  %v896 = vpop.permute.xlu0 %895
  %v897 = vmul.f32 %v894, %v896
  %898 = vrot.lane.b32.xlu0 %v897, 32
  %v899 = vpop.permute.xlu0 %898
  %v900 = vmul.f32 %v894, %v828
  %v901 = vadd.f32 %v899, %v900
  %v902 = vtanh.pop %v901
  %903 = vrot.lane.b32.xlu0 %v902, 64
  %v904 = vpop.permute.xlu0 %903
  %v905 = vmul.f32 %v894, %v904
  %v906 = vld [vmem:[#allocation2 + $0x18] sm:$0xff]
  %907 = vmatpush.bf16.msra.mxu0 %v583
  %908 = vmatpush.bf16.msra.mxu0 %v582
  %909 = vmatpush.bf16.msra.mxu0 %v581
  %910 = vmatpush.bf16.msra.mxu0 %v580
  %911 = vmatpush.bf16.msra.mxu0 %v579
  %912 = vmatpush.bf16.msra.mxu0 %v578
  %913 = vmatpush.bf16.msra.mxu0 %v577
  %914 = vmatpush.bf16.msra.mxu0 %v576
  %915 = vmatmul.bf16.gmra.mxu0 %v863
  %v916 = vpop.f32.mrf.mxu0
  %v917 = vadd.f32 0.0, %v916
  %v918 = vpop.f32.mrf.mxu0
  %919 = vdwg.mxu0
  %v920 = vadd.f32 %v906, %v917
  %v921 = vmul.f32 %v541, %v920
  %v922 = vtanh.pop %v921
  %v923 = vmul.f32 %v541, %v922
  %v924 = vadd.f32 %v923, %v542
  %925 = vrot.lane.b32.xlu0 %v924, 64
  %v926 = vpop.permute.xlu0 %925
  %v927 = vmul.f32 %v924, %v926
  %928 = vrot.lane.b32.xlu0 %v927, 32
  %v929 = vpop.permute.xlu0 %928
  %v930 = vmul.f32 %v924, %v858
  %v931 = vadd.f32 %v929, %v930
  %v932 = vtanh.pop %v931
  %933 = vrot.lane.b32.xlu0 %v932, 64
  %v934 = vpop.permute.xlu0 %933
  %v935 = vmul.f32 %v924, %v934
  %v936 = vpack.c.bf16 %v935, %v935
  %v937 = vpack.c.bf16 %v905, %v905
  %938 = vmatpush.bf16.msra.mxu0 %v694
  %939 = vmatpush.bf16.msra.mxu0 %v693
  %940 = vmatpush.bf16.msra.mxu0 %v692
  %941 = vmatpush.bf16.msra.mxu0 %v691
  %942 = vmatpush.bf16.msra.mxu0 %v690
  %943 = vmatpush.bf16.msra.mxu0 %v689
  %944 = vmatpush.bf16.msra.mxu0 %v688
  %945 = vmatpush.bf16.msra.mxu0 %v687
  %946 = vmatmul.bf16.gmra.mxu0 %v936
  %v947 = vpop.f32.mrf.mxu0
  %v948 = vadd.f32 %v534, %v947
  %v949 = vpop.f32.mrf.mxu0
  %950 = vdwg.mxu0
  %951 = vmatpush.bf16.msra.mxu0 %v702
  %952 = vmatpush.bf16.msra.mxu0 %v701
  %953 = vmatpush.bf16.msra.mxu0 %v700
  %954 = vmatpush.bf16.msra.mxu0 %v699
  %955 = vmatpush.bf16.msra.mxu0 %v698
  %956 = vmatpush.bf16.msra.mxu0 %v697
  %957 = vmatpush.bf16.msra.mxu0 %v696
  %958 = vmatpush.bf16.msra.mxu0 %v695
  %959 = vmatmul.bf16.gmra.mxu0 %v937
  %v960 = vpop.f32.mrf.mxu0
  %v961 = vadd.f32 %v948, %v960
  %v962 = vpop.f32.mrf.mxu0
  %963 = vdwg.mxu0
  %v964 = vmul.f32 %v541, %v961
  %v965 = vtanh.pop %v964
  %v966 = vmul.f32 %v541, %v965
  %v967 = vadd.f32 %v966, %v542
  %968 = vrot.lane.b32.xlu0 %v967, 64
  %v969 = vpop.permute.xlu0 %968
  %v970 = vmul.f32 %v967, %v969
  %971 = vrot.lane.b32.xlu0 %v970, 32
  %v972 = vpop.permute.xlu0 %971
  %v973 = vmul.f32 %v967, %v901
  %v974 = vadd.f32 %v972, %v973
  %v975 = vtanh.pop %v974
  %976 = vrot.lane.b32.xlu0 %v975, 64
  %v977 = vpop.permute.xlu0 %976
  %v978 = vmul.f32 %v967, %v977
  %v979 = vld [vmem:[#allocation2 + $0x20] sm:$0xff]
  %980 = vmatpush.bf16.msra.mxu0 %v583
  %981 = vmatpush.bf16.msra.mxu0 %v582
  %982 = vmatpush.bf16.msra.mxu0 %v581
  %983 = vmatpush.bf16.msra.mxu0 %v580
  %984 = vmatpush.bf16.msra.mxu0 %v579
  %985 = vmatpush.bf16.msra.mxu0 %v578
  %986 = vmatpush.bf16.msra.mxu0 %v577
  %987 = vmatpush.bf16.msra.mxu0 %v576
  %988 = vmatmul.bf16.gmra.mxu0 %v936
  %v989 = vpop.f32.mrf.mxu0
  %v990 = vadd.f32 0.0, %v989
  %v991 = vpop.f32.mrf.mxu0
  %992 = vdwg.mxu0
  %v993 = vadd.f32 %v979, %v990
  %v994 = vmul.f32 %v541, %v993
  %v995 = vtanh.pop %v994
  %v996 = vmul.f32 %v541, %v995
  %v997 = vadd.f32 %v996, %v542
  %998 = vrot.lane.b32.xlu0 %v997, 64
  %v999 = vpop.permute.xlu0 %998
  %v1000 = vmul.f32 %v997, %v999
  %1001 = vrot.lane.b32.xlu0 %v1000, 32
  %v1002 = vpop.permute.xlu0 %1001
  %v1003 = vmul.f32 %v997, %v931
  %v1004 = vadd.f32 %v1002, %v1003
  %v1005 = vtanh.pop %v1004
  %1006 = vrot.lane.b32.xlu0 %v1005, 64
  %v1007 = vpop.permute.xlu0 %1006
  %v1008 = vmul.f32 %v997, %v1007
  %v1009 = vpack.c.bf16 %v1008, %v1008
  %v1010 = vpack.c.bf16 %v978, %v978
  %1011 = vmatpush.bf16.msra.mxu0 %v694
  %1012 = vmatpush.bf16.msra.mxu0 %v693
  %1013 = vmatpush.bf16.msra.mxu0 %v692
  %1014 = vmatpush.bf16.msra.mxu0 %v691
  %1015 = vmatpush.bf16.msra.mxu0 %v690
  %1016 = vmatpush.bf16.msra.mxu0 %v689
  %1017 = vmatpush.bf16.msra.mxu0 %v688
  %1018 = vmatpush.bf16.msra.mxu0 %v687
  %1019 = vmatmul.bf16.gmra.mxu0 %v1009
  %v1020 = vpop.f32.mrf.mxu0
  %v1021 = vadd.f32 %v534, %v1020
  %v1022 = vpop.f32.mrf.mxu0
  %1023 = vdwg.mxu0
  %1024 = vmatpush.bf16.msra.mxu0 %v702
  %1025 = vmatpush.bf16.msra.mxu0 %v701
  %1026 = vmatpush.bf16.msra.mxu0 %v700
  %1027 = vmatpush.bf16.msra.mxu0 %v699
  %1028 = vmatpush.bf16.msra.mxu0 %v698
  %1029 = vmatpush.bf16.msra.mxu0 %v697
  %1030 = vmatpush.bf16.msra.mxu0 %v696
  %1031 = vmatpush.bf16.msra.mxu0 %v695
  %1032 = vmatmul.bf16.gmra.mxu0 %v1010
  %v1033 = vpop.f32.mrf.mxu0
  %v1034 = vadd.f32 %v1021, %v1033
  %v1035 = vpop.f32.mrf.mxu0
  %1036 = vdwg.mxu0
  %v1037 = vmul.f32 %v541, %v1034
  %v1038 = vtanh.pop %v1037
  %v1039 = vmul.f32 %v541, %v1038
  %v1040 = vadd.f32 %v1039, %v542
  %1041 = vrot.lane.b32.xlu0 %v1040, 64
  %v1042 = vpop.permute.xlu0 %1041
  %v1043 = vmul.f32 %v1040, %v1042
  %1044 = vrot.lane.b32.xlu0 %v1043, 32
  %v1045 = vpop.permute.xlu0 %1044
  %v1046 = vmul.f32 %v1040, %v974
  %v1047 = vadd.f32 %v1045, %v1046
  %v1048 = vtanh.pop %v1047
  %1049 = vrot.lane.b32.xlu0 %v1048, 64
  %v1050 = vpop.permute.xlu0 %1049
  %v1051 = vmul.f32 %v1040, %v1050
  %v1052 = vld [vmem:[#allocation2 + $0x28] sm:$0xff]
  %1053 = vmatpush.bf16.msra.mxu0 %v583
  %1054 = vmatpush.bf16.msra.mxu0 %v582
  %1055 = vmatpush.bf16.msra.mxu0 %v581
  %1056 = vmatpush.bf16.msra.mxu0 %v580
  %1057 = vmatpush.bf16.msra.mxu0 %v579
  %1058 = vmatpush.bf16.msra.mxu0 %v578
  %1059 = vmatpush.bf16.msra.mxu0 %v577
  %1060 = vmatpush.bf16.msra.mxu0 %v576
  %1061 = vmatmul.bf16.gmra.mxu0 %v1009
  %v1062 = vpop.f32.mrf.mxu0
  %v1063 = vadd.f32 0.0, %v1062
  %v1064 = vpop.f32.mrf.mxu0
  %1065 = vdwg.mxu0
  %v1066 = vadd.f32 %v1052, %v1063
  %v1067 = vmul.f32 %v541, %v1066
  %v1068 = vtanh.pop %v1067
  %v1069 = vmul.f32 %v541, %v1068
  %v1070 = vadd.f32 %v1069, %v542
  %1071 = vrot.lane.b32.xlu0 %v1070, 64
  %v1072 = vpop.permute.xlu0 %1071
  %v1073 = vmul.f32 %v1070, %v1072
  %1074 = vrot.lane.b32.xlu0 %v1073, 32
  %v1075 = vpop.permute.xlu0 %1074
  %v1076 = vmul.f32 %v1070, %v1004
  %v1077 = vadd.f32 %v1075, %v1076
  %v1078 = vtanh.pop %v1077
  %1079 = vrot.lane.b32.xlu0 %v1078, 64
  %v1080 = vpop.permute.xlu0 %1079
  %v1081 = vmul.f32 %v1070, %v1080
  %v1082 = vpack.c.bf16 %v1081, %v1081
  %v1083 = vpack.c.bf16 %v1051, %v1051
  %1084 = vmatpush.bf16.msra.mxu0 %v694
  %1085 = vmatpush.bf16.msra.mxu0 %v693
  %1086 = vmatpush.bf16.msra.mxu0 %v692
  %1087 = vmatpush.bf16.msra.mxu0 %v691
  %1088 = vmatpush.bf16.msra.mxu0 %v690
  %1089 = vmatpush.bf16.msra.mxu0 %v689
  %1090 = vmatpush.bf16.msra.mxu0 %v688
  %1091 = vmatpush.bf16.msra.mxu0 %v687
  %1092 = vmatmul.bf16.gmra.mxu0 %v1082
  %v1093 = vpop.f32.mrf.mxu0
  %v1094 = vadd.f32 %v534, %v1093
  %v1095 = vpop.f32.mrf.mxu0
  %1096 = vdwg.mxu0
  %1097 = vmatpush.bf16.msra.mxu0 %v702
  %1098 = vmatpush.bf16.msra.mxu0 %v701
  %1099 = vmatpush.bf16.msra.mxu0 %v700
  %1100 = vmatpush.bf16.msra.mxu0 %v699
  %1101 = vmatpush.bf16.msra.mxu0 %v698
  %1102 = vmatpush.bf16.msra.mxu0 %v697
  %1103 = vmatpush.bf16.msra.mxu0 %v696
  %1104 = vmatpush.bf16.msra.mxu0 %v695
  %1105 = vmatmul.bf16.gmra.mxu0 %v1083
  %v1106 = vpop.f32.mrf.mxu0
  %v1107 = vadd.f32 %v1094, %v1106
  %v1108 = vpop.f32.mrf.mxu0
  %1109 = vdwg.mxu0
  %v1110 = vmul.f32 %v541, %v1107
  %v1111 = vtanh.pop %v1110
  %v1112 = vmul.f32 %v541, %v1111
  %v1113 = vadd.f32 %v1112, %v542
  %1114 = vrot.lane.b32.xlu0 %v1113, 64
  %v1115 = vpop.permute.xlu0 %1114
  %v1116 = vmul.f32 %v1113, %v1115
  %1117 = vrot.lane.b32.xlu0 %v1116, 32
  %v1118 = vpop.permute.xlu0 %1117
  %v1119 = vmul.f32 %v1113, %v1047
  %v1120 = vadd.f32 %v1118, %v1119
  %v1121 = vtanh.pop %v1120
  %1122 = vrot.lane.b32.xlu0 %v1121, 64
  %v1123 = vpop.permute.xlu0 %1122
  %v1124 = vmul.f32 %v1113, %v1123
  %v1125 = vld [vmem:[#allocation2 + $0x30] sm:$0xff]
  %1126 = vmatpush.bf16.msra.mxu0 %v583
  %1127 = vmatpush.bf16.msra.mxu0 %v582
  %1128 = vmatpush.bf16.msra.mxu0 %v581
  %1129 = vmatpush.bf16.msra.mxu0 %v580
  %1130 = vmatpush.bf16.msra.mxu0 %v579
  %1131 = vmatpush.bf16.msra.mxu0 %v578
  %1132 = vmatpush.bf16.msra.mxu0 %v577
  %1133 = vmatpush.bf16.msra.mxu0 %v576
  %1134 = vmatmul.bf16.gmra.mxu0 %v1082
  %v1135 = vpop.f32.mrf.mxu0
  %v1136 = vadd.f32 0.0, %v1135
  %v1137 = vpop.f32.mrf.mxu0
  %1138 = vdwg.mxu0
  %v1139 = vadd.f32 %v1125, %v1136
  %v1140 = vmul.f32 %v541, %v1139
  %v1141 = vtanh.pop %v1140
  %v1142 = vmul.f32 %v541, %v1141
  %v1143 = vadd.f32 %v1142, %v542
  %1144 = vrot.lane.b32.xlu0 %v1143, 64
  %v1145 = vpop.permute.xlu0 %1144
  %v1146 = vmul.f32 %v1143, %v1145
  %1147 = vrot.lane.b32.xlu0 %v1146, 32
  %v1148 = vpop.permute.xlu0 %1147
  %v1149 = vmul.f32 %v1143, %v1077
  %v1150 = vadd.f32 %v1148, %v1149
  %v1151 = vtanh.pop %v1150
  %1152 = vrot.lane.b32.xlu0 %v1151, 64
  %v1153 = vpop.permute.xlu0 %1152
  %v1154 = vmul.f32 %v1143, %v1153
  %v1155 = vpack.c.bf16 %v1154, %v1154
  %v1156 = vpack.c.bf16 %v1124, %v1124
  %1157 = vmatpush.bf16.msra.mxu0 %v694
  %1158 = vmatpush.bf16.msra.mxu0 %v693
  %1159 = vmatpush.bf16.msra.mxu0 %v692
  %1160 = vmatpush.bf16.msra.mxu0 %v691
  %1161 = vmatpush.bf16.msra.mxu0 %v690
  %1162 = vmatpush.bf16.msra.mxu0 %v689
  %1163 = vmatpush.bf16.msra.mxu0 %v688
  %1164 = vmatpush.bf16.msra.mxu0 %v687
  %1165 = vmatmul.bf16.gmra.mxu0 %v1155
  %v1166 = vpop.f32.mrf.mxu0
  %v1167 = vadd.f32 %v534, %v1166
  %v1168 = vpop.f32.mrf.mxu0
  %1169 = vdwg.mxu0
  %1170 = vmatpush.bf16.msra.mxu0 %v702
  %1171 = vmatpush.bf16.msra.mxu0 %v701
  %1172 = vmatpush.bf16.msra.mxu0 %v700
  %1173 = vmatpush.bf16.msra.mxu0 %v699
  %1174 = vmatpush.bf16.msra.mxu0 %v698
  %1175 = vmatpush.bf16.msra.mxu0 %v697
  %1176 = vmatpush.bf16.msra.mxu0 %v696
  %1177 = vmatpush.bf16.msra.mxu0 %v695
  %1178 = vmatmul.bf16.gmra.mxu0 %v1156
  %v1179 = vpop.f32.mrf.mxu0
  %v1180 = vadd.f32 %v1167, %v1179
  %v1181 = vpop.f32.mrf.mxu0
  %1182 = vdwg.mxu0
  %v1183 = vmul.f32 %v541, %v1180
  %v1184 = vtanh.pop %v1183
  %v1185 = vmul.f32 %v541, %v1184
  %v1186 = vadd.f32 %v1185, %v542
  %1187 = vrot.lane.b32.xlu0 %v1186, 64
  %v1188 = vpop.permute.xlu0 %1187
  %v1189 = vmul.f32 %v1186, %v1188
  %1190 = vrot.lane.b32.xlu0 %v1189, 32
  %v1191 = vpop.permute.xlu0 %1190
  %v1192 = vmul.f32 %v1186, %v1120
  %v1193 = vadd.f32 %v1191, %v1192
  %v1194 = vtanh.pop %v1193
  %1195 = vrot.lane.b32.xlu0 %v1194, 64
  %v1196 = vpop.permute.xlu0 %1195
  %v1197 = vmul.f32 %v1186, %v1196
  %v1198 = vld [vmem:[#allocation2 + $0x38] sm:$0xff]
  %1199 = vmatpush.bf16.msra.mxu0 %v583
  %1200 = vmatpush.bf16.msra.mxu0 %v582
  %1201 = vmatpush.bf16.msra.mxu0 %v581
  %1202 = vmatpush.bf16.msra.mxu0 %v580
  %1203 = vmatpush.bf16.msra.mxu0 %v579
  %1204 = vmatpush.bf16.msra.mxu0 %v578
  %1205 = vmatpush.bf16.msra.mxu0 %v577
  %1206 = vmatpush.bf16.msra.mxu0 %v576
  %1207 = vmatmul.bf16.gmra.mxu0 %v1155
  %v1208 = vpop.f32.mrf.mxu0
  %v1209 = vadd.f32 0.0, %v1208
  %v1210 = vpop.f32.mrf.mxu0
  %1211 = vdwg.mxu0
  %v1212 = vadd.f32 %v1198, %v1209
  %v1213 = vmul.f32 %v541, %v1212
  %v1214 = vtanh.pop %v1213
  %v1215 = vmul.f32 %v541, %v1214
  %v1216 = vadd.f32 %v1215, %v542
  %1217 = vrot.lane.b32.xlu0 %v1216, 64
  %v1218 = vpop.permute.xlu0 %1217
  %v1219 = vmul.f32 %v1216, %v1218
  %1220 = vrot.lane.b32.xlu0 %v1219, 32
  %v1221 = vpop.permute.xlu0 %1220
  %v1222 = vmul.f32 %v1216, %v1150
  %v1223 = vadd.f32 %v1221, %v1222
  %v1224 = vtanh.pop %v1223
  %1225 = vrot.lane.b32.xlu0 %v1224, 64
  %v1226 = vpop.permute.xlu0 %1225
  %v1227 = vmul.f32 %v1216, %v1226
  %v1228 = vpack.c.bf16 %v1227, %v1227
  %v1229 = vpack.c.bf16 %v1197, %v1197
  %1230 = vmatpush.bf16.msra.mxu0 %v694
  %1231 = vmatpush.bf16.msra.mxu0 %v693
  %1232 = vmatpush.bf16.msra.mxu0 %v692
  %1233 = vmatpush.bf16.msra.mxu0 %v691
  %1234 = vmatpush.bf16.msra.mxu0 %v690
  %1235 = vmatpush.bf16.msra.mxu0 %v689
  %1236 = vmatpush.bf16.msra.mxu0 %v688
  %1237 = vmatpush.bf16.msra.mxu0 %v687
  %1238 = vmatmul.bf16.gmra.mxu0 %v1228
  %v1239 = vpop.f32.mrf.mxu0
  %v1240 = vadd.f32 %v534, %v1239
  %v1241 = vpop.f32.mrf.mxu0
  %1242 = vdwg.mxu0
  %1243 = vmatpush.bf16.msra.mxu0 %v702
  %1244 = vmatpush.bf16.msra.mxu0 %v701
  %1245 = vmatpush.bf16.msra.mxu0 %v700
  %1246 = vmatpush.bf16.msra.mxu0 %v699
  %1247 = vmatpush.bf16.msra.mxu0 %v698
  %1248 = vmatpush.bf16.msra.mxu0 %v697
  %1249 = vmatpush.bf16.msra.mxu0 %v696
  %1250 = vmatpush.bf16.msra.mxu0 %v695
  %1251 = vmatmul.bf16.gmra.mxu0 %v1229
  %v1252 = vpop.f32.mrf.mxu0
  %v1253 = vadd.f32 %v1240, %v1252
  %v1254 = vpop.f32.mrf.mxu0
  %1255 = vdwg.mxu0
  %v1256 = vmul.f32 %v541, %v1253
  %v1257 = vtanh.pop %v1256
  %v1258 = vmul.f32 %v541, %v1257
  %v1259 = vadd.f32 %v1258, %v542
  %1260 = vrot.lane.b32.xlu0 %v1259, 64
  %v1261 = vpop.permute.xlu0 %1260
  %v1262 = vmul.f32 %v1259, %v1261
  %1263 = vrot.lane.b32.xlu0 %v1262, 32
  %v1264 = vpop.permute.xlu0 %1263
  %v1265 = vmul.f32 %v1259, %v1193
  %v1266 = vadd.f32 %v1264, %v1265
  %v1267 = vtanh.pop %v1266
  %1268 = vrot.lane.b32.xlu0 %v1267, 64
  %v1269 = vpop.permute.xlu0 %1268
  %v1270 = vmul.f32 %v1259, %v1269
  %v1271 = vld [vmem:[#allocation2 + $0x40] sm:$0xff]
  %1272 = vmatpush.bf16.msra.mxu0 %v583
  %1273 = vmatpush.bf16.msra.mxu0 %v582
  %1274 = vmatpush.bf16.msra.mxu0 %v581
  %1275 = vmatpush.bf16.msra.mxu0 %v580
  %1276 = vmatpush.bf16.msra.mxu0 %v579
  %1277 = vmatpush.bf16.msra.mxu0 %v578
  %1278 = vmatpush.bf16.msra.mxu0 %v577
  %1279 = vmatpush.bf16.msra.mxu0 %v576
  %1280 = vmatmul.bf16.gmra.mxu0 %v1228
  %v1281 = vpop.f32.mrf.mxu0
  %v1282 = vadd.f32 0.0, %v1281
  %v1283 = vpop.f32.mrf.mxu0
  %1284 = vdwg.mxu0
  %v1285 = vadd.f32 %v1271, %v1282
  %v1286 = vmul.f32 %v541, %v1285
  %v1287 = vtanh.pop %v1286
  %v1288 = vmul.f32 %v541, %v1287
  %v1289 = vadd.f32 %v1288, %v542
  %1290 = vrot.lane.b32.xlu0 %v1289, 64
  %v1291 = vpop.permute.xlu0 %1290
  %v1292 = vmul.f32 %v1289, %v1291
  %1293 = vrot.lane.b32.xlu0 %v1292, 32
  %v1294 = vpop.permute.xlu0 %1293
  %v1295 = vmul.f32 %v1289, %v1223
  %v1296 = vadd.f32 %v1294, %v1295
  %v1297 = vtanh.pop %v1296
  %1298 = vrot.lane.b32.xlu0 %v1297, 64
  %v1299 = vpop.permute.xlu0 %1298
  %v1300 = vmul.f32 %v1289, %v1299
  %v1301 = vpack.c.bf16 %v1300, %v1300
  %v1302 = vpack.c.bf16 %v1270, %v1270
  %1303 = vmatpush.bf16.msra.mxu0 %v694
  %1304 = vmatpush.bf16.msra.mxu0 %v693
  %1305 = vmatpush.bf16.msra.mxu0 %v692
  %1306 = vmatpush.bf16.msra.mxu0 %v691
  %1307 = vmatpush.bf16.msra.mxu0 %v690
  %1308 = vmatpush.bf16.msra.mxu0 %v689
  %1309 = vmatpush.bf16.msra.mxu0 %v688
  %1310 = vmatpush.bf16.msra.mxu0 %v687
  %1311 = vmatmul.bf16.gmra.mxu0 %v1301
  %v1312 = vpop.f32.mrf.mxu0
  %v1313 = vadd.f32 %v534, %v1312
  %v1314 = vpop.f32.mrf.mxu0
  %1315 = vdwg.mxu0
  %1316 = vmatpush.bf16.msra.mxu0 %v702
  %1317 = vmatpush.bf16.msra.mxu0 %v701
  %1318 = vmatpush.bf16.msra.mxu0 %v700
  %1319 = vmatpush.bf16.msra.mxu0 %v699
  %1320 = vmatpush.bf16.msra.mxu0 %v698
  %1321 = vmatpush.bf16.msra.mxu0 %v697
  %1322 = vmatpush.bf16.msra.mxu0 %v696
  %1323 = vmatpush.bf16.msra.mxu0 %v695
  %1324 = vmatmul.bf16.gmra.mxu0 %v1302
  %v1325 = vpop.f32.mrf.mxu0
  %v1326 = vadd.f32 %v1313, %v1325
  %v1327 = vpop.f32.mrf.mxu0
  %1328 = vdwg.mxu0
  %v1329 = vmul.f32 %v541, %v1326
  %v1330 = vtanh.pop %v1329
  %v1331 = vmul.f32 %v541, %v1330
  %v1332 = vadd.f32 %v1331, %v542
  %1333 = vrot.lane.b32.xlu0 %v1332, 64
  %v1334 = vpop.permute.xlu0 %1333
  %v1335 = vmul.f32 %v1332, %v1334
  %1336 = vrot.lane.b32.xlu0 %v1335, 32
  %v1337 = vpop.permute.xlu0 %1336
  %v1338 = vmul.f32 %v1332, %v1266
  %v1339 = vadd.f32 %v1337, %v1338
  %v1340 = vtanh.pop %v1339
  %1341 = vrot.lane.b32.xlu0 %v1340, 64
  %v1342 = vpop.permute.xlu0 %1341
  %v1343 = vmul.f32 %v1332, %v1342
  %v1344 = vld [vmem:[#allocation2 + $0x48] sm:$0xff]
  %1345 = vmatpush.bf16.msra.mxu0 %v583
  %1346 = vmatpush.bf16.msra.mxu0 %v582
  %1347 = vmatpush.bf16.msra.mxu0 %v581
  %1348 = vmatpush.bf16.msra.mxu0 %v580
  %1349 = vmatpush.bf16.msra.mxu0 %v579
  %1350 = vmatpush.bf16.msra.mxu0 %v578
  %1351 = vmatpush.bf16.msra.mxu0 %v577
  %1352 = vmatpush.bf16.msra.mxu0 %v576
  %1353 = vmatmul.bf16.gmra.mxu0 %v1301
  %v1354 = vpop.f32.mrf.mxu0
  %v1355 = vadd.f32 0.0, %v1354
  %v1356 = vpop.f32.mrf.mxu0
  %1357 = vdwg.mxu0
  %v1358 = vadd.f32 %v1344, %v1355
  %v1359 = vmul.f32 %v541, %v1358
  %v1360 = vtanh.pop %v1359
  %v1361 = vmul.f32 %v541, %v1360
  %v1362 = vadd.f32 %v1361, %v542
  %1363 = vrot.lane.b32.xlu0 %v1362, 64
  %v1364 = vpop.permute.xlu0 %1363
  %v1365 = vmul.f32 %v1362, %v1364
  %1366 = vrot.lane.b32.xlu0 %v1365, 32
  %v1367 = vpop.permute.xlu0 %1366
  %v1368 = vmul.f32 %v1362, %v1296
  %v1369 = vadd.f32 %v1367, %v1368
  %v1370 = vtanh.pop %v1369
  %1371 = vrot.lane.b32.xlu0 %v1370, 64
  %v1372 = vpop.permute.xlu0 %1371
  %v1373 = vmul.f32 %v1362, %v1372
  %v1374 = vpack.c.bf16 %v1373, %v1373
  %v1375 = vpack.c.bf16 %v1343, %v1343
  %1376 = vmatpush.bf16.msra.mxu0 %v694
  %1377 = vmatpush.bf16.msra.mxu0 %v693
  %1378 = vmatpush.bf16.msra.mxu0 %v692
  %1379 = vmatpush.bf16.msra.mxu0 %v691
  %1380 = vmatpush.bf16.msra.mxu0 %v690
  %1381 = vmatpush.bf16.msra.mxu0 %v689
  %1382 = vmatpush.bf16.msra.mxu0 %v688
  %1383 = vmatpush.bf16.msra.mxu0 %v687
  %1384 = vmatmul.bf16.gmra.mxu0 %v1374
  %v1385 = vpop.f32.mrf.mxu0
  %v1386 = vadd.f32 %v534, %v1385
  %v1387 = vpop.f32.mrf.mxu0
  %1388 = vdwg.mxu0
  %1389 = vmatpush.bf16.msra.mxu0 %v702
  %1390 = vmatpush.bf16.msra.mxu0 %v701
  %1391 = vmatpush.bf16.msra.mxu0 %v700
  %1392 = vmatpush.bf16.msra.mxu0 %v699
  %1393 = vmatpush.bf16.msra.mxu0 %v698
  %1394 = vmatpush.bf16.msra.mxu0 %v697
  %1395 = vmatpush.bf16.msra.mxu0 %v696
  %1396 = vmatpush.bf16.msra.mxu0 %v695
  %1397 = vmatmul.bf16.gmra.mxu0 %v1375
  %v1398 = vpop.f32.mrf.mxu0
  %v1399 = vadd.f32 %v1386, %v1398
  %v1400 = vpop.f32.mrf.mxu0
  %1401 = vdwg.mxu0
  %v1402 = vmul.f32 %v541, %v1399
  %v1403 = vtanh.pop %v1402
  %v1404 = vmul.f32 %v541, %v1403
  %v1405 = vadd.f32 %v1404, %v542
  %1406 = vrot.lane.b32.xlu0 %v1405, 64
  %v1407 = vpop.permute.xlu0 %1406
  %v1408 = vmul.f32 %v1405, %v1407
  %1409 = vrot.lane.b32.xlu0 %v1408, 32
  %v1410 = vpop.permute.xlu0 %1409
  %v1411 = vmul.f32 %v1405, %v1339
  %v1412 = vadd.f32 %v1410, %v1411
  %v1413 = vtanh.pop %v1412
  %1414 = vrot.lane.b32.xlu0 %v1413, 64
  %v1415 = vpop.permute.xlu0 %1414
  %v1416 = vmul.f32 %v1405, %v1415
  %v1417 = vld [vmem:[#allocation2 + $0x50] sm:$0xff]
  %1418 = vmatpush.bf16.msra.mxu0 %v583
  %1419 = vmatpush.bf16.msra.mxu0 %v582
  %1420 = vmatpush.bf16.msra.mxu0 %v581
  %1421 = vmatpush.bf16.msra.mxu0 %v580
  %1422 = vmatpush.bf16.msra.mxu0 %v579
  %1423 = vmatpush.bf16.msra.mxu0 %v578
  %1424 = vmatpush.bf16.msra.mxu0 %v577
  %1425 = vmatpush.bf16.msra.mxu0 %v576
  %1426 = vmatmul.bf16.gmra.mxu0 %v1374
  %v1427 = vpop.f32.mrf.mxu0
  %v1428 = vadd.f32 0.0, %v1427
  %v1429 = vpop.f32.mrf.mxu0
  %1430 = vdwg.mxu0
  %v1431 = vadd.f32 %v1417, %v1428
  %v1432 = vmul.f32 %v541, %v1431
  %v1433 = vtanh.pop %v1432
  %v1434 = vmul.f32 %v541, %v1433
  %v1435 = vadd.f32 %v1434, %v542
  %1436 = vrot.lane.b32.xlu0 %v1435, 64
  %v1437 = vpop.permute.xlu0 %1436
  %v1438 = vmul.f32 %v1435, %v1437
  %1439 = vrot.lane.b32.xlu0 %v1438, 32
  %v1440 = vpop.permute.xlu0 %1439
  %v1441 = vmul.f32 %v1435, %v1369
  %v1442 = vadd.f32 %v1440, %v1441
  %v1443 = vtanh.pop %v1442
  %1444 = vrot.lane.b32.xlu0 %v1443, 64
  %v1445 = vpop.permute.xlu0 %1444
  %v1446 = vmul.f32 %v1435, %v1445
  %v1447 = vpack.c.bf16 %v1446, %v1446
  %v1448 = vpack.c.bf16 %v1416, %v1416
  %1449 = vmatpush.bf16.msra.mxu0 %v694
  %1450 = vmatpush.bf16.msra.mxu0 %v693
  %1451 = vmatpush.bf16.msra.mxu0 %v692
  %1452 = vmatpush.bf16.msra.mxu0 %v691
  %1453 = vmatpush.bf16.msra.mxu0 %v690
  %1454 = vmatpush.bf16.msra.mxu0 %v689
  %1455 = vmatpush.bf16.msra.mxu0 %v688
  %1456 = vmatpush.bf16.msra.mxu0 %v687
  %1457 = vmatmul.bf16.gmra.mxu0 %v1447
  %v1458 = vpop.f32.mrf.mxu0
  %v1459 = vadd.f32 %v534, %v1458
  %v1460 = vpop.f32.mrf.mxu0
  %1461 = vdwg.mxu0
  %1462 = vmatpush.bf16.msra.mxu0 %v702
  %1463 = vmatpush.bf16.msra.mxu0 %v701
  %1464 = vmatpush.bf16.msra.mxu0 %v700
  %1465 = vmatpush.bf16.msra.mxu0 %v699
  %1466 = vmatpush.bf16.msra.mxu0 %v698
  %1467 = vmatpush.bf16.msra.mxu0 %v697
  %1468 = vmatpush.bf16.msra.mxu0 %v696
  %1469 = vmatpush.bf16.msra.mxu0 %v695
  %1470 = vmatmul.bf16.gmra.mxu0 %v1448
  %v1471 = vpop.f32.mrf.mxu0
  %v1472 = vadd.f32 %v1459, %v1471
  %v1473 = vpop.f32.mrf.mxu0
  %1474 = vdwg.mxu0
  %v1475 = vmul.f32 %v541, %v1472
  %v1476 = vtanh.pop %v1475
  %v1477 = vmul.f32 %v541, %v1476
  %v1478 = vadd.f32 %v1477, %v542
  %1479 = vrot.lane.b32.xlu0 %v1478, 64
  %v1480 = vpop.permute.xlu0 %1479
  %v1481 = vmul.f32 %v1478, %v1480
  %1482 = vrot.lane.b32.xlu0 %v1481, 32
  %v1483 = vpop.permute.xlu0 %1482
  %v1484 = vmul.f32 %v1478, %v1412
  %v1485 = vadd.f32 %v1483, %v1484
  %v1486 = vtanh.pop %v1485
  %1487 = vrot.lane.b32.xlu0 %v1486, 64
  %v1488 = vpop.permute.xlu0 %1487
  %v1489 = vmul.f32 %v1478, %v1488
  %v1490 = vld [vmem:[#allocation2 + $0x58] sm:$0xff]
  %1491 = vmatpush.bf16.msra.mxu0 %v583
  %1492 = vmatpush.bf16.msra.mxu0 %v582
  %1493 = vmatpush.bf16.msra.mxu0 %v581
  %1494 = vmatpush.bf16.msra.mxu0 %v580
  %1495 = vmatpush.bf16.msra.mxu0 %v579
  %1496 = vmatpush.bf16.msra.mxu0 %v578
  %1497 = vmatpush.bf16.msra.mxu0 %v577
  %1498 = vmatpush.bf16.msra.mxu0 %v576
  %1499 = vmatmul.bf16.gmra.mxu0 %v1447
  %v1500 = vpop.f32.mrf.mxu0
  %v1501 = vadd.f32 0.0, %v1500
  %v1502 = vpop.f32.mrf.mxu0
  %1503 = vdwg.mxu0
  %v1504 = vadd.f32 %v1490, %v1501
  %v1505 = vmul.f32 %v541, %v1504
  %v1506 = vtanh.pop %v1505
  %v1507 = vmul.f32 %v541, %v1506
  %v1508 = vadd.f32 %v1507, %v542
  %1509 = vrot.lane.b32.xlu0 %v1508, 64
  %v1510 = vpop.permute.xlu0 %1509
  %v1511 = vmul.f32 %v1508, %v1510
  %1512 = vrot.lane.b32.xlu0 %v1511, 32
  %v1513 = vpop.permute.xlu0 %1512
  %v1514 = vmul.f32 %v1508, %v1442
  %v1515 = vadd.f32 %v1513, %v1514
  %v1516 = vtanh.pop %v1515
  %1517 = vrot.lane.b32.xlu0 %v1516, 64
  %v1518 = vpop.permute.xlu0 %1517
  %v1519 = vmul.f32 %v1508, %v1518
  %v1520 = vpack.c.bf16 %v1519, %v1519
  %v1521 = vpack.c.bf16 %v1489, %v1489
  %1522 = vmatpush.bf16.msra.mxu0 %v694
  %1523 = vmatpush.bf16.msra.mxu0 %v693
  %1524 = vmatpush.bf16.msra.mxu0 %v692
  %1525 = vmatpush.bf16.msra.mxu0 %v691
  %1526 = vmatpush.bf16.msra.mxu0 %v690
  %1527 = vmatpush.bf16.msra.mxu0 %v689
  %1528 = vmatpush.bf16.msra.mxu0 %v688
  %1529 = vmatpush.bf16.msra.mxu0 %v687
  %1530 = vmatmul.bf16.gmra.mxu0 %v1520
  %v1531 = vpop.f32.mrf.mxu0
  %v1532 = vadd.f32 %v534, %v1531
  %v1533 = vpop.f32.mrf.mxu0
  %1534 = vdwg.mxu0
  %1535 = vmatpush.bf16.msra.mxu0 %v702
  %1536 = vmatpush.bf16.msra.mxu0 %v701
  %1537 = vmatpush.bf16.msra.mxu0 %v700
  %1538 = vmatpush.bf16.msra.mxu0 %v699
  %1539 = vmatpush.bf16.msra.mxu0 %v698
  %1540 = vmatpush.bf16.msra.mxu0 %v697
  %1541 = vmatpush.bf16.msra.mxu0 %v696
  %1542 = vmatpush.bf16.msra.mxu0 %v695
  %1543 = vmatmul.bf16.gmra.mxu0 %v1521
  %v1544 = vpop.f32.mrf.mxu0
  %v1545 = vadd.f32 %v1532, %v1544
  %v1546 = vpop.f32.mrf.mxu0
  %1547 = vdwg.mxu0
  %v1548 = vmul.f32 %v541, %v1545
  %v1549 = vtanh.pop %v1548
  %v1550 = vmul.f32 %v541, %v1549
  %v1551 = vadd.f32 %v1550, %v542
  %1552 = vrot.lane.b32.xlu0 %v1551, 64
  %v1553 = vpop.permute.xlu0 %1552
  %v1554 = vmul.f32 %v1551, %v1553
  %1555 = vrot.lane.b32.xlu0 %v1554, 32
  %v1556 = vpop.permute.xlu0 %1555
  %v1557 = vmul.f32 %v1551, %v1485
  %v1558 = vadd.f32 %v1556, %v1557
  %v1559 = vtanh.pop %v1558
  %1560 = vrot.lane.b32.xlu0 %v1559, 64
  %v1561 = vpop.permute.xlu0 %1560
  %v1562 = vmul.f32 %v1551, %v1561
  %v1563 = vld [vmem:[#allocation2 + $0x60] sm:$0xff]
  %1564 = vmatpush.bf16.msra.mxu0 %v583
  %1565 = vmatpush.bf16.msra.mxu0 %v582
  %1566 = vmatpush.bf16.msra.mxu0 %v581
  %1567 = vmatpush.bf16.msra.mxu0 %v580
  %1568 = vmatpush.bf16.msra.mxu0 %v579
  %1569 = vmatpush.bf16.msra.mxu0 %v578
  %1570 = vmatpush.bf16.msra.mxu0 %v577
  %1571 = vmatpush.bf16.msra.mxu0 %v576
  %1572 = vmatmul.bf16.gmra.mxu0 %v1520
  %v1573 = vpop.f32.mrf.mxu0
  %v1574 = vadd.f32 0.0, %v1573
  %v1575 = vpop.f32.mrf.mxu0
  %1576 = vdwg.mxu0
  %v1577 = vadd.f32 %v1563, %v1574
  %v1578 = vmul.f32 %v541, %v1577
  %v1579 = vtanh.pop %v1578
  %v1580 = vmul.f32 %v541, %v1579
  %v1581 = vadd.f32 %v1580, %v542
  %1582 = vrot.lane.b32.xlu0 %v1581, 64
  %v1583 = vpop.permute.xlu0 %1582
  %v1584 = vmul.f32 %v1581, %v1583
  %1585 = vrot.lane.b32.xlu0 %v1584, 32
  %v1586 = vpop.permute.xlu0 %1585
  %v1587 = vmul.f32 %v1581, %v1515
  %v1588 = vadd.f32 %v1586, %v1587
  %v1589 = vtanh.pop %v1588
  %1590 = vrot.lane.b32.xlu0 %v1589, 64
  %v1591 = vpop.permute.xlu0 %1590
  %v1592 = vmul.f32 %v1581, %v1591
  %v1593 = vpack.c.bf16 %v1592, %v1592
  %v1594 = vpack.c.bf16 %v1562, %v1562
  %1595 = vmatpush.bf16.msra.mxu0 %v694
  %1596 = vmatpush.bf16.msra.mxu0 %v693
  %1597 = vmatpush.bf16.msra.mxu0 %v692
  %1598 = vmatpush.bf16.msra.mxu0 %v691
  %1599 = vmatpush.bf16.msra.mxu0 %v690
  %1600 = vmatpush.bf16.msra.mxu0 %v689
  %1601 = vmatpush.bf16.msra.mxu0 %v688
  %1602 = vmatpush.bf16.msra.mxu0 %v687
  %1603 = vmatmul.bf16.gmra.mxu0 %v1593
  %v1604 = vpop.f32.mrf.mxu0
  %v1605 = vadd.f32 %v534, %v1604
  %v1606 = vpop.f32.mrf.mxu0
  %1607 = vdwg.mxu0
  %1608 = vmatpush.bf16.msra.mxu0 %v702
  %1609 = vmatpush.bf16.msra.mxu0 %v701
  %1610 = vmatpush.bf16.msra.mxu0 %v700
  %1611 = vmatpush.bf16.msra.mxu0 %v699
  %1612 = vmatpush.bf16.msra.mxu0 %v698
  %1613 = vmatpush.bf16.msra.mxu0 %v697
  %1614 = vmatpush.bf16.msra.mxu0 %v696
  %1615 = vmatpush.bf16.msra.mxu0 %v695
  %1616 = vmatmul.bf16.gmra.mxu0 %v1594
  %v1617 = vpop.f32.mrf.mxu0
  %v1618 = vadd.f32 %v1605, %v1617
  %v1619 = vpop.f32.mrf.mxu0
  %1620 = vdwg.mxu0
  %v1621 = vmul.f32 %v541, %v1618
  %v1622 = vtanh.pop %v1621
  %v1623 = vmul.f32 %v541, %v1622
  %v1624 = vadd.f32 %v1623, %v542
  %1625 = vrot.lane.b32.xlu0 %v1624, 64
  %v1626 = vpop.permute.xlu0 %1625
  %v1627 = vmul.f32 %v1624, %v1626
  %1628 = vrot.lane.b32.xlu0 %v1627, 32
  %v1629 = vpop.permute.xlu0 %1628
  %v1630 = vmul.f32 %v1624, %v1558
  %v1631 = vadd.f32 %v1629, %v1630
  %v1632 = vtanh.pop %v1631
  %1633 = vrot.lane.b32.xlu0 %v1632, 64
  %v1634 = vpop.permute.xlu0 %1633
  %v1635 = vmul.f32 %v1624, %v1634
  %v1636 = vld [vmem:[#allocation2 + $0x68] sm:$0xff]
  %1637 = vmatpush.bf16.msra.mxu0 %v583
  %1638 = vmatpush.bf16.msra.mxu0 %v582
  %1639 = vmatpush.bf16.msra.mxu0 %v581
  %1640 = vmatpush.bf16.msra.mxu0 %v580
  %1641 = vmatpush.bf16.msra.mxu0 %v579
  %1642 = vmatpush.bf16.msra.mxu0 %v578
  %1643 = vmatpush.bf16.msra.mxu0 %v577
  %1644 = vmatpush.bf16.msra.mxu0 %v576
  %1645 = vmatmul.bf16.gmra.mxu0 %v1593
  %v1646 = vpop.f32.mrf.mxu0
  %v1647 = vadd.f32 0.0, %v1646
  %v1648 = vpop.f32.mrf.mxu0
  %1649 = vdwg.mxu0
  %v1650 = vadd.f32 %v1636, %v1647
  %v1651 = vmul.f32 %v541, %v1650
  %v1652 = vtanh.pop %v1651
  %v1653 = vmul.f32 %v541, %v1652
  %v1654 = vadd.f32 %v1653, %v542
  %1655 = vrot.lane.b32.xlu0 %v1654, 64
  %v1656 = vpop.permute.xlu0 %1655
  %v1657 = vmul.f32 %v1654, %v1656
  %1658 = vrot.lane.b32.xlu0 %v1657, 32
  %v1659 = vpop.permute.xlu0 %1658
  %v1660 = vmul.f32 %v1654, %v1588
  %v1661 = vadd.f32 %v1659, %v1660
  %v1662 = vtanh.pop %v1661
  %1663 = vrot.lane.b32.xlu0 %v1662, 64
  %v1664 = vpop.permute.xlu0 %1663
  %v1665 = vmul.f32 %v1654, %v1664
  %v1666 = vpack.c.bf16 %v1665, %v1665
  %v1667 = vpack.c.bf16 %v1635, %v1635
  %1668 = vmatpush.bf16.msra.mxu0 %v694
  %1669 = vmatpush.bf16.msra.mxu0 %v693
  %1670 = vmatpush.bf16.msra.mxu0 %v692
  %1671 = vmatpush.bf16.msra.mxu0 %v691
  %1672 = vmatpush.bf16.msra.mxu0 %v690
  %1673 = vmatpush.bf16.msra.mxu0 %v689
  %1674 = vmatpush.bf16.msra.mxu0 %v688
  %1675 = vmatpush.bf16.msra.mxu0 %v687
  %1676 = vmatmul.bf16.gmra.mxu0 %v1666
  %v1677 = vpop.f32.mrf.mxu0
  %v1678 = vadd.f32 %v534, %v1677
  %v1679 = vpop.f32.mrf.mxu0
  %1680 = vdwg.mxu0
  %1681 = vmatpush.bf16.msra.mxu0 %v702
  %1682 = vmatpush.bf16.msra.mxu0 %v701
  %1683 = vmatpush.bf16.msra.mxu0 %v700
  %1684 = vmatpush.bf16.msra.mxu0 %v699
  %1685 = vmatpush.bf16.msra.mxu0 %v698
  %1686 = vmatpush.bf16.msra.mxu0 %v697
  %1687 = vmatpush.bf16.msra.mxu0 %v696
  %1688 = vmatpush.bf16.msra.mxu0 %v695
  %1689 = vmatmul.bf16.gmra.mxu0 %v1667
  %v1690 = vpop.f32.mrf.mxu0
  %v1691 = vadd.f32 %v1678, %v1690
  %v1692 = vpop.f32.mrf.mxu0
  %1693 = vdwg.mxu0
  %v1694 = vmul.f32 %v541, %v1691
  %v1695 = vtanh.pop %v1694
  %v1696 = vmul.f32 %v541, %v1695
  %v1697 = vadd.f32 %v1696, %v542
  %1698 = vrot.lane.b32.xlu0 %v1697, 64
  %v1699 = vpop.permute.xlu0 %1698
  %v1700 = vmul.f32 %v1697, %v1699
  %1701 = vrot.lane.b32.xlu0 %v1700, 32
  %v1702 = vpop.permute.xlu0 %1701
  %v1703 = vmul.f32 %v1697, %v1631
  %v1704 = vadd.f32 %v1702, %v1703
  %v1705 = vtanh.pop %v1704
  %1706 = vrot.lane.b32.xlu0 %v1705, 64
  %v1707 = vpop.permute.xlu0 %1706
  %v1708 = vmul.f32 %v1697, %v1707
  %v1709 = vld [vmem:[#allocation2 + $0x70] sm:$0xff]
  %1710 = vmatpush.bf16.msra.mxu0 %v583
  %1711 = vmatpush.bf16.msra.mxu0 %v582
  %1712 = vmatpush.bf16.msra.mxu0 %v581
  %1713 = vmatpush.bf16.msra.mxu0 %v580
  %1714 = vmatpush.bf16.msra.mxu0 %v579
  %1715 = vmatpush.bf16.msra.mxu0 %v578
  %1716 = vmatpush.bf16.msra.mxu0 %v577
  %1717 = vmatpush.bf16.msra.mxu0 %v576
  %1718 = vmatmul.bf16.gmra.mxu0 %v1666
  %v1719 = vpop.f32.mrf.mxu0
  %v1720 = vadd.f32 0.0, %v1719
  %v1721 = vpop.f32.mrf.mxu0
  %1722 = vdwg.mxu0
  %v1723 = vadd.f32 %v1709, %v1720
  %v1724 = vmul.f32 %v541, %v1723
  %v1725 = vtanh.pop %v1724
  %v1726 = vmul.f32 %v541, %v1725
  %v1727 = vadd.f32 %v1726, %v542
  %1728 = vrot.lane.b32.xlu0 %v1727, 64
  %v1729 = vpop.permute.xlu0 %1728
  %v1730 = vmul.f32 %v1727, %v1729
  %1731 = vrot.lane.b32.xlu0 %v1730, 32
  %v1732 = vpop.permute.xlu0 %1731
  %v1733 = vmul.f32 %v1727, %v1661
  %v1734 = vadd.f32 %v1732, %v1733
  %v1735 = vtanh.pop %v1734
  %1736 = vrot.lane.b32.xlu0 %v1735, 64
  %v1737 = vpop.permute.xlu0 %1736
  %v1738 = vmul.f32 %v1727, %v1737
  %v1739 = vpack.c.bf16 %v1738, %v1738
  %v1740 = vpack.c.bf16 %v1708, %v1708
  %1741 = vmatpush.bf16.msra.mxu0 %v694
  %1742 = vmatpush.bf16.msra.mxu0 %v693
  %1743 = vmatpush.bf16.msra.mxu0 %v692
  %1744 = vmatpush.bf16.msra.mxu0 %v691
  %1745 = vmatpush.bf16.msra.mxu0 %v690
  %1746 = vmatpush.bf16.msra.mxu0 %v689
  %1747 = vmatpush.bf16.msra.mxu0 %v688
  %1748 = vmatpush.bf16.msra.mxu0 %v687
  %1749 = vmatmul.bf16.gmra.mxu0 %v1739
  %v1750 = vpop.f32.mrf.mxu0
  %v1751 = vadd.f32 %v534, %v1750
  %v1752 = vpop.f32.mrf.mxu0
  %1753 = vdwg.mxu0
  %1754 = vmatpush.bf16.msra.mxu0 %v702
  %1755 = vmatpush.bf16.msra.mxu0 %v701
  %1756 = vmatpush.bf16.msra.mxu0 %v700
  %1757 = vmatpush.bf16.msra.mxu0 %v699
  %1758 = vmatpush.bf16.msra.mxu0 %v698
  %1759 = vmatpush.bf16.msra.mxu0 %v697
  %1760 = vmatpush.bf16.msra.mxu0 %v696
  %1761 = vmatpush.bf16.msra.mxu0 %v695
  %1762 = vmatmul.bf16.gmra.mxu0 %v1740
  %v1763 = vpop.f32.mrf.mxu0
  %v1764 = vadd.f32 %v1751, %v1763
  %v1765 = vpop.f32.mrf.mxu0
  %1766 = vdwg.mxu0
  %v1767 = vmul.f32 %v541, %v1764
  %v1768 = vtanh.pop %v1767
  %v1769 = vmul.f32 %v541, %v1768
  %v1770 = vadd.f32 %v1769, %v542
  %1771 = vrot.lane.b32.xlu0 %v1770, 64
  %v1772 = vpop.permute.xlu0 %1771
  %v1773 = vmul.f32 %v1770, %v1772
  %1774 = vrot.lane.b32.xlu0 %v1773, 32
  %v1775 = vpop.permute.xlu0 %1774
  %v1776 = vmul.f32 %v1770, %v1704
  %v1777 = vadd.f32 %v1775, %v1776
  %v1778 = vtanh.pop %v1777
  %1779 = vrot.lane.b32.xlu0 %v1778, 64
  %v1780 = vpop.permute.xlu0 %1779
  %v1781 = vmul.f32 %v1770, %v1780
  %v1782 = vld [vmem:[#allocation2 + $0x78] sm:$0xff]
  %1783 = vmatpush.bf16.msra.mxu0 %v583
  %1784 = vmatpush.bf16.msra.mxu0 %v582
  %1785 = vmatpush.bf16.msra.mxu0 %v581
  %1786 = vmatpush.bf16.msra.mxu0 %v580
  %1787 = vmatpush.bf16.msra.mxu0 %v579
  %1788 = vmatpush.bf16.msra.mxu0 %v578
  %1789 = vmatpush.bf16.msra.mxu0 %v577
  %1790 = vmatpush.bf16.msra.mxu0 %v576
  %1791 = vmatmul.bf16.gmra.mxu0 %v1739
  %v1792 = vpop.f32.mrf.mxu0
  %v1793 = vadd.f32 0.0, %v1792
  %v1794 = vpop.f32.mrf.mxu0
  %1795 = vdwg.mxu0
  %v1796 = vadd.f32 %v1782, %v1793
  %v1797 = vmul.f32 %v541, %v1796
  %v1798 = vtanh.pop %v1797
  %v1799 = vmul.f32 %v541, %v1798
  %v1800 = vadd.f32 %v1799, %v542
  %1801 = vrot.lane.b32.xlu0 %v1800, 64
  %v1802 = vpop.permute.xlu0 %1801
  %v1803 = vmul.f32 %v1800, %v1802
  %1804 = vrot.lane.b32.xlu0 %v1803, 32
  %v1805 = vpop.permute.xlu0 %1804
  %v1806 = vmul.f32 %v1800, %v1734
  %v1807 = vadd.f32 %v1805, %v1806
  %v1808 = vtanh.pop %v1807
  %1809 = vrot.lane.b32.xlu0 %v1808, 64
  %v1810 = vpop.permute.xlu0 %1809
  %v1811 = vmul.f32 %v1800, %v1810
  %v1812 = vpack.c.bf16 %v1811, %v1811
  %v1813 = vpack.c.bf16 %v1781, %v1781
  %1814 = vmatpush.bf16.msra.mxu0 %v694
  %1815 = vmatpush.bf16.msra.mxu0 %v693
  %1816 = vmatpush.bf16.msra.mxu0 %v692
  %1817 = vmatpush.bf16.msra.mxu0 %v691
  %1818 = vmatpush.bf16.msra.mxu0 %v690
  %1819 = vmatpush.bf16.msra.mxu0 %v689
  %1820 = vmatpush.bf16.msra.mxu0 %v688
  %1821 = vmatpush.bf16.msra.mxu0 %v687
  %1822 = vmatmul.bf16.gmra.mxu0 %v1812
  %v1823 = vpop.f32.mrf.mxu0
  %v1824 = vadd.f32 %v534, %v1823
  %v1825 = vpop.f32.mrf.mxu0
  %1826 = vdwg.mxu0
  %1827 = vmatpush.bf16.msra.mxu0 %v702
  %1828 = vmatpush.bf16.msra.mxu0 %v701
  %1829 = vmatpush.bf16.msra.mxu0 %v700
  %1830 = vmatpush.bf16.msra.mxu0 %v699
  %1831 = vmatpush.bf16.msra.mxu0 %v698
  %1832 = vmatpush.bf16.msra.mxu0 %v697
  %1833 = vmatpush.bf16.msra.mxu0 %v696
  %1834 = vmatpush.bf16.msra.mxu0 %v695
  %1835 = vmatmul.bf16.gmra.mxu0 %v1813
  %v1836 = vpop.f32.mrf.mxu0
  %v1837 = vadd.f32 %v1824, %v1836
  %v1838 = vpop.f32.mrf.mxu0
  %1839 = vdwg.mxu0
  %v1840 = vmul.f32 %v541, %v1837
  %v1841 = vtanh.pop %v1840
  %v1842 = vmul.f32 %v541, %v1841
  %v1843 = vadd.f32 %v1842, %v542
  %1844 = vrot.lane.b32.xlu0 %v1843, 64
  %v1845 = vpop.permute.xlu0 %1844
  %v1846 = vmul.f32 %v1843, %v1845
  %1847 = vrot.lane.b32.xlu0 %v1846, 32
  %v1848 = vpop.permute.xlu0 %1847
  %v1849 = vmul.f32 %v1843, %v1777
  %v1850 = vadd.f32 %v1848, %v1849
  %v1851 = vtanh.pop %v1850
  %1852 = vrot.lane.b32.xlu0 %v1851, 64
  %v1853 = vpop.permute.xlu0 %1852
  %v1854 = vmul.f32 %v1843, %v1853
  %v1855 = vld [vmem:[#allocation2 + $0x80] sm:$0xff]
  %1856 = vmatpush.bf16.msra.mxu0 %v583
  %1857 = vmatpush.bf16.msra.mxu0 %v582
  %1858 = vmatpush.bf16.msra.mxu0 %v581
  %1859 = vmatpush.bf16.msra.mxu0 %v580
  %1860 = vmatpush.bf16.msra.mxu0 %v579
  %1861 = vmatpush.bf16.msra.mxu0 %v578
  %1862 = vmatpush.bf16.msra.mxu0 %v577
  %1863 = vmatpush.bf16.msra.mxu0 %v576
  %1864 = vmatmul.bf16.gmra.mxu0 %v1812
  %v1865 = vpop.f32.mrf.mxu0
  %v1866 = vadd.f32 0.0, %v1865
  %v1867 = vpop.f32.mrf.mxu0
  %1868 = vdwg.mxu0
  %v1869 = vadd.f32 %v1855, %v1866
  %v1870 = vmul.f32 %v541, %v1869
  %v1871 = vtanh.pop %v1870
  %v1872 = vmul.f32 %v541, %v1871
  %v1873 = vadd.f32 %v1872, %v542
  %1874 = vrot.lane.b32.xlu0 %v1873, 64
  %v1875 = vpop.permute.xlu0 %1874
  %v1876 = vmul.f32 %v1873, %v1875
  %1877 = vrot.lane.b32.xlu0 %v1876, 32
  %v1878 = vpop.permute.xlu0 %1877
  %v1879 = vmul.f32 %v1873, %v1807
  %v1880 = vadd.f32 %v1878, %v1879
  %v1881 = vtanh.pop %v1880
  %1882 = vrot.lane.b32.xlu0 %v1881, 64
  %v1883 = vpop.permute.xlu0 %1882
  %v1884 = vmul.f32 %v1873, %v1883
  %v1885 = vpack.c.bf16 %v1884, %v1884
  %v1886 = vpack.c.bf16 %v1854, %v1854
  %1887 = vmatpush.bf16.msra.mxu0 %v694
  %1888 = vmatpush.bf16.msra.mxu0 %v693
  %1889 = vmatpush.bf16.msra.mxu0 %v692
  %1890 = vmatpush.bf16.msra.mxu0 %v691
  %1891 = vmatpush.bf16.msra.mxu0 %v690
  %1892 = vmatpush.bf16.msra.mxu0 %v689
  %1893 = vmatpush.bf16.msra.mxu0 %v688
  %1894 = vmatpush.bf16.msra.mxu0 %v687
  %1895 = vmatmul.bf16.gmra.mxu0 %v1885
  %v1896 = vpop.f32.mrf.mxu0
  %v1897 = vadd.f32 %v534, %v1896
  %v1898 = vpop.f32.mrf.mxu0
  %1899 = vdwg.mxu0
  %1900 = vmatpush.bf16.msra.mxu0 %v702
  %1901 = vmatpush.bf16.msra.mxu0 %v701
  %1902 = vmatpush.bf16.msra.mxu0 %v700
  %1903 = vmatpush.bf16.msra.mxu0 %v699
  %1904 = vmatpush.bf16.msra.mxu0 %v698
  %1905 = vmatpush.bf16.msra.mxu0 %v697
  %1906 = vmatpush.bf16.msra.mxu0 %v696
  %1907 = vmatpush.bf16.msra.mxu0 %v695
  %1908 = vmatmul.bf16.gmra.mxu0 %v1886
  %v1909 = vpop.f32.mrf.mxu0
  %v1910 = vadd.f32 %v1897, %v1909
  %v1911 = vpop.f32.mrf.mxu0
  %1912 = vdwg.mxu0
  %v1913 = vmul.f32 %v541, %v1910
  %v1914 = vtanh.pop %v1913
  %v1915 = vmul.f32 %v541, %v1914
  %v1916 = vadd.f32 %v1915, %v542
  %1917 = vrot.lane.b32.xlu0 %v1916, 64
  %v1918 = vpop.permute.xlu0 %1917
  %v1919 = vmul.f32 %v1916, %v1918
  %1920 = vrot.lane.b32.xlu0 %v1919, 32
  %v1921 = vpop.permute.xlu0 %1920
  %v1922 = vmul.f32 %v1916, %v1850
  %v1923 = vadd.f32 %v1921, %v1922
  %v1924 = vtanh.pop %v1923
  %1925 = vrot.lane.b32.xlu0 %v1924, 64
  %v1926 = vpop.permute.xlu0 %1925
  %v1927 = vmul.f32 %v1916, %v1926
  %v1928 = vld [vmem:[#allocation2 + $0x88] sm:$0xff]
  %1929 = vmatpush.bf16.msra.mxu0 %v583
  %1930 = vmatpush.bf16.msra.mxu0 %v582
  %1931 = vmatpush.bf16.msra.mxu0 %v581
  %1932 = vmatpush.bf16.msra.mxu0 %v580
  %1933 = vmatpush.bf16.msra.mxu0 %v579
  %1934 = vmatpush.bf16.msra.mxu0 %v578
  %1935 = vmatpush.bf16.msra.mxu0 %v577
  %1936 = vmatpush.bf16.msra.mxu0 %v576
  %1937 = vmatmul.bf16.gmra.mxu0 %v1885
  %v1938 = vpop.f32.mrf.mxu0
  %v1939 = vadd.f32 0.0, %v1938
  %v1940 = vpop.f32.mrf.mxu0
  %1941 = vdwg.mxu0
  %v1942 = vadd.f32 %v1928, %v1939
  %v1943 = vmul.f32 %v541, %v1942
  %v1944 = vtanh.pop %v1943
  %v1945 = vmul.f32 %v541, %v1944
  %v1946 = vadd.f32 %v1945, %v542
  %1947 = vrot.lane.b32.xlu0 %v1946, 64
  %v1948 = vpop.permute.xlu0 %1947
  %v1949 = vmul.f32 %v1946, %v1948
  %1950 = vrot.lane.b32.xlu0 %v1949, 32
  %v1951 = vpop.permute.xlu0 %1950
  %v1952 = vmul.f32 %v1946, %v1880
  %v1953 = vadd.f32 %v1951, %v1952
  %v1954 = vtanh.pop %v1953
  %1955 = vrot.lane.b32.xlu0 %v1954, 64
  %v1956 = vpop.permute.xlu0 %1955
  %v1957 = vmul.f32 %v1946, %v1956
  %v1958 = vpack.c.bf16 %v1957, %v1957
  %v1959 = vpack.c.bf16 %v1927, %v1927
  %1960 = vmatpush.bf16.msra.mxu0 %v694
  %1961 = vmatpush.bf16.msra.mxu0 %v693
  %1962 = vmatpush.bf16.msra.mxu0 %v692
  %1963 = vmatpush.bf16.msra.mxu0 %v691
  %1964 = vmatpush.bf16.msra.mxu0 %v690
  %1965 = vmatpush.bf16.msra.mxu0 %v689
  %1966 = vmatpush.bf16.msra.mxu0 %v688
  %1967 = vmatpush.bf16.msra.mxu0 %v687
  %1968 = vmatmul.bf16.gmra.mxu0 %v1958
  %v1969 = vpop.f32.mrf.mxu0
  %v1970 = vadd.f32 %v534, %v1969
  %v1971 = vpop.f32.mrf.mxu0
  %1972 = vdwg.mxu0
  %1973 = vmatpush.bf16.msra.mxu0 %v702
  %1974 = vmatpush.bf16.msra.mxu0 %v701
  %1975 = vmatpush.bf16.msra.mxu0 %v700
  %1976 = vmatpush.bf16.msra.mxu0 %v699
  %1977 = vmatpush.bf16.msra.mxu0 %v698
  %1978 = vmatpush.bf16.msra.mxu0 %v697
  %1979 = vmatpush.bf16.msra.mxu0 %v696
  %1980 = vmatpush.bf16.msra.mxu0 %v695
  %1981 = vmatmul.bf16.gmra.mxu0 %v1959
  %v1982 = vpop.f32.mrf.mxu0
  %v1983 = vadd.f32 %v1970, %v1982
  %v1984 = vpop.f32.mrf.mxu0
  %1985 = vdwg.mxu0
  %v1986 = vmul.f32 %v541, %v1983
  %v1987 = vtanh.pop %v1986
  %v1988 = vmul.f32 %v541, %v1987
  %v1989 = vadd.f32 %v1988, %v542
  %1990 = vrot.lane.b32.xlu0 %v1989, 64
  %v1991 = vpop.permute.xlu0 %1990
  %v1992 = vmul.f32 %v1989, %v1991
  %1993 = vrot.lane.b32.xlu0 %v1992, 32
  %v1994 = vpop.permute.xlu0 %1993
  %v1995 = vmul.f32 %v1989, %v1923
  %v1996 = vadd.f32 %v1994, %v1995
  %v1997 = vtanh.pop %v1996
  %1998 = vrot.lane.b32.xlu0 %v1997, 64
  %v1999 = vpop.permute.xlu0 %1998
  %v2000 = vmul.f32 %v1989, %v1999
  %v2001 = vld [vmem:[#allocation2 + $0x90] sm:$0xff]
  %2002 = vmatpush.bf16.msra.mxu0 %v583
  %2003 = vmatpush.bf16.msra.mxu0 %v582
  %2004 = vmatpush.bf16.msra.mxu0 %v581
  %2005 = vmatpush.bf16.msra.mxu0 %v580
  %2006 = vmatpush.bf16.msra.mxu0 %v579
  %2007 = vmatpush.bf16.msra.mxu0 %v578
  %2008 = vmatpush.bf16.msra.mxu0 %v577
  %2009 = vmatpush.bf16.msra.mxu0 %v576
  %2010 = vmatmul.bf16.gmra.mxu0 %v1958
  %v2011 = vpop.f32.mrf.mxu0
  %v2012 = vadd.f32 0.0, %v2011
  %v2013 = vpop.f32.mrf.mxu0
  %2014 = vdwg.mxu0
  %v2015 = vadd.f32 %v2001, %v2012
  %v2016 = vmul.f32 %v541, %v2015
  %v2017 = vtanh.pop %v2016
  %v2018 = vmul.f32 %v541, %v2017
  %v2019 = vadd.f32 %v2018, %v542
  %2020 = vrot.lane.b32.xlu0 %v2019, 64
  %v2021 = vpop.permute.xlu0 %2020
  %v2022 = vmul.f32 %v2019, %v2021
  %2023 = vrot.lane.b32.xlu0 %v2022, 32
  %v2024 = vpop.permute.xlu0 %2023
  %v2025 = vmul.f32 %v2019, %v1953
  %v2026 = vadd.f32 %v2024, %v2025
  %v2027 = vtanh.pop %v2026
  %2028 = vrot.lane.b32.xlu0 %v2027, 64
  %v2029 = vpop.permute.xlu0 %2028
  %v2030 = vmul.f32 %v2019, %v2029
  %v2031 = vpack.c.bf16 %v2030, %v2030
  %v2032 = vpack.c.bf16 %v2000, %v2000
  %2033 = vmatpush.bf16.msra.mxu0 %v694
  %2034 = vmatpush.bf16.msra.mxu0 %v693
  %2035 = vmatpush.bf16.msra.mxu0 %v692
  %2036 = vmatpush.bf16.msra.mxu0 %v691
  %2037 = vmatpush.bf16.msra.mxu0 %v690
  %2038 = vmatpush.bf16.msra.mxu0 %v689
  %2039 = vmatpush.bf16.msra.mxu0 %v688
  %2040 = vmatpush.bf16.msra.mxu0 %v687
  %2041 = vmatmul.bf16.gmra.mxu0 %v2031
  %v2042 = vpop.f32.mrf.mxu0
  %v2043 = vadd.f32 %v534, %v2042
  %v2044 = vpop.f32.mrf.mxu0
  %2045 = vdwg.mxu0
  %2046 = vmatpush.bf16.msra.mxu0 %v702
  %2047 = vmatpush.bf16.msra.mxu0 %v701
  %2048 = vmatpush.bf16.msra.mxu0 %v700
  %2049 = vmatpush.bf16.msra.mxu0 %v699
  %2050 = vmatpush.bf16.msra.mxu0 %v698
  %2051 = vmatpush.bf16.msra.mxu0 %v697
  %2052 = vmatpush.bf16.msra.mxu0 %v696
  %2053 = vmatpush.bf16.msra.mxu0 %v695
  %2054 = vmatmul.bf16.gmra.mxu0 %v2032
  %v2055 = vpop.f32.mrf.mxu0
  %v2056 = vadd.f32 %v2043, %v2055
  %v2057 = vpop.f32.mrf.mxu0
  %2058 = vdwg.mxu0
  %v2059 = vmul.f32 %v541, %v2056
  %v2060 = vtanh.pop %v2059
  %v2061 = vmul.f32 %v541, %v2060
  %v2062 = vadd.f32 %v2061, %v542
  %2063 = vrot.lane.b32.xlu0 %v2062, 64
  %v2064 = vpop.permute.xlu0 %2063
  %v2065 = vmul.f32 %v2062, %v2064
  %2066 = vrot.lane.b32.xlu0 %v2065, 32
  %v2067 = vpop.permute.xlu0 %2066
  %v2068 = vmul.f32 %v2062, %v1996
  %v2069 = vadd.f32 %v2067, %v2068
  %v2070 = vtanh.pop %v2069
  %2071 = vrot.lane.b32.xlu0 %v2070, 64
  %v2072 = vpop.permute.xlu0 %2071
  %v2073 = vmul.f32 %v2062, %v2072
  %v2074 = vld [vmem:[#allocation2 + $0x98] sm:$0xff]
  %2075 = vmatpush.bf16.msra.mxu0 %v583
  %2076 = vmatpush.bf16.msra.mxu0 %v582
  %2077 = vmatpush.bf16.msra.mxu0 %v581
  %2078 = vmatpush.bf16.msra.mxu0 %v580
  %2079 = vmatpush.bf16.msra.mxu0 %v579
  %2080 = vmatpush.bf16.msra.mxu0 %v578
  %2081 = vmatpush.bf16.msra.mxu0 %v577
  %2082 = vmatpush.bf16.msra.mxu0 %v576
  %2083 = vmatmul.bf16.gmra.mxu0 %v2031
  %v2084 = vpop.f32.mrf.mxu0
  %v2085 = vadd.f32 0.0, %v2084
  %v2086 = vpop.f32.mrf.mxu0
  %2087 = vdwg.mxu0
  %v2088 = vadd.f32 %v2074, %v2085
  %v2089 = vmul.f32 %v541, %v2088
  %v2090 = vtanh.pop %v2089
  %v2091 = vmul.f32 %v541, %v2090
  %v2092 = vadd.f32 %v2091, %v542
  %2093 = vrot.lane.b32.xlu0 %v2092, 64
  %v2094 = vpop.permute.xlu0 %2093
  %v2095 = vmul.f32 %v2092, %v2094
  %2096 = vrot.lane.b32.xlu0 %v2095, 32
  %v2097 = vpop.permute.xlu0 %2096
  %v2098 = vmul.f32 %v2092, %v2026
  %v2099 = vadd.f32 %v2097, %v2098
  %v2100 = vtanh.pop %v2099
  %2101 = vrot.lane.b32.xlu0 %v2100, 64
  %v2102 = vpop.permute.xlu0 %2101
  %v2103 = vmul.f32 %v2092, %v2102
  %v2104 = vpack.c.bf16 %v2103, %v2103
  %v2105 = vpack.c.bf16 %v2073, %v2073
  %2106 = vmatpush.bf16.msra.mxu0 %v694
  %2107 = vmatpush.bf16.msra.mxu0 %v693
  %2108 = vmatpush.bf16.msra.mxu0 %v692
  %2109 = vmatpush.bf16.msra.mxu0 %v691
  %2110 = vmatpush.bf16.msra.mxu0 %v690
  %2111 = vmatpush.bf16.msra.mxu0 %v689
  %2112 = vmatpush.bf16.msra.mxu0 %v688
  %2113 = vmatpush.bf16.msra.mxu0 %v687
  %2114 = vmatmul.bf16.gmra.mxu0 %v2104
  %v2115 = vpop.f32.mrf.mxu0
  %v2116 = vadd.f32 %v534, %v2115
  %v2117 = vpop.f32.mrf.mxu0
  %2118 = vdwg.mxu0
  %2119 = vmatpush.bf16.msra.mxu0 %v702
  %2120 = vmatpush.bf16.msra.mxu0 %v701
  %2121 = vmatpush.bf16.msra.mxu0 %v700
  %2122 = vmatpush.bf16.msra.mxu0 %v699
  %2123 = vmatpush.bf16.msra.mxu0 %v698
  %2124 = vmatpush.bf16.msra.mxu0 %v697
  %2125 = vmatpush.bf16.msra.mxu0 %v696
  %2126 = vmatpush.bf16.msra.mxu0 %v695
  %2127 = vmatmul.bf16.gmra.mxu0 %v2105
  %v2128 = vpop.f32.mrf.mxu0
  %v2129 = vadd.f32 %v2116, %v2128
  %v2130 = vpop.f32.mrf.mxu0
  %2131 = vdwg.mxu0
  %v2132 = vmul.f32 %v541, %v2129
  %v2133 = vtanh.pop %v2132
  %v2134 = vmul.f32 %v541, %v2133
  %v2135 = vadd.f32 %v2134, %v542
  %2136 = vrot.lane.b32.xlu0 %v2135, 64
  %v2137 = vpop.permute.xlu0 %2136
  %v2138 = vmul.f32 %v2135, %v2137
  %2139 = vrot.lane.b32.xlu0 %v2138, 32
  %v2140 = vpop.permute.xlu0 %2139
  %v2141 = vmul.f32 %v2135, %v2069
  %v2142 = vadd.f32 %v2140, %v2141
  %v2143 = vtanh.pop %v2142
  %2144 = vrot.lane.b32.xlu0 %v2143, 64
  %v2145 = vpop.permute.xlu0 %2144
  %v2146 = vmul.f32 %v2135, %v2145
  %v2147 = vld [vmem:[#allocation2 + $0xa0] sm:$0xff]
  %2148 = vmatpush.bf16.msra.mxu0 %v583
  %2149 = vmatpush.bf16.msra.mxu0 %v582
  %2150 = vmatpush.bf16.msra.mxu0 %v581
  %2151 = vmatpush.bf16.msra.mxu0 %v580
  %2152 = vmatpush.bf16.msra.mxu0 %v579
  %2153 = vmatpush.bf16.msra.mxu0 %v578
  %2154 = vmatpush.bf16.msra.mxu0 %v577
  %2155 = vmatpush.bf16.msra.mxu0 %v576
  %2156 = vmatmul.bf16.gmra.mxu0 %v2104
  %v2157 = vpop.f32.mrf.mxu0
  %v2158 = vadd.f32 0.0, %v2157
  %v2159 = vpop.f32.mrf.mxu0
  %2160 = vdwg.mxu0
  %v2161 = vadd.f32 %v2147, %v2158
  %v2162 = vmul.f32 %v541, %v2161
  %v2163 = vtanh.pop %v2162
  %v2164 = vmul.f32 %v541, %v2163
  %v2165 = vadd.f32 %v2164, %v542
  %2166 = vrot.lane.b32.xlu0 %v2165, 64
  %v2167 = vpop.permute.xlu0 %2166
  %v2168 = vmul.f32 %v2165, %v2167
  %2169 = vrot.lane.b32.xlu0 %v2168, 32
  %v2170 = vpop.permute.xlu0 %2169
  %v2171 = vmul.f32 %v2165, %v2099
  %v2172 = vadd.f32 %v2170, %v2171
  %v2173 = vtanh.pop %v2172
  %2174 = vrot.lane.b32.xlu0 %v2173, 64
  %v2175 = vpop.permute.xlu0 %2174
  %v2176 = vmul.f32 %v2165, %v2175
  %v2177 = vpack.c.bf16 %v2176, %v2176
  %v2178 = vpack.c.bf16 %v2146, %v2146
  %2179 = vmatpush.bf16.msra.mxu0 %v694
  %2180 = vmatpush.bf16.msra.mxu0 %v693
  %2181 = vmatpush.bf16.msra.mxu0 %v692
  %2182 = vmatpush.bf16.msra.mxu0 %v691
  %2183 = vmatpush.bf16.msra.mxu0 %v690
  %2184 = vmatpush.bf16.msra.mxu0 %v689
  %2185 = vmatpush.bf16.msra.mxu0 %v688
  %2186 = vmatpush.bf16.msra.mxu0 %v687
  %2187 = vmatmul.bf16.gmra.mxu0 %v2177
  %v2188 = vpop.f32.mrf.mxu0
  %v2189 = vadd.f32 %v534, %v2188
  %v2190 = vpop.f32.mrf.mxu0
  %2191 = vdwg.mxu0
  %2192 = vmatpush.bf16.msra.mxu0 %v702
  %2193 = vmatpush.bf16.msra.mxu0 %v701
  %2194 = vmatpush.bf16.msra.mxu0 %v700
  %2195 = vmatpush.bf16.msra.mxu0 %v699
  %2196 = vmatpush.bf16.msra.mxu0 %v698
  %2197 = vmatpush.bf16.msra.mxu0 %v697
  %2198 = vmatpush.bf16.msra.mxu0 %v696
  %2199 = vmatpush.bf16.msra.mxu0 %v695
  %2200 = vmatmul.bf16.gmra.mxu0 %v2178
  %v2201 = vpop.f32.mrf.mxu0
  %v2202 = vadd.f32 %v2189, %v2201
  %v2203 = vpop.f32.mrf.mxu0
  %2204 = vdwg.mxu0
  %v2205 = vmul.f32 %v541, %v2202
  %v2206 = vtanh.pop %v2205
  %v2207 = vmul.f32 %v541, %v2206
  %v2208 = vadd.f32 %v2207, %v542
  %2209 = vrot.lane.b32.xlu0 %v2208, 64
  %v2210 = vpop.permute.xlu0 %2209
  %v2211 = vmul.f32 %v2208, %v2210
  %2212 = vrot.lane.b32.xlu0 %v2211, 32
  %v2213 = vpop.permute.xlu0 %2212
  %v2214 = vmul.f32 %v2208, %v2142
  %v2215 = vadd.f32 %v2213, %v2214
  %v2216 = vtanh.pop %v2215
  %2217 = vrot.lane.b32.xlu0 %v2216, 64
  %v2218 = vpop.permute.xlu0 %2217
  %v2219 = vmul.f32 %v2208, %v2218
  %v2220 = vld [vmem:[#allocation2 + $0xa8] sm:$0xff]
  %2221 = vmatpush.bf16.msra.mxu0 %v583
  %2222 = vmatpush.bf16.msra.mxu0 %v582
  %2223 = vmatpush.bf16.msra.mxu0 %v581
  %2224 = vmatpush.bf16.msra.mxu0 %v580
  %2225 = vmatpush.bf16.msra.mxu0 %v579
  %2226 = vmatpush.bf16.msra.mxu0 %v578
  %2227 = vmatpush.bf16.msra.mxu0 %v577
  %2228 = vmatpush.bf16.msra.mxu0 %v576
  %2229 = vmatmul.bf16.gmra.mxu0 %v2177
  %v2230 = vpop.f32.mrf.mxu0
  %v2231 = vadd.f32 0.0, %v2230
  %v2232 = vpop.f32.mrf.mxu0
  %2233 = vdwg.mxu0
  %v2234 = vadd.f32 %v2220, %v2231
  %v2235 = vmul.f32 %v541, %v2234
  %v2236 = vtanh.pop %v2235
  %v2237 = vmul.f32 %v541, %v2236
  %v2238 = vadd.f32 %v2237, %v542
  %2239 = vrot.lane.b32.xlu0 %v2238, 64
  %v2240 = vpop.permute.xlu0 %2239
  %v2241 = vmul.f32 %v2238, %v2240
  %2242 = vrot.lane.b32.xlu0 %v2241, 32
  %v2243 = vpop.permute.xlu0 %2242
  %v2244 = vmul.f32 %v2238, %v2172
  %v2245 = vadd.f32 %v2243, %v2244
  %v2246 = vtanh.pop %v2245
  %2247 = vrot.lane.b32.xlu0 %v2246, 64
  %v2248 = vpop.permute.xlu0 %2247
  %v2249 = vmul.f32 %v2238, %v2248
  %v2250 = vpack.c.bf16 %v2249, %v2249
  %v2251 = vpack.c.bf16 %v2219, %v2219
  %2252 = vmatpush.bf16.msra.mxu0 %v694
  %2253 = vmatpush.bf16.msra.mxu0 %v693
  %2254 = vmatpush.bf16.msra.mxu0 %v692
  %2255 = vmatpush.bf16.msra.mxu0 %v691
  %2256 = vmatpush.bf16.msra.mxu0 %v690
  %2257 = vmatpush.bf16.msra.mxu0 %v689
  %2258 = vmatpush.bf16.msra.mxu0 %v688
  %2259 = vmatpush.bf16.msra.mxu0 %v687
  %2260 = vmatmul.bf16.gmra.mxu0 %v2250
  %v2261 = vpop.f32.mrf.mxu0
  %v2262 = vadd.f32 %v534, %v2261
  %v2263 = vpop.f32.mrf.mxu0
  %2264 = vdwg.mxu0
  %2265 = vmatpush.bf16.msra.mxu0 %v702
  %2266 = vmatpush.bf16.msra.mxu0 %v701
  %2267 = vmatpush.bf16.msra.mxu0 %v700
  %2268 = vmatpush.bf16.msra.mxu0 %v699
  %2269 = vmatpush.bf16.msra.mxu0 %v698
  %2270 = vmatpush.bf16.msra.mxu0 %v697
  %2271 = vmatpush.bf16.msra.mxu0 %v696
  %2272 = vmatpush.bf16.msra.mxu0 %v695
  %2273 = vmatmul.bf16.gmra.mxu0 %v2251
  %v2274 = vpop.f32.mrf.mxu0
  %v2275 = vadd.f32 %v2262, %v2274
  %v2276 = vpop.f32.mrf.mxu0
  %2277 = vdwg.mxu0
  %v2278 = vmul.f32 %v541, %v2275
  %v2279 = vtanh.pop %v2278
  %v2280 = vmul.f32 %v541, %v2279
  %v2281 = vadd.f32 %v2280, %v542
  %2282 = vrot.lane.b32.xlu0 %v2281, 64
  %v2283 = vpop.permute.xlu0 %2282
  %v2284 = vmul.f32 %v2281, %v2283
  %2285 = vrot.lane.b32.xlu0 %v2284, 32
  %v2286 = vpop.permute.xlu0 %2285
  %v2287 = vmul.f32 %v2281, %v2215
  %v2288 = vadd.f32 %v2286, %v2287
  %v2289 = vtanh.pop %v2288
  %2290 = vrot.lane.b32.xlu0 %v2289, 64
  %v2291 = vpop.permute.xlu0 %2290
  %v2292 = vmul.f32 %v2281, %v2291
  %v2293 = vld [vmem:[#allocation2 + $0xb0] sm:$0xff]
  %2294 = vmatpush.bf16.msra.mxu0 %v583
  %2295 = vmatpush.bf16.msra.mxu0 %v582
  %2296 = vmatpush.bf16.msra.mxu0 %v581
  %2297 = vmatpush.bf16.msra.mxu0 %v580
  %2298 = vmatpush.bf16.msra.mxu0 %v579
  %2299 = vmatpush.bf16.msra.mxu0 %v578
  %2300 = vmatpush.bf16.msra.mxu0 %v577
  %2301 = vmatpush.bf16.msra.mxu0 %v576
  %2302 = vmatmul.bf16.gmra.mxu0 %v2250
  %v2303 = vpop.f32.mrf.mxu0
  %v2304 = vadd.f32 0.0, %v2303
  %v2305 = vpop.f32.mrf.mxu0
  %2306 = vdwg.mxu0
  %v2307 = vadd.f32 %v2293, %v2304
  %v2308 = vmul.f32 %v541, %v2307
  %v2309 = vtanh.pop %v2308
  %v2310 = vmul.f32 %v541, %v2309
  %v2311 = vadd.f32 %v2310, %v542
  %2312 = vrot.lane.b32.xlu0 %v2311, 64
  %v2313 = vpop.permute.xlu0 %2312
  %v2314 = vmul.f32 %v2311, %v2313
  %2315 = vrot.lane.b32.xlu0 %v2314, 32
  %v2316 = vpop.permute.xlu0 %2315
  %v2317 = vmul.f32 %v2311, %v2245
  %v2318 = vadd.f32 %v2316, %v2317
  %v2319 = vtanh.pop %v2318
  %2320 = vrot.lane.b32.xlu0 %v2319, 64
  %v2321 = vpop.permute.xlu0 %2320
  %v2322 = vmul.f32 %v2311, %v2321
  %v2323 = vpack.c.bf16 %v2322, %v2322
  %v2324 = vpack.c.bf16 %v2292, %v2292
  %2325 = vmatpush.bf16.msra.mxu0 %v694
  %2326 = vmatpush.bf16.msra.mxu0 %v693
  %2327 = vmatpush.bf16.msra.mxu0 %v692
  %2328 = vmatpush.bf16.msra.mxu0 %v691
  %2329 = vmatpush.bf16.msra.mxu0 %v690
  %2330 = vmatpush.bf16.msra.mxu0 %v689
  %2331 = vmatpush.bf16.msra.mxu0 %v688
  %2332 = vmatpush.bf16.msra.mxu0 %v687
  %2333 = vmatmul.bf16.gmra.mxu0 %v2323
  %v2334 = vpop.f32.mrf.mxu0
  %v2335 = vadd.f32 %v534, %v2334
  %v2336 = vpop.f32.mrf.mxu0
  %2337 = vdwg.mxu0
  %2338 = vmatpush.bf16.msra.mxu0 %v702
  %2339 = vmatpush.bf16.msra.mxu0 %v701
  %2340 = vmatpush.bf16.msra.mxu0 %v700
  %2341 = vmatpush.bf16.msra.mxu0 %v699
  %2342 = vmatpush.bf16.msra.mxu0 %v698
  %2343 = vmatpush.bf16.msra.mxu0 %v697
  %2344 = vmatpush.bf16.msra.mxu0 %v696
  %2345 = vmatpush.bf16.msra.mxu0 %v695
  %2346 = vmatmul.bf16.gmra.mxu0 %v2324
  %v2347 = vpop.f32.mrf.mxu0
  %v2348 = vadd.f32 %v2335, %v2347
  %v2349 = vpop.f32.mrf.mxu0
  %2350 = vdwg.mxu0
  %v2351 = vmul.f32 %v541, %v2348
  %v2352 = vtanh.pop %v2351
  %v2353 = vmul.f32 %v541, %v2352
  %v2354 = vadd.f32 %v2353, %v542
  %2355 = vrot.lane.b32.xlu0 %v2354, 64
  %v2356 = vpop.permute.xlu0 %2355
  %v2357 = vmul.f32 %v2354, %v2356
  %2358 = vrot.lane.b32.xlu0 %v2357, 32
  %v2359 = vpop.permute.xlu0 %2358
  %v2360 = vmul.f32 %v2354, %v2288
  %v2361 = vadd.f32 %v2359, %v2360
  %v2362 = vtanh.pop %v2361
  %2363 = vrot.lane.b32.xlu0 %v2362, 64
  %v2364 = vpop.permute.xlu0 %2363
  %v2365 = vmul.f32 %v2354, %v2364
  %v2366 = vld [vmem:[#allocation2 + $0xb8] sm:$0xff]
  %2367 = vmatpush.bf16.msra.mxu0 %v583
  %2368 = vmatpush.bf16.msra.mxu0 %v582
  %2369 = vmatpush.bf16.msra.mxu0 %v581
  %2370 = vmatpush.bf16.msra.mxu0 %v580
  %2371 = vmatpush.bf16.msra.mxu0 %v579
  %2372 = vmatpush.bf16.msra.mxu0 %v578
  %2373 = vmatpush.bf16.msra.mxu0 %v577
  %2374 = vmatpush.bf16.msra.mxu0 %v576
  %2375 = vmatmul.bf16.gmra.mxu0 %v2323
  %v2376 = vpop.f32.mrf.mxu0
  %v2377 = vadd.f32 0.0, %v2376
  %v2378 = vpop.f32.mrf.mxu0
  %2379 = vdwg.mxu0
  %v2380 = vadd.f32 %v2366, %v2377
  %v2381 = vmul.f32 %v541, %v2380
  %v2382 = vtanh.pop %v2381
  %v2383 = vmul.f32 %v541, %v2382
  %v2384 = vadd.f32 %v2383, %v542
  %2385 = vrot.lane.b32.xlu0 %v2384, 64
  %v2386 = vpop.permute.xlu0 %2385
  %v2387 = vmul.f32 %v2384, %v2386
  %2388 = vrot.lane.b32.xlu0 %v2387, 32
  %v2389 = vpop.permute.xlu0 %2388
  %v2390 = vmul.f32 %v2384, %v2318
  %v2391 = vadd.f32 %v2389, %v2390
  %v2392 = vtanh.pop %v2391
  %2393 = vrot.lane.b32.xlu0 %v2392, 64
  %v2394 = vpop.permute.xlu0 %2393
  %v2395 = vmul.f32 %v2384, %v2394
  %v2396 = vpack.c.bf16 %v2395, %v2395
  %v2397 = vpack.c.bf16 %v2365, %v2365
  %2398 = vmatpush.bf16.msra.mxu0 %v694
  %2399 = vmatpush.bf16.msra.mxu0 %v693
  %2400 = vmatpush.bf16.msra.mxu0 %v692
  %2401 = vmatpush.bf16.msra.mxu0 %v691
  %2402 = vmatpush.bf16.msra.mxu0 %v690
  %2403 = vmatpush.bf16.msra.mxu0 %v689
  %2404 = vmatpush.bf16.msra.mxu0 %v688
  %2405 = vmatpush.bf16.msra.mxu0 %v687
  %2406 = vmatmul.bf16.gmra.mxu0 %v2396
  %v2407 = vpop.f32.mrf.mxu0
  %v2408 = vadd.f32 %v534, %v2407
  %v2409 = vpop.f32.mrf.mxu0
  %2410 = vdwg.mxu0
  %2411 = vmatpush.bf16.msra.mxu0 %v702
  %2412 = vmatpush.bf16.msra.mxu0 %v701
  %2413 = vmatpush.bf16.msra.mxu0 %v700
  %2414 = vmatpush.bf16.msra.mxu0 %v699
  %2415 = vmatpush.bf16.msra.mxu0 %v698
  %2416 = vmatpush.bf16.msra.mxu0 %v697
  %2417 = vmatpush.bf16.msra.mxu0 %v696
  %2418 = vmatpush.bf16.msra.mxu0 %v695
  %2419 = vmatmul.bf16.gmra.mxu0 %v2397
  %v2420 = vpop.f32.mrf.mxu0
  %v2421 = vadd.f32 %v2408, %v2420
  %v2422 = vpop.f32.mrf.mxu0
  %2423 = vdwg.mxu0
  %v2424 = vmul.f32 %v541, %v2421
  %v2425 = vtanh.pop %v2424
  %v2426 = vmul.f32 %v541, %v2425
  %v2427 = vadd.f32 %v2426, %v542
  %2428 = vrot.lane.b32.xlu0 %v2427, 64
  %v2429 = vpop.permute.xlu0 %2428
  %v2430 = vmul.f32 %v2427, %v2429
  %2431 = vrot.lane.b32.xlu0 %v2430, 32
  %v2432 = vpop.permute.xlu0 %2431
  %v2433 = vmul.f32 %v2427, %v2361
  %v2434 = vadd.f32 %v2432, %v2433
  %v2435 = vtanh.pop %v2434
  %2436 = vrot.lane.b32.xlu0 %v2435, 64
  %v2437 = vpop.permute.xlu0 %2436
  %v2438 = vmul.f32 %v2427, %v2437
  %v2439 = vld [vmem:[#allocation2 + $0xc0] sm:$0xff]
  %2440 = vmatpush.bf16.msra.mxu0 %v583
  %2441 = vmatpush.bf16.msra.mxu0 %v582
  %2442 = vmatpush.bf16.msra.mxu0 %v581
  %2443 = vmatpush.bf16.msra.mxu0 %v580
  %2444 = vmatpush.bf16.msra.mxu0 %v579
  %2445 = vmatpush.bf16.msra.mxu0 %v578
  %2446 = vmatpush.bf16.msra.mxu0 %v577
  %2447 = vmatpush.bf16.msra.mxu0 %v576
  %2448 = vmatmul.bf16.gmra.mxu0 %v2396
  %v2449 = vpop.f32.mrf.mxu0
  %v2450 = vadd.f32 0.0, %v2449
  %v2451 = vpop.f32.mrf.mxu0
  %2452 = vdwg.mxu0
  %v2453 = vadd.f32 %v2439, %v2450
  %v2454 = vmul.f32 %v541, %v2453
  %v2455 = vtanh.pop %v2454
  %v2456 = vmul.f32 %v541, %v2455
  %v2457 = vadd.f32 %v2456, %v542
  %2458 = vrot.lane.b32.xlu0 %v2457, 64
  %v2459 = vpop.permute.xlu0 %2458
  %v2460 = vmul.f32 %v2457, %v2459
  %2461 = vrot.lane.b32.xlu0 %v2460, 32
  %v2462 = vpop.permute.xlu0 %2461
  %v2463 = vmul.f32 %v2457, %v2391
  %v2464 = vadd.f32 %v2462, %v2463
  %v2465 = vtanh.pop %v2464
  %2466 = vrot.lane.b32.xlu0 %v2465, 64
  %v2467 = vpop.permute.xlu0 %2466
  %v2468 = vmul.f32 %v2457, %v2467
  %v2469 = vpack.c.bf16 %v2468, %v2468
  %v2470 = vpack.c.bf16 %v2438, %v2438
  %2471 = vmatpush.bf16.msra.mxu0 %v694
  %2472 = vmatpush.bf16.msra.mxu0 %v693
  %2473 = vmatpush.bf16.msra.mxu0 %v692
  %2474 = vmatpush.bf16.msra.mxu0 %v691
  %2475 = vmatpush.bf16.msra.mxu0 %v690
  %2476 = vmatpush.bf16.msra.mxu0 %v689
  %2477 = vmatpush.bf16.msra.mxu0 %v688
  %2478 = vmatpush.bf16.msra.mxu0 %v687
  %2479 = vmatmul.bf16.gmra.mxu0 %v2469
  %v2480 = vpop.f32.mrf.mxu0
  %v2481 = vadd.f32 %v534, %v2480
  %v2482 = vpop.f32.mrf.mxu0
  %2483 = vdwg.mxu0
  %2484 = vmatpush.bf16.msra.mxu0 %v702
  %2485 = vmatpush.bf16.msra.mxu0 %v701
  %2486 = vmatpush.bf16.msra.mxu0 %v700
  %2487 = vmatpush.bf16.msra.mxu0 %v699
  %2488 = vmatpush.bf16.msra.mxu0 %v698
  %2489 = vmatpush.bf16.msra.mxu0 %v697
  %2490 = vmatpush.bf16.msra.mxu0 %v696
  %2491 = vmatpush.bf16.msra.mxu0 %v695
  %2492 = vmatmul.bf16.gmra.mxu0 %v2470
  %v2493 = vpop.f32.mrf.mxu0
  %v2494 = vadd.f32 %v2481, %v2493
  %v2495 = vpop.f32.mrf.mxu0
  %2496 = vdwg.mxu0
  %v2497 = vmul.f32 %v541, %v2494
  %v2498 = vtanh.pop %v2497
  %v2499 = vmul.f32 %v541, %v2498
  %v2500 = vadd.f32 %v2499, %v542
  %2501 = vrot.lane.b32.xlu0 %v2500, 64
  %v2502 = vpop.permute.xlu0 %2501
  %v2503 = vmul.f32 %v2500, %v2502
  %2504 = vrot.lane.b32.xlu0 %v2503, 32
  %v2505 = vpop.permute.xlu0 %2504
  %v2506 = vmul.f32 %v2500, %v2434
  %v2507 = vadd.f32 %v2505, %v2506
  %v2508 = vtanh.pop %v2507
  %2509 = vrot.lane.b32.xlu0 %v2508, 64
  %v2510 = vpop.permute.xlu0 %2509
  %v2511 = vmul.f32 %v2500, %v2510
  %v2512 = vld [vmem:[#allocation2 + $0xc8] sm:$0xff]
  %2513 = vmatpush.bf16.msra.mxu0 %v583
  %2514 = vmatpush.bf16.msra.mxu0 %v582
  %2515 = vmatpush.bf16.msra.mxu0 %v581
  %2516 = vmatpush.bf16.msra.mxu0 %v580
  %2517 = vmatpush.bf16.msra.mxu0 %v579
  %2518 = vmatpush.bf16.msra.mxu0 %v578
  %2519 = vmatpush.bf16.msra.mxu0 %v577
  %2520 = vmatpush.bf16.msra.mxu0 %v576
  %2521 = vmatmul.bf16.gmra.mxu0 %v2469
  %v2522 = vpop.f32.mrf.mxu0
  %v2523 = vadd.f32 0.0, %v2522
  %v2524 = vpop.f32.mrf.mxu0
  %2525 = vdwg.mxu0
  %v2526 = vadd.f32 %v2512, %v2523
  %v2527 = vmul.f32 %v541, %v2526
  %v2528 = vtanh.pop %v2527
  %v2529 = vmul.f32 %v541, %v2528
  %v2530 = vadd.f32 %v2529, %v542
  %2531 = vrot.lane.b32.xlu0 %v2530, 64
  %v2532 = vpop.permute.xlu0 %2531
  %v2533 = vmul.f32 %v2530, %v2532
  %2534 = vrot.lane.b32.xlu0 %v2533, 32
  %v2535 = vpop.permute.xlu0 %2534
  %v2536 = vmul.f32 %v2530, %v2464
  %v2537 = vadd.f32 %v2535, %v2536
  %v2538 = vtanh.pop %v2537
  %2539 = vrot.lane.b32.xlu0 %v2538, 64
  %v2540 = vpop.permute.xlu0 %2539
  %v2541 = vmul.f32 %v2530, %v2540
  %v2542 = vpack.c.bf16 %v2541, %v2541
  %v2543 = vpack.c.bf16 %v2511, %v2511
  %2544 = vmatpush.bf16.msra.mxu0 %v694
  %2545 = vmatpush.bf16.msra.mxu0 %v693
  %2546 = vmatpush.bf16.msra.mxu0 %v692
  %2547 = vmatpush.bf16.msra.mxu0 %v691
  %2548 = vmatpush.bf16.msra.mxu0 %v690
  %2549 = vmatpush.bf16.msra.mxu0 %v689
  %2550 = vmatpush.bf16.msra.mxu0 %v688
  %2551 = vmatpush.bf16.msra.mxu0 %v687
  %2552 = vmatmul.bf16.gmra.mxu0 %v2542
  %v2553 = vpop.f32.mrf.mxu0
  %v2554 = vadd.f32 %v534, %v2553
  %v2555 = vpop.f32.mrf.mxu0
  %2556 = vdwg.mxu0
  %2557 = vmatpush.bf16.msra.mxu0 %v702
  %2558 = vmatpush.bf16.msra.mxu0 %v701
  %2559 = vmatpush.bf16.msra.mxu0 %v700
  %2560 = vmatpush.bf16.msra.mxu0 %v699
  %2561 = vmatpush.bf16.msra.mxu0 %v698
  %2562 = vmatpush.bf16.msra.mxu0 %v697
  %2563 = vmatpush.bf16.msra.mxu0 %v696
  %2564 = vmatpush.bf16.msra.mxu0 %v695
  %2565 = vmatmul.bf16.gmra.mxu0 %v2543
  %v2566 = vpop.f32.mrf.mxu0
  %v2567 = vadd.f32 %v2554, %v2566
  %v2568 = vpop.f32.mrf.mxu0
  %2569 = vdwg.mxu0
  %v2570 = vmul.f32 %v541, %v2567
  %v2571 = vtanh.pop %v2570
  %v2572 = vmul.f32 %v541, %v2571
  %v2573 = vadd.f32 %v2572, %v542
  %2574 = vrot.lane.b32.xlu0 %v2573, 64
  %v2575 = vpop.permute.xlu0 %2574
  %v2576 = vmul.f32 %v2573, %v2575
  %2577 = vrot.lane.b32.xlu0 %v2576, 32
  %v2578 = vpop.permute.xlu0 %2577
  %v2579 = vmul.f32 %v2573, %v2507
  %v2580 = vadd.f32 %v2578, %v2579
  %v2581 = vtanh.pop %v2580
  %2582 = vrot.lane.b32.xlu0 %v2581, 64
  %v2583 = vpop.permute.xlu0 %2582
  %v2584 = vmul.f32 %v2573, %v2583
  %v2585 = vld [vmem:[#allocation2 + $0xd0] sm:$0xff]
  %2586 = vmatpush.bf16.msra.mxu0 %v583
  %2587 = vmatpush.bf16.msra.mxu0 %v582
  %2588 = vmatpush.bf16.msra.mxu0 %v581
  %2589 = vmatpush.bf16.msra.mxu0 %v580
  %2590 = vmatpush.bf16.msra.mxu0 %v579
  %2591 = vmatpush.bf16.msra.mxu0 %v578
  %2592 = vmatpush.bf16.msra.mxu0 %v577
  %2593 = vmatpush.bf16.msra.mxu0 %v576
  %2594 = vmatmul.bf16.gmra.mxu0 %v2542
  %v2595 = vpop.f32.mrf.mxu0
  %v2596 = vadd.f32 0.0, %v2595
  %v2597 = vpop.f32.mrf.mxu0
  %2598 = vdwg.mxu0
  %v2599 = vadd.f32 %v2585, %v2596
  %v2600 = vmul.f32 %v541, %v2599
  %v2601 = vtanh.pop %v2600
  %v2602 = vmul.f32 %v541, %v2601
  %v2603 = vadd.f32 %v2602, %v542
  %2604 = vrot.lane.b32.xlu0 %v2603, 64
  %v2605 = vpop.permute.xlu0 %2604
  %v2606 = vmul.f32 %v2603, %v2605
  %2607 = vrot.lane.b32.xlu0 %v2606, 32
  %v2608 = vpop.permute.xlu0 %2607
  %v2609 = vmul.f32 %v2603, %v2537
  %v2610 = vadd.f32 %v2608, %v2609
  %v2611 = vtanh.pop %v2610
  %2612 = vrot.lane.b32.xlu0 %v2611, 64
  %v2613 = vpop.permute.xlu0 %2612
  %v2614 = vmul.f32 %v2603, %v2613
  %v2615 = vpack.c.bf16 %v2614, %v2614
  %v2616 = vpack.c.bf16 %v2584, %v2584
  %2617 = vmatpush.bf16.msra.mxu0 %v694
  %2618 = vmatpush.bf16.msra.mxu0 %v693
  %2619 = vmatpush.bf16.msra.mxu0 %v692
  %2620 = vmatpush.bf16.msra.mxu0 %v691
  %2621 = vmatpush.bf16.msra.mxu0 %v690
  %2622 = vmatpush.bf16.msra.mxu0 %v689
  %2623 = vmatpush.bf16.msra.mxu0 %v688
  %2624 = vmatpush.bf16.msra.mxu0 %v687
  %2625 = vmatmul.bf16.gmra.mxu0 %v2615
  %v2626 = vpop.f32.mrf.mxu0
  %v2627 = vadd.f32 %v534, %v2626
  %v2628 = vpop.f32.mrf.mxu0
  %2629 = vdwg.mxu0
  %2630 = vmatpush.bf16.msra.mxu0 %v702
  %2631 = vmatpush.bf16.msra.mxu0 %v701
  %2632 = vmatpush.bf16.msra.mxu0 %v700
  %2633 = vmatpush.bf16.msra.mxu0 %v699
  %2634 = vmatpush.bf16.msra.mxu0 %v698
  %2635 = vmatpush.bf16.msra.mxu0 %v697
  %2636 = vmatpush.bf16.msra.mxu0 %v696
  %2637 = vmatpush.bf16.msra.mxu0 %v695
  %2638 = vmatmul.bf16.gmra.mxu0 %v2616
  %v2639 = vpop.f32.mrf.mxu0
  %v2640 = vadd.f32 %v2627, %v2639
  %v2641 = vpop.f32.mrf.mxu0
  %2642 = vdwg.mxu0
  %v2643 = vmul.f32 %v541, %v2640
  %v2644 = vtanh.pop %v2643
  %v2645 = vmul.f32 %v541, %v2644
  %v2646 = vadd.f32 %v2645, %v542
  %2647 = vrot.lane.b32.xlu0 %v2646, 64
  %v2648 = vpop.permute.xlu0 %2647
  %v2649 = vmul.f32 %v2646, %v2648
  %2650 = vrot.lane.b32.xlu0 %v2649, 32
  %v2651 = vpop.permute.xlu0 %2650
  %v2652 = vmul.f32 %v2646, %v2580
  %v2653 = vadd.f32 %v2651, %v2652
  %v2654 = vtanh.pop %v2653
  %2655 = vrot.lane.b32.xlu0 %v2654, 64
  %v2656 = vpop.permute.xlu0 %2655
  %v2657 = vmul.f32 %v2646, %v2656
  %v2658 = vld [vmem:[#allocation2 + $0xd8] sm:$0xff]
  %2659 = vmatpush.bf16.msra.mxu0 %v583
  %2660 = vmatpush.bf16.msra.mxu0 %v582
  %2661 = vmatpush.bf16.msra.mxu0 %v581
  %2662 = vmatpush.bf16.msra.mxu0 %v580
  %2663 = vmatpush.bf16.msra.mxu0 %v579
  %2664 = vmatpush.bf16.msra.mxu0 %v578
  %2665 = vmatpush.bf16.msra.mxu0 %v577
  %2666 = vmatpush.bf16.msra.mxu0 %v576
  %2667 = vmatmul.bf16.gmra.mxu0 %v2615
  %v2668 = vpop.f32.mrf.mxu0
  %v2669 = vadd.f32 0.0, %v2668
  %v2670 = vpop.f32.mrf.mxu0
  %2671 = vdwg.mxu0
  %v2672 = vadd.f32 %v2658, %v2669
  %v2673 = vmul.f32 %v541, %v2672
  %v2674 = vtanh.pop %v2673
  %v2675 = vmul.f32 %v541, %v2674
  %v2676 = vadd.f32 %v2675, %v542
  %2677 = vrot.lane.b32.xlu0 %v2676, 64
  %v2678 = vpop.permute.xlu0 %2677
  %v2679 = vmul.f32 %v2676, %v2678
  %2680 = vrot.lane.b32.xlu0 %v2679, 32
  %v2681 = vpop.permute.xlu0 %2680
  %v2682 = vmul.f32 %v2676, %v2610
  %v2683 = vadd.f32 %v2681, %v2682
  %v2684 = vtanh.pop %v2683
  %2685 = vrot.lane.b32.xlu0 %v2684, 64
  %v2686 = vpop.permute.xlu0 %2685
  %v2687 = vmul.f32 %v2676, %v2686
  %v2688 = vpack.c.bf16 %v2687, %v2687
  %v2689 = vpack.c.bf16 %v2657, %v2657
  %2690 = vmatpush.bf16.msra.mxu0 %v694
  %2691 = vmatpush.bf16.msra.mxu0 %v693
  %2692 = vmatpush.bf16.msra.mxu0 %v692
  %2693 = vmatpush.bf16.msra.mxu0 %v691
  %2694 = vmatpush.bf16.msra.mxu0 %v690
  %2695 = vmatpush.bf16.msra.mxu0 %v689
  %2696 = vmatpush.bf16.msra.mxu0 %v688
  %2697 = vmatpush.bf16.msra.mxu0 %v687
  %2698 = vmatmul.bf16.gmra.mxu0 %v2688
  %v2699 = vpop.f32.mrf.mxu0
  %v2700 = vadd.f32 %v534, %v2699
  %v2701 = vpop.f32.mrf.mxu0
  %2702 = vdwg.mxu0
  %2703 = vmatpush.bf16.msra.mxu0 %v702
  %2704 = vmatpush.bf16.msra.mxu0 %v701
  %2705 = vmatpush.bf16.msra.mxu0 %v700
  %2706 = vmatpush.bf16.msra.mxu0 %v699
  %2707 = vmatpush.bf16.msra.mxu0 %v698
  %2708 = vmatpush.bf16.msra.mxu0 %v697
  %2709 = vmatpush.bf16.msra.mxu0 %v696
  %2710 = vmatpush.bf16.msra.mxu0 %v695
  %2711 = vmatmul.bf16.gmra.mxu0 %v2689
  %v2712 = vpop.f32.mrf.mxu0
  %v2713 = vadd.f32 %v2700, %v2712
  %v2714 = vpop.f32.mrf.mxu0
  %2715 = vdwg.mxu0
  %v2716 = vmul.f32 %v541, %v2713
  %v2717 = vtanh.pop %v2716
  %v2718 = vmul.f32 %v541, %v2717
  %v2719 = vadd.f32 %v2718, %v542
  %2720 = vrot.lane.b32.xlu0 %v2719, 64
  %v2721 = vpop.permute.xlu0 %2720
  %v2722 = vmul.f32 %v2719, %v2721
  %2723 = vrot.lane.b32.xlu0 %v2722, 32
  %v2724 = vpop.permute.xlu0 %2723
  %v2725 = vmul.f32 %v2719, %v2653
  %v2726 = vadd.f32 %v2724, %v2725
  %v2727 = vtanh.pop %v2726
  %2728 = vrot.lane.b32.xlu0 %v2727, 64
  %v2729 = vpop.permute.xlu0 %2728
  %v2730 = vmul.f32 %v2719, %v2729
  %v2731 = vld [vmem:[#allocation2 + $0xe0] sm:$0xff]
  %2732 = vmatpush.bf16.msra.mxu0 %v583
  %2733 = vmatpush.bf16.msra.mxu0 %v582
  %2734 = vmatpush.bf16.msra.mxu0 %v581
  %2735 = vmatpush.bf16.msra.mxu0 %v580
  %2736 = vmatpush.bf16.msra.mxu0 %v579
  %2737 = vmatpush.bf16.msra.mxu0 %v578
  %2738 = vmatpush.bf16.msra.mxu0 %v577
  %2739 = vmatpush.bf16.msra.mxu0 %v576
  %2740 = vmatmul.bf16.gmra.mxu0 %v2688
  %v2741 = vpop.f32.mrf.mxu0
  %v2742 = vadd.f32 0.0, %v2741
  %v2743 = vpop.f32.mrf.mxu0
  %2744 = vdwg.mxu0
  %v2745 = vadd.f32 %v2731, %v2742
  %v2746 = vmul.f32 %v541, %v2745
  %v2747 = vtanh.pop %v2746
  %v2748 = vmul.f32 %v541, %v2747
  %v2749 = vadd.f32 %v2748, %v542
  %2750 = vrot.lane.b32.xlu0 %v2749, 64
  %v2751 = vpop.permute.xlu0 %2750
  %v2752 = vmul.f32 %v2749, %v2751
  %2753 = vrot.lane.b32.xlu0 %v2752, 32
  %v2754 = vpop.permute.xlu0 %2753
  %v2755 = vmul.f32 %v2749, %v2683
  %v2756 = vadd.f32 %v2754, %v2755
  %v2757 = vtanh.pop %v2756
  %2758 = vrot.lane.b32.xlu0 %v2757, 64
  %v2759 = vpop.permute.xlu0 %2758
  %v2760 = vmul.f32 %v2749, %v2759
  %v2761 = vpack.c.bf16 %v2760, %v2760
  %v2762 = vpack.c.bf16 %v2730, %v2730
  %2763 = vmatpush.bf16.msra.mxu0 %v694
  %2764 = vmatpush.bf16.msra.mxu0 %v693
  %2765 = vmatpush.bf16.msra.mxu0 %v692
  %2766 = vmatpush.bf16.msra.mxu0 %v691
  %2767 = vmatpush.bf16.msra.mxu0 %v690
  %2768 = vmatpush.bf16.msra.mxu0 %v689
  %2769 = vmatpush.bf16.msra.mxu0 %v688
  %2770 = vmatpush.bf16.msra.mxu0 %v687
  %2771 = vmatmul.bf16.gmra.mxu0 %v2761
  %v2772 = vpop.f32.mrf.mxu0
  %v2773 = vadd.f32 %v534, %v2772
  %v2774 = vpop.f32.mrf.mxu0
  %2775 = vdwg.mxu0
  %2776 = vmatpush.bf16.msra.mxu0 %v702
  %2777 = vmatpush.bf16.msra.mxu0 %v701
  %2778 = vmatpush.bf16.msra.mxu0 %v700
  %2779 = vmatpush.bf16.msra.mxu0 %v699
  %2780 = vmatpush.bf16.msra.mxu0 %v698
  %2781 = vmatpush.bf16.msra.mxu0 %v697
  %2782 = vmatpush.bf16.msra.mxu0 %v696
  %2783 = vmatpush.bf16.msra.mxu0 %v695
  %2784 = vmatmul.bf16.gmra.mxu0 %v2762
  %v2785 = vpop.f32.mrf.mxu0
  %v2786 = vadd.f32 %v2773, %v2785
  %v2787 = vpop.f32.mrf.mxu0
  %2788 = vdwg.mxu0
  %v2789 = vmul.f32 %v541, %v2786
  %v2790 = vtanh.pop %v2789
  %v2791 = vmul.f32 %v541, %v2790
  %v2792 = vadd.f32 %v2791, %v542
  %2793 = vrot.lane.b32.xlu0 %v2792, 64
  %v2794 = vpop.permute.xlu0 %2793
  %v2795 = vmul.f32 %v2792, %v2794
  %2796 = vrot.lane.b32.xlu0 %v2795, 32
  %v2797 = vpop.permute.xlu0 %2796
  %v2798 = vmul.f32 %v2792, %v2726
  %v2799 = vadd.f32 %v2797, %v2798
  %v2800 = vtanh.pop %v2799
  %2801 = vrot.lane.b32.xlu0 %v2800, 64
  %v2802 = vpop.permute.xlu0 %2801
  %v2803 = vmul.f32 %v2792, %v2802
  %v2804 = vld [vmem:[#allocation2 + $0xe8] sm:$0xff]
  %2805 = vmatpush.bf16.msra.mxu0 %v583
  %2806 = vmatpush.bf16.msra.mxu0 %v582
  %2807 = vmatpush.bf16.msra.mxu0 %v581
  %2808 = vmatpush.bf16.msra.mxu0 %v580
  %2809 = vmatpush.bf16.msra.mxu0 %v579
  %2810 = vmatpush.bf16.msra.mxu0 %v578
  %2811 = vmatpush.bf16.msra.mxu0 %v577
  %2812 = vmatpush.bf16.msra.mxu0 %v576
  %2813 = vmatmul.bf16.gmra.mxu0 %v2761
  %v2814 = vpop.f32.mrf.mxu0
  %v2815 = vadd.f32 0.0, %v2814
  %v2816 = vpop.f32.mrf.mxu0
  %2817 = vdwg.mxu0
  %v2818 = vadd.f32 %v2804, %v2815
  %v2819 = vmul.f32 %v541, %v2818
  %v2820 = vtanh.pop %v2819
  %v2821 = vmul.f32 %v541, %v2820
  %v2822 = vadd.f32 %v2821, %v542
  %2823 = vrot.lane.b32.xlu0 %v2822, 64
  %v2824 = vpop.permute.xlu0 %2823
  %v2825 = vmul.f32 %v2822, %v2824
  %2826 = vrot.lane.b32.xlu0 %v2825, 32
  %v2827 = vpop.permute.xlu0 %2826
  %v2828 = vmul.f32 %v2822, %v2756
  %v2829 = vadd.f32 %v2827, %v2828
  %v2830 = vtanh.pop %v2829
  %2831 = vrot.lane.b32.xlu0 %v2830, 64
  %v2832 = vpop.permute.xlu0 %2831
  %v2833 = vmul.f32 %v2822, %v2832
  %v2834 = vpack.c.bf16 %v2833, %v2833
  %v2835 = vpack.c.bf16 %v2803, %v2803
  %2836 = vmatpush.bf16.msra.mxu0 %v694
  %2837 = vmatpush.bf16.msra.mxu0 %v693
  %2838 = vmatpush.bf16.msra.mxu0 %v692
  %2839 = vmatpush.bf16.msra.mxu0 %v691
  %2840 = vmatpush.bf16.msra.mxu0 %v690
  %2841 = vmatpush.bf16.msra.mxu0 %v689
  %2842 = vmatpush.bf16.msra.mxu0 %v688
  %2843 = vmatpush.bf16.msra.mxu0 %v687
  %2844 = vmatmul.bf16.gmra.mxu0 %v2834
  %v2845 = vpop.f32.mrf.mxu0
  %v2846 = vadd.f32 %v534, %v2845
  %v2847 = vpop.f32.mrf.mxu0
  %2848 = vdwg.mxu0
  %2849 = vmatpush.bf16.msra.mxu0 %v702
  %2850 = vmatpush.bf16.msra.mxu0 %v701
  %2851 = vmatpush.bf16.msra.mxu0 %v700
  %2852 = vmatpush.bf16.msra.mxu0 %v699
  %2853 = vmatpush.bf16.msra.mxu0 %v698
  %2854 = vmatpush.bf16.msra.mxu0 %v697
  %2855 = vmatpush.bf16.msra.mxu0 %v696
  %2856 = vmatpush.bf16.msra.mxu0 %v695
  %2857 = vmatmul.bf16.gmra.mxu0 %v2835
  %v2858 = vpop.f32.mrf.mxu0
  %v2859 = vadd.f32 %v2846, %v2858
  %v2860 = vpop.f32.mrf.mxu0
  %2861 = vdwg.mxu0
  %v2862 = vmul.f32 %v541, %v2859
  %v2863 = vtanh.pop %v2862
  %v2864 = vmul.f32 %v541, %v2863
  %v2865 = vadd.f32 %v2864, %v542
  %2866 = vrot.lane.b32.xlu0 %v2865, 64
  %v2867 = vpop.permute.xlu0 %2866
  %v2868 = vmul.f32 %v2865, %v2867
  %2869 = vrot.lane.b32.xlu0 %v2868, 32
  %v2870 = vpop.permute.xlu0 %2869
  %v2871 = vmul.f32 %v2865, %v2799
  %v2872 = vadd.f32 %v2870, %v2871
  %v2873 = vtanh.pop %v2872
  %2874 = vrot.lane.b32.xlu0 %v2873, 64
  %v2875 = vpop.permute.xlu0 %2874
  %v2876 = vmul.f32 %v2865, %v2875
  %v2877 = vld [vmem:[#allocation2 + $0xf0] sm:$0xff]
  %2878 = vmatpush.bf16.msra.mxu0 %v583
  %2879 = vmatpush.bf16.msra.mxu0 %v582
  %2880 = vmatpush.bf16.msra.mxu0 %v581
  %2881 = vmatpush.bf16.msra.mxu0 %v580
  %2882 = vmatpush.bf16.msra.mxu0 %v579
  %2883 = vmatpush.bf16.msra.mxu0 %v578
  %2884 = vmatpush.bf16.msra.mxu0 %v577
  %2885 = vmatpush.bf16.msra.mxu0 %v576
  %2886 = vmatmul.bf16.gmra.mxu0 %v2834
  %v2887 = vpop.f32.mrf.mxu0
  %v2888 = vadd.f32 0.0, %v2887
  %v2889 = vpop.f32.mrf.mxu0
  %2890 = vdwg.mxu0
  %v2891 = vadd.f32 %v2877, %v2888
  %v2892 = vmul.f32 %v541, %v2891
  %v2893 = vtanh.pop %v2892
  %v2894 = vmul.f32 %v541, %v2893
  %v2895 = vadd.f32 %v2894, %v542
  %2896 = vrot.lane.b32.xlu0 %v2895, 64
  %v2897 = vpop.permute.xlu0 %2896
  %v2898 = vmul.f32 %v2895, %v2897
  %2899 = vrot.lane.b32.xlu0 %v2898, 32
  %v2900 = vpop.permute.xlu0 %2899
  %v2901 = vmul.f32 %v2895, %v2829
  %v2902 = vadd.f32 %v2900, %v2901
  %v2903 = vtanh.pop %v2902
  %2904 = vrot.lane.b32.xlu0 %v2903, 64
  %v2905 = vpop.permute.xlu0 %2904
  %v2906 = vmul.f32 %v2895, %v2905
  %v2907 = vpack.c.bf16 %v2906, %v2906
  %v2908 = vpack.c.bf16 %v2876, %v2876
  %2909 = vmatpush.bf16.msra.mxu0 %v694
  %2910 = vmatpush.bf16.msra.mxu0 %v693
  %2911 = vmatpush.bf16.msra.mxu0 %v692
  %2912 = vmatpush.bf16.msra.mxu0 %v691
  %2913 = vmatpush.bf16.msra.mxu0 %v690
  %2914 = vmatpush.bf16.msra.mxu0 %v689
  %2915 = vmatpush.bf16.msra.mxu0 %v688
  %2916 = vmatpush.bf16.msra.mxu0 %v687
  %2917 = vmatmul.bf16.gmra.mxu0 %v2907
  %v2918 = vpop.f32.mrf.mxu0
  %v2919 = vadd.f32 %v534, %v2918
  %v2920 = vpop.f32.mrf.mxu0
  %2921 = vdwg.mxu0
  %2922 = vmatpush.bf16.msra.mxu0 %v702
  %2923 = vmatpush.bf16.msra.mxu0 %v701
  %2924 = vmatpush.bf16.msra.mxu0 %v700
  %2925 = vmatpush.bf16.msra.mxu0 %v699
  %2926 = vmatpush.bf16.msra.mxu0 %v698
  %2927 = vmatpush.bf16.msra.mxu0 %v697
  %2928 = vmatpush.bf16.msra.mxu0 %v696
  %2929 = vmatpush.bf16.msra.mxu0 %v695
  %2930 = vmatmul.bf16.gmra.mxu0 %v2908
  %v2931 = vpop.f32.mrf.mxu0
  %v2932 = vadd.f32 %v2919, %v2931
  %v2933 = vpop.f32.mrf.mxu0
  %2934 = vdwg.mxu0
  %v2935 = vmul.f32 %v541, %v2932
  %v2936 = vtanh.pop %v2935
  %v2937 = vmul.f32 %v541, %v2936
  %v2938 = vadd.f32 %v2937, %v542
  %2939 = vrot.lane.b32.xlu0 %v2938, 64
  %v2940 = vpop.permute.xlu0 %2939
  %v2941 = vmul.f32 %v2938, %v2940
  %2942 = vrot.lane.b32.xlu0 %v2941, 32
  %v2943 = vpop.permute.xlu0 %2942
  %v2944 = vmul.f32 %v2938, %v2872
  %v2945 = vadd.f32 %v2943, %v2944
  %v2946 = vtanh.pop %v2945
  %2947 = vrot.lane.b32.xlu0 %v2946, 64
  %v2948 = vpop.permute.xlu0 %2947
  %v2949 = vmul.f32 %v2938, %v2948
  %v2950 = vld [vmem:[#allocation2 + $0xf8] sm:$0xff]
  %2951 = vmatpush.bf16.msra.mxu0 %v583
  %2952 = vmatpush.bf16.msra.mxu0 %v582
  %2953 = vmatpush.bf16.msra.mxu0 %v581
  %2954 = vmatpush.bf16.msra.mxu0 %v580
  %2955 = vmatpush.bf16.msra.mxu0 %v579
  %2956 = vmatpush.bf16.msra.mxu0 %v578
  %2957 = vmatpush.bf16.msra.mxu0 %v577
  %2958 = vmatpush.bf16.msra.mxu0 %v576
  %2959 = vmatmul.bf16.gmra.mxu0 %v2907
  %v2960 = vpop.f32.mrf.mxu0
  %v2961 = vadd.f32 0.0, %v2960
  %v2962 = vpop.f32.mrf.mxu0
  %2963 = vdwg.mxu0
  %v2964 = vadd.f32 %v2950, %v2961
  %v2965 = vmul.f32 %v541, %v2964
  %v2966 = vtanh.pop %v2965
  %v2967 = vmul.f32 %v541, %v2966
  %v2968 = vadd.f32 %v2967, %v542
  %2969 = vrot.lane.b32.xlu0 %v2968, 64
  %v2970 = vpop.permute.xlu0 %2969
  %v2971 = vmul.f32 %v2968, %v2970
  %2972 = vrot.lane.b32.xlu0 %v2971, 32
  %v2973 = vpop.permute.xlu0 %2972
  %v2974 = vmul.f32 %v2968, %v2902
  %v2975 = vadd.f32 %v2973, %v2974
  %v2976 = vtanh.pop %v2975
  %2977 = vrot.lane.b32.xlu0 %v2976, 64
  %v2978 = vpop.permute.xlu0 %2977
  %v2979 = vmul.f32 %v2968, %v2978
  %v2980 = vpack.c.bf16 %v2979, %v2979
  %v2981 = vpack.c.bf16 %v2949, %v2949
  %2982 = vmatpush.bf16.msra.mxu0 %v694
  %2983 = vmatpush.bf16.msra.mxu0 %v693
  %2984 = vmatpush.bf16.msra.mxu0 %v692
  %2985 = vmatpush.bf16.msra.mxu0 %v691
  %2986 = vmatpush.bf16.msra.mxu0 %v690
  %2987 = vmatpush.bf16.msra.mxu0 %v689
  %2988 = vmatpush.bf16.msra.mxu0 %v688
  %2989 = vmatpush.bf16.msra.mxu0 %v687
  %2990 = vmatmul.bf16.gmra.mxu0 %v2980
  %v2991 = vpop.f32.mrf.mxu0
  %v2992 = vadd.f32 %v534, %v2991
  %v2993 = vpop.f32.mrf.mxu0
  %2994 = vdwg.mxu0
  %2995 = vmatpush.bf16.msra.mxu0 %v702
  %2996 = vmatpush.bf16.msra.mxu0 %v701
  %2997 = vmatpush.bf16.msra.mxu0 %v700
  %2998 = vmatpush.bf16.msra.mxu0 %v699
  %2999 = vmatpush.bf16.msra.mxu0 %v698
  %3000 = vmatpush.bf16.msra.mxu0 %v697
  %3001 = vmatpush.bf16.msra.mxu0 %v696
  %3002 = vmatpush.bf16.msra.mxu0 %v695
  %3003 = vmatmul.bf16.gmra.mxu0 %v2981
  %v3004 = vpop.f32.mrf.mxu0
  %v3005 = vadd.f32 %v2992, %v3004
  %v3006 = vpop.f32.mrf.mxu0
  %3007 = vdwg.mxu0
  %v3008 = vmul.f32 %v541, %v3005
  %v3009 = vtanh.pop %v3008
  %v3010 = vmul.f32 %v541, %v3009
  %v3011 = vadd.f32 %v3010, %v542
  %3012 = vrot.lane.b32.xlu0 %v3011, 64
  %v3013 = vpop.permute.xlu0 %3012
  %v3014 = vmul.f32 %v3011, %v3013
  %3015 = vrot.lane.b32.xlu0 %v3014, 32
  %v3016 = vpop.permute.xlu0 %3015
  %v3017 = vmul.f32 %v3011, %v2945
  %v3018 = vadd.f32 %v3016, %v3017
  %v3019 = vtanh.pop %v3018
  %3020 = vrot.lane.b32.xlu0 %v3019, 64
  %v3021 = vpop.permute.xlu0 %3020
  %v3022 = vmul.f32 %v3011, %v3021
  %v3023 = vld [vmem:[#allocation2 + $0x100] sm:$0xff]
  %3024 = vmatpush.bf16.msra.mxu0 %v583
  %3025 = vmatpush.bf16.msra.mxu0 %v582
  %3026 = vmatpush.bf16.msra.mxu0 %v581
  %3027 = vmatpush.bf16.msra.mxu0 %v580
  %3028 = vmatpush.bf16.msra.mxu0 %v579
  %3029 = vmatpush.bf16.msra.mxu0 %v578
  %3030 = vmatpush.bf16.msra.mxu0 %v577
  %3031 = vmatpush.bf16.msra.mxu0 %v576
  %3032 = vmatmul.bf16.gmra.mxu0 %v2980
  %v3033 = vpop.f32.mrf.mxu0
  %v3034 = vadd.f32 0.0, %v3033
  %v3035 = vpop.f32.mrf.mxu0
  %3036 = vdwg.mxu0
  %v3037 = vadd.f32 %v3023, %v3034
  %v3038 = vmul.f32 %v541, %v3037
  %v3039 = vtanh.pop %v3038
  %v3040 = vmul.f32 %v541, %v3039
  %v3041 = vadd.f32 %v3040, %v542
  %3042 = vrot.lane.b32.xlu0 %v3041, 64
  %v3043 = vpop.permute.xlu0 %3042
  %v3044 = vmul.f32 %v3041, %v3043
  %3045 = vrot.lane.b32.xlu0 %v3044, 32
  %v3046 = vpop.permute.xlu0 %3045
  %v3047 = vmul.f32 %v3041, %v2975
  %v3048 = vadd.f32 %v3046, %v3047
  %v3049 = vtanh.pop %v3048
  %3050 = vrot.lane.b32.xlu0 %v3049, 64
  %v3051 = vpop.permute.xlu0 %3050
  %v3052 = vmul.f32 %v3041, %v3051
  %v3053 = vpack.c.bf16 %v3052, %v3052
  %v3054 = vpack.c.bf16 %v3022, %v3022
  %3055 = vmatpush.bf16.msra.mxu0 %v694
  %3056 = vmatpush.bf16.msra.mxu0 %v693
  %3057 = vmatpush.bf16.msra.mxu0 %v692
  %3058 = vmatpush.bf16.msra.mxu0 %v691
  %3059 = vmatpush.bf16.msra.mxu0 %v690
  %3060 = vmatpush.bf16.msra.mxu0 %v689
  %3061 = vmatpush.bf16.msra.mxu0 %v688
  %3062 = vmatpush.bf16.msra.mxu0 %v687
  %3063 = vmatmul.bf16.gmra.mxu0 %v3053
  %v3064 = vpop.f32.mrf.mxu0
  %v3065 = vadd.f32 %v534, %v3064
  %v3066 = vpop.f32.mrf.mxu0
  %3067 = vdwg.mxu0
  %3068 = vmatpush.bf16.msra.mxu0 %v702
  %3069 = vmatpush.bf16.msra.mxu0 %v701
  %3070 = vmatpush.bf16.msra.mxu0 %v700
  %3071 = vmatpush.bf16.msra.mxu0 %v699
  %3072 = vmatpush.bf16.msra.mxu0 %v698
  %3073 = vmatpush.bf16.msra.mxu0 %v697
  %3074 = vmatpush.bf16.msra.mxu0 %v696
  %3075 = vmatpush.bf16.msra.mxu0 %v695
  %3076 = vmatmul.bf16.gmra.mxu0 %v3054
  %v3077 = vpop.f32.mrf.mxu0
  %v3078 = vadd.f32 %v3065, %v3077
  %v3079 = vpop.f32.mrf.mxu0
  %3080 = vdwg.mxu0
  %v3081 = vmul.f32 %v541, %v3078
  %v3082 = vtanh.pop %v3081
  %v3083 = vmul.f32 %v541, %v3082
  %v3084 = vadd.f32 %v3083, %v542
  %3085 = vrot.lane.b32.xlu0 %v3084, 64
  %v3086 = vpop.permute.xlu0 %3085
  %v3087 = vmul.f32 %v3084, %v3086
  %3088 = vrot.lane.b32.xlu0 %v3087, 32
  %v3089 = vpop.permute.xlu0 %3088
  %v3090 = vmul.f32 %v3084, %v3018
  %v3091 = vadd.f32 %v3089, %v3090
  %v3092 = vtanh.pop %v3091
  %3093 = vrot.lane.b32.xlu0 %v3092, 64
  %v3094 = vpop.permute.xlu0 %3093
  %v3095 = vmul.f32 %v3084, %v3094
  %v3096 = vld [vmem:[#allocation2 + $0x108] sm:$0xff]
  %3097 = vmatpush.bf16.msra.mxu0 %v583
  %3098 = vmatpush.bf16.msra.mxu0 %v582
  %3099 = vmatpush.bf16.msra.mxu0 %v581
  %3100 = vmatpush.bf16.msra.mxu0 %v580
  %3101 = vmatpush.bf16.msra.mxu0 %v579
  %3102 = vmatpush.bf16.msra.mxu0 %v578
  %3103 = vmatpush.bf16.msra.mxu0 %v577
  %3104 = vmatpush.bf16.msra.mxu0 %v576
  %3105 = vmatmul.bf16.gmra.mxu0 %v3053
  %v3106 = vpop.f32.mrf.mxu0
  %v3107 = vadd.f32 0.0, %v3106
  %v3108 = vpop.f32.mrf.mxu0
  %3109 = vdwg.mxu0
  %v3110 = vadd.f32 %v3096, %v3107
  %v3111 = vmul.f32 %v541, %v3110
  %v3112 = vtanh.pop %v3111
  %v3113 = vmul.f32 %v541, %v3112
  %v3114 = vadd.f32 %v3113, %v542
  %3115 = vrot.lane.b32.xlu0 %v3114, 64
  %v3116 = vpop.permute.xlu0 %3115
  %v3117 = vmul.f32 %v3114, %v3116
  %3118 = vrot.lane.b32.xlu0 %v3117, 32
  %v3119 = vpop.permute.xlu0 %3118
  %v3120 = vmul.f32 %v3114, %v3048
  %v3121 = vadd.f32 %v3119, %v3120
  %v3122 = vtanh.pop %v3121
  %3123 = vrot.lane.b32.xlu0 %v3122, 64
  %v3124 = vpop.permute.xlu0 %3123
  %v3125 = vmul.f32 %v3114, %v3124
  %v3126 = vpack.c.bf16 %v3125, %v3125
  %v3127 = vpack.c.bf16 %v3095, %v3095
  %3128 = vmatpush.bf16.msra.mxu0 %v694
  %3129 = vmatpush.bf16.msra.mxu0 %v693
  %3130 = vmatpush.bf16.msra.mxu0 %v692
  %3131 = vmatpush.bf16.msra.mxu0 %v691
  %3132 = vmatpush.bf16.msra.mxu0 %v690
  %3133 = vmatpush.bf16.msra.mxu0 %v689
  %3134 = vmatpush.bf16.msra.mxu0 %v688
  %3135 = vmatpush.bf16.msra.mxu0 %v687
  %3136 = vmatmul.bf16.gmra.mxu0 %v3126
  %v3137 = vpop.f32.mrf.mxu0
  %v3138 = vadd.f32 %v534, %v3137
  %v3139 = vpop.f32.mrf.mxu0
  %3140 = vdwg.mxu0
  %3141 = vmatpush.bf16.msra.mxu0 %v702
  %3142 = vmatpush.bf16.msra.mxu0 %v701
  %3143 = vmatpush.bf16.msra.mxu0 %v700
  %3144 = vmatpush.bf16.msra.mxu0 %v699
  %3145 = vmatpush.bf16.msra.mxu0 %v698
  %3146 = vmatpush.bf16.msra.mxu0 %v697
  %3147 = vmatpush.bf16.msra.mxu0 %v696
  %3148 = vmatpush.bf16.msra.mxu0 %v695
  %3149 = vmatmul.bf16.gmra.mxu0 %v3127
  %v3150 = vpop.f32.mrf.mxu0
  %v3151 = vadd.f32 %v3138, %v3150
  %v3152 = vpop.f32.mrf.mxu0
  %3153 = vdwg.mxu0
  %v3154 = vmul.f32 %v541, %v3151
  %v3155 = vtanh.pop %v3154
  %v3156 = vmul.f32 %v541, %v3155
  %v3157 = vadd.f32 %v3156, %v542
  %3158 = vrot.lane.b32.xlu0 %v3157, 64
  %v3159 = vpop.permute.xlu0 %3158
  %v3160 = vmul.f32 %v3157, %v3159
  %3161 = vrot.lane.b32.xlu0 %v3160, 32
  %v3162 = vpop.permute.xlu0 %3161
  %v3163 = vmul.f32 %v3157, %v3091
  %v3164 = vadd.f32 %v3162, %v3163
  %v3165 = vtanh.pop %v3164
  %3166 = vrot.lane.b32.xlu0 %v3165, 64
  %v3167 = vpop.permute.xlu0 %3166
  %v3168 = vmul.f32 %v3157, %v3167
  %v3169 = vld [vmem:[#allocation2 + $0x110] sm:$0xff]
  %3170 = vmatpush.bf16.msra.mxu0 %v583
  %3171 = vmatpush.bf16.msra.mxu0 %v582
  %3172 = vmatpush.bf16.msra.mxu0 %v581
  %3173 = vmatpush.bf16.msra.mxu0 %v580
  %3174 = vmatpush.bf16.msra.mxu0 %v579
  %3175 = vmatpush.bf16.msra.mxu0 %v578
  %3176 = vmatpush.bf16.msra.mxu0 %v577
  %3177 = vmatpush.bf16.msra.mxu0 %v576
  %3178 = vmatmul.bf16.gmra.mxu0 %v3126
  %v3179 = vpop.f32.mrf.mxu0
  %v3180 = vadd.f32 0.0, %v3179
  %v3181 = vpop.f32.mrf.mxu0
  %3182 = vdwg.mxu0
  %v3183 = vadd.f32 %v3169, %v3180
  %v3184 = vmul.f32 %v541, %v3183
  %v3185 = vtanh.pop %v3184
  %v3186 = vmul.f32 %v541, %v3185
  %v3187 = vadd.f32 %v3186, %v542
  %3188 = vrot.lane.b32.xlu0 %v3187, 64
  %v3189 = vpop.permute.xlu0 %3188
  %v3190 = vmul.f32 %v3187, %v3189
  %3191 = vrot.lane.b32.xlu0 %v3190, 32
  %v3192 = vpop.permute.xlu0 %3191
  %v3193 = vmul.f32 %v3187, %v3121
  %v3194 = vadd.f32 %v3192, %v3193
  %v3195 = vtanh.pop %v3194
  %3196 = vrot.lane.b32.xlu0 %v3195, 64
  %v3197 = vpop.permute.xlu0 %3196
  %v3198 = vmul.f32 %v3187, %v3197
  %v3199 = vpack.c.bf16 %v3198, %v3198
  %v3200 = vpack.c.bf16 %v3168, %v3168
  %3201 = vmatpush.bf16.msra.mxu0 %v694
  %3202 = vmatpush.bf16.msra.mxu0 %v693
  %3203 = vmatpush.bf16.msra.mxu0 %v692
  %3204 = vmatpush.bf16.msra.mxu0 %v691
  %3205 = vmatpush.bf16.msra.mxu0 %v690
  %3206 = vmatpush.bf16.msra.mxu0 %v689
  %3207 = vmatpush.bf16.msra.mxu0 %v688
  %3208 = vmatpush.bf16.msra.mxu0 %v687
  %3209 = vmatmul.bf16.gmra.mxu0 %v3199
  %v3210 = vpop.f32.mrf.mxu0
  %v3211 = vadd.f32 %v534, %v3210
  %v3212 = vpop.f32.mrf.mxu0
  %3213 = vdwg.mxu0
  %3214 = vmatpush.bf16.msra.mxu0 %v702
  %3215 = vmatpush.bf16.msra.mxu0 %v701
  %3216 = vmatpush.bf16.msra.mxu0 %v700
  %3217 = vmatpush.bf16.msra.mxu0 %v699
  %3218 = vmatpush.bf16.msra.mxu0 %v698
  %3219 = vmatpush.bf16.msra.mxu0 %v697
  %3220 = vmatpush.bf16.msra.mxu0 %v696
  %3221 = vmatpush.bf16.msra.mxu0 %v695
  %3222 = vmatmul.bf16.gmra.mxu0 %v3200
  %v3223 = vpop.f32.mrf.mxu0
  %v3224 = vadd.f32 %v3211, %v3223
  %v3225 = vpop.f32.mrf.mxu0
  %3226 = vdwg.mxu0
  %v3227 = vmul.f32 %v541, %v3224
  %v3228 = vtanh.pop %v3227
  %v3229 = vmul.f32 %v541, %v3228
  %v3230 = vadd.f32 %v3229, %v542
  %3231 = vrot.lane.b32.xlu0 %v3230, 64
  %v3232 = vpop.permute.xlu0 %3231
  %v3233 = vmul.f32 %v3230, %v3232
  %3234 = vrot.lane.b32.xlu0 %v3233, 32
  %v3235 = vpop.permute.xlu0 %3234
  %v3236 = vmul.f32 %v3230, %v3164
  %v3237 = vadd.f32 %v3235, %v3236
  %v3238 = vtanh.pop %v3237
  %3239 = vrot.lane.b32.xlu0 %v3238, 64
  %v3240 = vpop.permute.xlu0 %3239
  %v3241 = vmul.f32 %v3230, %v3240
  %v3242 = vld [vmem:[#allocation2 + $0x118] sm:$0xff]
  %3243 = vmatpush.bf16.msra.mxu0 %v583
  %3244 = vmatpush.bf16.msra.mxu0 %v582
  %3245 = vmatpush.bf16.msra.mxu0 %v581
  %3246 = vmatpush.bf16.msra.mxu0 %v580
  %3247 = vmatpush.bf16.msra.mxu0 %v579
  %3248 = vmatpush.bf16.msra.mxu0 %v578
  %3249 = vmatpush.bf16.msra.mxu0 %v577
  %3250 = vmatpush.bf16.msra.mxu0 %v576
  %3251 = vmatmul.bf16.gmra.mxu0 %v3199
  %v3252 = vpop.f32.mrf.mxu0
  %v3253 = vadd.f32 0.0, %v3252
  %v3254 = vpop.f32.mrf.mxu0
  %3255 = vdwg.mxu0
  %v3256 = vadd.f32 %v3242, %v3253
  %v3257 = vmul.f32 %v541, %v3256
  %v3258 = vtanh.pop %v3257
  %v3259 = vmul.f32 %v541, %v3258
  %v3260 = vadd.f32 %v3259, %v542
  %3261 = vrot.lane.b32.xlu0 %v3260, 64
  %v3262 = vpop.permute.xlu0 %3261
  %v3263 = vmul.f32 %v3260, %v3262
  %3264 = vrot.lane.b32.xlu0 %v3263, 32
  %v3265 = vpop.permute.xlu0 %3264
  %v3266 = vmul.f32 %v3260, %v3194
  %v3267 = vadd.f32 %v3265, %v3266
  %v3268 = vtanh.pop %v3267
  %3269 = vrot.lane.b32.xlu0 %v3268, 64
  %v3270 = vpop.permute.xlu0 %3269
  %v3271 = vmul.f32 %v3260, %v3270
  %v3272 = vpack.c.bf16 %v3271, %v3271
  %v3273 = vpack.c.bf16 %v3241, %v3241
  %3274 = vmatpush.bf16.msra.mxu0 %v694
  %3275 = vmatpush.bf16.msra.mxu0 %v693
  %3276 = vmatpush.bf16.msra.mxu0 %v692
  %3277 = vmatpush.bf16.msra.mxu0 %v691
  %3278 = vmatpush.bf16.msra.mxu0 %v690
  %3279 = vmatpush.bf16.msra.mxu0 %v689
  %3280 = vmatpush.bf16.msra.mxu0 %v688
  %3281 = vmatpush.bf16.msra.mxu0 %v687
  %3282 = vmatmul.bf16.gmra.mxu0 %v3272
  %v3283 = vpop.f32.mrf.mxu0
  %v3284 = vadd.f32 %v534, %v3283
  %v3285 = vpop.f32.mrf.mxu0
  %3286 = vdwg.mxu0
  %3287 = vmatpush.bf16.msra.mxu0 %v702
  %3288 = vmatpush.bf16.msra.mxu0 %v701
  %3289 = vmatpush.bf16.msra.mxu0 %v700
  %3290 = vmatpush.bf16.msra.mxu0 %v699
  %3291 = vmatpush.bf16.msra.mxu0 %v698
  %3292 = vmatpush.bf16.msra.mxu0 %v697
  %3293 = vmatpush.bf16.msra.mxu0 %v696
  %3294 = vmatpush.bf16.msra.mxu0 %v695
  %3295 = vmatmul.bf16.gmra.mxu0 %v3273
  %v3296 = vpop.f32.mrf.mxu0
  %v3297 = vadd.f32 %v3284, %v3296
  %v3298 = vpop.f32.mrf.mxu0
  %3299 = vdwg.mxu0
  %v3300 = vmul.f32 %v541, %v3297
  %v3301 = vtanh.pop %v3300
  %v3302 = vmul.f32 %v541, %v3301
  %v3303 = vadd.f32 %v3302, %v542
  %3304 = vrot.lane.b32.xlu0 %v3303, 64
  %v3305 = vpop.permute.xlu0 %3304
  %v3306 = vmul.f32 %v3303, %v3305
  %3307 = vrot.lane.b32.xlu0 %v3306, 32
  %v3308 = vpop.permute.xlu0 %3307
  %v3309 = vmul.f32 %v3303, %v3237
  %v3310 = vadd.f32 %v3308, %v3309
  %v3311 = vtanh.pop %v3310
  %3312 = vrot.lane.b32.xlu0 %v3311, 64
  %v3313 = vpop.permute.xlu0 %3312
  %v3314 = vmul.f32 %v3303, %v3313
  %v3315 = vld [vmem:[#allocation2 + $0x120] sm:$0xff]
  %3316 = vmatpush.bf16.msra.mxu0 %v583
  %3317 = vmatpush.bf16.msra.mxu0 %v582
  %3318 = vmatpush.bf16.msra.mxu0 %v581
  %3319 = vmatpush.bf16.msra.mxu0 %v580
  %3320 = vmatpush.bf16.msra.mxu0 %v579
  %3321 = vmatpush.bf16.msra.mxu0 %v578
  %3322 = vmatpush.bf16.msra.mxu0 %v577
  %3323 = vmatpush.bf16.msra.mxu0 %v576
  %3324 = vmatmul.bf16.gmra.mxu0 %v3272
  %v3325 = vpop.f32.mrf.mxu0
  %v3326 = vadd.f32 0.0, %v3325
  %v3327 = vpop.f32.mrf.mxu0
  %3328 = vdwg.mxu0
  %v3329 = vadd.f32 %v3315, %v3326
  %v3330 = vmul.f32 %v541, %v3329
  %v3331 = vtanh.pop %v3330
  %v3332 = vmul.f32 %v541, %v3331
  %v3333 = vadd.f32 %v3332, %v542
  %3334 = vrot.lane.b32.xlu0 %v3333, 64
  %v3335 = vpop.permute.xlu0 %3334
  %v3336 = vmul.f32 %v3333, %v3335
  %3337 = vrot.lane.b32.xlu0 %v3336, 32
  %v3338 = vpop.permute.xlu0 %3337
  %v3339 = vmul.f32 %v3333, %v3267
  %v3340 = vadd.f32 %v3338, %v3339
  %v3341 = vtanh.pop %v3340
  %3342 = vrot.lane.b32.xlu0 %v3341, 64
  %v3343 = vpop.permute.xlu0 %3342
  %v3344 = vmul.f32 %v3333, %v3343
  %v3345 = vpack.c.bf16 %v3344, %v3344
  %v3346 = vpack.c.bf16 %v3314, %v3314
  %3347 = vmatpush.bf16.msra.mxu0 %v694
  %3348 = vmatpush.bf16.msra.mxu0 %v693
  %3349 = vmatpush.bf16.msra.mxu0 %v692
  %3350 = vmatpush.bf16.msra.mxu0 %v691
  %3351 = vmatpush.bf16.msra.mxu0 %v690
  %3352 = vmatpush.bf16.msra.mxu0 %v689
  %3353 = vmatpush.bf16.msra.mxu0 %v688
  %3354 = vmatpush.bf16.msra.mxu0 %v687
  %3355 = vmatmul.bf16.gmra.mxu0 %v3345
  %v3356 = vpop.f32.mrf.mxu0
  %v3357 = vadd.f32 %v534, %v3356
  %v3358 = vpop.f32.mrf.mxu0
  %3359 = vdwg.mxu0
  %3360 = vmatpush.bf16.msra.mxu0 %v702
  %3361 = vmatpush.bf16.msra.mxu0 %v701
  %3362 = vmatpush.bf16.msra.mxu0 %v700
  %3363 = vmatpush.bf16.msra.mxu0 %v699
  %3364 = vmatpush.bf16.msra.mxu0 %v698
  %3365 = vmatpush.bf16.msra.mxu0 %v697
  %3366 = vmatpush.bf16.msra.mxu0 %v696
  %3367 = vmatpush.bf16.msra.mxu0 %v695
  %3368 = vmatmul.bf16.gmra.mxu0 %v3346
  %v3369 = vpop.f32.mrf.mxu0
  %v3370 = vadd.f32 %v3357, %v3369
  %v3371 = vpop.f32.mrf.mxu0
  %3372 = vdwg.mxu0
  %v3373 = vmul.f32 %v541, %v3370
  %v3374 = vtanh.pop %v3373
  %v3375 = vmul.f32 %v541, %v3374
  %v3376 = vadd.f32 %v3375, %v542
  %3377 = vrot.lane.b32.xlu0 %v3376, 64
  %v3378 = vpop.permute.xlu0 %3377
  %v3379 = vmul.f32 %v3376, %v3378
  %3380 = vrot.lane.b32.xlu0 %v3379, 32
  %v3381 = vpop.permute.xlu0 %3380
  %v3382 = vmul.f32 %v3376, %v3310
  %v3383 = vadd.f32 %v3381, %v3382
  %v3384 = vtanh.pop %v3383
  %3385 = vrot.lane.b32.xlu0 %v3384, 64
  %v3386 = vpop.permute.xlu0 %3385
  %v3387 = vmul.f32 %v3376, %v3386
  %v3388 = vld [vmem:[#allocation2 + $0x128] sm:$0xff]
  %3389 = vmatpush.bf16.msra.mxu0 %v583
  %3390 = vmatpush.bf16.msra.mxu0 %v582
  %3391 = vmatpush.bf16.msra.mxu0 %v581
  %3392 = vmatpush.bf16.msra.mxu0 %v580
  %3393 = vmatpush.bf16.msra.mxu0 %v579
  %3394 = vmatpush.bf16.msra.mxu0 %v578
  %3395 = vmatpush.bf16.msra.mxu0 %v577
  %3396 = vmatpush.bf16.msra.mxu0 %v576
  %3397 = vmatmul.bf16.gmra.mxu0 %v3345
  %v3398 = vpop.f32.mrf.mxu0
  %v3399 = vadd.f32 0.0, %v3398
  %v3400 = vpop.f32.mrf.mxu0
  %3401 = vdwg.mxu0
  %v3402 = vadd.f32 %v3388, %v3399
  %v3403 = vmul.f32 %v541, %v3402
  %v3404 = vtanh.pop %v3403
  %v3405 = vmul.f32 %v541, %v3404
  %v3406 = vadd.f32 %v3405, %v542
  %3407 = vrot.lane.b32.xlu0 %v3406, 64
  %v3408 = vpop.permute.xlu0 %3407
  %v3409 = vmul.f32 %v3406, %v3408
  %3410 = vrot.lane.b32.xlu0 %v3409, 32
  %v3411 = vpop.permute.xlu0 %3410
  %v3412 = vmul.f32 %v3406, %v3340
  %v3413 = vadd.f32 %v3411, %v3412
  %v3414 = vtanh.pop %v3413
  %3415 = vrot.lane.b32.xlu0 %v3414, 64
  %v3416 = vpop.permute.xlu0 %3415
  %v3417 = vmul.f32 %v3406, %v3416
  %v3418 = vpack.c.bf16 %v3417, %v3417
  %v3419 = vpack.c.bf16 %v3387, %v3387
  %3420 = vmatpush.bf16.msra.mxu0 %v694
  %3421 = vmatpush.bf16.msra.mxu0 %v693
  %3422 = vmatpush.bf16.msra.mxu0 %v692
  %3423 = vmatpush.bf16.msra.mxu0 %v691
  %3424 = vmatpush.bf16.msra.mxu0 %v690
  %3425 = vmatpush.bf16.msra.mxu0 %v689
  %3426 = vmatpush.bf16.msra.mxu0 %v688
  %3427 = vmatpush.bf16.msra.mxu0 %v687
  %3428 = vmatmul.bf16.gmra.mxu0 %v3418
  %v3429 = vpop.f32.mrf.mxu0
  %v3430 = vadd.f32 %v534, %v3429
  %v3431 = vpop.f32.mrf.mxu0
  %3432 = vdwg.mxu0
  %3433 = vmatpush.bf16.msra.mxu0 %v702
  %3434 = vmatpush.bf16.msra.mxu0 %v701
  %3435 = vmatpush.bf16.msra.mxu0 %v700
  %3436 = vmatpush.bf16.msra.mxu0 %v699
  %3437 = vmatpush.bf16.msra.mxu0 %v698
  %3438 = vmatpush.bf16.msra.mxu0 %v697
  %3439 = vmatpush.bf16.msra.mxu0 %v696
  %3440 = vmatpush.bf16.msra.mxu0 %v695
  %3441 = vmatmul.bf16.gmra.mxu0 %v3419
  %v3442 = vpop.f32.mrf.mxu0
  %v3443 = vadd.f32 %v3430, %v3442
  %v3444 = vpop.f32.mrf.mxu0
  %3445 = vdwg.mxu0
  %v3446 = vmul.f32 %v541, %v3443
  %v3447 = vtanh.pop %v3446
  %v3448 = vmul.f32 %v541, %v3447
  %v3449 = vadd.f32 %v3448, %v542
  %3450 = vrot.lane.b32.xlu0 %v3449, 64
  %v3451 = vpop.permute.xlu0 %3450
  %v3452 = vmul.f32 %v3449, %v3451
  %3453 = vrot.lane.b32.xlu0 %v3452, 32
  %v3454 = vpop.permute.xlu0 %3453
  %v3455 = vmul.f32 %v3449, %v3383
  %v3456 = vadd.f32 %v3454, %v3455
  %v3457 = vtanh.pop %v3456
  %3458 = vrot.lane.b32.xlu0 %v3457, 64
  %v3459 = vpop.permute.xlu0 %3458
  %v3460 = vmul.f32 %v3449, %v3459
  %v3461 = vld [vmem:[#allocation2 + $0x130] sm:$0xff]
  %3462 = vmatpush.bf16.msra.mxu0 %v583
  %3463 = vmatpush.bf16.msra.mxu0 %v582
  %3464 = vmatpush.bf16.msra.mxu0 %v581
  %3465 = vmatpush.bf16.msra.mxu0 %v580
  %3466 = vmatpush.bf16.msra.mxu0 %v579
  %3467 = vmatpush.bf16.msra.mxu0 %v578
  %3468 = vmatpush.bf16.msra.mxu0 %v577
  %3469 = vmatpush.bf16.msra.mxu0 %v576
  %3470 = vmatmul.bf16.gmra.mxu0 %v3418
  %v3471 = vpop.f32.mrf.mxu0
  %v3472 = vadd.f32 0.0, %v3471
  %v3473 = vpop.f32.mrf.mxu0
  %3474 = vdwg.mxu0
  %v3475 = vadd.f32 %v3461, %v3472
  %v3476 = vmul.f32 %v541, %v3475
  %v3477 = vtanh.pop %v3476
  %v3478 = vmul.f32 %v541, %v3477
  %v3479 = vadd.f32 %v3478, %v542
  %3480 = vrot.lane.b32.xlu0 %v3479, 64
  %v3481 = vpop.permute.xlu0 %3480
  %v3482 = vmul.f32 %v3479, %v3481
  %3483 = vrot.lane.b32.xlu0 %v3482, 32
  %v3484 = vpop.permute.xlu0 %3483
  %v3485 = vmul.f32 %v3479, %v3413
  %v3486 = vadd.f32 %v3484, %v3485
  %v3487 = vtanh.pop %v3486
  %3488 = vrot.lane.b32.xlu0 %v3487, 64
  %v3489 = vpop.permute.xlu0 %3488
  %v3490 = vmul.f32 %v3479, %v3489
  %v3491 = vpack.c.bf16 %v3490, %v3490
  %v3492 = vpack.c.bf16 %v3460, %v3460
  %3493 = vmatpush.bf16.msra.mxu0 %v694
  %3494 = vmatpush.bf16.msra.mxu0 %v693
  %3495 = vmatpush.bf16.msra.mxu0 %v692
  %3496 = vmatpush.bf16.msra.mxu0 %v691
  %3497 = vmatpush.bf16.msra.mxu0 %v690
  %3498 = vmatpush.bf16.msra.mxu0 %v689
  %3499 = vmatpush.bf16.msra.mxu0 %v688
  %3500 = vmatpush.bf16.msra.mxu0 %v687
  %3501 = vmatmul.bf16.gmra.mxu0 %v3491
  %v3502 = vpop.f32.mrf.mxu0
  %v3503 = vadd.f32 %v534, %v3502
  %v3504 = vpop.f32.mrf.mxu0
  %3505 = vdwg.mxu0
  %3506 = vmatpush.bf16.msra.mxu0 %v702
  %3507 = vmatpush.bf16.msra.mxu0 %v701
  %3508 = vmatpush.bf16.msra.mxu0 %v700
  %3509 = vmatpush.bf16.msra.mxu0 %v699
  %3510 = vmatpush.bf16.msra.mxu0 %v698
  %3511 = vmatpush.bf16.msra.mxu0 %v697
  %3512 = vmatpush.bf16.msra.mxu0 %v696
  %3513 = vmatpush.bf16.msra.mxu0 %v695
  %3514 = vmatmul.bf16.gmra.mxu0 %v3492
  %v3515 = vpop.f32.mrf.mxu0
  %v3516 = vadd.f32 %v3503, %v3515
  %v3517 = vpop.f32.mrf.mxu0
  %3518 = vdwg.mxu0
  %v3519 = vmul.f32 %v541, %v3516
  %v3520 = vtanh.pop %v3519
  %v3521 = vmul.f32 %v541, %v3520
  %v3522 = vadd.f32 %v3521, %v542
  %3523 = vrot.lane.b32.xlu0 %v3522, 64
  %v3524 = vpop.permute.xlu0 %3523
  %v3525 = vmul.f32 %v3522, %v3524
  %3526 = vrot.lane.b32.xlu0 %v3525, 32
  %v3527 = vpop.permute.xlu0 %3526
  %v3528 = vmul.f32 %v3522, %v3456
  %v3529 = vadd.f32 %v3527, %v3528
  %v3530 = vtanh.pop %v3529
  %3531 = vrot.lane.b32.xlu0 %v3530, 64
  %v3532 = vpop.permute.xlu0 %3531
  %v3533 = vmul.f32 %v3522, %v3532
  %v3534 = vld [vmem:[#allocation2 + $0x138] sm:$0xff]
  %3535 = vmatpush.bf16.msra.mxu0 %v583
  %3536 = vmatpush.bf16.msra.mxu0 %v582
  %3537 = vmatpush.bf16.msra.mxu0 %v581
  %3538 = vmatpush.bf16.msra.mxu0 %v580
  %3539 = vmatpush.bf16.msra.mxu0 %v579
  %3540 = vmatpush.bf16.msra.mxu0 %v578
  %3541 = vmatpush.bf16.msra.mxu0 %v577
  %3542 = vmatpush.bf16.msra.mxu0 %v576
  %3543 = vmatmul.bf16.gmra.mxu0 %v3491
  %v3544 = vpop.f32.mrf.mxu0
  %v3545 = vadd.f32 0.0, %v3544
  %v3546 = vpop.f32.mrf.mxu0
  %3547 = vdwg.mxu0
  %v3548 = vadd.f32 %v3534, %v3545
  %v3549 = vmul.f32 %v541, %v3548
  %v3550 = vtanh.pop %v3549
  %v3551 = vmul.f32 %v541, %v3550
  %v3552 = vadd.f32 %v3551, %v542
  %3553 = vrot.lane.b32.xlu0 %v3552, 64
  %v3554 = vpop.permute.xlu0 %3553
  %v3555 = vmul.f32 %v3552, %v3554
  %3556 = vrot.lane.b32.xlu0 %v3555, 32
  %v3557 = vpop.permute.xlu0 %3556
  %v3558 = vmul.f32 %v3552, %v3486
  %v3559 = vadd.f32 %v3557, %v3558
  %v3560 = vtanh.pop %v3559
  %3561 = vrot.lane.b32.xlu0 %v3560, 64
  %v3562 = vpop.permute.xlu0 %3561
  %v3563 = vmul.f32 %v3552, %v3562
  %v3564 = vpack.c.bf16 %v3563, %v3563
  %v3565 = vpack.c.bf16 %v3533, %v3533
  %3566 = vmatpush.bf16.msra.mxu0 %v694
  %3567 = vmatpush.bf16.msra.mxu0 %v693
  %3568 = vmatpush.bf16.msra.mxu0 %v692
  %3569 = vmatpush.bf16.msra.mxu0 %v691
  %3570 = vmatpush.bf16.msra.mxu0 %v690
  %3571 = vmatpush.bf16.msra.mxu0 %v689
  %3572 = vmatpush.bf16.msra.mxu0 %v688
  %3573 = vmatpush.bf16.msra.mxu0 %v687
  %3574 = vmatmul.bf16.gmra.mxu0 %v3564
  %v3575 = vpop.f32.mrf.mxu0
  %v3576 = vadd.f32 %v534, %v3575
  %v3577 = vpop.f32.mrf.mxu0
  %3578 = vdwg.mxu0
  %3579 = vmatpush.bf16.msra.mxu0 %v702
  %3580 = vmatpush.bf16.msra.mxu0 %v701
  %3581 = vmatpush.bf16.msra.mxu0 %v700
  %3582 = vmatpush.bf16.msra.mxu0 %v699
  %3583 = vmatpush.bf16.msra.mxu0 %v698
  %3584 = vmatpush.bf16.msra.mxu0 %v697
  %3585 = vmatpush.bf16.msra.mxu0 %v696
  %3586 = vmatpush.bf16.msra.mxu0 %v695
  %3587 = vmatmul.bf16.gmra.mxu0 %v3565
  %v3588 = vpop.f32.mrf.mxu0
  %v3589 = vadd.f32 %v3576, %v3588
  %v3590 = vpop.f32.mrf.mxu0
  %3591 = vdwg.mxu0
  %v3592 = vmul.f32 %v541, %v3589
  %v3593 = vtanh.pop %v3592
  %v3594 = vmul.f32 %v541, %v3593
  %v3595 = vadd.f32 %v3594, %v542
  %3596 = vrot.lane.b32.xlu0 %v3595, 64
  %v3597 = vpop.permute.xlu0 %3596
  %v3598 = vmul.f32 %v3595, %v3597
  %3599 = vrot.lane.b32.xlu0 %v3598, 32
  %v3600 = vpop.permute.xlu0 %3599
  %v3601 = vmul.f32 %v3595, %v3529
  %v3602 = vadd.f32 %v3600, %v3601
  %v3603 = vtanh.pop %v3602
  %3604 = vrot.lane.b32.xlu0 %v3603, 64
  %v3605 = vpop.permute.xlu0 %3604
  %v3606 = vmul.f32 %v3595, %v3605
  %v3607 = vld [vmem:[#allocation2 + $0x140] sm:$0xff]
  %3608 = vmatpush.bf16.msra.mxu0 %v583
  %3609 = vmatpush.bf16.msra.mxu0 %v582
  %3610 = vmatpush.bf16.msra.mxu0 %v581
  %3611 = vmatpush.bf16.msra.mxu0 %v580
  %3612 = vmatpush.bf16.msra.mxu0 %v579
  %3613 = vmatpush.bf16.msra.mxu0 %v578
  %3614 = vmatpush.bf16.msra.mxu0 %v577
  %3615 = vmatpush.bf16.msra.mxu0 %v576
  %3616 = vmatmul.bf16.gmra.mxu0 %v3564
  %v3617 = vpop.f32.mrf.mxu0
  %v3618 = vadd.f32 0.0, %v3617
  %v3619 = vpop.f32.mrf.mxu0
  %3620 = vdwg.mxu0
  %v3621 = vadd.f32 %v3607, %v3618
  %v3622 = vmul.f32 %v541, %v3621
  %v3623 = vtanh.pop %v3622
  %v3624 = vmul.f32 %v541, %v3623
  %v3625 = vadd.f32 %v3624, %v542
  %3626 = vrot.lane.b32.xlu0 %v3625, 64
  %v3627 = vpop.permute.xlu0 %3626
  %v3628 = vmul.f32 %v3625, %v3627
  %3629 = vrot.lane.b32.xlu0 %v3628, 32
  %v3630 = vpop.permute.xlu0 %3629
  %v3631 = vmul.f32 %v3625, %v3559
  %v3632 = vadd.f32 %v3630, %v3631
  %v3633 = vtanh.pop %v3632
  %3634 = vrot.lane.b32.xlu0 %v3633, 64
  %v3635 = vpop.permute.xlu0 %3634
  %v3636 = vmul.f32 %v3625, %v3635
  %v3637 = vpack.c.bf16 %v3636, %v3636
  %v3638 = vpack.c.bf16 %v3606, %v3606
  %3639 = vmatpush.bf16.msra.mxu0 %v694
  %3640 = vmatpush.bf16.msra.mxu0 %v693
  %3641 = vmatpush.bf16.msra.mxu0 %v692
  %3642 = vmatpush.bf16.msra.mxu0 %v691
  %3643 = vmatpush.bf16.msra.mxu0 %v690
  %3644 = vmatpush.bf16.msra.mxu0 %v689
  %3645 = vmatpush.bf16.msra.mxu0 %v688
  %3646 = vmatpush.bf16.msra.mxu0 %v687
  %3647 = vmatmul.bf16.gmra.mxu0 %v3637
  %v3648 = vpop.f32.mrf.mxu0
  %v3649 = vadd.f32 %v534, %v3648
  %v3650 = vpop.f32.mrf.mxu0
  %3651 = vdwg.mxu0
  %3652 = vmatpush.bf16.msra.mxu0 %v702
  %3653 = vmatpush.bf16.msra.mxu0 %v701
  %3654 = vmatpush.bf16.msra.mxu0 %v700
  %3655 = vmatpush.bf16.msra.mxu0 %v699
  %3656 = vmatpush.bf16.msra.mxu0 %v698
  %3657 = vmatpush.bf16.msra.mxu0 %v697
  %3658 = vmatpush.bf16.msra.mxu0 %v696
  %3659 = vmatpush.bf16.msra.mxu0 %v695
  %3660 = vmatmul.bf16.gmra.mxu0 %v3638
  %v3661 = vpop.f32.mrf.mxu0
  %v3662 = vadd.f32 %v3649, %v3661
  %v3663 = vpop.f32.mrf.mxu0
  %3664 = vdwg.mxu0
  %v3665 = vmul.f32 %v541, %v3662
  %v3666 = vtanh.pop %v3665
  %v3667 = vmul.f32 %v541, %v3666
  %v3668 = vadd.f32 %v3667, %v542
  %3669 = vrot.lane.b32.xlu0 %v3668, 64
  %v3670 = vpop.permute.xlu0 %3669
  %v3671 = vmul.f32 %v3668, %v3670
  %3672 = vrot.lane.b32.xlu0 %v3671, 32
  %v3673 = vpop.permute.xlu0 %3672
  %v3674 = vmul.f32 %v3668, %v3602
  %v3675 = vadd.f32 %v3673, %v3674
  %v3676 = vtanh.pop %v3675
  %3677 = vrot.lane.b32.xlu0 %v3676, 64
  %v3678 = vpop.permute.xlu0 %3677
  %v3679 = vmul.f32 %v3668, %v3678
  %v3680 = vld [vmem:[#allocation2 + $0x148] sm:$0xff]
  %3681 = vmatpush.bf16.msra.mxu0 %v583
  %3682 = vmatpush.bf16.msra.mxu0 %v582
  %3683 = vmatpush.bf16.msra.mxu0 %v581
  %3684 = vmatpush.bf16.msra.mxu0 %v580
  %3685 = vmatpush.bf16.msra.mxu0 %v579
  %3686 = vmatpush.bf16.msra.mxu0 %v578
  %3687 = vmatpush.bf16.msra.mxu0 %v577
  %3688 = vmatpush.bf16.msra.mxu0 %v576
  %3689 = vmatmul.bf16.gmra.mxu0 %v3637
  %v3690 = vpop.f32.mrf.mxu0
  %v3691 = vadd.f32 0.0, %v3690
  %v3692 = vpop.f32.mrf.mxu0
  %3693 = vdwg.mxu0
  %v3694 = vadd.f32 %v3680, %v3691
  %v3695 = vmul.f32 %v541, %v3694
  %v3696 = vtanh.pop %v3695
  %v3697 = vmul.f32 %v541, %v3696
  %v3698 = vadd.f32 %v3697, %v542
  %3699 = vrot.lane.b32.xlu0 %v3698, 64
  %v3700 = vpop.permute.xlu0 %3699
  %v3701 = vmul.f32 %v3698, %v3700
  %3702 = vrot.lane.b32.xlu0 %v3701, 32
  %v3703 = vpop.permute.xlu0 %3702
  %v3704 = vmul.f32 %v3698, %v3632
  %v3705 = vadd.f32 %v3703, %v3704
  %v3706 = vtanh.pop %v3705
  %3707 = vrot.lane.b32.xlu0 %v3706, 64
  %v3708 = vpop.permute.xlu0 %3707
  %v3709 = vmul.f32 %v3698, %v3708
  %v3710 = vpack.c.bf16 %v3709, %v3709
  %v3711 = vpack.c.bf16 %v3679, %v3679
  %3712 = vmatpush.bf16.msra.mxu0 %v694
  %3713 = vmatpush.bf16.msra.mxu0 %v693
  %3714 = vmatpush.bf16.msra.mxu0 %v692
  %3715 = vmatpush.bf16.msra.mxu0 %v691
  %3716 = vmatpush.bf16.msra.mxu0 %v690
  %3717 = vmatpush.bf16.msra.mxu0 %v689
  %3718 = vmatpush.bf16.msra.mxu0 %v688
  %3719 = vmatpush.bf16.msra.mxu0 %v687
  %3720 = vmatmul.bf16.gmra.mxu0 %v3710
  %v3721 = vpop.f32.mrf.mxu0
  %v3722 = vadd.f32 %v534, %v3721
  %v3723 = vpop.f32.mrf.mxu0
  %3724 = vdwg.mxu0
  %3725 = vmatpush.bf16.msra.mxu0 %v702
  %3726 = vmatpush.bf16.msra.mxu0 %v701
  %3727 = vmatpush.bf16.msra.mxu0 %v700
  %3728 = vmatpush.bf16.msra.mxu0 %v699
  %3729 = vmatpush.bf16.msra.mxu0 %v698
  %3730 = vmatpush.bf16.msra.mxu0 %v697
  %3731 = vmatpush.bf16.msra.mxu0 %v696
  %3732 = vmatpush.bf16.msra.mxu0 %v695
  %3733 = vmatmul.bf16.gmra.mxu0 %v3711
  %v3734 = vpop.f32.mrf.mxu0
  %v3735 = vadd.f32 %v3722, %v3734
  %v3736 = vpop.f32.mrf.mxu0
  %3737 = vdwg.mxu0
  %v3738 = vmul.f32 %v541, %v3735
  %v3739 = vtanh.pop %v3738
  %v3740 = vmul.f32 %v541, %v3739
  %v3741 = vadd.f32 %v3740, %v542
  %3742 = vrot.lane.b32.xlu0 %v3741, 64
  %v3743 = vpop.permute.xlu0 %3742
  %v3744 = vmul.f32 %v3741, %v3743
  %3745 = vrot.lane.b32.xlu0 %v3744, 32
  %v3746 = vpop.permute.xlu0 %3745
  %v3747 = vmul.f32 %v3741, %v3675
  %v3748 = vadd.f32 %v3746, %v3747
  %v3749 = vtanh.pop %v3748
  %3750 = vrot.lane.b32.xlu0 %v3749, 64
  %v3751 = vpop.permute.xlu0 %3750
  %v3752 = vmul.f32 %v3741, %v3751
  %v3753 = vlaneseq
  %v3754 = vshrl.u32 %v3753, 7
  %v3755 = vmul.u32 %v3754, 2
  %vm3756 = vcmp.ge.s32.totalorder %v3755, 2
  %v3757 = vsel %vm3756, 1, 0
  %v3758 = vmul.u32 %v3757, 8
  %v3759 = vmul.u32 %v3757, 2
  %v3760 = vsub.s32 %v3755, %v3759
  %v3761 = vadd.s32 %v3758, %v3760
  %vm3762 = vcmp.eq.s32.totalorder %v537, %v3761
  %vm3763 = vcmp.lt.s32.totalorder %v3754, 2
  %vm3764 = vmand %vm3762, %vm3763
  %v3765 = vsel %vm3764, 1, 0
  %v3766 = vcvt.s32.f32 %v3765
  %vm3767 = vcmask 130048
  %v3769 = vsel %vm3767, %v3766, 0
  %3771 = vmatpush.msra.mxu0 0.0
  %3772 = vmatpush.msra.mxu0 0.0
  %3773 = vmatpush.msra.mxu0 0.0
  %3774 = vmatpush.msra.mxu0 0.0
  %3775 = vmatpush.msra.mxu0 0.0
  %3776 = vmatpush.msra.mxu0 0.0
  %3777 = vmatpush.msra.mxu0 0.0
  %3778 = vmatpush.msra.mxu0 0.0
  %3779 = vmatpush.msra.mxu0 0.0
  %3780 = vmatpush.msra.mxu0 0.0
  %3781 = vmatpush.msra.mxu0 0.0
  %3782 = vmatpush.msra.mxu0 0.0
  %3783 = vmatpush.msra.mxu0 0.0
  %3784 = vmatpush.msra.mxu0 0.0
  %3785 = vmatpush.msra.mxu0 %v3752
  %3786 = vmatpush.msra.mxu0 %v3709
  %3787 = vmatmul.f32.gmra.mxu0 %v3769
  %v3788 = vpop.f32.mrf.mxu0
  %v3789 = vadd.f32 0.0, %v3788
  %3790 = vdwg.mxu0
  %v3791 = vadd.s32 %v3755, 1
  %vm3792 = vcmp.ge.s32.totalorder %v3791, 2
  %v3793 = vsel %vm3792, 1, 0
  %v3794 = vmul.u32 %v3793, 8
  %v3795 = vmul.u32 %v3793, 2
  %v3796 = vsub.s32 %v3791, %v3795
  %v3797 = vadd.s32 %v3794, %v3796
  %vm3798 = vcmp.eq.s32.totalorder %v537, %v3797
  %vm3799 = vmand %vm3798, %vm3763
  %v3800 = vsel %vm3799, 1, 0
  %v3801 = vcvt.s32.f32 %v3800
  %v3803 = vsel %vm3767, %v3801, 0
  %3805 = vmatpush.msra.mxu0 0.0
  %3806 = vmatpush.msra.mxu0 0.0
  %3807 = vmatpush.msra.mxu0 0.0
  %3808 = vmatpush.msra.mxu0 0.0
  %3809 = vmatpush.msra.mxu0 0.0
  %3810 = vmatpush.msra.mxu0 0.0
  %3811 = vmatpush.msra.mxu0 0.0
  %3812 = vmatpush.msra.mxu0 0.0
  %3813 = vmatpush.msra.mxu0 0.0
  %3814 = vmatpush.msra.mxu0 0.0
  %3815 = vmatpush.msra.mxu0 0.0
  %3816 = vmatpush.msra.mxu0 0.0
  %3817 = vmatpush.msra.mxu0 0.0
  %3818 = vmatpush.msra.mxu0 0.0
  %3819 = vmatpush.msra.mxu0 %v3752
  %3820 = vmatpush.msra.mxu0 %v3709
  %3821 = vmatmul.f32.gmra.mxu0 %v3803
  %v3822 = vpop.f32.mrf.mxu0
  %v3823 = vadd.f32 0.0, %v3822
  %3824 = vdwg.mxu0
  %v3825 = vpack.c.bf16 %v3789, %v3789
  %v3826 = vpack.c.bf16 %v3823, %v3823
  %v3827 = vld [vmem:[%s5] sm:$0xf]
  %v3828 = vld [vmem:[%s5 + $0x4] sm:$0xf]
  %v3829 = vld [vmem:[%s5 + $0x8] sm:$0xf]
  %v3830 = vld [vmem:[%s5 + $0xc] sm:$0xf]
  %v3831 = vld [vmem:[%s5 + $0x10] sm:$0xf]
  %v3832 = vld [vmem:[%s5 + $0x14] sm:$0xf]
  %v3833 = vld [vmem:[%s5 + $0x18] sm:$0xf]
  %v3834 = vld [vmem:[%s5 + $0x1c] sm:$0xf]
  %v3835 = vld [vmem:[%s5 + $0x20] sm:$0xf]
  %v3836 = vld [vmem:[%s5 + $0x24] sm:$0xf]
  %v3837 = vld [vmem:[%s5 + $0x28] sm:$0xf]
  %v3838 = vld [vmem:[%s5 + $0x2c] sm:$0xf]
  %v3839 = vld [vmem:[%s5 + $0x30] sm:$0xf]
  %v3840 = vld [vmem:[%s5 + $0x34] sm:$0xf]
  %v3841 = vld [vmem:[%s5 + $0x38] sm:$0xf]
  %v3842 = vld [vmem:[%s5 + $0x3c] sm:$0xf]
  %v3843 = vld [vmem:[%s5 + $0x40] sm:$0xf]
  %v3844 = vld [vmem:[%s5 + $0x44] sm:$0xf]
  %v3845 = vld [vmem:[%s5 + $0x48] sm:$0xf]
  %v3846 = vld [vmem:[%s5 + $0x4c] sm:$0xf]
  %v3847 = vld [vmem:[%s5 + $0x50] sm:$0xf]
  %v3848 = vld [vmem:[%s5 + $0x54] sm:$0xf]
  %v3849 = vld [vmem:[%s5 + $0x58] sm:$0xf]
  %v3850 = vld [vmem:[%s5 + $0x5c] sm:$0xf]
  %v3851 = vld [vmem:[%s5 + $0x60] sm:$0xf]
  %v3852 = vld [vmem:[%s5 + $0x64] sm:$0xf]
  %v3853 = vld [vmem:[%s5 + $0x68] sm:$0xf]
  %v3854 = vld [vmem:[%s5 + $0x6c] sm:$0xf]
  %v3855 = vld [vmem:[%s5 + $0x70] sm:$0xf]
  %v3856 = vld [vmem:[%s5 + $0x74] sm:$0xf]
  %v3857 = vld [vmem:[%s5 + $0x78] sm:$0xf]
  %v3858 = vld [vmem:[%s5 + $0x7c] sm:$0xf]
  %v3859 = vld [vmem:[%s6] sm:$0x1]
  %v3861 = vperm.slane %v3859, 0
  %v3895 = vunpack.c.l.b16 %v3827
  %v3896 = vunpack.c.l.b16 %v3828
  %v3897 = vunpack.c.l.b16 %v3829
  %v3898 = vunpack.c.l.b16 %v3830
  %v3899 = vunpack.c.l.b16 %v3831
  %v3900 = vunpack.c.l.b16 %v3832
  %v3901 = vunpack.c.l.b16 %v3833
  %v3902 = vunpack.c.l.b16 %v3834
  %v3903 = vunpack.c.l.b16 %v3835
  %v3904 = vunpack.c.l.b16 %v3836
  %v3905 = vunpack.c.l.b16 %v3837
  %v3906 = vunpack.c.l.b16 %v3838
  %v3907 = vunpack.c.l.b16 %v3839
  %v3908 = vunpack.c.l.b16 %v3840
  %v3909 = vunpack.c.l.b16 %v3841
  %v3910 = vunpack.c.l.b16 %v3842
  %v3911 = vunpack.c.l.b16 %v3843
  %v3912 = vunpack.c.l.b16 %v3844
  %v3913 = vunpack.c.l.b16 %v3845
  %v3914 = vunpack.c.l.b16 %v3846
  %v3915 = vunpack.c.l.b16 %v3847
  %v3916 = vunpack.c.l.b16 %v3848
  %v3917 = vunpack.c.l.b16 %v3849
  %v3918 = vunpack.c.l.b16 %v3850
  %v3919 = vunpack.c.l.b16 %v3851
  %v3920 = vunpack.c.l.b16 %v3852
  %v3921 = vunpack.c.l.b16 %v3853
  %v3922 = vunpack.c.l.b16 %v3854
  %v3923 = vunpack.c.l.b16 %v3855
  %v3924 = vunpack.c.l.b16 %v3856
  %v3925 = vunpack.c.l.b16 %v3857
  %v3926 = vunpack.c.l.b16 %v3858
  %v3927 = vpack.c.b16 %v3896, %v3895
  %v3928 = vpack.c.b16 %v3898, %v3897
  %v3929 = vpack.c.b16 %v3900, %v3899
  %v3930 = vpack.c.b16 %v3902, %v3901
  %v3931 = vpack.c.b16 %v3904, %v3903
  %v3932 = vpack.c.b16 %v3906, %v3905
  %v3933 = vpack.c.b16 %v3908, %v3907
  %v3934 = vpack.c.b16 %v3910, %v3909
  %v3935 = vpack.c.b16 %v3912, %v3911
  %v3936 = vpack.c.b16 %v3914, %v3913
  %v3937 = vpack.c.b16 %v3916, %v3915
  %v3938 = vpack.c.b16 %v3918, %v3917
  %v3939 = vpack.c.b16 %v3920, %v3919
  %v3940 = vpack.c.b16 %v3922, %v3921
  %v3941 = vpack.c.b16 %v3924, %v3923
  %v3942 = vpack.c.b16 %v3926, %v3925
  %3959 = vmatpush.bf16.msra.mxu0 %v3934
  %3960 = vmatpush.bf16.msra.mxu0 %v3933
  %3961 = vmatpush.bf16.msra.mxu0 %v3932
  %3962 = vmatpush.bf16.msra.mxu0 %v3931
  %3963 = vmatpush.bf16.msra.mxu0 %v3930
  %3964 = vmatpush.bf16.msra.mxu0 %v3929
  %3965 = vmatpush.bf16.msra.mxu0 %v3928
  %3966 = vmatpush.bf16.msra.mxu0 %v3927
  %3967 = vmatmul.bf16.gmra.mxu0 %v3825
  %v3968 = vpop.f32.mrf.mxu0
  %v3969 = vadd.f32 %v3861, %v3968
  %v3970 = vpop.f32.mrf.mxu0
  %3971 = vdwg.mxu0
  %3972 = vmatpush.bf16.msra.mxu0 %v3942
  %3973 = vmatpush.bf16.msra.mxu0 %v3941
  %3974 = vmatpush.bf16.msra.mxu0 %v3940
  %3975 = vmatpush.bf16.msra.mxu0 %v3939
  %3976 = vmatpush.bf16.msra.mxu0 %v3938
  %3977 = vmatpush.bf16.msra.mxu0 %v3937
  %3978 = vmatpush.bf16.msra.mxu0 %v3936
  %3979 = vmatpush.bf16.msra.mxu0 %v3935
  %3980 = vmatmul.bf16.gmra.mxu0 %v3826
  %v3981 = vpop.f32.mrf.mxu0
  %v3982 = vadd.f32 %v3969, %v3981
  %v3983 = vpop.f32.mrf.mxu0
  %3984 = vdwg.mxu0
  %v3985 = vmax.f32 %v3982, 0.0
  %v3986 = vpack.c.bf16 %v3985, %v3985
  %v3987 = vld [vmem:[%s7] sm:$0xf]
  %v3988 = vld [vmem:[%s7 + $0x4] sm:$0xf]
  %v3989 = vld [vmem:[%s7 + $0x8] sm:$0xf]
  %v3990 = vld [vmem:[%s7 + $0xc] sm:$0xf]
  %v3991 = vld [vmem:[%s7 + $0x10] sm:$0xf]
  %v3992 = vld [vmem:[%s7 + $0x14] sm:$0xf]
  %v3993 = vld [vmem:[%s7 + $0x18] sm:$0xf]
  %v3994 = vld [vmem:[%s7 + $0x1c] sm:$0xf]
  %v3995 = vld [vmem:[%s7 + $0x20] sm:$0xf]
  %v3996 = vld [vmem:[%s7 + $0x24] sm:$0xf]
  %v3997 = vld [vmem:[%s7 + $0x28] sm:$0xf]
  %v3998 = vld [vmem:[%s7 + $0x2c] sm:$0xf]
  %v3999 = vld [vmem:[%s7 + $0x30] sm:$0xf]
  %v4000 = vld [vmem:[%s7 + $0x34] sm:$0xf]
  %v4001 = vld [vmem:[%s7 + $0x38] sm:$0xf]
  %v4002 = vld [vmem:[%s7 + $0x3c] sm:$0xf]
  %v4003 = vld [vmem:[%s8] sm:$0x1]
  %v4005 = vperm.slane %v4003, 0
  %v4023 = vunpack.c.l.b16 %v3987
  %v4024 = vunpack.c.l.b16 %v3988
  %v4025 = vunpack.c.l.b16 %v3989
  %v4026 = vunpack.c.l.b16 %v3990
  %v4027 = vunpack.c.l.b16 %v3991
  %v4028 = vunpack.c.l.b16 %v3992
  %v4029 = vunpack.c.l.b16 %v3993
  %v4030 = vunpack.c.l.b16 %v3994
  %v4031 = vunpack.c.l.b16 %v3995
  %v4032 = vunpack.c.l.b16 %v3996
  %v4033 = vunpack.c.l.b16 %v3997
  %v4034 = vunpack.c.l.b16 %v3998
  %v4035 = vunpack.c.l.b16 %v3999
  %v4036 = vunpack.c.l.b16 %v4000
  %v4037 = vunpack.c.l.b16 %v4001
  %v4038 = vunpack.c.l.b16 %v4002
  %v4039 = vpack.c.b16 %v4024, %v4023
  %v4040 = vpack.c.b16 %v4026, %v4025
  %v4041 = vpack.c.b16 %v4028, %v4027
  %v4042 = vpack.c.b16 %v4030, %v4029
  %v4043 = vpack.c.b16 %v4032, %v4031
  %v4044 = vpack.c.b16 %v4034, %v4033
  %v4045 = vpack.c.b16 %v4036, %v4035
  %v4046 = vpack.c.b16 %v4038, %v4037
  %4055 = vmatpush.bf16.msra.mxu0 %v4046
  %4056 = vmatpush.bf16.msra.mxu0 %v4045
  %4057 = vmatpush.bf16.msra.mxu0 %v4044
  %4058 = vmatpush.bf16.msra.mxu0 %v4043
  %4059 = vmatpush.bf16.msra.mxu0 %v4042
  %4060 = vmatpush.bf16.msra.mxu0 %v4041
  %4061 = vmatpush.bf16.msra.mxu0 %v4040
  %4062 = vmatpush.bf16.msra.mxu0 %v4039
  %4063 = vmatmul.bf16.gmra.mxu0 %v3986
  %v4064 = vpop.f32.mrf.mxu0
  %v4065 = vadd.f32 %v4005, %v4064
  %v4066 = vpop.f32.mrf.mxu0
  %4067 = vdwg.mxu0
  %v4068 = vmax.f32 %v4065, 0.0
  %v4069 = vpack.c.bf16 %v4068, %v4068
  %v4070 = vld [vmem:[%s9] sm:$0xf]
  %v4071 = vld [vmem:[%s9 + $0x4] sm:$0xf]
  %v4072 = vld [vmem:[%s9 + $0x8] sm:$0xf]
  %v4073 = vld [vmem:[%s9 + $0xc] sm:$0xf]
  %v4074 = vld [vmem:[%s9 + $0x10] sm:$0xf]
  %v4075 = vld [vmem:[%s9 + $0x14] sm:$0xf]
  %v4076 = vld [vmem:[%s9 + $0x18] sm:$0xf]
  %v4077 = vld [vmem:[%s9 + $0x1c] sm:$0xf]
  %v4078 = vld [vmem:[%s9 + $0x20] sm:$0xf]
  %v4079 = vld [vmem:[%s9 + $0x24] sm:$0xf]
  %v4080 = vld [vmem:[%s9 + $0x28] sm:$0xf]
  %v4081 = vld [vmem:[%s9 + $0x2c] sm:$0xf]
  %v4082 = vld [vmem:[%s9 + $0x30] sm:$0xf]
  %v4083 = vld [vmem:[%s9 + $0x34] sm:$0xf]
  %v4084 = vld [vmem:[%s9 + $0x38] sm:$0xf]
  %v4085 = vld [vmem:[%s9 + $0x3c] sm:$0xf]
  %v4086 = vld [vmem:[%s10] sm:$0x1]
  %v4088 = vperm.slane %v4086, 0
  %v4106 = vunpack.c.l.b16 %v4070
  %v4107 = vunpack.c.l.b16 %v4071
  %v4108 = vunpack.c.l.b16 %v4072
  %v4109 = vunpack.c.l.b16 %v4073
  %v4110 = vunpack.c.l.b16 %v4074
  %v4111 = vunpack.c.l.b16 %v4075
  %v4112 = vunpack.c.l.b16 %v4076
  %v4113 = vunpack.c.l.b16 %v4077
  %v4114 = vunpack.c.l.b16 %v4078
  %v4115 = vunpack.c.l.b16 %v4079
  %v4116 = vunpack.c.l.b16 %v4080
  %v4117 = vunpack.c.l.b16 %v4081
  %v4118 = vunpack.c.l.b16 %v4082
  %v4119 = vunpack.c.l.b16 %v4083
  %v4120 = vunpack.c.l.b16 %v4084
  %v4121 = vunpack.c.l.b16 %v4085
  %v4122 = vpack.c.b16 %v4107, %v4106
  %v4123 = vpack.c.b16 %v4109, %v4108
  %v4124 = vpack.c.b16 %v4111, %v4110
  %v4125 = vpack.c.b16 %v4113, %v4112
  %v4126 = vpack.c.b16 %v4115, %v4114
  %v4127 = vpack.c.b16 %v4117, %v4116
  %v4128 = vpack.c.b16 %v4119, %v4118
  %v4129 = vpack.c.b16 %v4121, %v4120
  %4138 = vmatpush.bf16.msra.mxu0 %v4129
  %4139 = vmatpush.bf16.msra.mxu0 %v4128
  %4140 = vmatpush.bf16.msra.mxu0 %v4127
  %4141 = vmatpush.bf16.msra.mxu0 %v4126
  %4142 = vmatpush.bf16.msra.mxu0 %v4125
  %4143 = vmatpush.bf16.msra.mxu0 %v4124
  %4144 = vmatpush.bf16.msra.mxu0 %v4123
  %4145 = vmatpush.bf16.msra.mxu0 %v4122
  %4146 = vmatmul.bf16.gmra.mxu0 %v4069
  %v4147 = vpop.f32.mrf.mxu0
  %v4148 = vadd.f32 %v4088, %v4147
  %v4149 = vpop.f32.mrf.mxu0
  %4150 = vdwg.mxu0
  %4151 = vst [vmem:[%s11] sm:$0xff] %v4148
  // Predicated region
  $region46: #{dqn_forward.1} parent=0 // pred_check
    _
  $region47: #{dqn_forward.1} parent=0 // pred_check_branch
    %4153 = sbr.rel (0) target = $region49
  $region48: #{dqn_forward.1} parent=0 // pred_region
    _
  $region49: #{dqn_forward.1} parent=0 // pred_fallthru
    _
  // Predicated region
  $region50: #{dqn_forward.1} parent=0 // pred_check
    _
  $region51: #{dqn_forward.1} parent=0 // pred_check_branch
    %4155 = sbr.rel (0) target = $region53
  $region52: #{dqn_forward.1} parent=0 // pred_region
    _
  $region53: #{dqn_forward.1} parent=0 // pred_fallthru
    _

</llo_original>
